<compile_context>
chip_gen: v5e
topology: v5e:2x2
jax: 0.10.0
libtpu: 0.0.40
codegen_flags: <defaults>
</compile_context>

<pallas_src>
import math

import jax
import jax.numpy as jnp
from jax import lax
from jax.experimental import pallas as pl
from jax.experimental.pallas import tpu as pltpu

EPS = 1e-5  # PyTorch BatchNorm2d default eps


# ----------------------------------------------------------------------------
# static helpers for align_corners=True bilinear interpolation
# ----------------------------------------------------------------------------
def _lerp_taps(n_in, n_out):
    """Static (python) 2-tap lerp coefficients: out[j] = (1-f)*x[lo] + f*x[hi]."""
    taps = []
    for j in range(n_out):
        if n_in == 1:
            taps.append((0, 0, 0.0))
            continue
        src = j * (n_in - 1) / (n_out - 1)
        lo = min(int(math.floor(src)), n_in - 2)
        taps.append((lo, lo + 1, float(src - lo)))
    return taps


def _interp_matrix(n_in, n_out):
    # used only by the pure-JAX reference
    dst = jnp.arange(n_out, dtype=jnp.float32)
    if n_in == 1:
        return jnp.ones((n_out, 1), jnp.float32)
    src = dst * (n_in - 1) / (n_out - 1)
    lo = jnp.clip(jnp.floor(src).astype(jnp.int32), 0, n_in - 2)
    frac = src - lo.astype(jnp.float32)
    m = jnp.zeros((n_out, n_in), jnp.float32)
    rows = jnp.arange(n_out)
    m = m.at[rows, lo].add(1.0 - frac)
    m = m.at[rows, lo + 1].add(frac)
    return m


_TAP_OFFSETS = [(ky, kx) for ky in range(3) for kx in range(3)]


# ----------------------------------------------------------------------------
# conv1 (fused): bilinear 2x upsample of x1 + F.pad alignment + channel-concat
#                with x2 + conv3x3(pad=1) + bias + per-sample BN statistics
# ----------------------------------------------------------------------------
def _make_conv1_call(n, hs, ws, c2, h1, w1, c1, cm, dy, dx):
    h2, w2 = 2 * h1, 2 * w1
    ctot = c2 + c1
    hw = hs * ws
    dy0, dx0 = dy // 2, dx // 2
    taps_h = _lerp_taps(h1, h2)
    taps_w = _lerp_taps(w1, w2)

    def kernel(x2_ref, x1_ref, wk_ref, b_ref, y_ref, st_ref,
               pad2_ref, pad1_ref, tmp_ref, cols_ref):
        # --- separable bilinear 2x upsample of x1 (pure-VPU 2-tap lerp) -------
        x1v = x1_ref[0]                                   # (h1, w1, c1) f32
        for i, (lo, hi, f) in enumerate(taps_h):          # H direction
            tmp_ref[i:i + 1] = (1.0 - f) * x1v[lo:lo + 1] + f * x1v[hi:hi + 1]
        tmpv = tmp_ref[...]                               # (h2, w1, c1)

        # --- zero halos: conv pad=1 + F.pad size alignment, in VMEM -----------
        pad2_ref[...] = jnp.zeros_like(pad2_ref)
        pad1_ref[...] = jnp.zeros_like(pad1_ref)
        pad2_ref[1:hs + 1, 1:ws + 1, :] = x2_ref[0]
        for j, (lo, hi, f) in enumerate(taps_w):          # W direction -> halo buf
            col = (1.0 - f) * tmpv[:, lo:lo + 1, :] + f * tmpv[:, hi:hi + 1, :]
            pad1_ref[1 + dy0:1 + dy0 + h2, 1 + dx0 + j:2 + dx0 + j, :] = col

        # --- im2col: one (hs*ws, 9*(c2+c1)) bf16 matrix; the channel-concat of
        #     [x2, up(x1)] happens here (matches weight row order), so the
        #     concatenated activation is never materialized in HBM -------------
        pad2v = pad2_ref[...]
        pad1v = pad1_ref[...]
        for t, (ky, kx) in enumerate(_TAP_OFFSETS):
            cols_ref[:, t * ctot:t * ctot + c2] = (
                pad2v[ky:ky + hs, kx:kx + ws, :].reshape(hw, c2)
                .astype(jnp.bfloat16))
            cols_ref[:, t * ctot + c2:(t + 1) * ctot] = (
                pad1v[ky:ky + hs, kx:kx + ws, :].reshape(hw, c1)
                .astype(jnp.bfloat16))

        # --- single MXU matmul (bf16 operands, f32 accumulate) + bias ---------
        acc = jnp.dot(cols_ref[...], wk_ref[...],
                      preferred_element_type=jnp.float32) + b_ref[...]

        # --- per-sample partial BN statistics (reduced over batch in JAX) -----
        st_ref[0, 0:1, :] = jnp.sum(acc, axis=0, keepdims=True)
        st_ref[0, 1:2, :] = jnp.sum(acc * acc, axis=0, keepdims=True)
        y_ref[0] = acc.reshape(hs, ws, cm)

    flops = 2 * n * hw * (9 * ctot) * cm + 8 * n * h2 * w2 * c1
    bytes_accessed = 4 * n * (hs * ws * c2 + h1 * w1 * c1 + hs * ws * cm
                              + 2 * cm) + 2 * 9 * ctot * cm + 4 * cm

    return pl.pallas_call(
        kernel,
        out_shape=(jax.ShapeDtypeStruct((n, hs, ws, cm), jnp.float32),
                   jax.ShapeDtypeStruct((n, 2, cm), jnp.float32)),
        grid_spec=pltpu.PrefetchScalarGridSpec(
            num_scalar_prefetch=0,
            grid=(n,),
            in_specs=[
                pl.BlockSpec((1, hs, ws, c2), lambda i: (i, 0, 0, 0)),
                pl.BlockSpec((1, h1, w1, c1), lambda i: (i, 0, 0, 0)),
                pl.BlockSpec((9 * ctot, cm), lambda i: (0, 0)),
                pl.BlockSpec((1, cm), lambda i: (0, 0)),
            ],
            out_specs=(pl.BlockSpec((1, hs, ws, cm), lambda i: (i, 0, 0, 0)),
                       pl.BlockSpec((1, 2, cm), lambda i: (i, 0, 0))),
            scratch_shapes=[
                pltpu.VMEM((hs + 2, ws + 2, c2), jnp.float32),   # x2 halo
                pltpu.VMEM((hs + 2, ws + 2, c1), jnp.float32),   # up(x1) halo
                pltpu.VMEM((h2, w1, c1), jnp.float32),           # H-lerp temp
                pltpu.VMEM((hw, 9 * ctot), jnp.bfloat16),        # im2col
            ]),
        compiler_params=pltpu.CompilerParams(
            dimension_semantics=("parallel",)),
        cost_estimate=pl.CostEstimate(flops=flops, transcendentals=0,
                                      bytes_accessed=bytes_accessed),
    )


# ----------------------------------------------------------------------------
# conv2 (fused): BN1(scale/shift) + ReLU prologue + conv3x3(pad=1) + bias
#                + per-sample BN statistics
# ----------------------------------------------------------------------------
def _make_conv2_call(n, hs, ws, cm, cout):
    hw = hs * ws

    def kernel(y1_ref, sc_ref, sh_ref, wk_ref, b_ref, y_ref, st_ref,
               pad_ref, cols_ref):
        # --- fused BatchNorm (precomputed scale/shift) + ReLU on conv1 output -
        a = jnp.maximum(y1_ref[0] * sc_ref[...] + sh_ref[...], 0.0)

        pad_ref[...] = jnp.zeros_like(pad_ref)
        pad_ref[1:hs + 1, 1:ws + 1, :] = a
        padv = pad_ref[...]
        for t, (ky, kx) in enumerate(_TAP_OFFSETS):
            cols_ref[:, t * cm:(t + 1) * cm] = (
                padv[ky:ky + hs, kx:kx + ws, :].reshape(hw, cm)
                .astype(jnp.bfloat16))

        acc = jnp.dot(cols_ref[...], wk_ref[...],
                      preferred_element_type=jnp.float32) + b_ref[...]

        st_ref[0, 0:1, :] = jnp.sum(acc, axis=0, keepdims=True)
        st_ref[0, 1:2, :] = jnp.sum(acc * acc, axis=0, keepdims=True)
        y_ref[0] = acc.reshape(hs, ws, cout)

    flops = 2 * n * hw * (9 * cm) * cout + 2 * n * hw * cm
    bytes_accessed = 4 * n * (hw * cm + hw * cout + 2 * cout) \
        + 2 * 9 * cm * cout + 4 * (2 * cm + cout)

    return pl.pallas_call(
        kernel,
        out_shape=(jax.ShapeDtypeStruct((n, hs, ws, cout), jnp.float32),
                   jax.ShapeDtypeStruct((n, 2, cout), jnp.float32)),
        grid_spec=pltpu.PrefetchScalarGridSpec(
            num_scalar_prefetch=0,
            grid=(n,),
            in_specs=[
                pl.BlockSpec((1, hs, ws, cm), lambda i: (i, 0, 0, 0)),
                pl.BlockSpec((1, cm), lambda i: (0, 0)),
                pl.BlockSpec((1, cm), lambda i: (0, 0)),
                pl.BlockSpec((9 * cm, cout), lambda i: (0, 0)),
                pl.BlockSpec((1, cout), lambda i: (0, 0)),
            ],
            out_specs=(pl.BlockSpec((1, hs, ws, cout), lambda i: (i, 0, 0, 0)),
                       pl.BlockSpec((1, 2, cout), lambda i: (i, 0, 0))),
            scratch_shapes=[
                pltpu.VMEM((hs + 2, ws + 2, cm), jnp.float32),   # halo
                pltpu.VMEM((hw, 9 * cm), jnp.bfloat16),          # im2col
            ]),
        compiler_params=pltpu.CompilerParams(
            dimension_semantics=("parallel",)),
        cost_estimate=pl.CostEstimate(flops=flops, transcendentals=0,
                                      bytes_accessed=bytes_accessed),
    )


# ----------------------------------------------------------------------------
# final BatchNorm(scale/shift) + ReLU (must wait for global batch stats)
# ----------------------------------------------------------------------------
def _bn_relu_kernel(y_ref, scale_ref, shift_ref, o_ref):
    o_ref[0] = jnp.maximum(y_ref[0] * scale_ref[...] + shift_ref[...], 0.0)


def bn_relu(y, scale, shift):
    n, h, w, c = y.shape
    return pl.pallas_call(
        _bn_relu_kernel,
        out_shape=jax.ShapeDtypeStruct((n, h, w, c), jnp.float32),
        grid_spec=pltpu.PrefetchScalarGridSpec(
            num_scalar_prefetch=0,
            grid=(n,),
            in_specs=[
                pl.BlockSpec((1, h, w, c), lambda i: (i, 0, 0, 0)),
                pl.BlockSpec((1, c), lambda i: (0, 0)),
                pl.BlockSpec((1, c), lambda i: (0, 0)),
            ],
            out_specs=pl.BlockSpec((1, h, w, c), lambda i: (i, 0, 0, 0)),
        ),
        compiler_params=pltpu.CompilerParams(dimension_semantics=("parallel",)),
    )(y, scale.reshape(1, c), shift.reshape(1, c))


def _bn_affine(stats, count, gamma, beta):
    # Training-mode BatchNorm2d: normalize with biased batch mean/variance.
    mean = stats[0] / count
    var = jnp.maximum(stats[1] / count - mean * mean, 0.0)
    scale = gamma * lax.rsqrt(var + EPS)
    shift = beta - mean * scale
    return scale, shift
    # TODO(synk): running_mean / running_var buffer updates (training side
    # effect) are not reproduced; they do not affect the forward output.


# ----------------------------------------------------------------------------
# Up forward
# ----------------------------------------------------------------------------
def up_forward(x1_nchw, x2_nchw, params):
    # NCHW (PyTorch) -> NHWC (kernel layout)
    x1 = jnp.transpose(x1_nchw, (0, 2, 3, 1)).astype(jnp.float32)
    x2 = jnp.transpose(x2_nchw, (0, 2, 3, 1)).astype(jnp.float32)
    n, h1, w1, c1 = x1.shape
    _, hs, ws, c2 = x2.shape
    dy = hs - 2 * h1
    dx = ws - 2 * w1

    ctot = c2 + c1
    cm = params["w1"].shape[-1]
    cout = params["w2"].shape[-1]

    # weights in im2col row order (tap-major, then [x2-channels, x1-channels])
    wk1 = params["w1"].reshape(9 * ctot, cm).astype(jnp.bfloat16)
    b1 = params["b1"].reshape(1, cm).astype(jnp.float32)
    wk2 = params["w2"].reshape(9 * cm, cout).astype(jnp.bfloat16)
    b2 = params["b2"].reshape(1, cout).astype(jnp.float32)

    cnt = float(n * hs * ws)

    # conv1: upsample + pad + concat + conv + bias + partial stats (one kernel)
    y1, st1 = _make_conv1_call(n, hs, ws, c2, h1, w1, c1, cm, dy, dx)(
        x2, x1, wk1, b1)
    sc1, sh1 = _bn_affine(jnp.sum(st1, axis=0), cnt,
                          params["g1"], params["bt1"])

    # conv2: BN1+ReLU prologue + conv + bias + partial stats (one kernel)
    y2, st2 = _make_conv2_call(n, hs, ws, cm, cout)(
        y1, sc1.reshape(1, cm).astype(jnp.float32),
        sh1.reshape(1, cm).astype(jnp.float32), wk2, b2)
    sc2, sh2 = _bn_affine(jnp.sum(st2, axis=0), cnt,
                          params["g2"], params["bt2"])

    out = bn_relu(y2, sc2, sh2)
    return jnp.transpose(out, (0, 3, 1, 2))  # back to NCHW


# ----------------------------------------------------------------------------
# deterministic parameter init (Up(in_channels, out_channels, bilinear=True))
# ----------------------------------------------------------------------------
def init_params(key, in_ch, out_ch, mid_ch):
    ks = jax.random.split(key, 8)
    f32 = jnp.float32
    return dict(
        w1=0.1 * jax.random.normal(ks[0], (3, 3, in_ch, mid_ch), f32),
        b1=0.1 * jax.random.normal(ks[1], (mid_ch,), f32),
        g1=1.0 + 0.1 * jax.random.normal(ks[2], (mid_ch,), f32),
        bt1=0.1 * jax.random.normal(ks[3], (mid_ch,), f32),
        w2=0.1 * jax.random.normal(ks[4], (3, 3, mid_ch, out_ch), f32),
        b2=0.1 * jax.random.normal(ks[5], (out_ch,), f32),
        g2=1.0 + 0.1 * jax.random.normal(ks[6], (out_ch,), f32),
        bt2=0.1 * jax.random.normal(ks[7], (out_ch,), f32),
    )


# ----------------------------------------------------------------------------
# pure-JAX reference (NCHW) for correctness check
# ----------------------------------------------------------------------------
def reference_forward(x1_nchw, x2_nchw, params):
    x1 = x1_nchw.astype(jnp.float32)
    x2 = x2_nchw.astype(jnp.float32)
    _, _, h, w = x1.shape
    mh = _interp_matrix(h, 2 * h)
    mw = _interp_matrix(w, 2 * w)
    x1u = jnp.einsum('hH,wW,bcHW->bchw', mh, mw, x1)
    dy = x2.shape[2] - x1u.shape[2]
    dx = x2.shape[3] - x1u.shape[3]
    if dy != 0 or dx != 0:
        x1u = jnp.pad(x1u, ((0, 0), (0, 0), (dy // 2, dy - dy // 2),
                            (dx // 2, dx - dx // 2)))
    x = jnp.concatenate([x2, x1u], axis=1)

    def conv(z, w_hwio, b):
        out = lax.conv_general_dilated(
            z, w_hwio, (1, 1), 'SAME',
            dimension_numbers=('NCHW', 'HWIO', 'NCHW'),
            precision=lax.Precision.HIGHEST)
        return out + b[None, :, None, None]

    def bn_relu_ref(z, g, bt):
        mean = z.mean((0, 2, 3), keepdims=True)
        var = ((z - mean) ** 2).mean((0, 2, 3), keepdims=True)
        zn = (z - mean) * lax.rsqrt(var + EPS)
        return jnp.maximum(zn * g[None, :, None, None] + bt[None, :, None, None], 0.0)

    y = bn_relu_ref(conv(x, params["w1"], params["b1"]), params["g1"], params["bt1"])
    y = bn_relu_ref(conv(y, params["w2"], params["b2"]), params["g2"], params["bt2"])
    return y


if __name__ == "__main__":
    key = jax.random.PRNGKey(0)
    k1, k2, kp = jax.random.split(key, 3)

    in_channels, out_channels = 16, 16
    mid_channels = in_channels // 2          # DoubleConv(in, out, in // 2)
    # x1: deeper feature map (half spatial, in_channels//2 channels)
    # x2: skip connection (full spatial, in_channels//2 channels)
    x1 = jax.random.normal(k1, (2, in_channels // 2, 8, 8), jnp.float32)    # NCHW
    x2 = jax.random.normal(k2, (2, in_channels // 2, 16, 16), jnp.float32)  # NCHW
    params = init_params(kp, in_channels, out_channels, mid_channels)

    out = jax.jit(up_forward)(x1, x2, params)
    out = jax.block_until_ready(out)

    ref = reference_forward(x1, x2, params)
    assert out.shape == (2, out_channels, 16, 16)
    assert bool(jnp.isfinite(out).all())
    assert float(jnp.max(jnp.abs(out - ref))) < 0.1

    print("KERNEL_OK")
</pallas_src>

<mosaic_0001>
module attributes {stable_mosaic.version = 11 : i64} {
  func.func @_bn_relu_kernel(%arg0: i32, %arg1: memref<1x16x16x16xf32, #tpu.memory_space<vmem>>, %arg2: memref<1x16xf32, #tpu.memory_space<vmem>>, %arg3: memref<1x16xf32, #tpu.memory_space<vmem>>, %arg4: memref<1x16x16x16xf32, #tpu.memory_space<vmem>>) attributes {dimension_semantics = [#tpu.dimension_semantics<parallel>], iteration_bounds = array<i64: 2>, scalar_prefetch = 0 : i64, scratch_operands = 0 : i64, tpu.core_type = #tpu.core_type<tc>, window_params = [{transform_indices = @transform_0, window_bounds = array<i64: 1, 16, 16, 16>}, {pipeline_mode = #tpu.pipeline_mode<synchronous>, transform_indices = @transform_1, window_bounds = array<i64: 1, 16>}, {pipeline_mode = #tpu.pipeline_mode<synchronous>, transform_indices = @transform_2, window_bounds = array<i64: 1, 16>}, {transform_indices = @transform_3, window_bounds = array<i64: 1, 16, 16, 16>}]} {
    %c0 = arith.constant 0 : index
    %c0_0 = arith.constant 0 : index
    %c0_1 = arith.constant 0 : index
    %c0_2 = arith.constant 0 : index
    %0 = vector.load %arg1[%c0, %c0_0, %c0_1, %c0_2] : memref<1x16x16x16xf32, #tpu.memory_space<vmem>>, vector<1x16x16x16xf32>
    %1 = vector.shape_cast %0 : vector<1x16x16x16xf32> to vector<16x16x16xf32>
    %c0_3 = arith.constant 0 : index
    %c0_4 = arith.constant 0 : index
    %2 = vector.load %arg2[%c0_3, %c0_4] : memref<1x16xf32, #tpu.memory_space<vmem>>, vector<1x16xf32>
    %3 = vector.shape_cast %2 : vector<1x16xf32> to vector<1x1x16xf32>
    %4 = vector.broadcast %3 : vector<1x1x16xf32> to vector<16x16x16xf32>
    %5 = arith.mulf %1, %4 : vector<16x16x16xf32>
    %c0_5 = arith.constant 0 : index
    %c0_6 = arith.constant 0 : index
    %6 = vector.load %arg3[%c0_5, %c0_6] : memref<1x16xf32, #tpu.memory_space<vmem>>, vector<1x16xf32>
    %7 = vector.shape_cast %6 : vector<1x16xf32> to vector<1x1x16xf32>
    %8 = vector.broadcast %7 : vector<1x1x16xf32> to vector<16x16x16xf32>
    %9 = arith.addf %5, %8 : vector<16x16x16xf32>
    %cst = arith.constant 0.000000e+00 : f32
    %10 = vector.broadcast %cst : f32 to vector<16x16x16xf32>
    %11 = arith.maximumf %9, %10 : vector<16x16x16xf32>
    %c0_7 = arith.constant 0 : index
    %c0_8 = arith.constant 0 : index
    %c0_9 = arith.constant 0 : index
    %c0_10 = arith.constant 0 : index
    %12 = vector.load %arg4[%c0_7, %c0_8, %c0_9, %c0_10] : memref<1x16x16x16xf32, #tpu.memory_space<vmem>>, vector<1x16x16x16xf32>
    %13 = vector.shape_cast %12 : vector<1x16x16x16xf32> to vector<16x16x16xf32>
    %14 = vector.shape_cast %11 : vector<16x16x16xf32> to vector<1x16x16x16xf32>
    tpu.vector_store %arg4[%c0_7, %c0_8, %c0_9, %c0_10], %14 {strides = array<i32>} : memref<1x16x16x16xf32, #tpu.memory_space<vmem>>, vector<1x16x16x16xf32>,
    return
  }
  func.func @transform_0(%arg0: i32) -> (i32, i32, i32, i32) {
    %c0_i32 = arith.constant 0 : i32
    %c0_i32_0 = arith.constant 0 : i32
    %c0_i32_1 = arith.constant 0 : i32
    %c0_i32_2 = arith.constant 0 : i32
    return %arg0, %c0_i32, %c0_i32_0, %c0_i32_1 : i32, i32, i32, i32
  }
  func.func @transform_1(%arg0: i32) -> (i32, i32) {
    %c0_i32 = arith.constant 0 : i32
    %c0_i32_0 = arith.constant 0 : i32
    %c0_i32_1 = arith.constant 0 : i32
    return %c0_i32, %c0_i32_0 : i32, i32
  }
  func.func @transform_2(%arg0: i32) -> (i32, i32) {
    %c0_i32 = arith.constant 0 : i32
    %c0_i32_0 = arith.constant 0 : i32
    %c0_i32_1 = arith.constant 0 : i32
    return %c0_i32, %c0_i32_0 : i32, i32
  }
  func.func @transform_3(%arg0: i32) -> (i32, i32, i32, i32) {
    %c0_i32 = arith.constant 0 : i32
    %c0_i32_0 = arith.constant 0 : i32
    %c0_i32_1 = arith.constant 0 : i32
    %c0_i32_2 = arith.constant 0 : i32
    return %arg0, %c0_i32, %c0_i32_0, %c0_i32_1 : i32, i32, i32, i32
  }
}

module attributes {stable_mosaic.version = 11 : i64} {
  func.func @kernel(%arg0: i32, %arg1: memref<1x16x16x8xf32, #tpu.memory_space<vmem>>, %arg2: memref<1x8xf32, #tpu.memory_space<vmem>>, %arg3: memref<1x8xf32, #tpu.memory_space<vmem>>, %arg4: memref<72x16xbf16, #tpu.memory_space<vmem>>, %arg5: memref<1x16xf32, #tpu.memory_space<vmem>>, %arg6: memref<1x16x16x16xf32, #tpu.memory_space<vmem>>, %arg7: memref<1x2x16xf32, #tpu.memory_space<vmem>>, %arg8: memref<18x18x8xf32, #tpu.memory_space<vmem>>, %arg9: memref<256x72xbf16, #tpu.memory_space<vmem>>) attributes {dimension_semantics = [#tpu.dimension_semantics<parallel>], iteration_bounds = array<i64: 2>, scalar_prefetch = 0 : i64, scratch_operands = 2 : i64, tpu.core_type = #tpu.core_type<tc>, window_params = [{transform_indices = @transform_0, window_bounds = array<i64: 1, 16, 16, 8>}, {pipeline_mode = #tpu.pipeline_mode<synchronous>, transform_indices = @transform_1, window_bounds = array<i64: 1, 8>}, {pipeline_mode = #tpu.pipeline_mode<synchronous>, transform_indices = @transform_2, window_bounds = array<i64: 1, 8>}, {pipeline_mode = #tpu.pipeline_mode<synchronous>, transform_indices = @transform_3, window_bounds = array<i64: 72, 16>}, {pipeline_mode = #tpu.pipeline_mode<synchronous>, transform_indices = @transform_4, window_bounds = array<i64: 1, 16>}, {transform_indices = @transform_5, window_bounds = array<i64: 1, 16, 16, 16>}, {transform_indices = @transform_6, window_bounds = array<i64: 1, 2, 16>}]} {
    %c0 = arith.constant 0 : index
    %c0_0 = arith.constant 0 : index
    %c0_1 = arith.constant 0 : index
    %c0_2 = arith.constant 0 : index
    %0 = vector.load %arg1[%c0, %c0_0, %c0_1, %c0_2] : memref<1x16x16x8xf32, #tpu.memory_space<vmem>>, vector<1x16x16x8xf32>
    %1 = vector.shape_cast %0 : vector<1x16x16x8xf32> to vector<16x16x8xf32>
    %c0_3 = arith.constant 0 : index
    %c0_4 = arith.constant 0 : index
    %2 = vector.load %arg2[%c0_3, %c0_4] : memref<1x8xf32, #tpu.memory_space<vmem>>, vector<1x8xf32>
    %3 = vector.shape_cast %2 : vector<1x8xf32> to vector<1x1x8xf32>
    %4 = vector.broadcast %3 : vector<1x1x8xf32> to vector<16x16x8xf32>
    %5 = arith.mulf %1, %4 : vector<16x16x8xf32>
    %c0_5 = arith.constant 0 : index
    %c0_6 = arith.constant 0 : index
    %6 = vector.load %arg3[%c0_5, %c0_6] : memref<1x8xf32, #tpu.memory_space<vmem>>, vector<1x8xf32>
    %7 = vector.shape_cast %6 : vector<1x8xf32> to vector<1x1x8xf32>
    %8 = vector.broadcast %7 : vector<1x1x8xf32> to vector<16x16x8xf32>
    %9 = arith.addf %5, %8 : vector<16x16x8xf32>
    %cst = arith.constant 0.000000e+00 : f32
    %10 = vector.broadcast %cst : f32 to vector<16x16x8xf32>
    %11 = arith.maximumf %9, %10 : vector<16x16x8xf32>
    %cst_7 = arith.constant 0.000000e+00 : f32
    %12 = vector.broadcast %cst_7 : f32 to vector<18x18x8xf32>
    %c0_8 = arith.constant 0 : index
    %c0_9 = arith.constant 0 : index
    %c0_10 = arith.constant 0 : index
    %13 = vector.load %arg8[%c0_8, %c0_9, %c0_10] : memref<18x18x8xf32, #tpu.memory_space<vmem>>, vector<18x18x8xf32>
    tpu.vector_store %arg8[%c0_8, %c0_9, %c0_10], %12 {strides = array<i32>} : memref<18x18x8xf32, #tpu.memory_space<vmem>>, vector<18x18x8xf32>,
    %c1 = arith.constant 1 : index
    %c1_11 = arith.constant 1 : index
    %c0_12 = arith.constant 0 : index
    %14 = vector.load %arg8[%c1, %c1_11, %c0_12] : memref<18x18x8xf32, #tpu.memory_space<vmem>>, vector<16x16x8xf32>
    tpu.vector_store %arg8[%c1, %c1_11, %c0_12], %11 {strides = array<i32>} : memref<18x18x8xf32, #tpu.memory_space<vmem>>, vector<16x16x8xf32>,
    %c0_13 = arith.constant 0 : index
    %c0_14 = arith.constant 0 : index
    %c0_15 = arith.constant 0 : index
    %15 = vector.load %arg8[%c0_13, %c0_14, %c0_15] : memref<18x18x8xf32, #tpu.memory_space<vmem>>, vector<18x18x8xf32>
    %16 = vector.extract_strided_slice %15 {offsets = [0, 0, 0], sizes = [16, 16, 8], strides = [1, 1, 1]} : vector<18x18x8xf32> to vector<16x16x8xf32>
    %17 = vector.shape_cast %16 : vector<16x16x8xf32> to vector<256x8xf32>
    %18 = arith.truncf %17 : vector<256x8xf32> to vector<256x8xbf16>
    %c0_16 = arith.constant 0 : index
    %c0_17 = arith.constant 0 : index
    %19 = vector.load %arg9[%c0_16, %c0_17] : memref<256x72xbf16, #tpu.memory_space<vmem>>, vector<256x8xbf16>
    tpu.vector_store %arg9[%c0_16, %c0_17], %18 {strides = array<i32>} : memref<256x72xbf16, #tpu.memory_space<vmem>>, vector<256x8xbf16>,
    %20 = vector.extract_strided_slice %15 {offsets = [0, 1, 0], sizes = [16, 16, 8], strides = [1, 1, 1]} : vector<18x18x8xf32> to vector<16x16x8xf32>
    %21 = vector.shape_cast %20 : vector<16x16x8xf32> to vector<256x8xf32>
    %22 = arith.truncf %21 : vector<256x8xf32> to vector<256x8xbf16>
    %c0_18 = arith.constant 0 : index
    %c8 = arith.constant 8 : index
    %23 = vector.load %arg9[%c0_18, %c8] : memref<256x72xbf16, #tpu.memory_space<vmem>>, vector<256x8xbf16>
    tpu.vector_store %arg9[%c0_18, %c8], %22 {strides = array<i32>} : memref<256x72xbf16, #tpu.memory_space<vmem>>, vector<256x8xbf16>,
    %24 = vector.extract_strided_slice %15 {offsets = [0, 2, 0], sizes = [16, 16, 8], strides = [1, 1, 1]} : vector<18x18x8xf32> to vector<16x16x8xf32>
    %25 = vector.shape_cast %24 : vector<16x16x8xf32> to vector<256x8xf32>
    %26 = arith.truncf %25 : vector<256x8xf32> to vector<256x8xbf16>
    %c0_19 = arith.constant 0 : index
    %c16 = arith.constant 16 : index
    %27 = vector.load %arg9[%c0_19, %c16] : memref<256x72xbf16, #tpu.memory_space<vmem>>, vector<256x8xbf16>
    tpu.vector_store %arg9[%c0_19, %c16], %26 {strides = array<i32>} : memref<256x72xbf16, #tpu.memory_space<vmem>>, vector<256x8xbf16>,
    %28 = vector.extract_strided_slice %15 {offsets = [1, 0, 0], sizes = [16, 16, 8], strides = [1, 1, 1]} : vector<18x18x8xf32> to vector<16x16x8xf32>
    %29 = vector.shape_cast %28 : vector<16x16x8xf32> to vector<256x8xf32>
    %30 = arith.truncf %29 : vector<256x8xf32> to vector<256x8xbf16>
    %c0_20 = arith.constant 0 : index
    %c24 = arith.constant 24 : index
    %31 = vector.load %arg9[%c0_20, %c24] : memref<256x72xbf16, #tpu.memory_space<vmem>>, vector<256x8xbf16>
    tpu.vector_store %arg9[%c0_20, %c24], %30 {strides = array<i32>} : memref<256x72xbf16, #tpu.memory_space<vmem>>, vector<256x8xbf16>,
    %32 = vector.extract_strided_slice %15 {offsets = [1, 1, 0], sizes = [16, 16, 8], strides = [1, 1, 1]} : vector<18x18x8xf32> to vector<16x16x8xf32>
    %33 = vector.shape_cast %32 : vector<16x16x8xf32> to vector<256x8xf32>
    %34 = arith.truncf %33 : vector<256x8xf32> to vector<256x8xbf16>
    %c0_21 = arith.constant 0 : index
    %c32 = arith.constant 32 : index
    %35 = vector.load %arg9[%c0_21, %c32] : memref<256x72xbf16, #tpu.memory_space<vmem>>, vector<256x8xbf16>
    tpu.vector_store %arg9[%c0_21, %c32], %34 {strides = array<i32>} : memref<256x72xbf16, #tpu.memory_space<vmem>>, vector<256x8xbf16>,
    %36 = vector.extract_strided_slice %15 {offsets = [1, 2, 0], sizes = [16, 16, 8], strides = [1, 1, 1]} : vector<18x18x8xf32> to vector<16x16x8xf32>
    %37 = vector.shape_cast %36 : vector<16x16x8xf32> to vector<256x8xf32>
    %38 = arith.truncf %37 : vector<256x8xf32> to vector<256x8xbf16>
    %c0_22 = arith.constant 0 : index
    %c40 = arith.constant 40 : index
    %39 = vector.load %arg9[%c0_22, %c40] : memref<256x72xbf16, #tpu.memory_space<vmem>>, vector<256x8xbf16>
    tpu.vector_store %arg9[%c0_22, %c40], %38 {strides = array<i32>} : memref<256x72xbf16, #tpu.memory_space<vmem>>, vector<256x8xbf16>,
    %40 = vector.extract_strided_slice %15 {offsets = [2, 0, 0], sizes = [16, 16, 8], strides = [1, 1, 1]} : vector<18x18x8xf32> to vector<16x16x8xf32>
    %41 = vector.shape_cast %40 : vector<16x16x8xf32> to vector<256x8xf32>
    %42 = arith.truncf %41 : vector<256x8xf32> to vector<256x8xbf16>
    %c0_23 = arith.constant 0 : index
    %c48 = arith.constant 48 : index
    %43 = vector.load %arg9[%c0_23, %c48] : memref<256x72xbf16, #tpu.memory_space<vmem>>, vector<256x8xbf16>
    tpu.vector_store %arg9[%c0_23, %c48], %42 {strides = array<i32>} : memref<256x72xbf16, #tpu.memory_space<vmem>>, vector<256x8xbf16>,
    %44 = vector.extract_strided_slice %15 {offsets = [2, 1, 0], sizes = [16, 16, 8], strides = [1, 1, 1]} : vector<18x18x8xf32> to vector<16x16x8xf32>
    %45 = vector.shape_cast %44 : vector<16x16x8xf32> to vector<256x8xf32>
    %46 = arith.truncf %45 : vector<256x8xf32> to vector<256x8xbf16>
    %c0_24 = arith.constant 0 : index
    %c56 = arith.constant 56 : index
    %47 = vector.load %arg9[%c0_24, %c56] : memref<256x72xbf16, #tpu.memory_space<vmem>>, vector<256x8xbf16>
    tpu.vector_store %arg9[%c0_24, %c56], %46 {strides = array<i32>} : memref<256x72xbf16, #tpu.memory_space<vmem>>, vector<256x8xbf16>,
    %48 = vector.extract_strided_slice %15 {offsets = [2, 2, 0], sizes = [16, 16, 8], strides = [1, 1, 1]} : vector<18x18x8xf32> to vector<16x16x8xf32>
    %49 = vector.shape_cast %48 : vector<16x16x8xf32> to vector<256x8xf32>
    %50 = arith.truncf %49 : vector<256x8xf32> to vector<256x8xbf16>
    %c0_25 = arith.constant 0 : index
    %c64 = arith.constant 64 : index
    %51 = vector.load %arg9[%c0_25, %c64] : memref<256x72xbf16, #tpu.memory_space<vmem>>, vector<256x8xbf16>
    tpu.vector_store %arg9[%c0_25, %c64], %50 {strides = array<i32>} : memref<256x72xbf16, #tpu.memory_space<vmem>>, vector<256x8xbf16>,
    %c0_26 = arith.constant 0 : index
    %c0_27 = arith.constant 0 : index
    %52 = vector.load %arg9[%c0_26, %c0_27] : memref<256x72xbf16, #tpu.memory_space<vmem>>, vector<256x72xbf16>
    %c0_28 = arith.constant 0 : index
    %c0_29 = arith.constant 0 : index
    %53 = vector.load %arg4[%c0_28, %c0_29] : memref<72x16xbf16, #tpu.memory_space<vmem>>, vector<72x16xbf16>
    %cst_30 = arith.constant dense<0.000000e+00> : vector<256x16xf32>
    %54 = tpu.matmul %52, %53, %cst_30 {dimension_numbers = #tpu.dot_dimension_numbers<[1], [0], [0], [1], [0, 0, 1, 1], [], []>} : vector<256x72xbf16>, vector<72x16xbf16>, vector<256x16xf32> -> vector<256x16xf32>
    %c0_31 = arith.constant 0 : index
    %c0_32 = arith.constant 0 : index
    %55 = vector.load %arg5[%c0_31, %c0_32] : memref<1x16xf32, #tpu.memory_space<vmem>>, vector<1x16xf32>
    %56 = vector.broadcast %55 : vector<1x16xf32> to vector<256x16xf32>
    %57 = arith.addf %54, %56 : vector<256x16xf32>
    %cst_33 = arith.constant dense<0.000000e+00> : vector<16xf32>
    %58 = vector.multi_reduction <add>, %57, %cst_33 [0] : vector<256x16xf32> to vector<16xf32>
    %59 = vector.shape_cast %58 : vector<16xf32> to vector<1x16xf32>
    %c0_34 = arith.constant 0 : index
    %c0_35 = arith.constant 0 : index
    %c0_36 = arith.constant 0 : index
    %60 = vector.load %arg7[%c0_34, %c0_35, %c0_36] : memref<1x2x16xf32, #tpu.memory_space<vmem>>, vector<1x1x16xf32>
    %61 = vector.shape_cast %60 : vector<1x1x16xf32> to vector<1x16xf32>
    %62 = vector.shape_cast %59 : vector<1x16xf32> to vector<1x1x16xf32>
    tpu.vector_store %arg7[%c0_34, %c0_35, %c0_36], %62 {strides = array<i32>} : memref<1x2x16xf32, #tpu.memory_space<vmem>>, vector<1x1x16xf32>,
    %63 = arith.mulf %57, %57 : vector<256x16xf32>
    %cst_37 = arith.constant dense<0.000000e+00> : vector<16xf32>
    %64 = vector.multi_reduction <add>, %63, %cst_37 [0] : vector<256x16xf32> to vector<16xf32>
    %65 = vector.shape_cast %64 : vector<16xf32> to vector<1x16xf32>
    %c0_38 = arith.constant 0 : index
    %c1_39 = arith.constant 1 : index
    %c0_40 = arith.constant 0 : index
    %66 = vector.load %arg7[%c0_38, %c1_39, %c0_40] : memref<1x2x16xf32, #tpu.memory_space<vmem>>, vector<1x1x16xf32>
    %67 = vector.shape_cast %66 : vector<1x1x16xf32> to vector<1x16xf32>
    %68 = vector.shape_cast %65 : vector<1x16xf32> to vector<1x1x16xf32>
    tpu.vector_store %arg7[%c0_38, %c1_39, %c0_40], %68 {strides = array<i32>} : memref<1x2x16xf32, #tpu.memory_space<vmem>>, vector<1x1x16xf32>,
    %69 = vector.shape_cast %57 : vector<256x16xf32> to vector<16x16x16xf32>
    %c0_41 = arith.constant 0 : index
    %c0_42 = arith.constant 0 : index
    %c0_43 = arith.constant 0 : index
    %c0_44 = arith.constant 0 : index
    %70 = vector.load %arg6[%c0_41, %c0_42, %c0_43, %c0_44] : memref<1x16x16x16xf32, #tpu.memory_space<vmem>>, vector<1x16x16x16xf32>
    %71 = vector.shape_cast %70 : vector<1x16x16x16xf32> to vector<16x16x16xf32>
    %72 = vector.shape_cast %69 : vector<16x16x16xf32> to vector<1x16x16x16xf32>
    tpu.vector_store %arg6[%c0_41, %c0_42, %c0_43, %c0_44], %72 {strides = array<i32>} : memref<1x16x16x16xf32, #tpu.memory_space<vmem>>, vector<1x16x16x16xf32>,
    return
  }
  func.func @transform_0(%arg0: i32) -> (i32, i32, i32, i32) {
    %c0_i32 = arith.constant 0 : i32
    %c0_i32_0 = arith.constant 0 : i32
    %c0_i32_1 = arith.constant 0 : i32
    %c0_i32_2 = arith.constant 0 : i32
    return %arg0, %c0_i32, %c0_i32_0, %c0_i32_1 : i32, i32, i32, i32
  }
  func.func @transform_1(%arg0: i32) -> (i32, i32) {
    %c0_i32 = arith.constant 0 : i32
    %c0_i32_0 = arith.constant 0 : i32
    %c0_i32_1 = arith.constant 0 : i32
    return %c0_i32, %c0_i32_0 : i32, i32
  }
  func.func @transform_2(%arg0: i32) -> (i32, i32) {
    %c0_i32 = arith.constant 0 : i32
    %c0_i32_0 = arith.constant 0 : i32
    %c0_i32_1 = arith.constant 0 : i32
    return %c0_i32, %c0_i32_0 : i32, i32
  }
  func.func @transform_3(%arg0: i32) -> (i32, i32) {
    %c0_i32 = arith.constant 0 : i32
    %c0_i32_0 = arith.constant 0 : i32
    %c0_i32_1 = arith.constant 0 : i32
    return %c0_i32, %c0_i32_0 : i32, i32
  }
  func.func @transform_4(%arg0: i32) -> (i32, i32) {
    %c0_i32 = arith.constant 0 : i32
    %c0_i32_0 = arith.constant 0 : i32
    %c0_i32_1 = arith.constant 0 : i32
    return %c0_i32, %c0_i32_0 : i32, i32
  }
  func.func @transform_5(%arg0: i32) -> (i32, i32, i32, i32) {
    %c0_i32 = arith.constant 0 : i32
    %c0_i32_0 = arith.constant 0 : i32
    %c0_i32_1 = arith.constant 0 : i32
    %c0_i32_2 = arith.constant 0 : i32
    return %arg0, %c0_i32, %c0_i32_0, %c0_i32_1 : i32, i32, i32, i32
  }
  func.func @transform_6(%arg0: i32) -> (i32, i32, i32) {
    %c0_i32 = arith.constant 0 : i32
    %c0_i32_0 = arith.constant 0 : i32
    %c0_i32_1 = arith.constant 0 : i32
    return %arg0, %c0_i32, %c0_i32_0 : i32, i32, i32
  }
}

module attributes {stable_mosaic.version = 11 : i64} {
  func.func @kernel(%arg0: i32, %arg1: memref<1x16x16x8xf32, #tpu.memory_space<vmem>>, %arg2: memref<1x8x8x8xf32, #tpu.memory_space<vmem>>, %arg3: memref<144x8xbf16, #tpu.memory_space<vmem>>, %arg4: memref<1x8xf32, #tpu.memory_space<vmem>>, %arg5: memref<1x16x16x8xf32, #tpu.memory_space<vmem>>, %arg6: memref<1x2x8xf32, #tpu.memory_space<vmem>>, %arg7: memref<18x18x8xf32, #tpu.memory_space<vmem>>, %arg8: memref<18x18x8xf32, #tpu.memory_space<vmem>>, %arg9: memref<16x8x8xf32, #tpu.memory_space<vmem>>, %arg10: memref<256x144xbf16, #tpu.memory_space<vmem>>) attributes {dimension_semantics = [#tpu.dimension_semantics<parallel>], iteration_bounds = array<i64: 2>, scalar_prefetch = 0 : i64, scratch_operands = 4 : i64, tpu.core_type = #tpu.core_type<tc>, window_params = [{transform_indices = @transform_0, window_bounds = array<i64: 1, 16, 16, 8>}, {transform_indices = @transform_1, window_bounds = array<i64: 1, 8, 8, 8>}, {pipeline_mode = #tpu.pipeline_mode<synchronous>, transform_indices = @transform_2, window_bounds = array<i64: 144, 8>}, {pipeline_mode = #tpu.pipeline_mode<synchronous>, transform_indices = @transform_3, window_bounds = array<i64: 1, 8>}, {transform_indices = @transform_4, window_bounds = array<i64: 1, 16, 16, 8>}, {transform_indices = @transform_5, window_bounds = array<i64: 1, 2, 8>}]} {
    %c0 = arith.constant 0 : index
    %c0_0 = arith.constant 0 : index
    %c0_1 = arith.constant 0 : index
    %c0_2 = arith.constant 0 : index
    %0 = vector.load %arg2[%c0, %c0_0, %c0_1, %c0_2] : memref<1x8x8x8xf32, #tpu.memory_space<vmem>>, vector<1x8x8x8xf32>
    %1 = vector.shape_cast %0 : vector<1x8x8x8xf32> to vector<8x8x8xf32>
    %2 = vector.extract_strided_slice %1 {offsets = [0, 0, 0], sizes = [1, 8, 8], strides = [1, 1, 1]} : vector<8x8x8xf32> to vector<1x8x8xf32>
    %cst = arith.constant 1.000000e+00 : f32
    %3 = vector.broadcast %cst : f32 to vector<1x8x8xf32>
    %4 = arith.mulf %3, %2 : vector<1x8x8xf32>
    %5 = vector.extract_strided_slice %1 {offsets = [1, 0, 0], sizes = [1, 8, 8], strides = [1, 1, 1]} : vector<8x8x8xf32> to vector<1x8x8xf32>
    %cst_3 = arith.constant 0.000000e+00 : f32
    %6 = vector.broadcast %cst_3 : f32 to vector<1x8x8xf32>
    %7 = arith.mulf %6, %5 : vector<1x8x8xf32>
    %8 = arith.addf %4, %7 : vector<1x8x8xf32>
    %c0_4 = arith.constant 0 : index
    %c0_5 = arith.constant 0 : index
    %c0_6 = arith.constant 0 : index
    %9 = vector.load %arg9[%c0_4, %c0_5, %c0_6] : memref<16x8x8xf32, #tpu.memory_space<vmem>>, vector<1x8x8xf32>
    tpu.vector_store %arg9[%c0_4, %c0_5, %c0_6], %8 {strides = array<i32>} : memref<16x8x8xf32, #tpu.memory_space<vmem>>, vector<1x8x8xf32>,
    %10 = vector.extract_strided_slice %1 {offsets = [0, 0, 0], sizes = [1, 8, 8], strides = [1, 1, 1]} : vector<8x8x8xf32> to vector<1x8x8xf32>
    %cst_7 = arith.constant 0.533333361 : f32
    %11 = vector.broadcast %cst_7 : f32 to vector<1x8x8xf32>
    %12 = arith.mulf %11, %10 : vector<1x8x8xf32>
    %13 = vector.extract_strided_slice %1 {offsets = [1, 0, 0], sizes = [1, 8, 8], strides = [1, 1, 1]} : vector<8x8x8xf32> to vector<1x8x8xf32>
    %cst_8 = arith.constant 0.466666669 : f32
    %14 = vector.broadcast %cst_8 : f32 to vector<1x8x8xf32>
    %15 = arith.mulf %14, %13 : vector<1x8x8xf32>
    %16 = arith.addf %12, %15 : vector<1x8x8xf32>
    %c1 = arith.constant 1 : index
    %c0_9 = arith.constant 0 : index
    %c0_10 = arith.constant 0 : index
    %17 = vector.load %arg9[%c1, %c0_9, %c0_10] : memref<16x8x8xf32, #tpu.memory_space<vmem>>, vector<1x8x8xf32>
    tpu.vector_store %arg9[%c1, %c0_9, %c0_10], %16 {strides = array<i32>} : memref<16x8x8xf32, #tpu.memory_space<vmem>>, vector<1x8x8xf32>,
    %18 = vector.extract_strided_slice %1 {offsets = [0, 0, 0], sizes = [1, 8, 8], strides = [1, 1, 1]} : vector<8x8x8xf32> to vector<1x8x8xf32>
    %cst_11 = arith.constant 0.0666666701 : f32
    %19 = vector.broadcast %cst_11 : f32 to vector<1x8x8xf32>
    %20 = arith.mulf %19, %18 : vector<1x8x8xf32>
    %21 = vector.extract_strided_slice %1 {offsets = [1, 0, 0], sizes = [1, 8, 8], strides = [1, 1, 1]} : vector<8x8x8xf32> to vector<1x8x8xf32>
    %cst_12 = arith.constant 0.933333337 : f32
    %22 = vector.broadcast %cst_12 : f32 to vector<1x8x8xf32>
    %23 = arith.mulf %22, %21 : vector<1x8x8xf32>
    %24 = arith.addf %20, %23 : vector<1x8x8xf32>
    %c2 = arith.constant 2 : index
    %c0_13 = arith.constant 0 : index
    %c0_14 = arith.constant 0 : index
    %25 = vector.load %arg9[%c2, %c0_13, %c0_14] : memref<16x8x8xf32, #tpu.memory_space<vmem>>, vector<1x8x8xf32>
    tpu.vector_store %arg9[%c2, %c0_13, %c0_14], %24 {strides = array<i32>} : memref<16x8x8xf32, #tpu.memory_space<vmem>>, vector<1x8x8xf32>,
    %26 = vector.extract_strided_slice %1 {offsets = [1, 0, 0], sizes = [1, 8, 8], strides = [1, 1, 1]} : vector<8x8x8xf32> to vector<1x8x8xf32>
    %cst_15 = arith.constant 6.000000e-01 : f32
    %27 = vector.broadcast %cst_15 : f32 to vector<1x8x8xf32>
    %28 = arith.mulf %27, %26 : vector<1x8x8xf32>
    %29 = vector.extract_strided_slice %1 {offsets = [2, 0, 0], sizes = [1, 8, 8], strides = [1, 1, 1]} : vector<8x8x8xf32> to vector<1x8x8xf32>
    %cst_16 = arith.constant 4.000000e-01 : f32
    %30 = vector.broadcast %cst_16 : f32 to vector<1x8x8xf32>
    %31 = arith.mulf %30, %29 : vector<1x8x8xf32>
    %32 = arith.addf %28, %31 : vector<1x8x8xf32>
    %c3 = arith.constant 3 : index
    %c0_17 = arith.constant 0 : index
    %c0_18 = arith.constant 0 : index
    %33 = vector.load %arg9[%c3, %c0_17, %c0_18] : memref<16x8x8xf32, #tpu.memory_space<vmem>>, vector<1x8x8xf32>
    tpu.vector_store %arg9[%c3, %c0_17, %c0_18], %32 {strides = array<i32>} : memref<16x8x8xf32, #tpu.memory_space<vmem>>, vector<1x8x8xf32>,
    %34 = vector.extract_strided_slice %1 {offsets = [1, 0, 0], sizes = [1, 8, 8], strides = [1, 1, 1]} : vector<8x8x8xf32> to vector<1x8x8xf32>
    %cst_19 = arith.constant 0.13333334 : f32
    %35 = vector.broadcast %cst_19 : f32 to vector<1x8x8xf32>
    %36 = arith.mulf %35, %34 : vector<1x8x8xf32>
    %37 = vector.extract_strided_slice %1 {offsets = [2, 0, 0], sizes = [1, 8, 8], strides = [1, 1, 1]} : vector<8x8x8xf32> to vector<1x8x8xf32>
    %cst_20 = arith.constant 0.866666674 : f32
    %38 = vector.broadcast %cst_20 : f32 to vector<1x8x8xf32>
    %39 = arith.mulf %38, %37 : vector<1x8x8xf32>
    %40 = arith.addf %36, %39 : vector<1x8x8xf32>
    %c4 = arith.constant 4 : index
    %c0_21 = arith.constant 0 : index
    %c0_22 = arith.constant 0 : index
    %41 = vector.load %arg9[%c4, %c0_21, %c0_22] : memref<16x8x8xf32, #tpu.memory_space<vmem>>, vector<1x8x8xf32>
    tpu.vector_store %arg9[%c4, %c0_21, %c0_22], %40 {strides = array<i32>} : memref<16x8x8xf32, #tpu.memory_space<vmem>>, vector<1x8x8xf32>,
    %42 = vector.extract_strided_slice %1 {offsets = [2, 0, 0], sizes = [1, 8, 8], strides = [1, 1, 1]} : vector<8x8x8xf32> to vector<1x8x8xf32>
    %cst_23 = arith.constant 0.666666686 : f32
    %43 = vector.broadcast %cst_23 : f32 to vector<1x8x8xf32>
    %44 = arith.mulf %43, %42 : vector<1x8x8xf32>
    %45 = vector.extract_strided_slice %1 {offsets = [3, 0, 0], sizes = [1, 8, 8], strides = [1, 1, 1]} : vector<8x8x8xf32> to vector<1x8x8xf32>
    %cst_24 = arith.constant 0.333333343 : f32
    %46 = vector.broadcast %cst_24 : f32 to vector<1x8x8xf32>
    %47 = arith.mulf %46, %45 : vector<1x8x8xf32>
    %48 = arith.addf %44, %47 : vector<1x8x8xf32>
    %c5 = arith.constant 5 : index
    %c0_25 = arith.constant 0 : index
    %c0_26 = arith.constant 0 : index
    %49 = vector.load %arg9[%c5, %c0_25, %c0_26] : memref<16x8x8xf32, #tpu.memory_space<vmem>>, vector<1x8x8xf32>
    tpu.vector_store %arg9[%c5, %c0_25, %c0_26], %48 {strides = array<i32>} : memref<16x8x8xf32, #tpu.memory_space<vmem>>, vector<1x8x8xf32>,
    %50 = vector.extract_strided_slice %1 {offsets = [2, 0, 0], sizes = [1, 8, 8], strides = [1, 1, 1]} : vector<8x8x8xf32> to vector<1x8x8xf32>
    %cst_27 = arith.constant 2.000000e-01 : f32
    %51 = vector.broadcast %cst_27 : f32 to vector<1x8x8xf32>
    %52 = arith.mulf %51, %50 : vector<1x8x8xf32>
    %53 = vector.extract_strided_slice %1 {offsets = [3, 0, 0], sizes = [1, 8, 8], strides = [1, 1, 1]} : vector<8x8x8xf32> to vector<1x8x8xf32>
    %cst_28 = arith.constant 8.000000e-01 : f32
    %54 = vector.broadcast %cst_28 : f32 to vector<1x8x8xf32>
    %55 = arith.mulf %54, %53 : vector<1x8x8xf32>
    %56 = arith.addf %52, %55 : vector<1x8x8xf32>
    %c6 = arith.constant 6 : index
    %c0_29 = arith.constant 0 : index
    %c0_30 = arith.constant 0 : index
    %57 = vector.load %arg9[%c6, %c0_29, %c0_30] : memref<16x8x8xf32, #tpu.memory_space<vmem>>, vector<1x8x8xf32>
    tpu.vector_store %arg9[%c6, %c0_29, %c0_30], %56 {strides = array<i32>} : memref<16x8x8xf32, #tpu.memory_space<vmem>>, vector<1x8x8xf32>,
    %58 = vector.extract_strided_slice %1 {offsets = [3, 0, 0], sizes = [1, 8, 8], strides = [1, 1, 1]} : vector<8x8x8xf32> to vector<1x8x8xf32>
    %cst_31 = arith.constant 0.733333349 : f32
    %59 = vector.broadcast %cst_31 : f32 to vector<1x8x8xf32>
    %60 = arith.mulf %59, %58 : vector<1x8x8xf32>
    %61 = vector.extract_strided_slice %1 {offsets = [4, 0, 0], sizes = [1, 8, 8], strides = [1, 1, 1]} : vector<8x8x8xf32> to vector<1x8x8xf32>
    %cst_32 = arith.constant 0.266666681 : f32
    %62 = vector.broadcast %cst_32 : f32 to vector<1x8x8xf32>
    %63 = arith.mulf %62, %61 : vector<1x8x8xf32>
    %64 = arith.addf %60, %63 : vector<1x8x8xf32>
    %c7 = arith.constant 7 : index
    %c0_33 = arith.constant 0 : index
    %c0_34 = arith.constant 0 : index
    %65 = vector.load %arg9[%c7, %c0_33, %c0_34] : memref<16x8x8xf32, #tpu.memory_space<vmem>>, vector<1x8x8xf32>
    tpu.vector_store %arg9[%c7, %c0_33, %c0_34], %64 {strides = array<i32>} : memref<16x8x8xf32, #tpu.memory_space<vmem>>, vector<1x8x8xf32>,
    %66 = vector.extract_strided_slice %1 {offsets = [3, 0, 0], sizes = [1, 8, 8], strides = [1, 1, 1]} : vector<8x8x8xf32> to vector<1x8x8xf32>
    %cst_35 = arith.constant 0.266666681 : f32
    %67 = vector.broadcast %cst_35 : f32 to vector<1x8x8xf32>
    %68 = arith.mulf %67, %66 : vector<1x8x8xf32>
    %69 = vector.extract_strided_slice %1 {offsets = [4, 0, 0], sizes = [1, 8, 8], strides = [1, 1, 1]} : vector<8x8x8xf32> to vector<1x8x8xf32>
    %cst_36 = arith.constant 0.733333349 : f32
    %70 = vector.broadcast %cst_36 : f32 to vector<1x8x8xf32>
    %71 = arith.mulf %70, %69 : vector<1x8x8xf32>
    %72 = arith.addf %68, %71 : vector<1x8x8xf32>
    %c8 = arith.constant 8 : index
    %c0_37 = arith.constant 0 : index
    %c0_38 = arith.constant 0 : index
    %73 = vector.load %arg9[%c8, %c0_37, %c0_38] : memref<16x8x8xf32, #tpu.memory_space<vmem>>, vector<1x8x8xf32>
    tpu.vector_store %arg9[%c8, %c0_37, %c0_38], %72 {strides = array<i32>} : memref<16x8x8xf32, #tpu.memory_space<vmem>>, vector<1x8x8xf32>,
    %74 = vector.extract_strided_slice %1 {offsets = [4, 0, 0], sizes = [1, 8, 8], strides = [1, 1, 1]} : vector<8x8x8xf32> to vector<1x8x8xf32>
    %cst_39 = arith.constant 8.000000e-01 : f32
    %75 = vector.broadcast %cst_39 : f32 to vector<1x8x8xf32>
    %76 = arith.mulf %75, %74 : vector<1x8x8xf32>
    %77 = vector.extract_strided_slice %1 {offsets = [5, 0, 0], sizes = [1, 8, 8], strides = [1, 1, 1]} : vector<8x8x8xf32> to vector<1x8x8xf32>
    %cst_40 = arith.constant 2.000000e-01 : f32
    %78 = vector.broadcast %cst_40 : f32 to vector<1x8x8xf32>
    %79 = arith.mulf %78, %77 : vector<1x8x8xf32>
    %80 = arith.addf %76, %79 : vector<1x8x8xf32>
    %c9 = arith.constant 9 : index
    %c0_41 = arith.constant 0 : index
    %c0_42 = arith.constant 0 : index
    %81 = vector.load %arg9[%c9, %c0_41, %c0_42] : memref<16x8x8xf32, #tpu.memory_space<vmem>>, vector<1x8x8xf32>
    tpu.vector_store %arg9[%c9, %c0_41, %c0_42], %80 {strides = array<i32>} : memref<16x8x8xf32, #tpu.memory_space<vmem>>, vector<1x8x8xf32>,
    %82 = vector.extract_strided_slice %1 {offsets = [4, 0, 0], sizes = [1, 8, 8], strides = [1, 1, 1]} : vector<8x8x8xf32> to vector<1x8x8xf32>
    %cst_43 = arith.constant 0.333333343 : f32
    %83 = vector.broadcast %cst_43 : f32 to vector<1x8x8xf32>
    %84 = arith.mulf %83, %82 : vector<1x8x8xf32>
    %85 = vector.extract_strided_slice %1 {offsets = [5, 0, 0], sizes = [1, 8, 8], strides = [1, 1, 1]} : vector<8x8x8xf32> to vector<1x8x8xf32>
    %cst_44 = arith.constant 0.666666686 : f32
    %86 = vector.broadcast %cst_44 : f32 to vector<1x8x8xf32>
    %87 = arith.mulf %86, %85 : vector<1x8x8xf32>
    %88 = arith.addf %84, %87 : vector<1x8x8xf32>
    %c10 = arith.constant 10 : index
    %c0_45 = arith.constant 0 : index
    %c0_46 = arith.constant 0 : index
    %89 = vector.load %arg9[%c10, %c0_45, %c0_46] : memref<16x8x8xf32, #tpu.memory_space<vmem>>, vector<1x8x8xf32>
    tpu.vector_store %arg9[%c10, %c0_45, %c0_46], %88 {strides = array<i32>} : memref<16x8x8xf32, #tpu.memory_space<vmem>>, vector<1x8x8xf32>,
    %90 = vector.extract_strided_slice %1 {offsets = [5, 0, 0], sizes = [1, 8, 8], strides = [1, 1, 1]} : vector<8x8x8xf32> to vector<1x8x8xf32>
    %cst_47 = arith.constant 0.866666674 : f32
    %91 = vector.broadcast %cst_47 : f32 to vector<1x8x8xf32>
    %92 = arith.mulf %91, %90 : vector<1x8x8xf32>
    %93 = vector.extract_strided_slice %1 {offsets = [6, 0, 0], sizes = [1, 8, 8], strides = [1, 1, 1]} : vector<8x8x8xf32> to vector<1x8x8xf32>
    %cst_48 = arith.constant 0.13333334 : f32
    %94 = vector.broadcast %cst_48 : f32 to vector<1x8x8xf32>
    %95 = arith.mulf %94, %93 : vector<1x8x8xf32>
    %96 = arith.addf %92, %95 : vector<1x8x8xf32>
    %c11 = arith.constant 11 : index
    %c0_49 = arith.constant 0 : index
    %c0_50 = arith.constant 0 : index
    %97 = vector.load %arg9[%c11, %c0_49, %c0_50] : memref<16x8x8xf32, #tpu.memory_space<vmem>>, vector<1x8x8xf32>
    tpu.vector_store %arg9[%c11, %c0_49, %c0_50], %96 {strides = array<i32>} : memref<16x8x8xf32, #tpu.memory_space<vmem>>, vector<1x8x8xf32>,
    %98 = vector.extract_strided_slice %1 {offsets = [5, 0, 0], sizes = [1, 8, 8], strides = [1, 1, 1]} : vector<8x8x8xf32> to vector<1x8x8xf32>
    %cst_51 = arith.constant 4.000000e-01 : f32
    %99 = vector.broadcast %cst_51 : f32 to vector<1x8x8xf32>
    %100 = arith.mulf %99, %98 : vector<1x8x8xf32>
    %101 = vector.extract_strided_slice %1 {offsets = [6, 0, 0], sizes = [1, 8, 8], strides = [1, 1, 1]} : vector<8x8x8xf32> to vector<1x8x8xf32>
    %cst_52 = arith.constant 6.000000e-01 : f32
    %102 = vector.broadcast %cst_52 : f32 to vector<1x8x8xf32>
    %103 = arith.mulf %102, %101 : vector<1x8x8xf32>
    %104 = arith.addf %100, %103 : vector<1x8x8xf32>
    %c12 = arith.constant 12 : index
    %c0_53 = arith.constant 0 : index
    %c0_54 = arith.constant 0 : index
    %105 = vector.load %arg9[%c12, %c0_53, %c0_54] : memref<16x8x8xf32, #tpu.memory_space<vmem>>, vector<1x8x8xf32>
    tpu.vector_store %arg9[%c12, %c0_53, %c0_54], %104 {strides = array<i32>} : memref<16x8x8xf32, #tpu.memory_space<vmem>>, vector<1x8x8xf32>,
    %106 = vector.extract_strided_slice %1 {offsets = [6, 0, 0], sizes = [1, 8, 8], strides = [1, 1, 1]} : vector<8x8x8xf32> to vector<1x8x8xf32>
    %cst_55 = arith.constant 0.933333337 : f32
    %107 = vector.broadcast %cst_55 : f32 to vector<1x8x8xf32>
    %108 = arith.mulf %107, %106 : vector<1x8x8xf32>
    %109 = vector.extract_strided_slice %1 {offsets = [7, 0, 0], sizes = [1, 8, 8], strides = [1, 1, 1]} : vector<8x8x8xf32> to vector<1x8x8xf32>
    %cst_56 = arith.constant 0.0666666701 : f32
    %110 = vector.broadcast %cst_56 : f32 to vector<1x8x8xf32>
    %111 = arith.mulf %110, %109 : vector<1x8x8xf32>
    %112 = arith.addf %108, %111 : vector<1x8x8xf32>
    %c13 = arith.constant 13 : index
    %c0_57 = arith.constant 0 : index
    %c0_58 = arith.constant 0 : index
    %113 = vector.load %arg9[%c13, %c0_57, %c0_58] : memref<16x8x8xf32, #tpu.memory_space<vmem>>, vector<1x8x8xf32>
    tpu.vector_store %arg9[%c13, %c0_57, %c0_58], %112 {strides = array<i32>} : memref<16x8x8xf32, #tpu.memory_space<vmem>>, vector<1x8x8xf32>,
    %114 = vector.extract_strided_slice %1 {offsets = [6, 0, 0], sizes = [1, 8, 8], strides = [1, 1, 1]} : vector<8x8x8xf32> to vector<1x8x8xf32>
    %cst_59 = arith.constant 0.466666669 : f32
    %115 = vector.broadcast %cst_59 : f32 to vector<1x8x8xf32>
    %116 = arith.mulf %115, %114 : vector<1x8x8xf32>
    %117 = vector.extract_strided_slice %1 {offsets = [7, 0, 0], sizes = [1, 8, 8], strides = [1, 1, 1]} : vector<8x8x8xf32> to vector<1x8x8xf32>
    %cst_60 = arith.constant 0.533333361 : f32
    %118 = vector.broadcast %cst_60 : f32 to vector<1x8x8xf32>
    %119 = arith.mulf %118, %117 : vector<1x8x8xf32>
    %120 = arith.addf %116, %119 : vector<1x8x8xf32>
    %c14 = arith.constant 14 : index
    %c0_61 = arith.constant 0 : index
    %c0_62 = arith.constant 0 : index
    %121 = vector.load %arg9[%c14, %c0_61, %c0_62] : memref<16x8x8xf32, #tpu.memory_space<vmem>>, vector<1x8x8xf32>
    tpu.vector_store %arg9[%c14, %c0_61, %c0_62], %120 {strides = array<i32>} : memref<16x8x8xf32, #tpu.memory_space<vmem>>, vector<1x8x8xf32>,
    %122 = vector.extract_strided_slice %1 {offsets = [6, 0, 0], sizes = [1, 8, 8], strides = [1, 1, 1]} : vector<8x8x8xf32> to vector<1x8x8xf32>
    %cst_63 = arith.constant 0.000000e+00 : f32
    %123 = vector.broadcast %cst_63 : f32 to vector<1x8x8xf32>
    %124 = arith.mulf %123, %122 : vector<1x8x8xf32>
    %125 = vector.extract_strided_slice %1 {offsets = [7, 0, 0], sizes = [1, 8, 8], strides = [1, 1, 1]} : vector<8x8x8xf32> to vector<1x8x8xf32>
    %cst_64 = arith.constant 1.000000e+00 : f32
    %126 = vector.broadcast %cst_64 : f32 to vector<1x8x8xf32>
    %127 = arith.mulf %126, %125 : vector<1x8x8xf32>
    %128 = arith.addf %124, %127 : vector<1x8x8xf32>
    %c15 = arith.constant 15 : index
    %c0_65 = arith.constant 0 : index
    %c0_66 = arith.constant 0 : index
    %129 = vector.load %arg9[%c15, %c0_65, %c0_66] : memref<16x8x8xf32, #tpu.memory_space<vmem>>, vector<1x8x8xf32>
    tpu.vector_store %arg9[%c15, %c0_65, %c0_66], %128 {strides = array<i32>} : memref<16x8x8xf32, #tpu.memory_space<vmem>>, vector<1x8x8xf32>,
    %c0_67 = arith.constant 0 : index
    %c0_68 = arith.constant 0 : index
    %c0_69 = arith.constant 0 : index
    %130 = vector.load %arg9[%c0_67, %c0_68, %c0_69] : memref<16x8x8xf32, #tpu.memory_space<vmem>>, vector<16x8x8xf32>
    %cst_70 = arith.constant 0.000000e+00 : f32
    %131 = vector.broadcast %cst_70 : f32 to vector<18x18x8xf32>
    %c0_71 = arith.constant 0 : index
    %c0_72 = arith.constant 0 : index
    %c0_73 = arith.constant 0 : index
    %132 = vector.load %arg7[%c0_71, %c0_72, %c0_73] : memref<18x18x8xf32, #tpu.memory_space<vmem>>, vector<18x18x8xf32>
    tpu.vector_store %arg7[%c0_71, %c0_72, %c0_73], %131 {strides = array<i32>} : memref<18x18x8xf32, #tpu.memory_space<vmem>>, vector<18x18x8xf32>,
    %cst_74 = arith.constant 0.000000e+00 : f32
    %133 = vector.broadcast %cst_74 : f32 to vector<18x18x8xf32>
    %c0_75 = arith.constant 0 : index
    %c0_76 = arith.constant 0 : index
    %c0_77 = arith.constant 0 : index
    %134 = vector.load %arg8[%c0_75, %c0_76, %c0_77] : memref<18x18x8xf32, #tpu.memory_space<vmem>>, vector<18x18x8xf32>
    tpu.vector_store %arg8[%c0_75, %c0_76, %c0_77], %133 {strides = array<i32>} : memref<18x18x8xf32, #tpu.memory_space<vmem>>, vector<18x18x8xf32>,
    %c0_78 = arith.constant 0 : index
    %c0_79 = arith.constant 0 : index
    %c0_80 = arith.constant 0 : index
    %c0_81 = arith.constant 0 : index
    %135 = vector.load %arg1[%c0_78, %c0_79, %c0_80, %c0_81] : memref<1x16x16x8xf32, #tpu.memory_space<vmem>>, vector<1x16x16x8xf32>
    %136 = vector.shape_cast %135 : vector<1x16x16x8xf32> to vector<16x16x8xf32>
    %c1_82 = arith.constant 1 : index
    %c1_83 = arith.constant 1 : index
    %c0_84 = arith.constant 0 : index
    %137 = vector.load %arg7[%c1_82, %c1_83, %c0_84] : memref<18x18x8xf32, #tpu.memory_space<vmem>>, vector<16x16x8xf32>
    tpu.vector_store %arg7[%c1_82, %c1_83, %c0_84], %136 {strides = array<i32>} : memref<18x18x8xf32, #tpu.memory_space<vmem>>, vector<16x16x8xf32>,
    %138 = vector.extract_strided_slice %130 {offsets = [0, 0, 0], sizes = [16, 1, 8], strides = [1, 1, 1]} : vector<16x8x8xf32> to vector<16x1x8xf32>
    %cst_85 = arith.constant 1.000000e+00 : f32
    %139 = vector.broadcast %cst_85 : f32 to vector<16x1x8xf32>
    %140 = arith.mulf %139, %138 : vector<16x1x8xf32>
    %141 = vector.extract_strided_slice %130 {offsets = [0, 1, 0], sizes = [16, 1, 8], strides = [1, 1, 1]} : vector<16x8x8xf32> to vector<16x1x8xf32>
    %cst_86 = arith.constant 0.000000e+00 : f32
    %142 = vector.broadcast %cst_86 : f32 to vector<16x1x8xf32>
    %143 = arith.mulf %142, %141 : vector<16x1x8xf32>
    %144 = arith.addf %140, %143 : vector<16x1x8xf32>
    %c1_87 = arith.constant 1 : index
    %c1_88 = arith.constant 1 : index
    %c0_89 = arith.constant 0 : index
    %145 = vector.load %arg8[%c1_87, %c1_88, %c0_89] : memref<18x18x8xf32, #tpu.memory_space<vmem>>, vector<16x1x8xf32>
    tpu.vector_store %arg8[%c1_87, %c1_88, %c0_89], %144 {strides = array<i32>} : memref<18x18x8xf32, #tpu.memory_space<vmem>>, vector<16x1x8xf32>,
    %146 = vector.extract_strided_slice %130 {offsets = [0, 0, 0], sizes = [16, 1, 8], strides = [1, 1, 1]} : vector<16x8x8xf32> to vector<16x1x8xf32>
    %cst_90 = arith.constant 0.533333361 : f32
    %147 = vector.broadcast %cst_90 : f32 to vector<16x1x8xf32>
    %148 = arith.mulf %147, %146 : vector<16x1x8xf32>
    %149 = vector.extract_strided_slice %130 {offsets = [0, 1, 0], sizes = [16, 1, 8], strides = [1, 1, 1]} : vector<16x8x8xf32> to vector<16x1x8xf32>
    %cst_91 = arith.constant 0.466666669 : f32
    %150 = vector.broadcast %cst_91 : f32 to vector<16x1x8xf32>
    %151 = arith.mulf %150, %149 : vector<16x1x8xf32>
    %152 = arith.addf %148, %151 : vector<16x1x8xf32>
    %c1_92 = arith.constant 1 : index
    %c2_93 = arith.constant 2 : index
    %c0_94 = arith.constant 0 : index
    %153 = vector.load %arg8[%c1_92, %c2_93, %c0_94] : memref<18x18x8xf32, #tpu.memory_space<vmem>>, vector<16x1x8xf32>
    tpu.vector_store %arg8[%c1_92, %c2_93, %c0_94], %152 {strides = array<i32>} : memref<18x18x8xf32, #tpu.memory_space<vmem>>, vector<16x1x8xf32>,
    %154 = vector.extract_strided_slice %130 {offsets = [0, 0, 0], sizes = [16, 1, 8], strides = [1, 1, 1]} : vector<16x8x8xf32> to vector<16x1x8xf32>
    %cst_95 = arith.constant 0.0666666701 : f32
    %155 = vector.broadcast %cst_95 : f32 to vector<16x1x8xf32>
    %156 = arith.mulf %155, %154 : vector<16x1x8xf32>
    %157 = vector.extract_strided_slice %130 {offsets = [0, 1, 0], sizes = [16, 1, 8], strides = [1, 1, 1]} : vector<16x8x8xf32> to vector<16x1x8xf32>
    %cst_96 = arith.constant 0.933333337 : f32
    %158 = vector.broadcast %cst_96 : f32 to vector<16x1x8xf32>
    %159 = arith.mulf %158, %157 : vector<16x1x8xf32>
    %160 = arith.addf %156, %159 : vector<16x1x8xf32>
    %c1_97 = arith.constant 1 : index
    %c3_98 = arith.constant 3 : index
    %c0_99 = arith.constant 0 : index
    %161 = vector.load %arg8[%c1_97, %c3_98, %c0_99] : memref<18x18x8xf32, #tpu.memory_space<vmem>>, vector<16x1x8xf32>
    tpu.vector_store %arg8[%c1_97, %c3_98, %c0_99], %160 {strides = array<i32>} : memref<18x18x8xf32, #tpu.memory_space<vmem>>, vector<16x1x8xf32>,
    %162 = vector.extract_strided_slice %130 {offsets = [0, 1, 0], sizes = [16, 1, 8], strides = [1, 1, 1]} : vector<16x8x8xf32> to vector<16x1x8xf32>
    %cst_100 = arith.constant 6.000000e-01 : f32
    %163 = vector.broadcast %cst_100 : f32 to vector<16x1x8xf32>
    %164 = arith.mulf %163, %162 : vector<16x1x8xf32>
    %165 = vector.extract_strided_slice %130 {offsets = [0, 2, 0], sizes = [16, 1, 8], strides = [1, 1, 1]} : vector<16x8x8xf32> to vector<16x1x8xf32>
    %cst_101 = arith.constant 4.000000e-01 : f32
    %166 = vector.broadcast %cst_101 : f32 to vector<16x1x8xf32>
    %167 = arith.mulf %166, %165 : vector<16x1x8xf32>
    %168 = arith.addf %164, %167 : vector<16x1x8xf32>
    %c1_102 = arith.constant 1 : index
    %c4_103 = arith.constant 4 : index
    %c0_104 = arith.constant 0 : index
    %169 = vector.load %arg8[%c1_102, %c4_103, %c0_104] : memref<18x18x8xf32, #tpu.memory_space<vmem>>, vector<16x1x8xf32>
    tpu.vector_store %arg8[%c1_102, %c4_103, %c0_104], %168 {strides = array<i32>} : memref<18x18x8xf32, #tpu.memory_space<vmem>>, vector<16x1x8xf32>,
    %170 = vector.extract_strided_slice %130 {offsets = [0, 1, 0], sizes = [16, 1, 8], strides = [1, 1, 1]} : vector<16x8x8xf32> to vector<16x1x8xf32>
    %cst_105 = arith.constant 0.13333334 : f32
    %171 = vector.broadcast %cst_105 : f32 to vector<16x1x8xf32>
    %172 = arith.mulf %171, %170 : vector<16x1x8xf32>
    %173 = vector.extract_strided_slice %130 {offsets = [0, 2, 0], sizes = [16, 1, 8], strides = [1, 1, 1]} : vector<16x8x8xf32> to vector<16x1x8xf32>
    %cst_106 = arith.constant 0.866666674 : f32
    %174 = vector.broadcast %cst_106 : f32 to vector<16x1x8xf32>
    %175 = arith.mulf %174, %173 : vector<16x1x8xf32>
    %176 = arith.addf %172, %175 : vector<16x1x8xf32>
    %c1_107 = arith.constant 1 : index
    %c5_108 = arith.constant 5 : index
    %c0_109 = arith.constant 0 : index
    %177 = vector.load %arg8[%c1_107, %c5_108, %c0_109] : memref<18x18x8xf32, #tpu.memory_space<vmem>>, vector<16x1x8xf32>
    tpu.vector_store %arg8[%c1_107, %c5_108, %c0_109], %176 {strides = array<i32>} : memref<18x18x8xf32, #tpu.memory_space<vmem>>, vector<16x1x8xf32>,
    %178 = vector.extract_strided_slice %130 {offsets = [0, 2, 0], sizes = [16, 1, 8], strides = [1, 1, 1]} : vector<16x8x8xf32> to vector<16x1x8xf32>
    %cst_110 = arith.constant 0.666666686 : f32
    %179 = vector.broadcast %cst_110 : f32 to vector<16x1x8xf32>
    %180 = arith.mulf %179, %178 : vector<16x1x8xf32>
    %181 = vector.extract_strided_slice %130 {offsets = [0, 3, 0], sizes = [16, 1, 8], strides = [1, 1, 1]} : vector<16x8x8xf32> to vector<16x1x8xf32>
    %cst_111 = arith.constant 0.333333343 : f32
    %182 = vector.broadcast %cst_111 : f32 to vector<16x1x8xf32>
    %183 = arith.mulf %182, %181 : vector<16x1x8xf32>
    %184 = arith.addf %180, %183 : vector<16x1x8xf32>
    %c1_112 = arith.constant 1 : index
    %c6_113 = arith.constant 6 : index
    %c0_114 = arith.constant 0 : index
    %185 = vector.load %arg8[%c1_112, %c6_113, %c0_114] : memref<18x18x8xf32, #tpu.memory_space<vmem>>, vector<16x1x8xf32>
    tpu.vector_store %arg8[%c1_112, %c6_113, %c0_114], %184 {strides = array<i32>} : memref<18x18x8xf32, #tpu.memory_space<vmem>>, vector<16x1x8xf32>,
    %186 = vector.extract_strided_slice %130 {offsets = [0, 2, 0], sizes = [16, 1, 8], strides = [1, 1, 1]} : vector<16x8x8xf32> to vector<16x1x8xf32>
    %cst_115 = arith.constant 2.000000e-01 : f32
    %187 = vector.broadcast %cst_115 : f32 to vector<16x1x8xf32>
    %188 = arith.mulf %187, %186 : vector<16x1x8xf32>
    %189 = vector.extract_strided_slice %130 {offsets = [0, 3, 0], sizes = [16, 1, 8], strides = [1, 1, 1]} : vector<16x8x8xf32> to vector<16x1x8xf32>
    %cst_116 = arith.constant 8.000000e-01 : f32
    %190 = vector.broadcast %cst_116 : f32 to vector<16x1x8xf32>
    %191 = arith.mulf %190, %189 : vector<16x1x8xf32>
    %192 = arith.addf %188, %191 : vector<16x1x8xf32>
    %c1_117 = arith.constant 1 : index
    %c7_118 = arith.constant 7 : index
    %c0_119 = arith.constant 0 : index
    %193 = vector.load %arg8[%c1_117, %c7_118, %c0_119] : memref<18x18x8xf32, #tpu.memory_space<vmem>>, vector<16x1x8xf32>
    tpu.vector_store %arg8[%c1_117, %c7_118, %c0_119], %192 {strides = array<i32>} : memref<18x18x8xf32, #tpu.memory_space<vmem>>, vector<16x1x8xf32>,
    %194 = vector.extract_strided_slice %130 {offsets = [0, 3, 0], sizes = [16, 1, 8], strides = [1, 1, 1]} : vector<16x8x8xf32> to vector<16x1x8xf32>
    %cst_120 = arith.constant 0.733333349 : f32
    %195 = vector.broadcast %cst_120 : f32 to vector<16x1x8xf32>
    %196 = arith.mulf %195, %194 : vector<16x1x8xf32>
    %197 = vector.extract_strided_slice %130 {offsets = [0, 4, 0], sizes = [16, 1, 8], strides = [1, 1, 1]} : vector<16x8x8xf32> to vector<16x1x8xf32>
    %cst_121 = arith.constant 0.266666681 : f32
    %198 = vector.broadcast %cst_121 : f32 to vector<16x1x8xf32>
    %199 = arith.mulf %198, %197 : vector<16x1x8xf32>
    %200 = arith.addf %196, %199 : vector<16x1x8xf32>
    %c1_122 = arith.constant 1 : index
    %c8_123 = arith.constant 8 : index
    %c0_124 = arith.constant 0 : index
    %201 = vector.load %arg8[%c1_122, %c8_123, %c0_124] : memref<18x18x8xf32, #tpu.memory_space<vmem>>, vector<16x1x8xf32>
    tpu.vector_store %arg8[%c1_122, %c8_123, %c0_124], %200 {strides = array<i32>} : memref<18x18x8xf32, #tpu.memory_space<vmem>>, vector<16x1x8xf32>,
    %202 = vector.extract_strided_slice %130 {offsets = [0, 3, 0], sizes = [16, 1, 8], strides = [1, 1, 1]} : vector<16x8x8xf32> to vector<16x1x8xf32>
    %cst_125 = arith.constant 0.266666681 : f32
    %203 = vector.broadcast %cst_125 : f32 to vector<16x1x8xf32>
    %204 = arith.mulf %203, %202 : vector<16x1x8xf32>
    %205 = vector.extract_strided_slice %130 {offsets = [0, 4, 0], sizes = [16, 1, 8], strides = [1, 1, 1]} : vector<16x8x8xf32> to vector<16x1x8xf32>
    %cst_126 = arith.constant 0.733333349 : f32
    %206 = vector.broadcast %cst_126 : f32 to vector<16x1x8xf32>
    %207 = arith.mulf %206, %205 : vector<16x1x8xf32>
    %208 = arith.addf %204, %207 : vector<16x1x8xf32>
    %c1_127 = arith.constant 1 : index
    %c9_128 = arith.constant 9 : index
    %c0_129 = arith.constant 0 : index
    %209 = vector.load %arg8[%c1_127, %c9_128, %c0_129] : memref<18x18x8xf32, #tpu.memory_space<vmem>>, vector<16x1x8xf32>
    tpu.vector_store %arg8[%c1_127, %c9_128, %c0_129], %208 {strides = array<i32>} : memref<18x18x8xf32, #tpu.memory_space<vmem>>, vector<16x1x8xf32>,
    %210 = vector.extract_strided_slice %130 {offsets = [0, 4, 0], sizes = [16, 1, 8], strides = [1, 1, 1]} : vector<16x8x8xf32> to vector<16x1x8xf32>
    %cst_130 = arith.constant 8.000000e-01 : f32
    %211 = vector.broadcast %cst_130 : f32 to vector<16x1x8xf32>
    %212 = arith.mulf %211, %210 : vector<16x1x8xf32>
    %213 = vector.extract_strided_slice %130 {offsets = [0, 5, 0], sizes = [16, 1, 8], strides = [1, 1, 1]} : vector<16x8x8xf32> to vector<16x1x8xf32>
    %cst_131 = arith.constant 2.000000e-01 : f32
    %214 = vector.broadcast %cst_131 : f32 to vector<16x1x8xf32>
    %215 = arith.mulf %214, %213 : vector<16x1x8xf32>
    %216 = arith.addf %212, %215 : vector<16x1x8xf32>
    %c1_132 = arith.constant 1 : index
    %c10_133 = arith.constant 10 : index
    %c0_134 = arith.constant 0 : index
    %217 = vector.load %arg8[%c1_132, %c10_133, %c0_134] : memref<18x18x8xf32, #tpu.memory_space<vmem>>, vector<16x1x8xf32>
    tpu.vector_store %arg8[%c1_132, %c10_133, %c0_134], %216 {strides = array<i32>} : memref<18x18x8xf32, #tpu.memory_space<vmem>>, vector<16x1x8xf32>,
    %218 = vector.extract_strided_slice %130 {offsets = [0, 4, 0], sizes = [16, 1, 8], strides = [1, 1, 1]} : vector<16x8x8xf32> to vector<16x1x8xf32>
    %cst_135 = arith.constant 0.333333343 : f32
    %219 = vector.broadcast %cst_135 : f32 to vector<16x1x8xf32>
    %220 = arith.mulf %219, %218 : vector<16x1x8xf32>
    %221 = vector.extract_strided_slice %130 {offsets = [0, 5, 0], sizes = [16, 1, 8], strides = [1, 1, 1]} : vector<16x8x8xf32> to vector<16x1x8xf32>
    %cst_136 = arith.constant 0.666666686 : f32
    %222 = vector.broadcast %cst_136 : f32 to vector<16x1x8xf32>
    %223 = arith.mulf %222, %221 : vector<16x1x8xf32>
    %224 = arith.addf %220, %223 : vector<16x1x8xf32>
    %c1_137 = arith.constant 1 : index
    %c11_138 = arith.constant 11 : index
    %c0_139 = arith.constant 0 : index
    %225 = vector.load %arg8[%c1_137, %c11_138, %c0_139] : memref<18x18x8xf32, #tpu.memory_space<vmem>>, vector<16x1x8xf32>
    tpu.vector_store %arg8[%c1_137, %c11_138, %c0_139], %224 {strides = array<i32>} : memref<18x18x8xf32, #tpu.memory_space<vmem>>, vector<16x1x8xf32>,
    %226 = vector.extract_strided_slice %130 {offsets = [0, 5, 0], sizes = [16, 1, 8], strides = [1, 1, 1]} : vector<16x8x8xf32> to vector<16x1x8xf32>
    %cst_140 = arith.constant 0.866666674 : f32
    %227 = vector.broadcast %cst_140 : f32 to vector<16x1x8xf32>
    %228 = arith.mulf %227, %226 : vector<16x1x8xf32>
    %229 = vector.extract_strided_slice %130 {offsets = [0, 6, 0], sizes = [16, 1, 8], strides = [1, 1, 1]} : vector<16x8x8xf32> to vector<16x1x8xf32>
    %cst_141 = arith.constant 0.13333334 : f32
    %230 = vector.broadcast %cst_141 : f32 to vector<16x1x8xf32>
    %231 = arith.mulf %230, %229 : vector<16x1x8xf32>
    %232 = arith.addf %228, %231 : vector<16x1x8xf32>
    %c1_142 = arith.constant 1 : index
    %c12_143 = arith.constant 12 : index
    %c0_144 = arith.constant 0 : index
    %233 = vector.load %arg8[%c1_142, %c12_143, %c0_144] : memref<18x18x8xf32, #tpu.memory_space<vmem>>, vector<16x1x8xf32>
    tpu.vector_store %arg8[%c1_142, %c12_143, %c0_144], %232 {strides = array<i32>} : memref<18x18x8xf32, #tpu.memory_space<vmem>>, vector<16x1x8xf32>,
    %234 = vector.extract_strided_slice %130 {offsets = [0, 5, 0], sizes = [16, 1, 8], strides = [1, 1, 1]} : vector<16x8x8xf32> to vector<16x1x8xf32>
    %cst_145 = arith.constant 4.000000e-01 : f32
    %235 = vector.broadcast %cst_145 : f32 to vector<16x1x8xf32>
    %236 = arith.mulf %235, %234 : vector<16x1x8xf32>
    %237 = vector.extract_strided_slice %130 {offsets = [0, 6, 0], sizes = [16, 1, 8], strides = [1, 1, 1]} : vector<16x8x8xf32> to vector<16x1x8xf32>
    %cst_146 = arith.constant 6.000000e-01 : f32
    %238 = vector.broadcast %cst_146 : f32 to vector<16x1x8xf32>
    %239 = arith.mulf %238, %237 : vector<16x1x8xf32>
    %240 = arith.addf %236, %239 : vector<16x1x8xf32>
    %c1_147 = arith.constant 1 : index
    %c13_148 = arith.constant 13 : index
    %c0_149 = arith.constant 0 : index
    %241 = vector.load %arg8[%c1_147, %c13_148, %c0_149] : memref<18x18x8xf32, #tpu.memory_space<vmem>>, vector<16x1x8xf32>
    tpu.vector_store %arg8[%c1_147, %c13_148, %c0_149], %240 {strides = array<i32>} : memref<18x18x8xf32, #tpu.memory_space<vmem>>, vector<16x1x8xf32>,
    %242 = vector.extract_strided_slice %130 {offsets = [0, 6, 0], sizes = [16, 1, 8], strides = [1, 1, 1]} : vector<16x8x8xf32> to vector<16x1x8xf32>
    %cst_150 = arith.constant 0.933333337 : f32
    %243 = vector.broadcast %cst_150 : f32 to vector<16x1x8xf32>
    %244 = arith.mulf %243, %242 : vector<16x1x8xf32>
    %245 = vector.extract_strided_slice %130 {offsets = [0, 7, 0], sizes = [16, 1, 8], strides = [1, 1, 1]} : vector<16x8x8xf32> to vector<16x1x8xf32>
    %cst_151 = arith.constant 0.0666666701 : f32
    %246 = vector.broadcast %cst_151 : f32 to vector<16x1x8xf32>
    %247 = arith.mulf %246, %245 : vector<16x1x8xf32>
    %248 = arith.addf %244, %247 : vector<16x1x8xf32>
    %c1_152 = arith.constant 1 : index
    %c14_153 = arith.constant 14 : index
    %c0_154 = arith.constant 0 : index
    %249 = vector.load %arg8[%c1_152, %c14_153, %c0_154] : memref<18x18x8xf32, #tpu.memory_space<vmem>>, vector<16x1x8xf32>
    tpu.vector_store %arg8[%c1_152, %c14_153, %c0_154], %248 {strides = array<i32>} : memref<18x18x8xf32, #tpu.memory_space<vmem>>, vector<16x1x8xf32>,
    %250 = vector.extract_strided_slice %130 {offsets = [0, 6, 0], sizes = [16, 1, 8], strides = [1, 1, 1]} : vector<16x8x8xf32> to vector<16x1x8xf32>
    %cst_155 = arith.constant 0.466666669 : f32
    %251 = vector.broadcast %cst_155 : f32 to vector<16x1x8xf32>
    %252 = arith.mulf %251, %250 : vector<16x1x8xf32>
    %253 = vector.extract_strided_slice %130 {offsets = [0, 7, 0], sizes = [16, 1, 8], strides = [1, 1, 1]} : vector<16x8x8xf32> to vector<16x1x8xf32>
    %cst_156 = arith.constant 0.533333361 : f32
    %254 = vector.broadcast %cst_156 : f32 to vector<16x1x8xf32>
    %255 = arith.mulf %254, %253 : vector<16x1x8xf32>
    %256 = arith.addf %252, %255 : vector<16x1x8xf32>
    %c1_157 = arith.constant 1 : index
    %c15_158 = arith.constant 15 : index
    %c0_159 = arith.constant 0 : index
    %257 = vector.load %arg8[%c1_157, %c15_158, %c0_159] : memref<18x18x8xf32, #tpu.memory_space<vmem>>, vector<16x1x8xf32>
    tpu.vector_store %arg8[%c1_157, %c15_158, %c0_159], %256 {strides = array<i32>} : memref<18x18x8xf32, #tpu.memory_space<vmem>>, vector<16x1x8xf32>,
    %258 = vector.extract_strided_slice %130 {offsets = [0, 6, 0], sizes = [16, 1, 8], strides = [1, 1, 1]} : vector<16x8x8xf32> to vector<16x1x8xf32>
    %cst_160 = arith.constant 0.000000e+00 : f32
    %259 = vector.broadcast %cst_160 : f32 to vector<16x1x8xf32>
    %260 = arith.mulf %259, %258 : vector<16x1x8xf32>
    %261 = vector.extract_strided_slice %130 {offsets = [0, 7, 0], sizes = [16, 1, 8], strides = [1, 1, 1]} : vector<16x8x8xf32> to vector<16x1x8xf32>
    %cst_161 = arith.constant 1.000000e+00 : f32
    %262 = vector.broadcast %cst_161 : f32 to vector<16x1x8xf32>
    %263 = arith.mulf %262, %261 : vector<16x1x8xf32>
    %264 = arith.addf %260, %263 : vector<16x1x8xf32>
    %c1_162 = arith.constant 1 : index
    %c16 = arith.constant 16 : index
    %c0_163 = arith.constant 0 : index
    %265 = vector.load %arg8[%c1_162, %c16, %c0_163] : memref<18x18x8xf32, #tpu.memory_space<vmem>>, vector<16x1x8xf32>
    tpu.vector_store %arg8[%c1_162, %c16, %c0_163], %264 {strides = array<i32>} : memref<18x18x8xf32, #tpu.memory_space<vmem>>, vector<16x1x8xf32>,
    %c0_164 = arith.constant 0 : index
    %c0_165 = arith.constant 0 : index
    %c0_166 = arith.constant 0 : index
    %266 = vector.load %arg7[%c0_164, %c0_165, %c0_166] : memref<18x18x8xf32, #tpu.memory_space<vmem>>, vector<18x18x8xf32>
    %c0_167 = arith.constant 0 : index
    %c0_168 = arith.constant 0 : index
    %c0_169 = arith.constant 0 : index
    %267 = vector.load %arg8[%c0_167, %c0_168, %c0_169] : memref<18x18x8xf32, #tpu.memory_space<vmem>>, vector<18x18x8xf32>
    %268 = vector.extract_strided_slice %266 {offsets = [0, 0, 0], sizes = [16, 16, 8], strides = [1, 1, 1]} : vector<18x18x8xf32> to vector<16x16x8xf32>
    %269 = vector.shape_cast %268 : vector<16x16x8xf32> to vector<256x8xf32>
    %270 = arith.truncf %269 : vector<256x8xf32> to vector<256x8xbf16>
    %c0_170 = arith.constant 0 : index
    %c0_171 = arith.constant 0 : index
    %271 = vector.load %arg10[%c0_170, %c0_171] : memref<256x144xbf16, #tpu.memory_space<vmem>>, vector<256x8xbf16>
    tpu.vector_store %arg10[%c0_170, %c0_171], %270 {strides = array<i32>} : memref<256x144xbf16, #tpu.memory_space<vmem>>, vector<256x8xbf16>,
    %272 = vector.extract_strided_slice %267 {offsets = [0, 0, 0], sizes = [16, 16, 8], strides = [1, 1, 1]} : vector<18x18x8xf32> to vector<16x16x8xf32>
    %273 = vector.shape_cast %272 : vector<16x16x8xf32> to vector<256x8xf32>
    %274 = arith.truncf %273 : vector<256x8xf32> to vector<256x8xbf16>
    %c0_172 = arith.constant 0 : index
    %c8_173 = arith.constant 8 : index
    %275 = vector.load %arg10[%c0_172, %c8_173] : memref<256x144xbf16, #tpu.memory_space<vmem>>, vector<256x8xbf16>
    tpu.vector_store %arg10[%c0_172, %c8_173], %274 {strides = array<i32>} : memref<256x144xbf16, #tpu.memory_space<vmem>>, vector<256x8xbf16>,
    %276 = vector.extract_strided_slice %266 {offsets = [0, 1, 0], sizes = [16, 16, 8], strides = [1, 1, 1]} : vector<18x18x8xf32> to vector<16x16x8xf32>
    %277 = vector.shape_cast %276 : vector<16x16x8xf32> to vector<256x8xf32>
    %278 = arith.truncf %277 : vector<256x8xf32> to vector<256x8xbf16>
    %c0_174 = arith.constant 0 : index
    %c16_175 = arith.constant 16 : index
    %279 = vector.load %arg10[%c0_174, %c16_175] : memref<256x144xbf16, #tpu.memory_space<vmem>>, vector<256x8xbf16>
    tpu.vector_store %arg10[%c0_174, %c16_175], %278 {strides = array<i32>} : memref<256x144xbf16, #tpu.memory_space<vmem>>, vector<256x8xbf16>,
    %280 = vector.extract_strided_slice %267 {offsets = [0, 1, 0], sizes = [16, 16, 8], strides = [1, 1, 1]} : vector<18x18x8xf32> to vector<16x16x8xf32>
    %281 = vector.shape_cast %280 : vector<16x16x8xf32> to vector<256x8xf32>
    %282 = arith.truncf %281 : vector<256x8xf32> to vector<256x8xbf16>
    %c0_176 = arith.constant 0 : index
    %c24 = arith.constant 24 : index
    %283 = vector.load %arg10[%c0_176, %c24] : memref<256x144xbf16, #tpu.memory_space<vmem>>, vector<256x8xbf16>
    tpu.vector_store %arg10[%c0_176, %c24], %282 {strides = array<i32>} : memref<256x144xbf16, #tpu.memory_space<vmem>>, vector<256x8xbf16>,
    %284 = vector.extract_strided_slice %266 {offsets = [0, 2, 0], sizes = [16, 16, 8], strides = [1, 1, 1]} : vector<18x18x8xf32> to vector<16x16x8xf32>
    %285 = vector.shape_cast %284 : vector<16x16x8xf32> to vector<256x8xf32>
    %286 = arith.truncf %285 : vector<256x8xf32> to vector<256x8xbf16>
    %c0_177 = arith.constant 0 : index
    %c32 = arith.constant 32 : index
    %287 = vector.load %arg10[%c0_177, %c32] : memref<256x144xbf16, #tpu.memory_space<vmem>>, vector<256x8xbf16>
    tpu.vector_store %arg10[%c0_177, %c32], %286 {strides = array<i32>} : memref<256x144xbf16, #tpu.memory_space<vmem>>, vector<256x8xbf16>,
    %288 = vector.extract_strided_slice %267 {offsets = [0, 2, 0], sizes = [16, 16, 8], strides = [1, 1, 1]} : vector<18x18x8xf32> to vector<16x16x8xf32>
    %289 = vector.shape_cast %288 : vector<16x16x8xf32> to vector<256x8xf32>
    %290 = arith.truncf %289 : vector<256x8xf32> to vector<256x8xbf16>
    %c0_178 = arith.constant 0 : index
    %c40 = arith.constant 40 : index
    %291 = vector.load %arg10[%c0_178, %c40] : memref<256x144xbf16, #tpu.memory_space<vmem>>, vector<256x8xbf16>
    tpu.vector_store %arg10[%c0_178, %c40], %290 {strides = array<i32>} : memref<256x144xbf16, #tpu.memory_space<vmem>>, vector<256x8xbf16>,
    %292 = vector.extract_strided_slice %266 {offsets = [1, 0, 0], sizes = [16, 16, 8], strides = [1, 1, 1]} : vector<18x18x8xf32> to vector<16x16x8xf32>
    %293 = vector.shape_cast %292 : vector<16x16x8xf32> to vector<256x8xf32>
    %294 = arith.truncf %293 : vector<256x8xf32> to vector<256x8xbf16>
    %c0_179 = arith.constant 0 : index
    %c48 = arith.constant 48 : index
    %295 = vector.load %arg10[%c0_179, %c48] : memref<256x144xbf16, #tpu.memory_space<vmem>>, vector<256x8xbf16>
    tpu.vector_store %arg10[%c0_179, %c48], %294 {strides = array<i32>} : memref<256x144xbf16, #tpu.memory_space<vmem>>, vector<256x8xbf16>,
    %296 = vector.extract_strided_slice %267 {offsets = [1, 0, 0], sizes = [16, 16, 8], strides = [1, 1, 1]} : vector<18x18x8xf32> to vector<16x16x8xf32>
    %297 = vector.shape_cast %296 : vector<16x16x8xf32> to vector<256x8xf32>
    %298 = arith.truncf %297 : vector<256x8xf32> to vector<256x8xbf16>
    %c0_180 = arith.constant 0 : index
    %c56 = arith.constant 56 : index
    %299 = vector.load %arg10[%c0_180, %c56] : memref<256x144xbf16, #tpu.memory_space<vmem>>, vector<256x8xbf16>
    tpu.vector_store %arg10[%c0_180, %c56], %298 {strides = array<i32>} : memref<256x144xbf16, #tpu.memory_space<vmem>>, vector<256x8xbf16>,
    %300 = vector.extract_strided_slice %266 {offsets = [1, 1, 0], sizes = [16, 16, 8], strides = [1, 1, 1]} : vector<18x18x8xf32> to vector<16x16x8xf32>
    %301 = vector.shape_cast %300 : vector<16x16x8xf32> to vector<256x8xf32>
    %302 = arith.truncf %301 : vector<256x8xf32> to vector<256x8xbf16>
    %c0_181 = arith.constant 0 : index
    %c64 = arith.constant 64 : index
    %303 = vector.load %arg10[%c0_181, %c64] : memref<256x144xbf16, #tpu.memory_space<vmem>>, vector<256x8xbf16>
    tpu.vector_store %arg10[%c0_181, %c64], %302 {strides = array<i32>} : memref<256x144xbf16, #tpu.memory_space<vmem>>, vector<256x8xbf16>,
    %304 = vector.extract_strided_slice %267 {offsets = [1, 1, 0], sizes = [16, 16, 8], strides = [1, 1, 1]} : vector<18x18x8xf32> to vector<16x16x8xf32>
    %305 = vector.shape_cast %304 : vector<16x16x8xf32> to vector<256x8xf32>
    %306 = arith.truncf %305 : vector<256x8xf32> to vector<256x8xbf16>
    %c0_182 = arith.constant 0 : index
    %c72 = arith.constant 72 : index
    %307 = vector.load %arg10[%c0_182, %c72] : memref<256x144xbf16, #tpu.memory_space<vmem>>, vector<256x8xbf16>
    tpu.vector_store %arg10[%c0_182, %c72], %306 {strides = array<i32>} : memref<256x144xbf16, #tpu.memory_space<vmem>>, vector<256x8xbf16>,
    %308 = vector.extract_strided_slice %266 {offsets = [1, 2, 0], sizes = [16, 16, 8], strides = [1, 1, 1]} : vector<18x18x8xf32> to vector<16x16x8xf32>
    %309 = vector.shape_cast %308 : vector<16x16x8xf32> to vector<256x8xf32>
    %310 = arith.truncf %309 : vector<256x8xf32> to vector<256x8xbf16>
    %c0_183 = arith.constant 0 : index
    %c80 = arith.constant 80 : index
    %311 = vector.load %arg10[%c0_183, %c80] : memref<256x144xbf16, #tpu.memory_space<vmem>>, vector<256x8xbf16>
    tpu.vector_store %arg10[%c0_183, %c80], %310 {strides = array<i32>} : memref<256x144xbf16, #tpu.memory_space<vmem>>, vector<256x8xbf16>,
    %312 = vector.extract_strided_slice %267 {offsets = [1, 2, 0], sizes = [16, 16, 8], strides = [1, 1, 1]} : vector<18x18x8xf32> to vector<16x16x8xf32>
    %313 = vector.shape_cast %312 : vector<16x16x8xf32> to vector<256x8xf32>
    %314 = arith.truncf %313 : vector<256x8xf32> to vector<256x8xbf16>
    %c0_184 = arith.constant 0 : index
    %c88 = arith.constant 88 : index
    %315 = vector.load %arg10[%c0_184, %c88] : memref<256x144xbf16, #tpu.memory_space<vmem>>, vector<256x8xbf16>
    tpu.vector_store %arg10[%c0_184, %c88], %314 {strides = array<i32>} : memref<256x144xbf16, #tpu.memory_space<vmem>>, vector<256x8xbf16>,
    %316 = vector.extract_strided_slice %266 {offsets = [2, 0, 0], sizes = [16, 16, 8], strides = [1, 1, 1]} : vector<18x18x8xf32> to vector<16x16x8xf32>
    %317 = vector.shape_cast %316 : vector<16x16x8xf32> to vector<256x8xf32>
    %318 = arith.truncf %317 : vector<256x8xf32> to vector<256x8xbf16>
    %c0_185 = arith.constant 0 : index
    %c96 = arith.constant 96 : index
    %319 = vector.load %arg10[%c0_185, %c96] : memref<256x144xbf16, #tpu.memory_space<vmem>>, vector<256x8xbf16>
    tpu.vector_store %arg10[%c0_185, %c96], %318 {strides = array<i32>} : memref<256x144xbf16, #tpu.memory_space<vmem>>, vector<256x8xbf16>,
    %320 = vector.extract_strided_slice %267 {offsets = [2, 0, 0], sizes = [16, 16, 8], strides = [1, 1, 1]} : vector<18x18x8xf32> to vector<16x16x8xf32>
    %321 = vector.shape_cast %320 : vector<16x16x8xf32> to vector<256x8xf32>
    %322 = arith.truncf %321 : vector<256x8xf32> to vector<256x8xbf16>
    %c0_186 = arith.constant 0 : index
    %c104 = arith.constant 104 : index
    %323 = vector.load %arg10[%c0_186, %c104] : memref<256x144xbf16, #tpu.memory_space<vmem>>, vector<256x8xbf16>
    tpu.vector_store %arg10[%c0_186, %c104], %322 {strides = array<i32>} : memref<256x144xbf16, #tpu.memory_space<vmem>>, vector<256x8xbf16>,
    %324 = vector.extract_strided_slice %266 {offsets = [2, 1, 0], sizes = [16, 16, 8], strides = [1, 1, 1]} : vector<18x18x8xf32> to vector<16x16x8xf32>
    %325 = vector.shape_cast %324 : vector<16x16x8xf32> to vector<256x8xf32>
    %326 = arith.truncf %325 : vector<256x8xf32> to vector<256x8xbf16>
    %c0_187 = arith.constant 0 : index
    %c112 = arith.constant 112 : index
    %327 = vector.load %arg10[%c0_187, %c112] : memref<256x144xbf16, #tpu.memory_space<vmem>>, vector<256x8xbf16>
    tpu.vector_store %arg10[%c0_187, %c112], %326 {strides = array<i32>} : memref<256x144xbf16, #tpu.memory_space<vmem>>, vector<256x8xbf16>,
    %328 = vector.extract_strided_slice %267 {offsets = [2, 1, 0], sizes = [16, 16, 8], strides = [1, 1, 1]} : vector<18x18x8xf32> to vector<16x16x8xf32>
    %329 = vector.shape_cast %328 : vector<16x16x8xf32> to vector<256x8xf32>
    %330 = arith.truncf %329 : vector<256x8xf32> to vector<256x8xbf16>
    %c0_188 = arith.constant 0 : index
    %c120 = arith.constant 120 : index
    %331 = vector.load %arg10[%c0_188, %c120] : memref<256x144xbf16, #tpu.memory_space<vmem>>, vector<256x8xbf16>
    tpu.vector_store %arg10[%c0_188, %c120], %330 {strides = array<i32>} : memref<256x144xbf16, #tpu.memory_space<vmem>>, vector<256x8xbf16>,
    %332 = vector.extract_strided_slice %266 {offsets = [2, 2, 0], sizes = [16, 16, 8], strides = [1, 1, 1]} : vector<18x18x8xf32> to vector<16x16x8xf32>
    %333 = vector.shape_cast %332 : vector<16x16x8xf32> to vector<256x8xf32>
    %334 = arith.truncf %333 : vector<256x8xf32> to vector<256x8xbf16>
    %c0_189 = arith.constant 0 : index
    %c128 = arith.constant 128 : index
    %335 = vector.load %arg10[%c0_189, %c128] : memref<256x144xbf16, #tpu.memory_space<vmem>>, vector<256x8xbf16>
    tpu.vector_store %arg10[%c0_189, %c128], %334 {strides = array<i32>} : memref<256x144xbf16, #tpu.memory_space<vmem>>, vector<256x8xbf16>,
    %336 = vector.extract_strided_slice %267 {offsets = [2, 2, 0], sizes = [16, 16, 8], strides = [1, 1, 1]} : vector<18x18x8xf32> to vector<16x16x8xf32>
    %337 = vector.shape_cast %336 : vector<16x16x8xf32> to vector<256x8xf32>
    %338 = arith.truncf %337 : vector<256x8xf32> to vector<256x8xbf16>
    %c0_190 = arith.constant 0 : index
    %c136 = arith.constant 136 : index
    %339 = vector.load %arg10[%c0_190, %c136] : memref<256x144xbf16, #tpu.memory_space<vmem>>, vector<256x8xbf16>
    tpu.vector_store %arg10[%c0_190, %c136], %338 {strides = array<i32>} : memref<256x144xbf16, #tpu.memory_space<vmem>>, vector<256x8xbf16>,
    %c0_191 = arith.constant 0 : index
    %c0_192 = arith.constant 0 : index
    %340 = vector.load %arg10[%c0_191, %c0_192] : memref<256x144xbf16, #tpu.memory_space<vmem>>, vector<256x144xbf16>
    %c0_193 = arith.constant 0 : index
    %c0_194 = arith.constant 0 : index
    %341 = vector.load %arg3[%c0_193, %c0_194] : memref<144x8xbf16, #tpu.memory_space<vmem>>, vector<144x8xbf16>
    %cst_195 = arith.constant dense<0.000000e+00> : vector<256x8xf32>
    %342 = tpu.matmul %340, %341, %cst_195 {dimension_numbers = #tpu.dot_dimension_numbers<[1], [0], [0], [1], [0, 0, 1, 1], [], []>} : vector<256x144xbf16>, vector<144x8xbf16>, vector<256x8xf32> -> vector<256x8xf32>
    %c0_196 = arith.constant 0 : index
    %c0_197 = arith.constant 0 : index
    %343 = vector.load %arg4[%c0_196, %c0_197] : memref<1x8xf32, #tpu.memory_space<vmem>>, vector<1x8xf32>
    %344 = vector.broadcast %343 : vector<1x8xf32> to vector<256x8xf32>
    %345 = arith.addf %342, %344 : vector<256x8xf32>
    %cst_198 = arith.constant dense<0.000000e+00> : vector<8xf32>
    %346 = vector.multi_reduction <add>, %345, %cst_198 [0] : vector<256x8xf32> to vector<8xf32>
    %347 = vector.shape_cast %346 : vector<8xf32> to vector<1x8xf32>
    %c0_199 = arith.constant 0 : index
    %c0_200 = arith.constant 0 : index
    %c0_201 = arith.constant 0 : index
    %348 = vector.load %arg6[%c0_199, %c0_200, %c0_201] : memref<1x2x8xf32, #tpu.memory_space<vmem>>, vector<1x1x8xf32>
    %349 = vector.shape_cast %348 : vector<1x1x8xf32> to vector<1x8xf32>
    %350 = vector.shape_cast %347 : vector<1x8xf32> to vector<1x1x8xf32>
    tpu.vector_store %arg6[%c0_199, %c0_200, %c0_201], %350 {strides = array<i32>} : memref<1x2x8xf32, #tpu.memory_space<vmem>>, vector<1x1x8xf32>,
    %351 = arith.mulf %345, %345 : vector<256x8xf32>
    %cst_202 = arith.constant dense<0.000000e+00> : vector<8xf32>
    %352 = vector.multi_reduction <add>, %351, %cst_202 [0] : vector<256x8xf32> to vector<8xf32>
    %353 = vector.shape_cast %352 : vector<8xf32> to vector<1x8xf32>
    %c0_203 = arith.constant 0 : index
    %c1_204 = arith.constant 1 : index
    %c0_205 = arith.constant 0 : index
    %354 = vector.load %arg6[%c0_203, %c1_204, %c0_205] : memref<1x2x8xf32, #tpu.memory_space<vmem>>, vector<1x1x8xf32>
    %355 = vector.shape_cast %354 : vector<1x1x8xf32> to vector<1x8xf32>
    %356 = vector.shape_cast %353 : vector<1x8xf32> to vector<1x1x8xf32>
    tpu.vector_store %arg6[%c0_203, %c1_204, %c0_205], %356 {strides = array<i32>} : memref<1x2x8xf32, #tpu.memory_space<vmem>>, vector<1x1x8xf32>,
    %357 = vector.shape_cast %345 : vector<256x8xf32> to vector<16x16x8xf32>
    %c0_206 = arith.constant 0 : index
    %c0_207 = arith.constant 0 : index
    %c0_208 = arith.constant 0 : index
    %c0_209 = arith.constant 0 : index
    %358 = vector.load %arg5[%c0_206, %c0_207, %c0_208, %c0_209] : memref<1x16x16x8xf32, #tpu.memory_space<vmem>>, vector<1x16x16x8xf32>
    %359 = vector.shape_cast %358 : vector<1x16x16x8xf32> to vector<16x16x8xf32>
    %360 = vector.shape_cast %357 : vector<16x16x8xf32> to vector<1x16x16x8xf32>
    tpu.vector_store %arg5[%c0_206, %c0_207, %c0_208, %c0_209], %360 {strides = array<i32>} : memref<1x16x16x8xf32, #tpu.memory_space<vmem>>, vector<1x16x16x8xf32>,
    return
  }
  func.func @transform_0(%arg0: i32) -> (i32, i32, i32, i32) {
    %c0_i32 = arith.constant 0 : i32
    %c0_i32_0 = arith.constant 0 : i32
    %c0_i32_1 = arith.constant 0 : i32
    %c0_i32_2 = arith.constant 0 : i32
    return %arg0, %c0_i32, %c0_i32_0, %c0_i32_1 : i32, i32, i32, i32
  }
  func.func @transform_1(%arg0: i32) -> (i32, i32, i32, i32) {
    %c0_i32 = arith.constant 0 : i32
    %c0_i32_0 = arith.constant 0 : i32
    %c0_i32_1 = arith.constant 0 : i32
    %c0_i32_2 = arith.constant 0 : i32
    return %arg0, %c0_i32, %c0_i32_0, %c0_i32_1 : i32, i32, i32, i32
  }
  func.func @transform_2(%arg0: i32) -> (i32, i32) {
    %c0_i32 = arith.constant 0 : i32
    %c0_i32_0 = arith.constant 0 : i32
    %c0_i32_1 = arith.constant 0 : i32
    return %c0_i32, %c0_i32_0 : i32, i32
  }
  func.func @transform_3(%arg0: i32) -> (i32, i32) {
    %c0_i32 = arith.constant 0 : i32
    %c0_i32_0 = arith.constant 0 : i32
    %c0_i32_1 = arith.constant 0 : i32
    return %c0_i32, %c0_i32_0 : i32, i32
  }
  func.func @transform_4(%arg0: i32) -> (i32, i32, i32, i32) {
    %c0_i32 = arith.constant 0 : i32
    %c0_i32_0 = arith.constant 0 : i32
    %c0_i32_1 = arith.constant 0 : i32
    %c0_i32_2 = arith.constant 0 : i32
    return %arg0, %c0_i32, %c0_i32_0, %c0_i32_1 : i32, i32, i32, i32
  }
  func.func @transform_5(%arg0: i32) -> (i32, i32, i32) {
    %c0_i32 = arith.constant 0 : i32
    %c0_i32_0 = arith.constant 0 : i32
    %c0_i32_1 = arith.constant 0 : i32
    return %arg0, %c0_i32, %c0_i32_0 : i32, i32, i32
  }
}

</mosaic_0001>

<llo_original>
// kernel: up_forward.5
$region0: #{up_forward.5}
  #allocation0 [shape = 'u32[]', space=smem, size = 0x4, offset = 0x4, fixed_abs, tag = 'smem constant byte address 0x4 - core index']
  #allocation1 [shape = 'u32[72,128]{1,0:T(1,128)}', space=vmem, size = 0x9000, scoped, tag = 'internal scratch']
  %s0 = inlined_call_operand.vmem [shape: f32[2,16,16,16], index: 0, kind: input, shape index: {}]
  %s1 = inlined_call_operand.vmem [shape: f32[1,16], index: 1, kind: input, shape index: {}]
  %s2 = inlined_call_operand.vmem [shape: f32[1,16], index: 2, kind: input, shape index: {}]
  %s3 = inlined_call_operand.vmem [shape: f32[2,16,16,16], index: 3, kind: output, shape index: {}]
  %s4 = sld [smem:[#allocation0]]
  $region45: #{up_forward.5} parent=0
    _
  %s6 = ssub.s32 1, %s4
  %s7 = scalar_select 0, %s6, %s4
  loop: start=0, step=1, limit=4
  $region2: #{up_forward.5} parent=0 // loop_pre_header
    _
  $region3: #{up_forward.5} parent=0 // loop_header
    %s9 = sphi 0, %s13
    %p10 = scmp.ge.s32.totalorder %s9, 4
    %s19 = sphi 0, %s21
    %s22 = sphi 0, %s19
    %s23 = sphi 0, %s22
    %s39 = sphi 0, %s23
    %s43 = sphi 0, %s43
    %s45 = sphi 0, %s43
    %s46 = sphi 0, %s45
    %s60 = sphi 0, %s46
    %s64 = sphi 0, %s64
    %s66 = sphi 0, %s64
    %s67 = sphi 0, %s66
    %s81 = sphi 0, %s67
    %s87 = sphi 0, %s89
    %s90 = sphi 0, %s87
    %s91 = sphi 0, %s90
    %s107 = sphi 0, %s91
  $region4: #{up_forward.5} parent=0 // loop_header_branch
    %12 = sbr.rel (%p10) target = $region8
  $region5: #{up_forward.5} parent=0 // loop_body
    %s14 = ssub.s32 %s9, 1
    %s15 = ssub.s32 %s9, 2
    %s16 = sadd.s32 %s9, 1
    %s17 = ssub.s32 %s9, %s16
    %p18 = scmp.eq.s32.totalorder %s17, 0
    %s20 = sadd.s32 %s19, 1
    %s21 = scalar_select %p18, %s19, %s20
    %p24 = pneg %p18
    %p25 = scmp.eq.s32.totalorder %s9, 1
    %p26 = por %p24, %p25
    %p27 = scmp.ne.s32.totalorder %s19, %s22
    %p28 = scmp.eq.s32.totalorder %s9, 0
    %p29 = por %p27, %p28
    %p30 = scmp.ne.s32.totalorder %s19, %s22
    %p31 = scmp.eq.s32.totalorder %s14, 1
    %p32 = por %p30, %p31
    %p33 = scmp.ne.s32.totalorder %s22, %s23
    %p34 = scmp.eq.s32.totalorder %s14, 0
    %p35 = por %p33, %p34
    %p36 = scmp.ne.s32.totalorder %s22, %s23
    %p37 = scmp.eq.s32.totalorder %s15, 1
    %p38 = por %p36, %p37
    %p40 = scmp.ne.s32.totalorder %s23, %s39
    %p41 = scmp.eq.s32.totalorder %s15, 0
    %p42 = por %p40, %p41
    %s44 = sadd.s32 %s43, 1
    %p47 = scmp.eq.s32.totalorder %s9, 1
    %p48 = scmp.ne.s32.totalorder %s43, %s45
    %p49 = scmp.eq.s32.totalorder %s9, 0
    %p50 = por %p48, %p49
    %p51 = scmp.ne.s32.totalorder %s43, %s45
    %p52 = scmp.eq.s32.totalorder %s14, 1
    %p53 = por %p51, %p52
    %p54 = scmp.ne.s32.totalorder %s45, %s46
    %p55 = scmp.eq.s32.totalorder %s14, 0
    %p56 = por %p54, %p55
    %p57 = scmp.ne.s32.totalorder %s45, %s46
    %p58 = scmp.eq.s32.totalorder %s15, 1
    %p59 = por %p57, %p58
    %p61 = scmp.ne.s32.totalorder %s46, %s60
    %p62 = scmp.eq.s32.totalorder %s15, 0
    %p63 = por %p61, %p62
    %s65 = sadd.s32 %s64, 1
    %p68 = scmp.eq.s32.totalorder %s9, 1
    %p69 = scmp.ne.s32.totalorder %s64, %s66
    %p70 = scmp.eq.s32.totalorder %s9, 0
    %p71 = por %p69, %p70
    %p72 = scmp.ne.s32.totalorder %s64, %s66
    %p73 = scmp.eq.s32.totalorder %s14, 1
    %p74 = por %p72, %p73
    %p75 = scmp.ne.s32.totalorder %s66, %s67
    %p76 = scmp.eq.s32.totalorder %s14, 0
    %p77 = por %p75, %p76
    %p78 = scmp.ne.s32.totalorder %s66, %s67
    %p79 = scmp.eq.s32.totalorder %s15, 1
    %p80 = por %p78, %p79
    %p82 = scmp.ne.s32.totalorder %s67, %s81
    %p83 = scmp.eq.s32.totalorder %s15, 0
    %p84 = por %p82, %p83
    %s85 = ssub.s32 %s9, %s16
    %p86 = scmp.eq.s32.totalorder %s85, 0
    %s88 = sadd.s32 %s87, 1
    %s89 = scalar_select %p86, %s87, %s88
    %p92 = pneg %p86
    %p93 = scmp.eq.s32.totalorder %s9, 1
    %p94 = por %p92, %p93
    %p95 = scmp.ne.s32.totalorder %s87, %s90
    %p96 = scmp.eq.s32.totalorder %s9, 0
    %p97 = por %p95, %p96
    %p98 = scmp.ne.s32.totalorder %s87, %s90
    %p99 = scmp.eq.s32.totalorder %s14, 1
    %p100 = por %p98, %p99
    %p101 = scmp.ne.s32.totalorder %s90, %s91
    %p102 = scmp.eq.s32.totalorder %s14, 0
    %p103 = por %p101, %p102
    %p104 = scmp.ne.s32.totalorder %s90, %s91
    %p105 = scmp.eq.s32.totalorder %s15, 1
    %p106 = por %p104, %p105
    %p108 = scmp.ne.s32.totalorder %s91, %s107
    %p109 = scmp.eq.s32.totalorder %s15, 0
    %p110 = por %p108, %p109
    %p111 = scmp.le.s32.totalorder 1, %s9
    %p112 = scmp.lt.s32.totalorder %s9, 3
    %p113 = pnand %p111, %p112
    %p114 = pneg %p113
    // Predicated region
    $region9: #{up_forward.5} parent=5 // pred_check
      _
    $region10: #{up_forward.5} parent=5 // pred_check_branch
      %116 = sbr.rel (%p113) target = $region12
    $region11: #{up_forward.5} parent=5 // pred_region
      %s117 = ssub.s32 %s9, 1
      // Predicated region
      $region13: #{up_forward.5} parent=11 // pred_check
        %p118 = pneg %p56
      $region14: #{up_forward.5} parent=11 // pred_check_branch
        %120 = sbr.rel (%p118) target = $region16
      $region15: #{up_forward.5} parent=11 // pred_region
        _
      $region16: #{up_forward.5} parent=11 // pred_fallthru
        _
      // Predicated region
      $region17: #{up_forward.5} parent=11 // pred_check
        %p121 = pneg %p77
      $region18: #{up_forward.5} parent=11 // pred_check_branch
        %123 = sbr.rel (%p121) target = $region20
      $region19: #{up_forward.5} parent=11 // pred_region
        _
      $region20: #{up_forward.5} parent=11 // pred_fallthru
        _
    $region12: #{up_forward.5} parent=5 // pred_fallthru
      _
    %p124 = scmp.lt.s32.totalorder %s9, 2
    // Predicated region
    $region21: #{up_forward.5} parent=5 // pred_check
      %p125 = pneg %p124
    $region22: #{up_forward.5} parent=5 // pred_check_branch
      %127 = sbr.rel (%p125) target = $region24
    $region23: #{up_forward.5} parent=5 // pred_region
      // Predicated region
      $region25: #{up_forward.5} parent=23 // pred_check
        %p128 = pneg %p29
      $region26: #{up_forward.5} parent=23 // pred_check_branch
        %130 = sbr.rel (%p128) target = $region28
      $region27: #{up_forward.5} parent=23 // pred_region
        %p131 = scmp.lt.s32.totalorder %s9, 1
        %s132 = scalar_select %p131, %s9, 1
        %s133 = smul.addr %s132, 32
        %s134 = smul.addr %s133, 8
        %s135 = scalar_lea.vmem %s0, %s134
      $region28: #{up_forward.5} parent=23 // pred_fallthru
        _
    $region24: #{up_forward.5} parent=5 // pred_fallthru
      _
    %p136 = scmp.le.s32.totalorder 1, %s9
    %p137 = scmp.lt.s32.totalorder %s9, 3
    %p138 = pnand %p136, %p137
    %p139 = pneg %p138
    // Predicated region
    $region29: #{up_forward.5} parent=5 // pred_check
      _
    $region30: #{up_forward.5} parent=5 // pred_check_branch
      %141 = sbr.rel (%p138) target = $region32
    $region31: #{up_forward.5} parent=5 // pred_region
      %s142 = ssub.s32 %s9, 1
      %p143 = scmp.lt.s32.totalorder %s14, 1
      %s144 = scalar_select %p143, %s14, 1
      %s145 = smul.addr %s144, 32
      %s146 = smul.addr %s145, 8
      %s147 = scalar_lea.vmem %s0, %s146
      %p148 = pneg %p35
      %p149 = pneg %p32
      %p150 = pneg %p56
      %p151 = pneg %p53
      %p152 = pneg %p77
      %p153 = pneg %p74
      %p154 = pneg %p103
      %p155 = pneg %p100
      %p156 = scmp.lt.s32.totalorder %s14, 1
      %s157 = scalar_select %p156, %s14, 1
      %s158 = smul.addr %s157, 32
      %s159 = smul.addr %s158, 8
      %s160 = scalar_lea.vmem %s3, %s159
      %p161 = scmp.lt.s32.totalorder %s14, 1
      %s162 = scalar_select %p161, %s14, 1
      %s163 = smul.addr %s162, 32
      %s164 = smul.addr %s163, 8
      %s165 = scalar_lea.vmem %s0, %s164
      %p166 = scmp.lt.s32.totalorder %s14, 1
      %s167 = scalar_select %p166, %s14, 1
      %s168 = smul.addr %s167, 32
      %s169 = smul.addr %s168, 8
      %s170 = scalar_lea.vmem %s3, %s169
      %v171 = vld [vmem:[%s165] sm:$0xff]
      %v172 = vld [vmem:[%s165 + $0x8] sm:$0xff]
      %v173 = vld [vmem:[%s165 + $0x10] sm:$0xff]
      %v174 = vld [vmem:[%s165 + $0x18] sm:$0xff]
      %v175 = vld [vmem:[%s165 + $0x20] sm:$0xff]
      %v176 = vld [vmem:[%s165 + $0x28] sm:$0xff]
      %v177 = vld [vmem:[%s165 + $0x30] sm:$0xff]
      %v178 = vld [vmem:[%s165 + $0x38] sm:$0xff]
      %v179 = vld [vmem:[%s165 + $0x40] sm:$0xff]
      %v180 = vld [vmem:[%s165 + $0x48] sm:$0xff]
      %v181 = vld [vmem:[%s165 + $0x50] sm:$0xff]
      %v182 = vld [vmem:[%s165 + $0x58] sm:$0xff]
      %v183 = vld [vmem:[%s165 + $0x60] sm:$0xff]
      %v184 = vld [vmem:[%s165 + $0x68] sm:$0xff]
      %v185 = vld [vmem:[%s165 + $0x70] sm:$0xff]
      %v186 = vld [vmem:[%s165 + $0x78] sm:$0xff]
      %v187 = vld [vmem:[%s165 + $0x80] sm:$0xff]
      %v188 = vld [vmem:[%s165 + $0x88] sm:$0xff]
      %v189 = vld [vmem:[%s165 + $0x90] sm:$0xff]
      %v190 = vld [vmem:[%s165 + $0x98] sm:$0xff]
      %v191 = vld [vmem:[%s165 + $0xa0] sm:$0xff]
      %v192 = vld [vmem:[%s165 + $0xa8] sm:$0xff]
      %v193 = vld [vmem:[%s165 + $0xb0] sm:$0xff]
      %v194 = vld [vmem:[%s165 + $0xb8] sm:$0xff]
      %v195 = vld [vmem:[%s165 + $0xc0] sm:$0xff]
      %v196 = vld [vmem:[%s165 + $0xc8] sm:$0xff]
      %v197 = vld [vmem:[%s165 + $0xd0] sm:$0xff]
      %v198 = vld [vmem:[%s165 + $0xd8] sm:$0xff]
      %v199 = vld [vmem:[%s165 + $0xe0] sm:$0xff]
      %v200 = vld [vmem:[%s165 + $0xe8] sm:$0xff]
      %v201 = vld [vmem:[%s165 + $0xf0] sm:$0xff]
      %v202 = vld [vmem:[%s165 + $0xf8] sm:$0xff]
      %v203 = vld [vmem:[%s1] sm:$0x1]
      %v205 = vperm.slane %v203, 0
      %v207 = vmul.f32 %v171, %v205
      %v208 = vmul.f32 %v172, %v205
      %v209 = vmul.f32 %v173, %v205
      %v210 = vmul.f32 %v174, %v205
      %v211 = vmul.f32 %v175, %v205
      %v212 = vmul.f32 %v176, %v205
      %v213 = vmul.f32 %v177, %v205
      %v214 = vmul.f32 %v178, %v205
      %v215 = vmul.f32 %v179, %v205
      %v216 = vmul.f32 %v180, %v205
      %v217 = vmul.f32 %v181, %v205
      %v218 = vmul.f32 %v182, %v205
      %v219 = vmul.f32 %v183, %v205
      %v220 = vmul.f32 %v184, %v205
      %v221 = vmul.f32 %v185, %v205
      %v222 = vmul.f32 %v186, %v205
      %v223 = vmul.f32 %v187, %v205
      %v224 = vmul.f32 %v188, %v205
      %v225 = vmul.f32 %v189, %v205
      %v226 = vmul.f32 %v190, %v205
      %v227 = vmul.f32 %v191, %v205
      %v228 = vmul.f32 %v192, %v205
      %v229 = vmul.f32 %v193, %v205
      %v230 = vmul.f32 %v194, %v205
      %v231 = vmul.f32 %v195, %v205
      %v232 = vmul.f32 %v196, %v205
      %v233 = vmul.f32 %v197, %v205
      %v234 = vmul.f32 %v198, %v205
      %v235 = vmul.f32 %v199, %v205
      %v236 = vmul.f32 %v200, %v205
      %v237 = vmul.f32 %v201, %v205
      %v238 = vmul.f32 %v202, %v205
      %v239 = vld [vmem:[%s2] sm:$0x1]
      %v241 = vperm.slane %v239, 0
      %v243 = vadd.f32 %v207, %v241
      %v244 = vadd.f32 %v208, %v241
      %v245 = vadd.f32 %v209, %v241
      %v246 = vadd.f32 %v210, %v241
      %v247 = vadd.f32 %v211, %v241
      %v248 = vadd.f32 %v212, %v241
      %v249 = vadd.f32 %v213, %v241
      %v250 = vadd.f32 %v214, %v241
      %v251 = vadd.f32 %v215, %v241
      %v252 = vadd.f32 %v216, %v241
      %v253 = vadd.f32 %v217, %v241
      %v254 = vadd.f32 %v218, %v241
      %v255 = vadd.f32 %v219, %v241
      %v256 = vadd.f32 %v220, %v241
      %v257 = vadd.f32 %v221, %v241
      %v258 = vadd.f32 %v222, %v241
      %v259 = vadd.f32 %v223, %v241
      %v260 = vadd.f32 %v224, %v241
      %v261 = vadd.f32 %v225, %v241
      %v262 = vadd.f32 %v226, %v241
      %v263 = vadd.f32 %v227, %v241
      %v264 = vadd.f32 %v228, %v241
      %v265 = vadd.f32 %v229, %v241
      %v266 = vadd.f32 %v230, %v241
      %v267 = vadd.f32 %v231, %v241
      %v268 = vadd.f32 %v232, %v241
      %v269 = vadd.f32 %v233, %v241
      %v270 = vadd.f32 %v234, %v241
      %v271 = vadd.f32 %v235, %v241
      %v272 = vadd.f32 %v236, %v241
      %v273 = vadd.f32 %v237, %v241
      %v274 = vadd.f32 %v238, %v241
      %v275 = vmax.f32 %v243, 0.0
      %v276 = vmax.f32 %v244, 0.0
      %v277 = vmax.f32 %v245, 0.0
      %v278 = vmax.f32 %v246, 0.0
      %v279 = vmax.f32 %v247, 0.0
      %v280 = vmax.f32 %v248, 0.0
      %v281 = vmax.f32 %v249, 0.0
      %v282 = vmax.f32 %v250, 0.0
      %v283 = vmax.f32 %v251, 0.0
      %v284 = vmax.f32 %v252, 0.0
      %v285 = vmax.f32 %v253, 0.0
      %v286 = vmax.f32 %v254, 0.0
      %v287 = vmax.f32 %v255, 0.0
      %v288 = vmax.f32 %v256, 0.0
      %v289 = vmax.f32 %v257, 0.0
      %v290 = vmax.f32 %v258, 0.0
      %v291 = vmax.f32 %v259, 0.0
      %v292 = vmax.f32 %v260, 0.0
      %v293 = vmax.f32 %v261, 0.0
      %v294 = vmax.f32 %v262, 0.0
      %v295 = vmax.f32 %v263, 0.0
      %v296 = vmax.f32 %v264, 0.0
      %v297 = vmax.f32 %v265, 0.0
      %v298 = vmax.f32 %v266, 0.0
      %v299 = vmax.f32 %v267, 0.0
      %v300 = vmax.f32 %v268, 0.0
      %v301 = vmax.f32 %v269, 0.0
      %v302 = vmax.f32 %v270, 0.0
      %v303 = vmax.f32 %v271, 0.0
      %v304 = vmax.f32 %v272, 0.0
      %v305 = vmax.f32 %v273, 0.0
      %v306 = vmax.f32 %v274, 0.0
      %vm307 = vcmask 130048
      %308 = vst.msk [vmem:[%s170] sm:$0xff] %vm307, %v275
      %309 = vst.msk [vmem:[%s170 + $0x8] sm:$0xff] %vm307, %v276
      %310 = vst.msk [vmem:[%s170 + $0x10] sm:$0xff] %vm307, %v277
      %311 = vst.msk [vmem:[%s170 + $0x18] sm:$0xff] %vm307, %v278
      %312 = vst.msk [vmem:[%s170 + $0x20] sm:$0xff] %vm307, %v279
      %313 = vst.msk [vmem:[%s170 + $0x28] sm:$0xff] %vm307, %v280
      %314 = vst.msk [vmem:[%s170 + $0x30] sm:$0xff] %vm307, %v281
      %315 = vst.msk [vmem:[%s170 + $0x38] sm:$0xff] %vm307, %v282
      %316 = vst.msk [vmem:[%s170 + $0x40] sm:$0xff] %vm307, %v283
      %317 = vst.msk [vmem:[%s170 + $0x48] sm:$0xff] %vm307, %v284
      %318 = vst.msk [vmem:[%s170 + $0x50] sm:$0xff] %vm307, %v285
      %319 = vst.msk [vmem:[%s170 + $0x58] sm:$0xff] %vm307, %v286
      %320 = vst.msk [vmem:[%s170 + $0x60] sm:$0xff] %vm307, %v287
      %321 = vst.msk [vmem:[%s170 + $0x68] sm:$0xff] %vm307, %v288
      %322 = vst.msk [vmem:[%s170 + $0x70] sm:$0xff] %vm307, %v289
      %323 = vst.msk [vmem:[%s170 + $0x78] sm:$0xff] %vm307, %v290
      %324 = vst.msk [vmem:[%s170 + $0x80] sm:$0xff] %vm307, %v291
      %325 = vst.msk [vmem:[%s170 + $0x88] sm:$0xff] %vm307, %v292
      %326 = vst.msk [vmem:[%s170 + $0x90] sm:$0xff] %vm307, %v293
      %327 = vst.msk [vmem:[%s170 + $0x98] sm:$0xff] %vm307, %v294
      %328 = vst.msk [vmem:[%s170 + $0xa0] sm:$0xff] %vm307, %v295
      %329 = vst.msk [vmem:[%s170 + $0xa8] sm:$0xff] %vm307, %v296
      %330 = vst.msk [vmem:[%s170 + $0xb0] sm:$0xff] %vm307, %v297
      %331 = vst.msk [vmem:[%s170 + $0xb8] sm:$0xff] %vm307, %v298
      %332 = vst.msk [vmem:[%s170 + $0xc0] sm:$0xff] %vm307, %v299
      %333 = vst.msk [vmem:[%s170 + $0xc8] sm:$0xff] %vm307, %v300
      %334 = vst.msk [vmem:[%s170 + $0xd0] sm:$0xff] %vm307, %v301
      %335 = vst.msk [vmem:[%s170 + $0xd8] sm:$0xff] %vm307, %v302
      %336 = vst.msk [vmem:[%s170 + $0xe0] sm:$0xff] %vm307, %v303
      %337 = vst.msk [vmem:[%s170 + $0xe8] sm:$0xff] %vm307, %v304
      %338 = vst.msk [vmem:[%s170 + $0xf0] sm:$0xff] %vm307, %v305
      %339 = vst.msk [vmem:[%s170 + $0xf8] sm:$0xff] %vm307, %v306
      %p340 = scmp.lt.s32.totalorder %s14, 1
      %s341 = scalar_select %p340, %s14, 1
      %s342 = smul.addr %s341, 32
      %s343 = smul.addr %s342, 8
      %s344 = scalar_lea.vmem %s3, %s343
      // Predicated region
      $region33: #{up_forward.5} parent=31 // pred_check
        %p345 = pneg %p100
      $region34: #{up_forward.5} parent=31 // pred_check_branch
        %347 = sbr.rel (%p345) target = $region36
      $region35: #{up_forward.5} parent=31 // pred_region
        _
      $region36: #{up_forward.5} parent=31 // pred_fallthru
        _
    $region32: #{up_forward.5} parent=5 // pred_fallthru
      _
    %p348 = scmp.le.s32.totalorder 2, %s9
    // Predicated region
    $region37: #{up_forward.5} parent=5 // pred_check
      %p349 = pneg %p348
    $region38: #{up_forward.5} parent=5 // pred_check_branch
      %351 = sbr.rel (%p349) target = $region40
    $region39: #{up_forward.5} parent=5 // pred_region
      %s352 = ssub.s32 %s9, 2
      // Predicated region
      $region41: #{up_forward.5} parent=39 // pred_check
        %p353 = pneg %p106
      $region42: #{up_forward.5} parent=39 // pred_check_branch
        %355 = sbr.rel (%p353) target = $region44
      $region43: #{up_forward.5} parent=39 // pred_region
        %p356 = scmp.lt.s32.totalorder %s15, 1
        %s357 = scalar_select %p356, %s15, 1
        %s358 = smul.addr %s357, 32
        %s359 = smul.addr %s358, 8
        %s360 = scalar_lea.vmem %s3, %s359
      $region44: #{up_forward.5} parent=39 // pred_fallthru
        _
    $region40: #{up_forward.5} parent=5 // pred_fallthru
      _
  $region6: #{up_forward.5} parent=0 // loop_footer
    %s13 = sadd.s32 1, %s9
  $region7: #{up_forward.5} parent=0 // loop_footer_branch
    %8 = sbr.rel target = $region3
  $region8: #{up_forward.5} parent=0 // loop_exit
    _

// kernel: up_forward.4
$region0: #{up_forward.4}
  #allocation0 [shape = 'u32[]', space=smem, size = 0x4, offset = 0x4, fixed_abs, tag = 'smem constant byte address 0x4 - core index']
  #allocation1 [shape = 'u32[72,128]{1,0:T(1,128)}', space=vmem, size = 0x9000, scoped, tag = 'internal scratch']
  #allocation2 [shape = 'f32[18,18,8]{2,1,0:T(8,128)}', space=vmem, size = 0x36000, scoped, tag = 'scratch operand']
  #allocation3 [shape = 'bf16[256,72]{1,0:T(8,128)(2,1)}', space=vmem, size = 0x10000, scoped, tag = 'scratch operand']
  %s0 = inlined_call_operand.vmem [shape: f32[2,16,16,8], index: 0, kind: input, shape index: {}]
  %s1 = inlined_call_operand.vmem [shape: f32[1,8], index: 1, kind: input, shape index: {}]
  %s2 = inlined_call_operand.vmem [shape: f32[1,8], index: 2, kind: input, shape index: {}]
  %s3 = inlined_call_operand.vmem [shape: bf16[72,16], index: 3, kind: input, shape index: {}]
  %s4 = inlined_call_operand.vmem [shape: f32[1,16], index: 4, kind: input, shape index: {}]
  %s5 = inlined_call_operand.vmem [shape: f32[2,16,16,16], index: 5, kind: output, shape index: {0}]
  %s6 = inlined_call_operand.vmem [shape: f32[2,2,16], index: 6, kind: output, shape index: {1}]
  %7 = xla_tuple %s5, %s6
  %s8 = sld [smem:[#allocation0]]
  $region61: #{up_forward.4} parent=0
    _
  %s10 = ssub.s32 1, %s8
  %s11 = scalar_select 0, %s10, %s8
  loop: start=0, step=1, limit=4
  $region2: #{up_forward.4} parent=0 // loop_pre_header
    _
  $region3: #{up_forward.4} parent=0 // loop_header
    %s13 = sphi 0, %s17
    %p14 = scmp.ge.s32.totalorder %s13, 4
    %s23 = sphi 0, %s25
    %s26 = sphi 0, %s23
    %s27 = sphi 0, %s26
    %s43 = sphi 0, %s27
    %s47 = sphi 0, %s47
    %s49 = sphi 0, %s47
    %s50 = sphi 0, %s49
    %s64 = sphi 0, %s50
    %s68 = sphi 0, %s68
    %s70 = sphi 0, %s68
    %s71 = sphi 0, %s70
    %s85 = sphi 0, %s71
    %s89 = sphi 0, %s89
    %s91 = sphi 0, %s89
    %s92 = sphi 0, %s91
    %s106 = sphi 0, %s92
    %s110 = sphi 0, %s110
    %s112 = sphi 0, %s110
    %s113 = sphi 0, %s112
    %s127 = sphi 0, %s113
    %s133 = sphi 0, %s135
    %s136 = sphi 0, %s133
    %s137 = sphi 0, %s136
    %s153 = sphi 0, %s137
    %s159 = sphi 0, %s161
    %s162 = sphi 0, %s159
    %s163 = sphi 0, %s162
    %s179 = sphi 0, %s163
  $region4: #{up_forward.4} parent=0 // loop_header_branch
    %16 = sbr.rel (%p14) target = $region8
  $region5: #{up_forward.4} parent=0 // loop_body
    %s18 = ssub.s32 %s13, 1
    %s19 = ssub.s32 %s13, 2
    %s20 = sadd.s32 %s13, 1
    %s21 = ssub.s32 %s13, %s20
    %p22 = scmp.eq.s32.totalorder %s21, 0
    %s24 = sadd.s32 %s23, 1
    %s25 = scalar_select %p22, %s23, %s24
    %p28 = pneg %p22
    %p29 = scmp.eq.s32.totalorder %s13, 1
    %p30 = por %p28, %p29
    %p31 = scmp.ne.s32.totalorder %s23, %s26
    %p32 = scmp.eq.s32.totalorder %s13, 0
    %p33 = por %p31, %p32
    %p34 = scmp.ne.s32.totalorder %s23, %s26
    %p35 = scmp.eq.s32.totalorder %s18, 1
    %p36 = por %p34, %p35
    %p37 = scmp.ne.s32.totalorder %s26, %s27
    %p38 = scmp.eq.s32.totalorder %s18, 0
    %p39 = por %p37, %p38
    %p40 = scmp.ne.s32.totalorder %s26, %s27
    %p41 = scmp.eq.s32.totalorder %s19, 1
    %p42 = por %p40, %p41
    %p44 = scmp.ne.s32.totalorder %s27, %s43
    %p45 = scmp.eq.s32.totalorder %s19, 0
    %p46 = por %p44, %p45
    %s48 = sadd.s32 %s47, 1
    %p51 = scmp.eq.s32.totalorder %s13, 1
    %p52 = scmp.ne.s32.totalorder %s47, %s49
    %p53 = scmp.eq.s32.totalorder %s13, 0
    %p54 = por %p52, %p53
    %p55 = scmp.ne.s32.totalorder %s47, %s49
    %p56 = scmp.eq.s32.totalorder %s18, 1
    %p57 = por %p55, %p56
    %p58 = scmp.ne.s32.totalorder %s49, %s50
    %p59 = scmp.eq.s32.totalorder %s18, 0
    %p60 = por %p58, %p59
    %p61 = scmp.ne.s32.totalorder %s49, %s50
    %p62 = scmp.eq.s32.totalorder %s19, 1
    %p63 = por %p61, %p62
    %p65 = scmp.ne.s32.totalorder %s50, %s64
    %p66 = scmp.eq.s32.totalorder %s19, 0
    %p67 = por %p65, %p66
    %s69 = sadd.s32 %s68, 1
    %p72 = scmp.eq.s32.totalorder %s13, 1
    %p73 = scmp.ne.s32.totalorder %s68, %s70
    %p74 = scmp.eq.s32.totalorder %s13, 0
    %p75 = por %p73, %p74
    %p76 = scmp.ne.s32.totalorder %s68, %s70
    %p77 = scmp.eq.s32.totalorder %s18, 1
    %p78 = por %p76, %p77
    %p79 = scmp.ne.s32.totalorder %s70, %s71
    %p80 = scmp.eq.s32.totalorder %s18, 0
    %p81 = por %p79, %p80
    %p82 = scmp.ne.s32.totalorder %s70, %s71
    %p83 = scmp.eq.s32.totalorder %s19, 1
    %p84 = por %p82, %p83
    %p86 = scmp.ne.s32.totalorder %s71, %s85
    %p87 = scmp.eq.s32.totalorder %s19, 0
    %p88 = por %p86, %p87
    %s90 = sadd.s32 %s89, 1
    %p93 = scmp.eq.s32.totalorder %s13, 1
    %p94 = scmp.ne.s32.totalorder %s89, %s91
    %p95 = scmp.eq.s32.totalorder %s13, 0
    %p96 = por %p94, %p95
    %p97 = scmp.ne.s32.totalorder %s89, %s91
    %p98 = scmp.eq.s32.totalorder %s18, 1
    %p99 = por %p97, %p98
    %p100 = scmp.ne.s32.totalorder %s91, %s92
    %p101 = scmp.eq.s32.totalorder %s18, 0
    %p102 = por %p100, %p101
    %p103 = scmp.ne.s32.totalorder %s91, %s92
    %p104 = scmp.eq.s32.totalorder %s19, 1
    %p105 = por %p103, %p104
    %p107 = scmp.ne.s32.totalorder %s92, %s106
    %p108 = scmp.eq.s32.totalorder %s19, 0
    %p109 = por %p107, %p108
    %s111 = sadd.s32 %s110, 1
    %p114 = scmp.eq.s32.totalorder %s13, 1
    %p115 = scmp.ne.s32.totalorder %s110, %s112
    %p116 = scmp.eq.s32.totalorder %s13, 0
    %p117 = por %p115, %p116
    %p118 = scmp.ne.s32.totalorder %s110, %s112
    %p119 = scmp.eq.s32.totalorder %s18, 1
    %p120 = por %p118, %p119
    %p121 = scmp.ne.s32.totalorder %s112, %s113
    %p122 = scmp.eq.s32.totalorder %s18, 0
    %p123 = por %p121, %p122
    %p124 = scmp.ne.s32.totalorder %s112, %s113
    %p125 = scmp.eq.s32.totalorder %s19, 1
    %p126 = por %p124, %p125
    %p128 = scmp.ne.s32.totalorder %s113, %s127
    %p129 = scmp.eq.s32.totalorder %s19, 0
    %p130 = por %p128, %p129
    %s131 = ssub.s32 %s13, %s20
    %p132 = scmp.eq.s32.totalorder %s131, 0
    %s134 = sadd.s32 %s133, 1
    %s135 = scalar_select %p132, %s133, %s134
    %p138 = pneg %p132
    %p139 = scmp.eq.s32.totalorder %s13, 1
    %p140 = por %p138, %p139
    %p141 = scmp.ne.s32.totalorder %s133, %s136
    %p142 = scmp.eq.s32.totalorder %s13, 0
    %p143 = por %p141, %p142
    %p144 = scmp.ne.s32.totalorder %s133, %s136
    %p145 = scmp.eq.s32.totalorder %s18, 1
    %p146 = por %p144, %p145
    %p147 = scmp.ne.s32.totalorder %s136, %s137
    %p148 = scmp.eq.s32.totalorder %s18, 0
    %p149 = por %p147, %p148
    %p150 = scmp.ne.s32.totalorder %s136, %s137
    %p151 = scmp.eq.s32.totalorder %s19, 1
    %p152 = por %p150, %p151
    %p154 = scmp.ne.s32.totalorder %s137, %s153
    %p155 = scmp.eq.s32.totalorder %s19, 0
    %p156 = por %p154, %p155
    %s157 = ssub.s32 %s13, %s20
    %p158 = scmp.eq.s32.totalorder %s157, 0
    %s160 = sadd.s32 %s159, 1
    %s161 = scalar_select %p158, %s159, %s160
    %p164 = pneg %p158
    %p165 = scmp.eq.s32.totalorder %s13, 1
    %p166 = por %p164, %p165
    %p167 = scmp.ne.s32.totalorder %s159, %s162
    %p168 = scmp.eq.s32.totalorder %s13, 0
    %p169 = por %p167, %p168
    %p170 = scmp.ne.s32.totalorder %s159, %s162
    %p171 = scmp.eq.s32.totalorder %s18, 1
    %p172 = por %p170, %p171
    %p173 = scmp.ne.s32.totalorder %s162, %s163
    %p174 = scmp.eq.s32.totalorder %s18, 0
    %p175 = por %p173, %p174
    %p176 = scmp.ne.s32.totalorder %s162, %s163
    %p177 = scmp.eq.s32.totalorder %s19, 1
    %p178 = por %p176, %p177
    %p180 = scmp.ne.s32.totalorder %s163, %s179
    %p181 = scmp.eq.s32.totalorder %s19, 0
    %p182 = por %p180, %p181
    %p183 = scmp.le.s32.totalorder 1, %s13
    %p184 = scmp.lt.s32.totalorder %s13, 3
    %p185 = pnand %p183, %p184
    %p186 = pneg %p185
    // Predicated region
    $region9: #{up_forward.4} parent=5 // pred_check
      _
    $region10: #{up_forward.4} parent=5 // pred_check_branch
      %188 = sbr.rel (%p185) target = $region12
    $region11: #{up_forward.4} parent=5 // pred_region
      %s189 = ssub.s32 %s13, 1
      // Predicated region
      $region13: #{up_forward.4} parent=11 // pred_check
        %p190 = pneg %p60
      $region14: #{up_forward.4} parent=11 // pred_check_branch
        %192 = sbr.rel (%p190) target = $region16
      $region15: #{up_forward.4} parent=11 // pred_region
        _
      $region16: #{up_forward.4} parent=11 // pred_fallthru
        _
      // Predicated region
      $region17: #{up_forward.4} parent=11 // pred_check
        %p193 = pneg %p81
      $region18: #{up_forward.4} parent=11 // pred_check_branch
        %195 = sbr.rel (%p193) target = $region20
      $region19: #{up_forward.4} parent=11 // pred_region
        _
      $region20: #{up_forward.4} parent=11 // pred_fallthru
        _
      // Predicated region
      $region21: #{up_forward.4} parent=11 // pred_check
        %p196 = pneg %p102
      $region22: #{up_forward.4} parent=11 // pred_check_branch
        %198 = sbr.rel (%p196) target = $region24
      $region23: #{up_forward.4} parent=11 // pred_region
        _
      $region24: #{up_forward.4} parent=11 // pred_fallthru
        _
      // Predicated region
      $region25: #{up_forward.4} parent=11 // pred_check
        %p199 = pneg %p123
      $region26: #{up_forward.4} parent=11 // pred_check_branch
        %201 = sbr.rel (%p199) target = $region28
      $region27: #{up_forward.4} parent=11 // pred_region
        _
      $region28: #{up_forward.4} parent=11 // pred_fallthru
        _
    $region12: #{up_forward.4} parent=5 // pred_fallthru
      _
    %p202 = scmp.lt.s32.totalorder %s13, 2
    // Predicated region
    $region29: #{up_forward.4} parent=5 // pred_check
      %p203 = pneg %p202
    $region30: #{up_forward.4} parent=5 // pred_check_branch
      %205 = sbr.rel (%p203) target = $region32
    $region31: #{up_forward.4} parent=5 // pred_region
      // Predicated region
      $region33: #{up_forward.4} parent=31 // pred_check
        %p206 = pneg %p33
      $region34: #{up_forward.4} parent=31 // pred_check_branch
        %208 = sbr.rel (%p206) target = $region36
      $region35: #{up_forward.4} parent=31 // pred_region
        %p209 = scmp.lt.s32.totalorder %s13, 1
        %s210 = scalar_select %p209, %s13, 1
        %s211 = smul.addr %s210, 32
        %s212 = smul.addr %s211, 8
        %s213 = scalar_lea.vmem %s0, %s212
      $region36: #{up_forward.4} parent=31 // pred_fallthru
        _
    $region32: #{up_forward.4} parent=5 // pred_fallthru
      _
    %p214 = scmp.le.s32.totalorder 1, %s13
    %p215 = scmp.lt.s32.totalorder %s13, 3
    %p216 = pnand %p214, %p215
    %p217 = pneg %p216
    // Predicated region
    $region37: #{up_forward.4} parent=5 // pred_check
      _
    $region38: #{up_forward.4} parent=5 // pred_check_branch
      %219 = sbr.rel (%p216) target = $region40
    $region39: #{up_forward.4} parent=5 // pred_region
      %s220 = ssub.s32 %s13, 1
      %p221 = scmp.lt.s32.totalorder %s18, 1
      %s222 = scalar_select %p221, %s18, 1
      %s223 = smul.addr %s222, 32
      %s224 = smul.addr %s223, 8
      %s225 = scalar_lea.vmem %s0, %s224
      %p226 = pneg %p39
      %p227 = pneg %p36
      %p228 = pneg %p60
      %p229 = pneg %p57
      %p230 = pneg %p81
      %p231 = pneg %p78
      %p232 = pneg %p102
      %p233 = pneg %p99
      %p234 = pneg %p123
      %p235 = pneg %p120
      %p236 = pneg %p149
      %p237 = pneg %p146
      %p238 = scmp.lt.s32.totalorder %s18, 1
      %s239 = scalar_select %p238, %s18, 1
      %s240 = smul.addr %s239, 32
      %s241 = smul.addr %s240, 8
      %s242 = scalar_lea.vmem %s5, %s241
      %p243 = pneg %p175
      %p244 = pneg %p172
      %p245 = scmp.lt.s32.totalorder %s18, 1
      %s246 = scalar_select %p245, %s18, 1
      %s247 = smul.addr %s246, 2
      %s248 = scalar_lea.vmem %s6, %s247
      %p249 = scmp.lt.s32.totalorder %s18, 1
      %s250 = scalar_select %p249, %s18, 1
      %s251 = smul.addr %s250, 32
      %s252 = smul.addr %s251, 8
      %s253 = scalar_lea.vmem %s0, %s252
      %p254 = scmp.lt.s32.totalorder %s18, 1
      %s255 = scalar_select %p254, %s18, 1
      %s256 = smul.addr %s255, 32
      %s257 = smul.addr %s256, 8
      %s258 = scalar_lea.vmem %s5, %s257
      %p259 = scmp.lt.s32.totalorder %s18, 1
      %s260 = scalar_select %p259, %s18, 1
      %s261 = smul.addr %s260, 2
      %s262 = scalar_lea.vmem %s6, %s261
      %v264 = vld [vmem:[%s253] sm:$0xff]
      %v265 = vld [vmem:[%s253 + $0x8] sm:$0xff]
      %v266 = vld [vmem:[%s253 + $0x10] sm:$0xff]
      %v267 = vld [vmem:[%s253 + $0x18] sm:$0xff]
      %v268 = vld [vmem:[%s253 + $0x20] sm:$0xff]
      %v269 = vld [vmem:[%s253 + $0x28] sm:$0xff]
      %v270 = vld [vmem:[%s253 + $0x30] sm:$0xff]
      %v271 = vld [vmem:[%s253 + $0x38] sm:$0xff]
      %v272 = vld [vmem:[%s253 + $0x40] sm:$0xff]
      %v273 = vld [vmem:[%s253 + $0x48] sm:$0xff]
      %v274 = vld [vmem:[%s253 + $0x50] sm:$0xff]
      %v275 = vld [vmem:[%s253 + $0x58] sm:$0xff]
      %v276 = vld [vmem:[%s253 + $0x60] sm:$0xff]
      %v277 = vld [vmem:[%s253 + $0x68] sm:$0xff]
      %v278 = vld [vmem:[%s253 + $0x70] sm:$0xff]
      %v279 = vld [vmem:[%s253 + $0x78] sm:$0xff]
      %v280 = vld [vmem:[%s253 + $0x80] sm:$0xff]
      %v281 = vld [vmem:[%s253 + $0x88] sm:$0xff]
      %v282 = vld [vmem:[%s253 + $0x90] sm:$0xff]
      %v283 = vld [vmem:[%s253 + $0x98] sm:$0xff]
      %v284 = vld [vmem:[%s253 + $0xa0] sm:$0xff]
      %v285 = vld [vmem:[%s253 + $0xa8] sm:$0xff]
      %v286 = vld [vmem:[%s253 + $0xb0] sm:$0xff]
      %v287 = vld [vmem:[%s253 + $0xb8] sm:$0xff]
      %v288 = vld [vmem:[%s253 + $0xc0] sm:$0xff]
      %v289 = vld [vmem:[%s253 + $0xc8] sm:$0xff]
      %v290 = vld [vmem:[%s253 + $0xd0] sm:$0xff]
      %v291 = vld [vmem:[%s253 + $0xd8] sm:$0xff]
      %v292 = vld [vmem:[%s253 + $0xe0] sm:$0xff]
      %v293 = vld [vmem:[%s253 + $0xe8] sm:$0xff]
      %v294 = vld [vmem:[%s253 + $0xf0] sm:$0xff]
      %v295 = vld [vmem:[%s253 + $0xf8] sm:$0xff]
      %v296 = vld [vmem:[%s1] sm:$0x1]
      %v298 = vperm.slane %v296, 0
      %v300 = vmul.f32 %v264, %v298
      %v301 = vmul.f32 %v265, %v298
      %v302 = vmul.f32 %v266, %v298
      %v303 = vmul.f32 %v267, %v298
      %v304 = vmul.f32 %v268, %v298
      %v305 = vmul.f32 %v269, %v298
      %v306 = vmul.f32 %v270, %v298
      %v307 = vmul.f32 %v271, %v298
      %v308 = vmul.f32 %v272, %v298
      %v309 = vmul.f32 %v273, %v298
      %v310 = vmul.f32 %v274, %v298
      %v311 = vmul.f32 %v275, %v298
      %v312 = vmul.f32 %v276, %v298
      %v313 = vmul.f32 %v277, %v298
      %v314 = vmul.f32 %v278, %v298
      %v315 = vmul.f32 %v279, %v298
      %v316 = vmul.f32 %v280, %v298
      %v317 = vmul.f32 %v281, %v298
      %v318 = vmul.f32 %v282, %v298
      %v319 = vmul.f32 %v283, %v298
      %v320 = vmul.f32 %v284, %v298
      %v321 = vmul.f32 %v285, %v298
      %v322 = vmul.f32 %v286, %v298
      %v323 = vmul.f32 %v287, %v298
      %v324 = vmul.f32 %v288, %v298
      %v325 = vmul.f32 %v289, %v298
      %v326 = vmul.f32 %v290, %v298
      %v327 = vmul.f32 %v291, %v298
      %v328 = vmul.f32 %v292, %v298
      %v329 = vmul.f32 %v293, %v298
      %v330 = vmul.f32 %v294, %v298
      %v331 = vmul.f32 %v295, %v298
      %v332 = vld [vmem:[%s2] sm:$0x1]
      %v334 = vperm.slane %v332, 0
      %v336 = vadd.f32 %v300, %v334
      %v337 = vadd.f32 %v301, %v334
      %v338 = vadd.f32 %v302, %v334
      %v339 = vadd.f32 %v303, %v334
      %v340 = vadd.f32 %v304, %v334
      %v341 = vadd.f32 %v305, %v334
      %v342 = vadd.f32 %v306, %v334
      %v343 = vadd.f32 %v307, %v334
      %v344 = vadd.f32 %v308, %v334
      %v345 = vadd.f32 %v309, %v334
      %v346 = vadd.f32 %v310, %v334
      %v347 = vadd.f32 %v311, %v334
      %v348 = vadd.f32 %v312, %v334
      %v349 = vadd.f32 %v313, %v334
      %v350 = vadd.f32 %v314, %v334
      %v351 = vadd.f32 %v315, %v334
      %v352 = vadd.f32 %v316, %v334
      %v353 = vadd.f32 %v317, %v334
      %v354 = vadd.f32 %v318, %v334
      %v355 = vadd.f32 %v319, %v334
      %v356 = vadd.f32 %v320, %v334
      %v357 = vadd.f32 %v321, %v334
      %v358 = vadd.f32 %v322, %v334
      %v359 = vadd.f32 %v323, %v334
      %v360 = vadd.f32 %v324, %v334
      %v361 = vadd.f32 %v325, %v334
      %v362 = vadd.f32 %v326, %v334
      %v363 = vadd.f32 %v327, %v334
      %v364 = vadd.f32 %v328, %v334
      %v365 = vadd.f32 %v329, %v334
      %v366 = vadd.f32 %v330, %v334
      %v367 = vadd.f32 %v331, %v334
      %v368 = vmax.f32 %v336, 0.0
      %v369 = vmax.f32 %v337, 0.0
      %v370 = vmax.f32 %v338, 0.0
      %v371 = vmax.f32 %v339, 0.0
      %v372 = vmax.f32 %v340, 0.0
      %v373 = vmax.f32 %v341, 0.0
      %v374 = vmax.f32 %v342, 0.0
      %v375 = vmax.f32 %v343, 0.0
      %v376 = vmax.f32 %v344, 0.0
      %v377 = vmax.f32 %v345, 0.0
      %v378 = vmax.f32 %v346, 0.0
      %v379 = vmax.f32 %v347, 0.0
      %v380 = vmax.f32 %v348, 0.0
      %v381 = vmax.f32 %v349, 0.0
      %v382 = vmax.f32 %v350, 0.0
      %v383 = vmax.f32 %v351, 0.0
      %v384 = vmax.f32 %v352, 0.0
      %v385 = vmax.f32 %v353, 0.0
      %v386 = vmax.f32 %v354, 0.0
      %v387 = vmax.f32 %v355, 0.0
      %v388 = vmax.f32 %v356, 0.0
      %v389 = vmax.f32 %v357, 0.0
      %v390 = vmax.f32 %v358, 0.0
      %v391 = vmax.f32 %v359, 0.0
      %v392 = vmax.f32 %v360, 0.0
      %v393 = vmax.f32 %v361, 0.0
      %v394 = vmax.f32 %v362, 0.0
      %v395 = vmax.f32 %v363, 0.0
      %v396 = vmax.f32 %v364, 0.0
      %v397 = vmax.f32 %v365, 0.0
      %v398 = vmax.f32 %v366, 0.0
      %v399 = vmax.f32 %v367, 0.0
      %vm400 = vcmask 64512
      %401 = vst.msk [vmem:[#allocation2] sm:$0xff] %vm400, 0.0
      %402 = vst.msk [vmem:[#allocation2 + $0x8] sm:$0xff] %vm400, 0.0
      %vm403 = vcmask 58368
      %404 = vst.msk [vmem:[#allocation2 + $0x10] sm:$0x3] %vm403, 0.0
      %405 = vst.msk [vmem:[#allocation2 + $0x18] sm:$0xff] %vm400, 0.0
      %406 = vst.msk [vmem:[#allocation2 + $0x20] sm:$0xff] %vm400, 0.0
      %407 = vst.msk [vmem:[#allocation2 + $0x28] sm:$0x3] %vm403, 0.0
      %408 = vst.msk [vmem:[#allocation2 + $0x30] sm:$0xff] %vm400, 0.0
      %409 = vst.msk [vmem:[#allocation2 + $0x38] sm:$0xff] %vm400, 0.0
      %410 = vst.msk [vmem:[#allocation2 + $0x40] sm:$0x3] %vm403, 0.0
      %411 = vst.msk [vmem:[#allocation2 + $0x48] sm:$0xff] %vm400, 0.0
      %412 = vst.msk [vmem:[#allocation2 + $0x50] sm:$0xff] %vm400, 0.0
      %413 = vst.msk [vmem:[#allocation2 + $0x58] sm:$0x3] %vm403, 0.0
      %414 = vst.msk [vmem:[#allocation2 + $0x60] sm:$0xff] %vm400, 0.0
      %415 = vst.msk [vmem:[#allocation2 + $0x68] sm:$0xff] %vm400, 0.0
      %416 = vst.msk [vmem:[#allocation2 + $0x70] sm:$0x3] %vm403, 0.0
      %417 = vst.msk [vmem:[#allocation2 + $0x78] sm:$0xff] %vm400, 0.0
      %418 = vst.msk [vmem:[#allocation2 + $0x80] sm:$0xff] %vm400, 0.0
      %419 = vst.msk [vmem:[#allocation2 + $0x88] sm:$0x3] %vm403, 0.0
      %420 = vst.msk [vmem:[#allocation2 + $0x90] sm:$0xff] %vm400, 0.0
      %421 = vst.msk [vmem:[#allocation2 + $0x98] sm:$0xff] %vm400, 0.0
      %422 = vst.msk [vmem:[#allocation2 + $0xa0] sm:$0x3] %vm403, 0.0
      %423 = vst.msk [vmem:[#allocation2 + $0xa8] sm:$0xff] %vm400, 0.0
      %424 = vst.msk [vmem:[#allocation2 + $0xb0] sm:$0xff] %vm400, 0.0
      %425 = vst.msk [vmem:[#allocation2 + $0xb8] sm:$0x3] %vm403, 0.0
      %426 = vst.msk [vmem:[#allocation2 + $0xc0] sm:$0xff] %vm400, 0.0
      %427 = vst.msk [vmem:[#allocation2 + $0xc8] sm:$0xff] %vm400, 0.0
      %428 = vst.msk [vmem:[#allocation2 + $0xd0] sm:$0x3] %vm403, 0.0
      %429 = vst.msk [vmem:[#allocation2 + $0xd8] sm:$0xff] %vm400, 0.0
      %430 = vst.msk [vmem:[#allocation2 + $0xe0] sm:$0xff] %vm400, 0.0
      %431 = vst.msk [vmem:[#allocation2 + $0xe8] sm:$0x3] %vm403, 0.0
      %432 = vst.msk [vmem:[#allocation2 + $0xf0] sm:$0xff] %vm400, 0.0
      %433 = vst.msk [vmem:[#allocation2 + $0xf8] sm:$0xff] %vm400, 0.0
      %434 = vst.msk [vmem:[#allocation2 + $0x100] sm:$0x3] %vm403, 0.0
      %435 = vst.msk [vmem:[#allocation2 + $0x108] sm:$0xff] %vm400, 0.0
      %436 = vst.msk [vmem:[#allocation2 + $0x110] sm:$0xff] %vm400, 0.0
      %437 = vst.msk [vmem:[#allocation2 + $0x118] sm:$0x3] %vm403, 0.0
      %438 = vst.msk [vmem:[#allocation2 + $0x120] sm:$0xff] %vm400, 0.0
      %439 = vst.msk [vmem:[#allocation2 + $0x128] sm:$0xff] %vm400, 0.0
      %440 = vst.msk [vmem:[#allocation2 + $0x130] sm:$0x3] %vm403, 0.0
      %441 = vst.msk [vmem:[#allocation2 + $0x138] sm:$0xff] %vm400, 0.0
      %442 = vst.msk [vmem:[#allocation2 + $0x140] sm:$0xff] %vm400, 0.0
      %443 = vst.msk [vmem:[#allocation2 + $0x148] sm:$0x3] %vm403, 0.0
      %444 = vst.msk [vmem:[#allocation2 + $0x150] sm:$0xff] %vm400, 0.0
      %445 = vst.msk [vmem:[#allocation2 + $0x158] sm:$0xff] %vm400, 0.0
      %446 = vst.msk [vmem:[#allocation2 + $0x160] sm:$0x3] %vm403, 0.0
      %447 = vst.msk [vmem:[#allocation2 + $0x168] sm:$0xff] %vm400, 0.0
      %448 = vst.msk [vmem:[#allocation2 + $0x170] sm:$0xff] %vm400, 0.0
      %449 = vst.msk [vmem:[#allocation2 + $0x178] sm:$0x3] %vm403, 0.0
      %450 = vst.msk [vmem:[#allocation2 + $0x180] sm:$0xff] %vm400, 0.0
      %451 = vst.msk [vmem:[#allocation2 + $0x188] sm:$0xff] %vm400, 0.0
      %452 = vst.msk [vmem:[#allocation2 + $0x190] sm:$0x3] %vm403, 0.0
      %453 = vst.msk [vmem:[#allocation2 + $0x198] sm:$0xff] %vm400, 0.0
      %454 = vst.msk [vmem:[#allocation2 + $0x1a0] sm:$0xff] %vm400, 0.0
      %455 = vst.msk [vmem:[#allocation2 + $0x1a8] sm:$0x3] %vm403, 0.0
      %s456 = scalar_lea.vmem [#allocation2], 24
      %457 = vst.msk [vmem:[%s456 + $0x1] sm:$0xff] %vm400, %v368
      %458 = vst.msk [vmem:[%s456 + $0x9] sm:$0xff] %vm400, %v369
      %459 = vst.msk [vmem:[%s456 + $0x19] sm:$0xff] %vm400, %v370
      %460 = vst.msk [vmem:[%s456 + $0x21] sm:$0xff] %vm400, %v371
      %461 = vst.msk [vmem:[%s456 + $0x31] sm:$0xff] %vm400, %v372
      %462 = vst.msk [vmem:[%s456 + $0x39] sm:$0xff] %vm400, %v373
      %463 = vst.msk [vmem:[%s456 + $0x49] sm:$0xff] %vm400, %v374
      %464 = vst.msk [vmem:[%s456 + $0x51] sm:$0xff] %vm400, %v375
      %465 = vst.msk [vmem:[%s456 + $0x61] sm:$0xff] %vm400, %v376
      %466 = vst.msk [vmem:[%s456 + $0x69] sm:$0xff] %vm400, %v377
      %467 = vst.msk [vmem:[%s456 + $0x79] sm:$0xff] %vm400, %v378
      %468 = vst.msk [vmem:[%s456 + $0x81] sm:$0xff] %vm400, %v379
      %469 = vst.msk [vmem:[%s456 + $0x91] sm:$0xff] %vm400, %v380
      %470 = vst.msk [vmem:[%s456 + $0x99] sm:$0xff] %vm400, %v381
      %471 = vst.msk [vmem:[%s456 + $0xa9] sm:$0xff] %vm400, %v382
      %472 = vst.msk [vmem:[%s456 + $0xb1] sm:$0xff] %vm400, %v383
      %473 = vst.msk [vmem:[%s456 + $0xc1] sm:$0xff] %vm400, %v384
      %474 = vst.msk [vmem:[%s456 + $0xc9] sm:$0xff] %vm400, %v385
      %475 = vst.msk [vmem:[%s456 + $0xd9] sm:$0xff] %vm400, %v386
      %476 = vst.msk [vmem:[%s456 + $0xe1] sm:$0xff] %vm400, %v387
      %477 = vst.msk [vmem:[%s456 + $0xf1] sm:$0xff] %vm400, %v388
      %478 = vst.msk [vmem:[%s456 + $0xf9] sm:$0xff] %vm400, %v389
      %479 = vst.msk [vmem:[%s456 + $0x109] sm:$0xff] %vm400, %v390
      %480 = vst.msk [vmem:[%s456 + $0x111] sm:$0xff] %vm400, %v391
      %481 = vst.msk [vmem:[%s456 + $0x121] sm:$0xff] %vm400, %v392
      %482 = vst.msk [vmem:[%s456 + $0x129] sm:$0xff] %vm400, %v393
      %483 = vst.msk [vmem:[%s456 + $0x139] sm:$0xff] %vm400, %v394
      %484 = vst.msk [vmem:[%s456 + $0x141] sm:$0xff] %vm400, %v395
      %485 = vst.msk [vmem:[%s456 + $0x151] sm:$0xff] %vm400, %v396
      %486 = vst.msk [vmem:[%s456 + $0x159] sm:$0xff] %vm400, %v397
      %487 = vst.msk [vmem:[%s456 + $0x169] sm:$0xff] %vm400, %v398
      %488 = vst.msk [vmem:[%s456 + $0x171] sm:$0xff] %vm400, %v399
      %v489 = vld [vmem:[#allocation2] sm:$0xff]
      %v490 = vld [vmem:[#allocation2 + $0x8] sm:$0xff]
      %v491 = vld [vmem:[#allocation2 + $0x10] sm:$0x3]
      %v492 = vld [vmem:[#allocation2 + $0x18] sm:$0xff]
      %v493 = vld [vmem:[#allocation2 + $0x20] sm:$0xff]
      %v494 = vld [vmem:[#allocation2 + $0x28] sm:$0x3]
      %v495 = vld [vmem:[#allocation2 + $0x30] sm:$0xff]
      %v496 = vld [vmem:[#allocation2 + $0x38] sm:$0xff]
      %v497 = vld [vmem:[#allocation2 + $0x40] sm:$0x3]
      %v498 = vld [vmem:[#allocation2 + $0x48] sm:$0xff]
      %v499 = vld [vmem:[#allocation2 + $0x50] sm:$0xff]
      %v500 = vld [vmem:[#allocation2 + $0x58] sm:$0x3]
      %v501 = vld [vmem:[#allocation2 + $0x60] sm:$0xff]
      %v502 = vld [vmem:[#allocation2 + $0x68] sm:$0xff]
      %v503 = vld [vmem:[#allocation2 + $0x70] sm:$0x3]
      %v504 = vld [vmem:[#allocation2 + $0x78] sm:$0xff]
      %v505 = vld [vmem:[#allocation2 + $0x80] sm:$0xff]
      %v506 = vld [vmem:[#allocation2 + $0x88] sm:$0x3]
      %v507 = vld [vmem:[#allocation2 + $0x90] sm:$0xff]
      %v508 = vld [vmem:[#allocation2 + $0x98] sm:$0xff]
      %v509 = vld [vmem:[#allocation2 + $0xa0] sm:$0x3]
      %v510 = vld [vmem:[#allocation2 + $0xa8] sm:$0xff]
      %v511 = vld [vmem:[#allocation2 + $0xb0] sm:$0xff]
      %v512 = vld [vmem:[#allocation2 + $0xb8] sm:$0x3]
      %v513 = vld [vmem:[#allocation2 + $0xc0] sm:$0xff]
      %v514 = vld [vmem:[#allocation2 + $0xc8] sm:$0xff]
      %v515 = vld [vmem:[#allocation2 + $0xd0] sm:$0x3]
      %v516 = vld [vmem:[#allocation2 + $0xd8] sm:$0xff]
      %v517 = vld [vmem:[#allocation2 + $0xe0] sm:$0xff]
      %v518 = vld [vmem:[#allocation2 + $0xe8] sm:$0x3]
      %v519 = vld [vmem:[#allocation2 + $0xf0] sm:$0xff]
      %v520 = vld [vmem:[#allocation2 + $0xf8] sm:$0xff]
      %v521 = vld [vmem:[#allocation2 + $0x100] sm:$0x3]
      %v522 = vld [vmem:[#allocation2 + $0x108] sm:$0xff]
      %v523 = vld [vmem:[#allocation2 + $0x110] sm:$0xff]
      %v524 = vld [vmem:[#allocation2 + $0x118] sm:$0x3]
      %v525 = vld [vmem:[#allocation2 + $0x120] sm:$0xff]
      %v526 = vld [vmem:[#allocation2 + $0x128] sm:$0xff]
      %v527 = vld [vmem:[#allocation2 + $0x130] sm:$0x3]
      %v528 = vld [vmem:[#allocation2 + $0x138] sm:$0xff]
      %v529 = vld [vmem:[#allocation2 + $0x140] sm:$0xff]
      %v530 = vld [vmem:[#allocation2 + $0x148] sm:$0x3]
      %v531 = vld [vmem:[#allocation2 + $0x150] sm:$0xff]
      %v532 = vld [vmem:[#allocation2 + $0x158] sm:$0xff]
      %v533 = vld [vmem:[#allocation2 + $0x160] sm:$0x3]
      %v534 = vld [vmem:[#allocation2 + $0x168] sm:$0xff]
      %v535 = vld [vmem:[#allocation2 + $0x170] sm:$0xff]
      %v536 = vld [vmem:[#allocation2 + $0x178] sm:$0x3]
      %v537 = vld [vmem:[#allocation2 + $0x180] sm:$0xff]
      %v538 = vld [vmem:[#allocation2 + $0x188] sm:$0xff]
      %v539 = vld [vmem:[#allocation2 + $0x190] sm:$0x3]
      %v540 = vld [vmem:[#allocation2 + $0x198] sm:$0xff]
      %v541 = vld [vmem:[#allocation2 + $0x1a0] sm:$0xff]
      %v542 = vld [vmem:[#allocation2 + $0x1a8] sm:$0x3]
      %v543 = vpack.c.bf16 %v489, %v489
      %v544 = vpack.c.bf16 %v490, %v490
      %v545 = vpack.c.bf16 %v492, %v492
      %v546 = vpack.c.bf16 %v493, %v493
      %v547 = vpack.c.bf16 %v495, %v495
      %v548 = vpack.c.bf16 %v496, %v496
      %v549 = vpack.c.bf16 %v498, %v498
      %v550 = vpack.c.bf16 %v499, %v499
      %v551 = vpack.c.bf16 %v501, %v501
      %v552 = vpack.c.bf16 %v502, %v502
      %v553 = vpack.c.bf16 %v504, %v504
      %v554 = vpack.c.bf16 %v505, %v505
      %v555 = vpack.c.bf16 %v507, %v507
      %v556 = vpack.c.bf16 %v508, %v508
      %v557 = vpack.c.bf16 %v510, %v510
      %v558 = vpack.c.bf16 %v511, %v511
      %v559 = vpack.c.bf16 %v513, %v513
      %v560 = vpack.c.bf16 %v514, %v514
      %v561 = vpack.c.bf16 %v516, %v516
      %v562 = vpack.c.bf16 %v517, %v517
      %v563 = vpack.c.bf16 %v519, %v519
      %v564 = vpack.c.bf16 %v520, %v520
      %v565 = vpack.c.bf16 %v522, %v522
      %v566 = vpack.c.bf16 %v523, %v523
      %v567 = vpack.c.bf16 %v525, %v525
      %v568 = vpack.c.bf16 %v526, %v526
      %v569 = vpack.c.bf16 %v528, %v528
      %v570 = vpack.c.bf16 %v529, %v529
      %v571 = vpack.c.bf16 %v531, %v531
      %v572 = vpack.c.bf16 %v532, %v532
      %v573 = vpack.c.bf16 %v534, %v534
      %v574 = vpack.c.bf16 %v535, %v535
      %vm575 = vcmask 60416
      %576 = vst.msk [vmem:[#allocation3] sm:$0xf] %vm575, %v543
      %577 = vst.msk [vmem:[#allocation3 + $0x4] sm:$0xf] %vm575, %v544
      %578 = vst.msk [vmem:[#allocation3 + $0x8] sm:$0xf] %vm575, %v545
      %579 = vst.msk [vmem:[#allocation3 + $0xc] sm:$0xf] %vm575, %v546
      %580 = vst.msk [vmem:[#allocation3 + $0x10] sm:$0xf] %vm575, %v547
      %581 = vst.msk [vmem:[#allocation3 + $0x14] sm:$0xf] %vm575, %v548
      %582 = vst.msk [vmem:[#allocation3 + $0x18] sm:$0xf] %vm575, %v549
      %583 = vst.msk [vmem:[#allocation3 + $0x1c] sm:$0xf] %vm575, %v550
      %584 = vst.msk [vmem:[#allocation3 + $0x20] sm:$0xf] %vm575, %v551
      %585 = vst.msk [vmem:[#allocation3 + $0x24] sm:$0xf] %vm575, %v552
      %586 = vst.msk [vmem:[#allocation3 + $0x28] sm:$0xf] %vm575, %v553
      %587 = vst.msk [vmem:[#allocation3 + $0x2c] sm:$0xf] %vm575, %v554
      %588 = vst.msk [vmem:[#allocation3 + $0x30] sm:$0xf] %vm575, %v555
      %589 = vst.msk [vmem:[#allocation3 + $0x34] sm:$0xf] %vm575, %v556
      %590 = vst.msk [vmem:[#allocation3 + $0x38] sm:$0xf] %vm575, %v557
      %591 = vst.msk [vmem:[#allocation3 + $0x3c] sm:$0xf] %vm575, %v558
      %592 = vst.msk [vmem:[#allocation3 + $0x40] sm:$0xf] %vm575, %v559
      %593 = vst.msk [vmem:[#allocation3 + $0x44] sm:$0xf] %vm575, %v560
      %594 = vst.msk [vmem:[#allocation3 + $0x48] sm:$0xf] %vm575, %v561
      %595 = vst.msk [vmem:[#allocation3 + $0x4c] sm:$0xf] %vm575, %v562
      %596 = vst.msk [vmem:[#allocation3 + $0x50] sm:$0xf] %vm575, %v563
      %597 = vst.msk [vmem:[#allocation3 + $0x54] sm:$0xf] %vm575, %v564
      %598 = vst.msk [vmem:[#allocation3 + $0x58] sm:$0xf] %vm575, %v565
      %599 = vst.msk [vmem:[#allocation3 + $0x5c] sm:$0xf] %vm575, %v566
      %600 = vst.msk [vmem:[#allocation3 + $0x60] sm:$0xf] %vm575, %v567
      %601 = vst.msk [vmem:[#allocation3 + $0x64] sm:$0xf] %vm575, %v568
      %602 = vst.msk [vmem:[#allocation3 + $0x68] sm:$0xf] %vm575, %v569
      %603 = vst.msk [vmem:[#allocation3 + $0x6c] sm:$0xf] %vm575, %v570
      %604 = vst.msk [vmem:[#allocation3 + $0x70] sm:$0xf] %vm575, %v571
      %605 = vst.msk [vmem:[#allocation3 + $0x74] sm:$0xf] %vm575, %v572
      %606 = vst.msk [vmem:[#allocation3 + $0x78] sm:$0xf] %vm575, %v573
      %607 = vst.msk [vmem:[#allocation3 + $0x7c] sm:$0xf] %vm575, %v574
      %vm656 = vcmask 1046528
      %v657 = vrot.slane %v489, 1
      %v658 = vrot.slane %v490, 1
      %v659 = vsel %vm656, %v657, %v658
      %v660 = vrot.slane %v491, 1
      %v661 = vsel %vm656, %v658, %v660
      %v662 = vrot.slane %v492, 1
      %v663 = vrot.slane %v493, 1
      %v664 = vsel %vm656, %v662, %v663
      %v665 = vrot.slane %v494, 1
      %v666 = vsel %vm656, %v663, %v665
      %v667 = vrot.slane %v495, 1
      %v668 = vrot.slane %v496, 1
      %v669 = vsel %vm656, %v667, %v668
      %v670 = vrot.slane %v497, 1
      %v671 = vsel %vm656, %v668, %v670
      %v672 = vrot.slane %v498, 1
      %v673 = vrot.slane %v499, 1
      %v674 = vsel %vm656, %v672, %v673
      %v675 = vrot.slane %v500, 1
      %v676 = vsel %vm656, %v673, %v675
      %v677 = vrot.slane %v501, 1
      %v678 = vrot.slane %v502, 1
      %v679 = vsel %vm656, %v677, %v678
      %v680 = vrot.slane %v503, 1
      %v681 = vsel %vm656, %v678, %v680
      %v682 = vrot.slane %v504, 1
      %v683 = vrot.slane %v505, 1
      %v684 = vsel %vm656, %v682, %v683
      %v685 = vrot.slane %v506, 1
      %v686 = vsel %vm656, %v683, %v685
      %v687 = vrot.slane %v507, 1
      %v688 = vrot.slane %v508, 1
      %v689 = vsel %vm656, %v687, %v688
      %v690 = vrot.slane %v509, 1
      %v691 = vsel %vm656, %v688, %v690
      %v692 = vrot.slane %v510, 1
      %v693 = vrot.slane %v511, 1
      %v694 = vsel %vm656, %v692, %v693
      %v695 = vrot.slane %v512, 1
      %v696 = vsel %vm656, %v693, %v695
      %v697 = vrot.slane %v513, 1
      %v698 = vrot.slane %v514, 1
      %v699 = vsel %vm656, %v697, %v698
      %v700 = vrot.slane %v515, 1
      %v701 = vsel %vm656, %v698, %v700
      %v702 = vrot.slane %v516, 1
      %v703 = vrot.slane %v517, 1
      %v704 = vsel %vm656, %v702, %v703
      %v705 = vrot.slane %v518, 1
      %v706 = vsel %vm656, %v703, %v705
      %v707 = vrot.slane %v519, 1
      %v708 = vrot.slane %v520, 1
      %v709 = vsel %vm656, %v707, %v708
      %v710 = vrot.slane %v521, 1
      %v711 = vsel %vm656, %v708, %v710
      %v712 = vrot.slane %v522, 1
      %v713 = vrot.slane %v523, 1
      %v714 = vsel %vm656, %v712, %v713
      %v715 = vrot.slane %v524, 1
      %v716 = vsel %vm656, %v713, %v715
      %v717 = vrot.slane %v525, 1
      %v718 = vrot.slane %v526, 1
      %v719 = vsel %vm656, %v717, %v718
      %v720 = vrot.slane %v527, 1
      %v721 = vsel %vm656, %v718, %v720
      %v722 = vrot.slane %v528, 1
      %v723 = vrot.slane %v529, 1
      %v724 = vsel %vm656, %v722, %v723
      %v725 = vrot.slane %v530, 1
      %v726 = vsel %vm656, %v723, %v725
      %v727 = vrot.slane %v531, 1
      %v728 = vrot.slane %v532, 1
      %v729 = vsel %vm656, %v727, %v728
      %v730 = vrot.slane %v533, 1
      %v731 = vsel %vm656, %v728, %v730
      %v732 = vrot.slane %v534, 1
      %v733 = vrot.slane %v535, 1
      %v734 = vsel %vm656, %v732, %v733
      %v735 = vrot.slane %v536, 1
      %v736 = vsel %vm656, %v733, %v735
      %v769 = vpack.c.bf16 %v659, %v659
      %v770 = vpack.c.bf16 %v661, %v661
      %v771 = vpack.c.bf16 %v664, %v664
      %v772 = vpack.c.bf16 %v666, %v666
      %v773 = vpack.c.bf16 %v669, %v669
      %v774 = vpack.c.bf16 %v671, %v671
      %v775 = vpack.c.bf16 %v674, %v674
      %v776 = vpack.c.bf16 %v676, %v676
      %v777 = vpack.c.bf16 %v679, %v679
      %v778 = vpack.c.bf16 %v681, %v681
      %v779 = vpack.c.bf16 %v684, %v684
      %v780 = vpack.c.bf16 %v686, %v686
      %v781 = vpack.c.bf16 %v689, %v689
      %v782 = vpack.c.bf16 %v691, %v691
      %v783 = vpack.c.bf16 %v694, %v694
      %v784 = vpack.c.bf16 %v696, %v696
      %v785 = vpack.c.bf16 %v699, %v699
      %v786 = vpack.c.bf16 %v701, %v701
      %v787 = vpack.c.bf16 %v704, %v704
      %v788 = vpack.c.bf16 %v706, %v706
      %v789 = vpack.c.bf16 %v709, %v709
      %v790 = vpack.c.bf16 %v711, %v711
      %v791 = vpack.c.bf16 %v714, %v714
      %v792 = vpack.c.bf16 %v716, %v716
      %v793 = vpack.c.bf16 %v719, %v719
      %v794 = vpack.c.bf16 %v721, %v721
      %v795 = vpack.c.bf16 %v724, %v724
      %v796 = vpack.c.bf16 %v726, %v726
      %v797 = vpack.c.bf16 %v729, %v729
      %v798 = vpack.c.bf16 %v731, %v731
      %v799 = vpack.c.bf16 %v734, %v734
      %v800 = vpack.c.bf16 %v736, %v736
      %833 = vrot.lane.b32.xlu0 %v769, 8
      %v834 = vpop.permute.xlu0 %833
      %835 = vrot.lane.b32.xlu0 %v770, 8
      %v836 = vpop.permute.xlu0 %835
      %837 = vrot.lane.b32.xlu0 %v771, 8
      %v838 = vpop.permute.xlu0 %837
      %839 = vrot.lane.b32.xlu0 %v772, 8
      %v840 = vpop.permute.xlu0 %839
      %841 = vrot.lane.b32.xlu0 %v773, 8
      %v842 = vpop.permute.xlu0 %841
      %843 = vrot.lane.b32.xlu0 %v774, 8
      %v844 = vpop.permute.xlu0 %843
      %845 = vrot.lane.b32.xlu0 %v775, 8
      %v846 = vpop.permute.xlu0 %845
      %847 = vrot.lane.b32.xlu0 %v776, 8
      %v848 = vpop.permute.xlu0 %847
      %849 = vrot.lane.b32.xlu0 %v777, 8
      %v850 = vpop.permute.xlu0 %849
      %851 = vrot.lane.b32.xlu0 %v778, 8
      %v852 = vpop.permute.xlu0 %851
      %853 = vrot.lane.b32.xlu0 %v779, 8
      %v854 = vpop.permute.xlu0 %853
      %855 = vrot.lane.b32.xlu0 %v780, 8
      %v856 = vpop.permute.xlu0 %855
      %857 = vrot.lane.b32.xlu0 %v781, 8
      %v858 = vpop.permute.xlu0 %857
      %859 = vrot.lane.b32.xlu0 %v782, 8
      %v860 = vpop.permute.xlu0 %859
      %861 = vrot.lane.b32.xlu0 %v783, 8
      %v862 = vpop.permute.xlu0 %861
      %863 = vrot.lane.b32.xlu0 %v784, 8
      %v864 = vpop.permute.xlu0 %863
      %865 = vrot.lane.b32.xlu0 %v785, 8
      %v866 = vpop.permute.xlu0 %865
      %867 = vrot.lane.b32.xlu0 %v786, 8
      %v868 = vpop.permute.xlu0 %867
      %869 = vrot.lane.b32.xlu0 %v787, 8
      %v870 = vpop.permute.xlu0 %869
      %871 = vrot.lane.b32.xlu0 %v788, 8
      %v872 = vpop.permute.xlu0 %871
      %873 = vrot.lane.b32.xlu0 %v789, 8
      %v874 = vpop.permute.xlu0 %873
      %875 = vrot.lane.b32.xlu0 %v790, 8
      %v876 = vpop.permute.xlu0 %875
      %877 = vrot.lane.b32.xlu0 %v791, 8
      %v878 = vpop.permute.xlu0 %877
      %879 = vrot.lane.b32.xlu0 %v792, 8
      %v880 = vpop.permute.xlu0 %879
      %881 = vrot.lane.b32.xlu0 %v793, 8
      %v882 = vpop.permute.xlu0 %881
      %883 = vrot.lane.b32.xlu0 %v794, 8
      %v884 = vpop.permute.xlu0 %883
      %885 = vrot.lane.b32.xlu0 %v795, 8
      %v886 = vpop.permute.xlu0 %885
      %887 = vrot.lane.b32.xlu0 %v796, 8
      %v888 = vpop.permute.xlu0 %887
      %889 = vrot.lane.b32.xlu0 %v797, 8
      %v890 = vpop.permute.xlu0 %889
      %891 = vrot.lane.b32.xlu0 %v798, 8
      %v892 = vpop.permute.xlu0 %891
      %893 = vrot.lane.b32.xlu0 %v799, 8
      %v894 = vpop.permute.xlu0 %893
      %895 = vrot.lane.b32.xlu0 %v800, 8
      %v896 = vpop.permute.xlu0 %895
      %vm929 = vcmask 126016
      %930 = vst.msk [vmem:[#allocation3] sm:$0xf] %vm929, %v834
      %931 = vst.msk [vmem:[#allocation3 + $0x4] sm:$0xf] %vm929, %v836
      %932 = vst.msk [vmem:[#allocation3 + $0x8] sm:$0xf] %vm929, %v838
      %933 = vst.msk [vmem:[#allocation3 + $0xc] sm:$0xf] %vm929, %v840
      %934 = vst.msk [vmem:[#allocation3 + $0x10] sm:$0xf] %vm929, %v842
      %935 = vst.msk [vmem:[#allocation3 + $0x14] sm:$0xf] %vm929, %v844
      %936 = vst.msk [vmem:[#allocation3 + $0x18] sm:$0xf] %vm929, %v846
      %937 = vst.msk [vmem:[#allocation3 + $0x1c] sm:$0xf] %vm929, %v848
      %938 = vst.msk [vmem:[#allocation3 + $0x20] sm:$0xf] %vm929, %v850
      %939 = vst.msk [vmem:[#allocation3 + $0x24] sm:$0xf] %vm929, %v852
      %940 = vst.msk [vmem:[#allocation3 + $0x28] sm:$0xf] %vm929, %v854
      %941 = vst.msk [vmem:[#allocation3 + $0x2c] sm:$0xf] %vm929, %v856
      %942 = vst.msk [vmem:[#allocation3 + $0x30] sm:$0xf] %vm929, %v858
      %943 = vst.msk [vmem:[#allocation3 + $0x34] sm:$0xf] %vm929, %v860
      %944 = vst.msk [vmem:[#allocation3 + $0x38] sm:$0xf] %vm929, %v862
      %945 = vst.msk [vmem:[#allocation3 + $0x3c] sm:$0xf] %vm929, %v864
      %946 = vst.msk [vmem:[#allocation3 + $0x40] sm:$0xf] %vm929, %v866
      %947 = vst.msk [vmem:[#allocation3 + $0x44] sm:$0xf] %vm929, %v868
      %948 = vst.msk [vmem:[#allocation3 + $0x48] sm:$0xf] %vm929, %v870
      %949 = vst.msk [vmem:[#allocation3 + $0x4c] sm:$0xf] %vm929, %v872
      %950 = vst.msk [vmem:[#allocation3 + $0x50] sm:$0xf] %vm929, %v874
      %951 = vst.msk [vmem:[#allocation3 + $0x54] sm:$0xf] %vm929, %v876
      %952 = vst.msk [vmem:[#allocation3 + $0x58] sm:$0xf] %vm929, %v878
      %953 = vst.msk [vmem:[#allocation3 + $0x5c] sm:$0xf] %vm929, %v880
      %954 = vst.msk [vmem:[#allocation3 + $0x60] sm:$0xf] %vm929, %v882
      %955 = vst.msk [vmem:[#allocation3 + $0x64] sm:$0xf] %vm929, %v884
      %956 = vst.msk [vmem:[#allocation3 + $0x68] sm:$0xf] %vm929, %v886
      %957 = vst.msk [vmem:[#allocation3 + $0x6c] sm:$0xf] %vm929, %v888
      %958 = vst.msk [vmem:[#allocation3 + $0x70] sm:$0xf] %vm929, %v890
      %959 = vst.msk [vmem:[#allocation3 + $0x74] sm:$0xf] %vm929, %v892
      %960 = vst.msk [vmem:[#allocation3 + $0x78] sm:$0xf] %vm929, %v894
      %961 = vst.msk [vmem:[#allocation3 + $0x7c] sm:$0xf] %vm929, %v896
      %vm962 = vcmask 1045504
      %v963 = vrot.slane %v489, 2
      %v964 = vrot.slane %v490, 2
      %v965 = vsel %vm962, %v963, %v964
      %v966 = vrot.slane %v491, 2
      %v967 = vsel %vm962, %v964, %v966
      %v968 = vrot.slane %v492, 2
      %v969 = vrot.slane %v493, 2
      %v970 = vsel %vm962, %v968, %v969
      %v971 = vrot.slane %v494, 2
      %v972 = vsel %vm962, %v969, %v971
      %v973 = vrot.slane %v495, 2
      %v974 = vrot.slane %v496, 2
      %v975 = vsel %vm962, %v973, %v974
      %v976 = vrot.slane %v497, 2
      %v977 = vsel %vm962, %v974, %v976
      %v978 = vrot.slane %v498, 2
      %v979 = vrot.slane %v499, 2
      %v980 = vsel %vm962, %v978, %v979
      %v981 = vrot.slane %v500, 2
      %v982 = vsel %vm962, %v979, %v981
      %v983 = vrot.slane %v501, 2
      %v984 = vrot.slane %v502, 2
      %v985 = vsel %vm962, %v983, %v984
      %v986 = vrot.slane %v503, 2
      %v987 = vsel %vm962, %v984, %v986
      %v988 = vrot.slane %v504, 2
      %v989 = vrot.slane %v505, 2
      %v990 = vsel %vm962, %v988, %v989
      %v991 = vrot.slane %v506, 2
      %v992 = vsel %vm962, %v989, %v991
      %v993 = vrot.slane %v507, 2
      %v994 = vrot.slane %v508, 2
      %v995 = vsel %vm962, %v993, %v994
      %v996 = vrot.slane %v509, 2
      %v997 = vsel %vm962, %v994, %v996
      %v998 = vrot.slane %v510, 2
      %v999 = vrot.slane %v511, 2
      %v1000 = vsel %vm962, %v998, %v999
      %v1001 = vrot.slane %v512, 2
      %v1002 = vsel %vm962, %v999, %v1001
      %v1003 = vrot.slane %v513, 2
      %v1004 = vrot.slane %v514, 2
      %v1005 = vsel %vm962, %v1003, %v1004
      %v1006 = vrot.slane %v515, 2
      %v1007 = vsel %vm962, %v1004, %v1006
      %v1008 = vrot.slane %v516, 2
      %v1009 = vrot.slane %v517, 2
      %v1010 = vsel %vm962, %v1008, %v1009
      %v1011 = vrot.slane %v518, 2
      %v1012 = vsel %vm962, %v1009, %v1011
      %v1013 = vrot.slane %v519, 2
      %v1014 = vrot.slane %v520, 2
      %v1015 = vsel %vm962, %v1013, %v1014
      %v1016 = vrot.slane %v521, 2
      %v1017 = vsel %vm962, %v1014, %v1016
      %v1018 = vrot.slane %v522, 2
      %v1019 = vrot.slane %v523, 2
      %v1020 = vsel %vm962, %v1018, %v1019
      %v1021 = vrot.slane %v524, 2
      %v1022 = vsel %vm962, %v1019, %v1021
      %v1023 = vrot.slane %v525, 2
      %v1024 = vrot.slane %v526, 2
      %v1025 = vsel %vm962, %v1023, %v1024
      %v1026 = vrot.slane %v527, 2
      %v1027 = vsel %vm962, %v1024, %v1026
      %v1028 = vrot.slane %v528, 2
      %v1029 = vrot.slane %v529, 2
      %v1030 = vsel %vm962, %v1028, %v1029
      %v1031 = vrot.slane %v530, 2
      %v1032 = vsel %vm962, %v1029, %v1031
      %v1033 = vrot.slane %v531, 2
      %v1034 = vrot.slane %v532, 2
      %v1035 = vsel %vm962, %v1033, %v1034
      %v1036 = vrot.slane %v533, 2
      %v1037 = vsel %vm962, %v1034, %v1036
      %v1038 = vrot.slane %v534, 2
      %v1039 = vrot.slane %v535, 2
      %v1040 = vsel %vm962, %v1038, %v1039
      %v1041 = vrot.slane %v536, 2
      %v1042 = vsel %vm962, %v1039, %v1041
      %v1075 = vpack.c.bf16 %v965, %v965
      %v1076 = vpack.c.bf16 %v967, %v967
      %v1077 = vpack.c.bf16 %v970, %v970
      %v1078 = vpack.c.bf16 %v972, %v972
      %v1079 = vpack.c.bf16 %v975, %v975
      %v1080 = vpack.c.bf16 %v977, %v977
      %v1081 = vpack.c.bf16 %v980, %v980
      %v1082 = vpack.c.bf16 %v982, %v982
      %v1083 = vpack.c.bf16 %v985, %v985
      %v1084 = vpack.c.bf16 %v987, %v987
      %v1085 = vpack.c.bf16 %v990, %v990
      %v1086 = vpack.c.bf16 %v992, %v992
      %v1087 = vpack.c.bf16 %v995, %v995
      %v1088 = vpack.c.bf16 %v997, %v997
      %v1089 = vpack.c.bf16 %v1000, %v1000
      %v1090 = vpack.c.bf16 %v1002, %v1002
      %v1091 = vpack.c.bf16 %v1005, %v1005
      %v1092 = vpack.c.bf16 %v1007, %v1007
      %v1093 = vpack.c.bf16 %v1010, %v1010
      %v1094 = vpack.c.bf16 %v1012, %v1012
      %v1095 = vpack.c.bf16 %v1015, %v1015
      %v1096 = vpack.c.bf16 %v1017, %v1017
      %v1097 = vpack.c.bf16 %v1020, %v1020
      %v1098 = vpack.c.bf16 %v1022, %v1022
      %v1099 = vpack.c.bf16 %v1025, %v1025
      %v1100 = vpack.c.bf16 %v1027, %v1027
      %v1101 = vpack.c.bf16 %v1030, %v1030
      %v1102 = vpack.c.bf16 %v1032, %v1032
      %v1103 = vpack.c.bf16 %v1035, %v1035
      %v1104 = vpack.c.bf16 %v1037, %v1037
      %v1105 = vpack.c.bf16 %v1040, %v1040
      %v1106 = vpack.c.bf16 %v1042, %v1042
      %1139 = vrot.lane.b32.xlu0 %v1075, 16
      %v1140 = vpop.permute.xlu0 %1139
      %1141 = vrot.lane.b32.xlu0 %v1076, 16
      %v1142 = vpop.permute.xlu0 %1141
      %1143 = vrot.lane.b32.xlu0 %v1077, 16
      %v1144 = vpop.permute.xlu0 %1143
      %1145 = vrot.lane.b32.xlu0 %v1078, 16
      %v1146 = vpop.permute.xlu0 %1145
      %1147 = vrot.lane.b32.xlu0 %v1079, 16
      %v1148 = vpop.permute.xlu0 %1147
      %1149 = vrot.lane.b32.xlu0 %v1080, 16
      %v1150 = vpop.permute.xlu0 %1149
      %1151 = vrot.lane.b32.xlu0 %v1081, 16
      %v1152 = vpop.permute.xlu0 %1151
      %1153 = vrot.lane.b32.xlu0 %v1082, 16
      %v1154 = vpop.permute.xlu0 %1153
      %1155 = vrot.lane.b32.xlu0 %v1083, 16
      %v1156 = vpop.permute.xlu0 %1155
      %1157 = vrot.lane.b32.xlu0 %v1084, 16
      %v1158 = vpop.permute.xlu0 %1157
      %1159 = vrot.lane.b32.xlu0 %v1085, 16
      %v1160 = vpop.permute.xlu0 %1159
      %1161 = vrot.lane.b32.xlu0 %v1086, 16
      %v1162 = vpop.permute.xlu0 %1161
      %1163 = vrot.lane.b32.xlu0 %v1087, 16
      %v1164 = vpop.permute.xlu0 %1163
      %1165 = vrot.lane.b32.xlu0 %v1088, 16
      %v1166 = vpop.permute.xlu0 %1165
      %1167 = vrot.lane.b32.xlu0 %v1089, 16
      %v1168 = vpop.permute.xlu0 %1167
      %1169 = vrot.lane.b32.xlu0 %v1090, 16
      %v1170 = vpop.permute.xlu0 %1169
      %1171 = vrot.lane.b32.xlu0 %v1091, 16
      %v1172 = vpop.permute.xlu0 %1171
      %1173 = vrot.lane.b32.xlu0 %v1092, 16
      %v1174 = vpop.permute.xlu0 %1173
      %1175 = vrot.lane.b32.xlu0 %v1093, 16
      %v1176 = vpop.permute.xlu0 %1175
      %1177 = vrot.lane.b32.xlu0 %v1094, 16
      %v1178 = vpop.permute.xlu0 %1177
      %1179 = vrot.lane.b32.xlu0 %v1095, 16
      %v1180 = vpop.permute.xlu0 %1179
      %1181 = vrot.lane.b32.xlu0 %v1096, 16
      %v1182 = vpop.permute.xlu0 %1181
      %1183 = vrot.lane.b32.xlu0 %v1097, 16
      %v1184 = vpop.permute.xlu0 %1183
      %1185 = vrot.lane.b32.xlu0 %v1098, 16
      %v1186 = vpop.permute.xlu0 %1185
      %1187 = vrot.lane.b32.xlu0 %v1099, 16
      %v1188 = vpop.permute.xlu0 %1187
      %1189 = vrot.lane.b32.xlu0 %v1100, 16
      %v1190 = vpop.permute.xlu0 %1189
      %1191 = vrot.lane.b32.xlu0 %v1101, 16
      %v1192 = vpop.permute.xlu0 %1191
      %1193 = vrot.lane.b32.xlu0 %v1102, 16
      %v1194 = vpop.permute.xlu0 %1193
      %1195 = vrot.lane.b32.xlu0 %v1103, 16
      %v1196 = vpop.permute.xlu0 %1195
      %1197 = vrot.lane.b32.xlu0 %v1104, 16
      %v1198 = vpop.permute.xlu0 %1197
      %1199 = vrot.lane.b32.xlu0 %v1105, 16
      %v1200 = vpop.permute.xlu0 %1199
      %1201 = vrot.lane.b32.xlu0 %v1106, 16
      %v1202 = vpop.permute.xlu0 %1201
      %vm1235 = vcmask 191616
      %1236 = vst.msk [vmem:[#allocation3] sm:$0xf] %vm1235, %v1140
      %1237 = vst.msk [vmem:[#allocation3 + $0x4] sm:$0xf] %vm1235, %v1142
      %1238 = vst.msk [vmem:[#allocation3 + $0x8] sm:$0xf] %vm1235, %v1144
      %1239 = vst.msk [vmem:[#allocation3 + $0xc] sm:$0xf] %vm1235, %v1146
      %1240 = vst.msk [vmem:[#allocation3 + $0x10] sm:$0xf] %vm1235, %v1148
      %1241 = vst.msk [vmem:[#allocation3 + $0x14] sm:$0xf] %vm1235, %v1150
      %1242 = vst.msk [vmem:[#allocation3 + $0x18] sm:$0xf] %vm1235, %v1152
      %1243 = vst.msk [vmem:[#allocation3 + $0x1c] sm:$0xf] %vm1235, %v1154
      %1244 = vst.msk [vmem:[#allocation3 + $0x20] sm:$0xf] %vm1235, %v1156
      %1245 = vst.msk [vmem:[#allocation3 + $0x24] sm:$0xf] %vm1235, %v1158
      %1246 = vst.msk [vmem:[#allocation3 + $0x28] sm:$0xf] %vm1235, %v1160
      %1247 = vst.msk [vmem:[#allocation3 + $0x2c] sm:$0xf] %vm1235, %v1162
      %1248 = vst.msk [vmem:[#allocation3 + $0x30] sm:$0xf] %vm1235, %v1164
      %1249 = vst.msk [vmem:[#allocation3 + $0x34] sm:$0xf] %vm1235, %v1166
      %1250 = vst.msk [vmem:[#allocation3 + $0x38] sm:$0xf] %vm1235, %v1168
      %1251 = vst.msk [vmem:[#allocation3 + $0x3c] sm:$0xf] %vm1235, %v1170
      %1252 = vst.msk [vmem:[#allocation3 + $0x40] sm:$0xf] %vm1235, %v1172
      %1253 = vst.msk [vmem:[#allocation3 + $0x44] sm:$0xf] %vm1235, %v1174
      %1254 = vst.msk [vmem:[#allocation3 + $0x48] sm:$0xf] %vm1235, %v1176
      %1255 = vst.msk [vmem:[#allocation3 + $0x4c] sm:$0xf] %vm1235, %v1178
      %1256 = vst.msk [vmem:[#allocation3 + $0x50] sm:$0xf] %vm1235, %v1180
      %1257 = vst.msk [vmem:[#allocation3 + $0x54] sm:$0xf] %vm1235, %v1182
      %1258 = vst.msk [vmem:[#allocation3 + $0x58] sm:$0xf] %vm1235, %v1184
      %1259 = vst.msk [vmem:[#allocation3 + $0x5c] sm:$0xf] %vm1235, %v1186
      %1260 = vst.msk [vmem:[#allocation3 + $0x60] sm:$0xf] %vm1235, %v1188
      %1261 = vst.msk [vmem:[#allocation3 + $0x64] sm:$0xf] %vm1235, %v1190
      %1262 = vst.msk [vmem:[#allocation3 + $0x68] sm:$0xf] %vm1235, %v1192
      %1263 = vst.msk [vmem:[#allocation3 + $0x6c] sm:$0xf] %vm1235, %v1194
      %1264 = vst.msk [vmem:[#allocation3 + $0x70] sm:$0xf] %vm1235, %v1196
      %1265 = vst.msk [vmem:[#allocation3 + $0x74] sm:$0xf] %vm1235, %v1198
      %1266 = vst.msk [vmem:[#allocation3 + $0x78] sm:$0xf] %vm1235, %v1200
      %1267 = vst.msk [vmem:[#allocation3 + $0x7c] sm:$0xf] %vm1235, %v1202
      %v1268 = vpack.c.bf16 %v537, %v537
      %v1269 = vpack.c.bf16 %v538, %v538
      %1302 = vrot.lane.b32.xlu0 %v545, 24
      %v1303 = vpop.permute.xlu0 %1302
      %1304 = vrot.lane.b32.xlu0 %v546, 24
      %v1305 = vpop.permute.xlu0 %1304
      %1306 = vrot.lane.b32.xlu0 %v547, 24
      %v1307 = vpop.permute.xlu0 %1306
      %1308 = vrot.lane.b32.xlu0 %v548, 24
      %v1309 = vpop.permute.xlu0 %1308
      %1310 = vrot.lane.b32.xlu0 %v549, 24
      %v1311 = vpop.permute.xlu0 %1310
      %1312 = vrot.lane.b32.xlu0 %v550, 24
      %v1313 = vpop.permute.xlu0 %1312
      %1314 = vrot.lane.b32.xlu0 %v551, 24
      %v1315 = vpop.permute.xlu0 %1314
      %1316 = vrot.lane.b32.xlu0 %v552, 24
      %v1317 = vpop.permute.xlu0 %1316
      %1318 = vrot.lane.b32.xlu0 %v553, 24
      %v1319 = vpop.permute.xlu0 %1318
      %1320 = vrot.lane.b32.xlu0 %v554, 24
      %v1321 = vpop.permute.xlu0 %1320
      %1322 = vrot.lane.b32.xlu0 %v555, 24
      %v1323 = vpop.permute.xlu0 %1322
      %1324 = vrot.lane.b32.xlu0 %v556, 24
      %v1325 = vpop.permute.xlu0 %1324
      %1326 = vrot.lane.b32.xlu0 %v557, 24
      %v1327 = vpop.permute.xlu0 %1326
      %1328 = vrot.lane.b32.xlu0 %v558, 24
      %v1329 = vpop.permute.xlu0 %1328
      %1330 = vrot.lane.b32.xlu0 %v559, 24
      %v1331 = vpop.permute.xlu0 %1330
      %1332 = vrot.lane.b32.xlu0 %v560, 24
      %v1333 = vpop.permute.xlu0 %1332
      %1334 = vrot.lane.b32.xlu0 %v561, 24
      %v1335 = vpop.permute.xlu0 %1334
      %1336 = vrot.lane.b32.xlu0 %v562, 24
      %v1337 = vpop.permute.xlu0 %1336
      %1338 = vrot.lane.b32.xlu0 %v563, 24
      %v1339 = vpop.permute.xlu0 %1338
      %1340 = vrot.lane.b32.xlu0 %v564, 24
      %v1341 = vpop.permute.xlu0 %1340
      %1342 = vrot.lane.b32.xlu0 %v565, 24
      %v1343 = vpop.permute.xlu0 %1342
      %1344 = vrot.lane.b32.xlu0 %v566, 24
      %v1345 = vpop.permute.xlu0 %1344
      %1346 = vrot.lane.b32.xlu0 %v567, 24
      %v1347 = vpop.permute.xlu0 %1346
      %1348 = vrot.lane.b32.xlu0 %v568, 24
      %v1349 = vpop.permute.xlu0 %1348
      %1350 = vrot.lane.b32.xlu0 %v569, 24
      %v1351 = vpop.permute.xlu0 %1350
      %1352 = vrot.lane.b32.xlu0 %v570, 24
      %v1353 = vpop.permute.xlu0 %1352
      %1354 = vrot.lane.b32.xlu0 %v571, 24
      %v1355 = vpop.permute.xlu0 %1354
      %1356 = vrot.lane.b32.xlu0 %v572, 24
      %v1357 = vpop.permute.xlu0 %1356
      %1358 = vrot.lane.b32.xlu0 %v573, 24
      %v1359 = vpop.permute.xlu0 %1358
      %1360 = vrot.lane.b32.xlu0 %v574, 24
      %v1361 = vpop.permute.xlu0 %1360
      %1362 = vrot.lane.b32.xlu0 %v1268, 24
      %v1363 = vpop.permute.xlu0 %1362
      %1364 = vrot.lane.b32.xlu0 %v1269, 24
      %v1365 = vpop.permute.xlu0 %1364
      %vm1398 = vcmask 257216
      %1399 = vst.msk [vmem:[#allocation3] sm:$0xf] %vm1398, %v1303
      %1400 = vst.msk [vmem:[#allocation3 + $0x4] sm:$0xf] %vm1398, %v1305
      %1401 = vst.msk [vmem:[#allocation3 + $0x8] sm:$0xf] %vm1398, %v1307
      %1402 = vst.msk [vmem:[#allocation3 + $0xc] sm:$0xf] %vm1398, %v1309
      %1403 = vst.msk [vmem:[#allocation3 + $0x10] sm:$0xf] %vm1398, %v1311
      %1404 = vst.msk [vmem:[#allocation3 + $0x14] sm:$0xf] %vm1398, %v1313
      %1405 = vst.msk [vmem:[#allocation3 + $0x18] sm:$0xf] %vm1398, %v1315
      %1406 = vst.msk [vmem:[#allocation3 + $0x1c] sm:$0xf] %vm1398, %v1317
      %1407 = vst.msk [vmem:[#allocation3 + $0x20] sm:$0xf] %vm1398, %v1319
      %1408 = vst.msk [vmem:[#allocation3 + $0x24] sm:$0xf] %vm1398, %v1321
      %1409 = vst.msk [vmem:[#allocation3 + $0x28] sm:$0xf] %vm1398, %v1323
      %1410 = vst.msk [vmem:[#allocation3 + $0x2c] sm:$0xf] %vm1398, %v1325
      %1411 = vst.msk [vmem:[#allocation3 + $0x30] sm:$0xf] %vm1398, %v1327
      %1412 = vst.msk [vmem:[#allocation3 + $0x34] sm:$0xf] %vm1398, %v1329
      %1413 = vst.msk [vmem:[#allocation3 + $0x38] sm:$0xf] %vm1398, %v1331
      %1414 = vst.msk [vmem:[#allocation3 + $0x3c] sm:$0xf] %vm1398, %v1333
      %1415 = vst.msk [vmem:[#allocation3 + $0x40] sm:$0xf] %vm1398, %v1335
      %1416 = vst.msk [vmem:[#allocation3 + $0x44] sm:$0xf] %vm1398, %v1337
      %1417 = vst.msk [vmem:[#allocation3 + $0x48] sm:$0xf] %vm1398, %v1339
      %1418 = vst.msk [vmem:[#allocation3 + $0x4c] sm:$0xf] %vm1398, %v1341
      %1419 = vst.msk [vmem:[#allocation3 + $0x50] sm:$0xf] %vm1398, %v1343
      %1420 = vst.msk [vmem:[#allocation3 + $0x54] sm:$0xf] %vm1398, %v1345
      %1421 = vst.msk [vmem:[#allocation3 + $0x58] sm:$0xf] %vm1398, %v1347
      %1422 = vst.msk [vmem:[#allocation3 + $0x5c] sm:$0xf] %vm1398, %v1349
      %1423 = vst.msk [vmem:[#allocation3 + $0x60] sm:$0xf] %vm1398, %v1351
      %1424 = vst.msk [vmem:[#allocation3 + $0x64] sm:$0xf] %vm1398, %v1353
      %1425 = vst.msk [vmem:[#allocation3 + $0x68] sm:$0xf] %vm1398, %v1355
      %1426 = vst.msk [vmem:[#allocation3 + $0x6c] sm:$0xf] %vm1398, %v1357
      %1427 = vst.msk [vmem:[#allocation3 + $0x70] sm:$0xf] %vm1398, %v1359
      %1428 = vst.msk [vmem:[#allocation3 + $0x74] sm:$0xf] %vm1398, %v1361
      %1429 = vst.msk [vmem:[#allocation3 + $0x78] sm:$0xf] %vm1398, %v1363
      %1430 = vst.msk [vmem:[#allocation3 + $0x7c] sm:$0xf] %vm1398, %v1365
      %v1434 = vrot.slane %v537, 1
      %v1435 = vrot.slane %v538, 1
      %v1436 = vsel %vm656, %v1434, %v1435
      %v1437 = vrot.slane %v539, 1
      %v1438 = vsel %vm656, %v1435, %v1437
      %v1441 = vpack.c.bf16 %v1436, %v1436
      %v1442 = vpack.c.bf16 %v1438, %v1438
      %1445 = vrot.lane.b32.xlu0 %v771, 32
      %v1446 = vpop.permute.xlu0 %1445
      %1447 = vrot.lane.b32.xlu0 %v772, 32
      %v1448 = vpop.permute.xlu0 %1447
      %1449 = vrot.lane.b32.xlu0 %v773, 32
      %v1450 = vpop.permute.xlu0 %1449
      %1451 = vrot.lane.b32.xlu0 %v774, 32
      %v1452 = vpop.permute.xlu0 %1451
      %1453 = vrot.lane.b32.xlu0 %v775, 32
      %v1454 = vpop.permute.xlu0 %1453
      %1455 = vrot.lane.b32.xlu0 %v776, 32
      %v1456 = vpop.permute.xlu0 %1455
      %1457 = vrot.lane.b32.xlu0 %v777, 32
      %v1458 = vpop.permute.xlu0 %1457
      %1459 = vrot.lane.b32.xlu0 %v778, 32
      %v1460 = vpop.permute.xlu0 %1459
      %1461 = vrot.lane.b32.xlu0 %v779, 32
      %v1462 = vpop.permute.xlu0 %1461
      %1463 = vrot.lane.b32.xlu0 %v780, 32
      %v1464 = vpop.permute.xlu0 %1463
      %1465 = vrot.lane.b32.xlu0 %v781, 32
      %v1466 = vpop.permute.xlu0 %1465
      %1467 = vrot.lane.b32.xlu0 %v782, 32
      %v1468 = vpop.permute.xlu0 %1467
      %1469 = vrot.lane.b32.xlu0 %v783, 32
      %v1470 = vpop.permute.xlu0 %1469
      %1471 = vrot.lane.b32.xlu0 %v784, 32
      %v1472 = vpop.permute.xlu0 %1471
      %1473 = vrot.lane.b32.xlu0 %v785, 32
      %v1474 = vpop.permute.xlu0 %1473
      %1475 = vrot.lane.b32.xlu0 %v786, 32
      %v1476 = vpop.permute.xlu0 %1475
      %1477 = vrot.lane.b32.xlu0 %v787, 32
      %v1478 = vpop.permute.xlu0 %1477
      %1479 = vrot.lane.b32.xlu0 %v788, 32
      %v1480 = vpop.permute.xlu0 %1479
      %1481 = vrot.lane.b32.xlu0 %v789, 32
      %v1482 = vpop.permute.xlu0 %1481
      %1483 = vrot.lane.b32.xlu0 %v790, 32
      %v1484 = vpop.permute.xlu0 %1483
      %1485 = vrot.lane.b32.xlu0 %v791, 32
      %v1486 = vpop.permute.xlu0 %1485
      %1487 = vrot.lane.b32.xlu0 %v792, 32
      %v1488 = vpop.permute.xlu0 %1487
      %1489 = vrot.lane.b32.xlu0 %v793, 32
      %v1490 = vpop.permute.xlu0 %1489
      %1491 = vrot.lane.b32.xlu0 %v794, 32
      %v1492 = vpop.permute.xlu0 %1491
      %1493 = vrot.lane.b32.xlu0 %v795, 32
      %v1494 = vpop.permute.xlu0 %1493
      %1495 = vrot.lane.b32.xlu0 %v796, 32
      %v1496 = vpop.permute.xlu0 %1495
      %1497 = vrot.lane.b32.xlu0 %v797, 32
      %v1498 = vpop.permute.xlu0 %1497
      %1499 = vrot.lane.b32.xlu0 %v798, 32
      %v1500 = vpop.permute.xlu0 %1499
      %1501 = vrot.lane.b32.xlu0 %v799, 32
      %v1502 = vpop.permute.xlu0 %1501
      %1503 = vrot.lane.b32.xlu0 %v800, 32
      %v1504 = vpop.permute.xlu0 %1503
      %1505 = vrot.lane.b32.xlu0 %v1441, 32
      %v1506 = vpop.permute.xlu0 %1505
      %1507 = vrot.lane.b32.xlu0 %v1442, 32
      %v1508 = vpop.permute.xlu0 %1507
      %vm1541 = vcmask 322816
      %1542 = vst.msk [vmem:[#allocation3] sm:$0xf] %vm1541, %v1446
      %1543 = vst.msk [vmem:[#allocation3 + $0x4] sm:$0xf] %vm1541, %v1448
      %1544 = vst.msk [vmem:[#allocation3 + $0x8] sm:$0xf] %vm1541, %v1450
      %1545 = vst.msk [vmem:[#allocation3 + $0xc] sm:$0xf] %vm1541, %v1452
      %1546 = vst.msk [vmem:[#allocation3 + $0x10] sm:$0xf] %vm1541, %v1454
      %1547 = vst.msk [vmem:[#allocation3 + $0x14] sm:$0xf] %vm1541, %v1456
      %1548 = vst.msk [vmem:[#allocation3 + $0x18] sm:$0xf] %vm1541, %v1458
      %1549 = vst.msk [vmem:[#allocation3 + $0x1c] sm:$0xf] %vm1541, %v1460
      %1550 = vst.msk [vmem:[#allocation3 + $0x20] sm:$0xf] %vm1541, %v1462
      %1551 = vst.msk [vmem:[#allocation3 + $0x24] sm:$0xf] %vm1541, %v1464
      %1552 = vst.msk [vmem:[#allocation3 + $0x28] sm:$0xf] %vm1541, %v1466
      %1553 = vst.msk [vmem:[#allocation3 + $0x2c] sm:$0xf] %vm1541, %v1468
      %1554 = vst.msk [vmem:[#allocation3 + $0x30] sm:$0xf] %vm1541, %v1470
      %1555 = vst.msk [vmem:[#allocation3 + $0x34] sm:$0xf] %vm1541, %v1472
      %1556 = vst.msk [vmem:[#allocation3 + $0x38] sm:$0xf] %vm1541, %v1474
      %1557 = vst.msk [vmem:[#allocation3 + $0x3c] sm:$0xf] %vm1541, %v1476
      %1558 = vst.msk [vmem:[#allocation3 + $0x40] sm:$0xf] %vm1541, %v1478
      %1559 = vst.msk [vmem:[#allocation3 + $0x44] sm:$0xf] %vm1541, %v1480
      %1560 = vst.msk [vmem:[#allocation3 + $0x48] sm:$0xf] %vm1541, %v1482
      %1561 = vst.msk [vmem:[#allocation3 + $0x4c] sm:$0xf] %vm1541, %v1484
      %1562 = vst.msk [vmem:[#allocation3 + $0x50] sm:$0xf] %vm1541, %v1486
      %1563 = vst.msk [vmem:[#allocation3 + $0x54] sm:$0xf] %vm1541, %v1488
      %1564 = vst.msk [vmem:[#allocation3 + $0x58] sm:$0xf] %vm1541, %v1490
      %1565 = vst.msk [vmem:[#allocation3 + $0x5c] sm:$0xf] %vm1541, %v1492
      %1566 = vst.msk [vmem:[#allocation3 + $0x60] sm:$0xf] %vm1541, %v1494
      %1567 = vst.msk [vmem:[#allocation3 + $0x64] sm:$0xf] %vm1541, %v1496
      %1568 = vst.msk [vmem:[#allocation3 + $0x68] sm:$0xf] %vm1541, %v1498
      %1569 = vst.msk [vmem:[#allocation3 + $0x6c] sm:$0xf] %vm1541, %v1500
      %1570 = vst.msk [vmem:[#allocation3 + $0x70] sm:$0xf] %vm1541, %v1502
      %1571 = vst.msk [vmem:[#allocation3 + $0x74] sm:$0xf] %vm1541, %v1504
      %1572 = vst.msk [vmem:[#allocation3 + $0x78] sm:$0xf] %vm1541, %v1506
      %1573 = vst.msk [vmem:[#allocation3 + $0x7c] sm:$0xf] %vm1541, %v1508
      %v1574 = vrot.slane %v537, 2
      %v1575 = vrot.slane %v538, 2
      %v1576 = vsel %vm962, %v1574, %v1575
      %v1577 = vrot.slane %v539, 2
      %v1578 = vsel %vm962, %v1575, %v1577
      %v1581 = vpack.c.bf16 %v1576, %v1576
      %v1582 = vpack.c.bf16 %v1578, %v1578
      %1585 = vrot.lane.b32.xlu0 %v1077, 40
      %v1586 = vpop.permute.xlu0 %1585
      %1587 = vrot.lane.b32.xlu0 %v1078, 40
      %v1588 = vpop.permute.xlu0 %1587
      %1589 = vrot.lane.b32.xlu0 %v1079, 40
      %v1590 = vpop.permute.xlu0 %1589
      %1591 = vrot.lane.b32.xlu0 %v1080, 40
      %v1592 = vpop.permute.xlu0 %1591
      %1593 = vrot.lane.b32.xlu0 %v1081, 40
      %v1594 = vpop.permute.xlu0 %1593
      %1595 = vrot.lane.b32.xlu0 %v1082, 40
      %v1596 = vpop.permute.xlu0 %1595
      %1597 = vrot.lane.b32.xlu0 %v1083, 40
      %v1598 = vpop.permute.xlu0 %1597
      %1599 = vrot.lane.b32.xlu0 %v1084, 40
      %v1600 = vpop.permute.xlu0 %1599
      %1601 = vrot.lane.b32.xlu0 %v1085, 40
      %v1602 = vpop.permute.xlu0 %1601
      %1603 = vrot.lane.b32.xlu0 %v1086, 40
      %v1604 = vpop.permute.xlu0 %1603
      %1605 = vrot.lane.b32.xlu0 %v1087, 40
      %v1606 = vpop.permute.xlu0 %1605
      %1607 = vrot.lane.b32.xlu0 %v1088, 40
      %v1608 = vpop.permute.xlu0 %1607
      %1609 = vrot.lane.b32.xlu0 %v1089, 40
      %v1610 = vpop.permute.xlu0 %1609
      %1611 = vrot.lane.b32.xlu0 %v1090, 40
      %v1612 = vpop.permute.xlu0 %1611
      %1613 = vrot.lane.b32.xlu0 %v1091, 40
      %v1614 = vpop.permute.xlu0 %1613
      %1615 = vrot.lane.b32.xlu0 %v1092, 40
      %v1616 = vpop.permute.xlu0 %1615
      %1617 = vrot.lane.b32.xlu0 %v1093, 40
      %v1618 = vpop.permute.xlu0 %1617
      %1619 = vrot.lane.b32.xlu0 %v1094, 40
      %v1620 = vpop.permute.xlu0 %1619
      %1621 = vrot.lane.b32.xlu0 %v1095, 40
      %v1622 = vpop.permute.xlu0 %1621
      %1623 = vrot.lane.b32.xlu0 %v1096, 40
      %v1624 = vpop.permute.xlu0 %1623
      %1625 = vrot.lane.b32.xlu0 %v1097, 40
      %v1626 = vpop.permute.xlu0 %1625
      %1627 = vrot.lane.b32.xlu0 %v1098, 40
      %v1628 = vpop.permute.xlu0 %1627
      %1629 = vrot.lane.b32.xlu0 %v1099, 40
      %v1630 = vpop.permute.xlu0 %1629
      %1631 = vrot.lane.b32.xlu0 %v1100, 40
      %v1632 = vpop.permute.xlu0 %1631
      %1633 = vrot.lane.b32.xlu0 %v1101, 40
      %v1634 = vpop.permute.xlu0 %1633
      %1635 = vrot.lane.b32.xlu0 %v1102, 40
      %v1636 = vpop.permute.xlu0 %1635
      %1637 = vrot.lane.b32.xlu0 %v1103, 40
      %v1638 = vpop.permute.xlu0 %1637
      %1639 = vrot.lane.b32.xlu0 %v1104, 40
      %v1640 = vpop.permute.xlu0 %1639
      %1641 = vrot.lane.b32.xlu0 %v1105, 40
      %v1642 = vpop.permute.xlu0 %1641
      %1643 = vrot.lane.b32.xlu0 %v1106, 40
      %v1644 = vpop.permute.xlu0 %1643
      %1645 = vrot.lane.b32.xlu0 %v1581, 40
      %v1646 = vpop.permute.xlu0 %1645
      %1647 = vrot.lane.b32.xlu0 %v1582, 40
      %v1648 = vpop.permute.xlu0 %1647
      %vm1681 = vcmask 388416
      %1682 = vst.msk [vmem:[#allocation3] sm:$0xf] %vm1681, %v1586
      %1683 = vst.msk [vmem:[#allocation3 + $0x4] sm:$0xf] %vm1681, %v1588
      %1684 = vst.msk [vmem:[#allocation3 + $0x8] sm:$0xf] %vm1681, %v1590
      %1685 = vst.msk [vmem:[#allocation3 + $0xc] sm:$0xf] %vm1681, %v1592
      %1686 = vst.msk [vmem:[#allocation3 + $0x10] sm:$0xf] %vm1681, %v1594
      %1687 = vst.msk [vmem:[#allocation3 + $0x14] sm:$0xf] %vm1681, %v1596
      %1688 = vst.msk [vmem:[#allocation3 + $0x18] sm:$0xf] %vm1681, %v1598
      %1689 = vst.msk [vmem:[#allocation3 + $0x1c] sm:$0xf] %vm1681, %v1600
      %1690 = vst.msk [vmem:[#allocation3 + $0x20] sm:$0xf] %vm1681, %v1602
      %1691 = vst.msk [vmem:[#allocation3 + $0x24] sm:$0xf] %vm1681, %v1604
      %1692 = vst.msk [vmem:[#allocation3 + $0x28] sm:$0xf] %vm1681, %v1606
      %1693 = vst.msk [vmem:[#allocation3 + $0x2c] sm:$0xf] %vm1681, %v1608
      %1694 = vst.msk [vmem:[#allocation3 + $0x30] sm:$0xf] %vm1681, %v1610
      %1695 = vst.msk [vmem:[#allocation3 + $0x34] sm:$0xf] %vm1681, %v1612
      %1696 = vst.msk [vmem:[#allocation3 + $0x38] sm:$0xf] %vm1681, %v1614
      %1697 = vst.msk [vmem:[#allocation3 + $0x3c] sm:$0xf] %vm1681, %v1616
      %1698 = vst.msk [vmem:[#allocation3 + $0x40] sm:$0xf] %vm1681, %v1618
      %1699 = vst.msk [vmem:[#allocation3 + $0x44] sm:$0xf] %vm1681, %v1620
      %1700 = vst.msk [vmem:[#allocation3 + $0x48] sm:$0xf] %vm1681, %v1622
      %1701 = vst.msk [vmem:[#allocation3 + $0x4c] sm:$0xf] %vm1681, %v1624
      %1702 = vst.msk [vmem:[#allocation3 + $0x50] sm:$0xf] %vm1681, %v1626
      %1703 = vst.msk [vmem:[#allocation3 + $0x54] sm:$0xf] %vm1681, %v1628
      %1704 = vst.msk [vmem:[#allocation3 + $0x58] sm:$0xf] %vm1681, %v1630
      %1705 = vst.msk [vmem:[#allocation3 + $0x5c] sm:$0xf] %vm1681, %v1632
      %1706 = vst.msk [vmem:[#allocation3 + $0x60] sm:$0xf] %vm1681, %v1634
      %1707 = vst.msk [vmem:[#allocation3 + $0x64] sm:$0xf] %vm1681, %v1636
      %1708 = vst.msk [vmem:[#allocation3 + $0x68] sm:$0xf] %vm1681, %v1638
      %1709 = vst.msk [vmem:[#allocation3 + $0x6c] sm:$0xf] %vm1681, %v1640
      %1710 = vst.msk [vmem:[#allocation3 + $0x70] sm:$0xf] %vm1681, %v1642
      %1711 = vst.msk [vmem:[#allocation3 + $0x74] sm:$0xf] %vm1681, %v1644
      %1712 = vst.msk [vmem:[#allocation3 + $0x78] sm:$0xf] %vm1681, %v1646
      %1713 = vst.msk [vmem:[#allocation3 + $0x7c] sm:$0xf] %vm1681, %v1648
      %v1714 = vpack.c.bf16 %v540, %v540
      %v1715 = vpack.c.bf16 %v541, %v541
      %1718 = vrot.lane.b32.xlu0 %v547, 48
      %v1719 = vpop.permute.xlu0 %1718
      %1720 = vrot.lane.b32.xlu0 %v548, 48
      %v1721 = vpop.permute.xlu0 %1720
      %1722 = vrot.lane.b32.xlu0 %v549, 48
      %v1723 = vpop.permute.xlu0 %1722
      %1724 = vrot.lane.b32.xlu0 %v550, 48
      %v1725 = vpop.permute.xlu0 %1724
      %1726 = vrot.lane.b32.xlu0 %v551, 48
      %v1727 = vpop.permute.xlu0 %1726
      %1728 = vrot.lane.b32.xlu0 %v552, 48
      %v1729 = vpop.permute.xlu0 %1728
      %1730 = vrot.lane.b32.xlu0 %v553, 48
      %v1731 = vpop.permute.xlu0 %1730
      %1732 = vrot.lane.b32.xlu0 %v554, 48
      %v1733 = vpop.permute.xlu0 %1732
      %1734 = vrot.lane.b32.xlu0 %v555, 48
      %v1735 = vpop.permute.xlu0 %1734
      %1736 = vrot.lane.b32.xlu0 %v556, 48
      %v1737 = vpop.permute.xlu0 %1736
      %1738 = vrot.lane.b32.xlu0 %v557, 48
      %v1739 = vpop.permute.xlu0 %1738
      %1740 = vrot.lane.b32.xlu0 %v558, 48
      %v1741 = vpop.permute.xlu0 %1740
      %1742 = vrot.lane.b32.xlu0 %v559, 48
      %v1743 = vpop.permute.xlu0 %1742
      %1744 = vrot.lane.b32.xlu0 %v560, 48
      %v1745 = vpop.permute.xlu0 %1744
      %1746 = vrot.lane.b32.xlu0 %v561, 48
      %v1747 = vpop.permute.xlu0 %1746
      %1748 = vrot.lane.b32.xlu0 %v562, 48
      %v1749 = vpop.permute.xlu0 %1748
      %1750 = vrot.lane.b32.xlu0 %v563, 48
      %v1751 = vpop.permute.xlu0 %1750
      %1752 = vrot.lane.b32.xlu0 %v564, 48
      %v1753 = vpop.permute.xlu0 %1752
      %1754 = vrot.lane.b32.xlu0 %v565, 48
      %v1755 = vpop.permute.xlu0 %1754
      %1756 = vrot.lane.b32.xlu0 %v566, 48
      %v1757 = vpop.permute.xlu0 %1756
      %1758 = vrot.lane.b32.xlu0 %v567, 48
      %v1759 = vpop.permute.xlu0 %1758
      %1760 = vrot.lane.b32.xlu0 %v568, 48
      %v1761 = vpop.permute.xlu0 %1760
      %1762 = vrot.lane.b32.xlu0 %v569, 48
      %v1763 = vpop.permute.xlu0 %1762
      %1764 = vrot.lane.b32.xlu0 %v570, 48
      %v1765 = vpop.permute.xlu0 %1764
      %1766 = vrot.lane.b32.xlu0 %v571, 48
      %v1767 = vpop.permute.xlu0 %1766
      %1768 = vrot.lane.b32.xlu0 %v572, 48
      %v1769 = vpop.permute.xlu0 %1768
      %1770 = vrot.lane.b32.xlu0 %v573, 48
      %v1771 = vpop.permute.xlu0 %1770
      %1772 = vrot.lane.b32.xlu0 %v574, 48
      %v1773 = vpop.permute.xlu0 %1772
      %1774 = vrot.lane.b32.xlu0 %v1268, 48
      %v1775 = vpop.permute.xlu0 %1774
      %1776 = vrot.lane.b32.xlu0 %v1269, 48
      %v1777 = vpop.permute.xlu0 %1776
      %1778 = vrot.lane.b32.xlu0 %v1714, 48
      %v1779 = vpop.permute.xlu0 %1778
      %1780 = vrot.lane.b32.xlu0 %v1715, 48
      %v1781 = vpop.permute.xlu0 %1780
      %vm1814 = vcmask 454016
      %1815 = vst.msk [vmem:[#allocation3] sm:$0xf] %vm1814, %v1719
      %1816 = vst.msk [vmem:[#allocation3 + $0x4] sm:$0xf] %vm1814, %v1721
      %1817 = vst.msk [vmem:[#allocation3 + $0x8] sm:$0xf] %vm1814, %v1723
      %1818 = vst.msk [vmem:[#allocation3 + $0xc] sm:$0xf] %vm1814, %v1725
      %1819 = vst.msk [vmem:[#allocation3 + $0x10] sm:$0xf] %vm1814, %v1727
      %1820 = vst.msk [vmem:[#allocation3 + $0x14] sm:$0xf] %vm1814, %v1729
      %1821 = vst.msk [vmem:[#allocation3 + $0x18] sm:$0xf] %vm1814, %v1731
      %1822 = vst.msk [vmem:[#allocation3 + $0x1c] sm:$0xf] %vm1814, %v1733
      %1823 = vst.msk [vmem:[#allocation3 + $0x20] sm:$0xf] %vm1814, %v1735
      %1824 = vst.msk [vmem:[#allocation3 + $0x24] sm:$0xf] %vm1814, %v1737
      %1825 = vst.msk [vmem:[#allocation3 + $0x28] sm:$0xf] %vm1814, %v1739
      %1826 = vst.msk [vmem:[#allocation3 + $0x2c] sm:$0xf] %vm1814, %v1741
      %1827 = vst.msk [vmem:[#allocation3 + $0x30] sm:$0xf] %vm1814, %v1743
      %1828 = vst.msk [vmem:[#allocation3 + $0x34] sm:$0xf] %vm1814, %v1745
      %1829 = vst.msk [vmem:[#allocation3 + $0x38] sm:$0xf] %vm1814, %v1747
      %1830 = vst.msk [vmem:[#allocation3 + $0x3c] sm:$0xf] %vm1814, %v1749
      %1831 = vst.msk [vmem:[#allocation3 + $0x40] sm:$0xf] %vm1814, %v1751
      %1832 = vst.msk [vmem:[#allocation3 + $0x44] sm:$0xf] %vm1814, %v1753
      %1833 = vst.msk [vmem:[#allocation3 + $0x48] sm:$0xf] %vm1814, %v1755
      %1834 = vst.msk [vmem:[#allocation3 + $0x4c] sm:$0xf] %vm1814, %v1757
      %1835 = vst.msk [vmem:[#allocation3 + $0x50] sm:$0xf] %vm1814, %v1759
      %1836 = vst.msk [vmem:[#allocation3 + $0x54] sm:$0xf] %vm1814, %v1761
      %1837 = vst.msk [vmem:[#allocation3 + $0x58] sm:$0xf] %vm1814, %v1763
      %1838 = vst.msk [vmem:[#allocation3 + $0x5c] sm:$0xf] %vm1814, %v1765
      %1839 = vst.msk [vmem:[#allocation3 + $0x60] sm:$0xf] %vm1814, %v1767
      %1840 = vst.msk [vmem:[#allocation3 + $0x64] sm:$0xf] %vm1814, %v1769
      %1841 = vst.msk [vmem:[#allocation3 + $0x68] sm:$0xf] %vm1814, %v1771
      %1842 = vst.msk [vmem:[#allocation3 + $0x6c] sm:$0xf] %vm1814, %v1773
      %1843 = vst.msk [vmem:[#allocation3 + $0x70] sm:$0xf] %vm1814, %v1775
      %1844 = vst.msk [vmem:[#allocation3 + $0x74] sm:$0xf] %vm1814, %v1777
      %1845 = vst.msk [vmem:[#allocation3 + $0x78] sm:$0xf] %vm1814, %v1779
      %1846 = vst.msk [vmem:[#allocation3 + $0x7c] sm:$0xf] %vm1814, %v1781
      %v1850 = vrot.slane %v540, 1
      %v1851 = vrot.slane %v541, 1
      %v1852 = vsel %vm656, %v1850, %v1851
      %v1853 = vrot.slane %v542, 1
      %v1854 = vsel %vm656, %v1851, %v1853
      %v1857 = vpack.c.bf16 %v1852, %v1852
      %v1858 = vpack.c.bf16 %v1854, %v1854
      %1861 = vrot.lane.b32.xlu0 %v773, 56
      %v1862 = vpop.permute.xlu0 %1861
      %1863 = vrot.lane.b32.xlu0 %v774, 56
      %v1864 = vpop.permute.xlu0 %1863
      %1865 = vrot.lane.b32.xlu0 %v775, 56
      %v1866 = vpop.permute.xlu0 %1865
      %1867 = vrot.lane.b32.xlu0 %v776, 56
      %v1868 = vpop.permute.xlu0 %1867
      %1869 = vrot.lane.b32.xlu0 %v777, 56
      %v1870 = vpop.permute.xlu0 %1869
      %1871 = vrot.lane.b32.xlu0 %v778, 56
      %v1872 = vpop.permute.xlu0 %1871
      %1873 = vrot.lane.b32.xlu0 %v779, 56
      %v1874 = vpop.permute.xlu0 %1873
      %1875 = vrot.lane.b32.xlu0 %v780, 56
      %v1876 = vpop.permute.xlu0 %1875
      %1877 = vrot.lane.b32.xlu0 %v781, 56
      %v1878 = vpop.permute.xlu0 %1877
      %1879 = vrot.lane.b32.xlu0 %v782, 56
      %v1880 = vpop.permute.xlu0 %1879
      %1881 = vrot.lane.b32.xlu0 %v783, 56
      %v1882 = vpop.permute.xlu0 %1881
      %1883 = vrot.lane.b32.xlu0 %v784, 56
      %v1884 = vpop.permute.xlu0 %1883
      %1885 = vrot.lane.b32.xlu0 %v785, 56
      %v1886 = vpop.permute.xlu0 %1885
      %1887 = vrot.lane.b32.xlu0 %v786, 56
      %v1888 = vpop.permute.xlu0 %1887
      %1889 = vrot.lane.b32.xlu0 %v787, 56
      %v1890 = vpop.permute.xlu0 %1889
      %1891 = vrot.lane.b32.xlu0 %v788, 56
      %v1892 = vpop.permute.xlu0 %1891
      %1893 = vrot.lane.b32.xlu0 %v789, 56
      %v1894 = vpop.permute.xlu0 %1893
      %1895 = vrot.lane.b32.xlu0 %v790, 56
      %v1896 = vpop.permute.xlu0 %1895
      %1897 = vrot.lane.b32.xlu0 %v791, 56
      %v1898 = vpop.permute.xlu0 %1897
      %1899 = vrot.lane.b32.xlu0 %v792, 56
      %v1900 = vpop.permute.xlu0 %1899
      %1901 = vrot.lane.b32.xlu0 %v793, 56
      %v1902 = vpop.permute.xlu0 %1901
      %1903 = vrot.lane.b32.xlu0 %v794, 56
      %v1904 = vpop.permute.xlu0 %1903
      %1905 = vrot.lane.b32.xlu0 %v795, 56
      %v1906 = vpop.permute.xlu0 %1905
      %1907 = vrot.lane.b32.xlu0 %v796, 56
      %v1908 = vpop.permute.xlu0 %1907
      %1909 = vrot.lane.b32.xlu0 %v797, 56
      %v1910 = vpop.permute.xlu0 %1909
      %1911 = vrot.lane.b32.xlu0 %v798, 56
      %v1912 = vpop.permute.xlu0 %1911
      %1913 = vrot.lane.b32.xlu0 %v799, 56
      %v1914 = vpop.permute.xlu0 %1913
      %1915 = vrot.lane.b32.xlu0 %v800, 56
      %v1916 = vpop.permute.xlu0 %1915
      %1917 = vrot.lane.b32.xlu0 %v1441, 56
      %v1918 = vpop.permute.xlu0 %1917
      %1919 = vrot.lane.b32.xlu0 %v1442, 56
      %v1920 = vpop.permute.xlu0 %1919
      %1921 = vrot.lane.b32.xlu0 %v1857, 56
      %v1922 = vpop.permute.xlu0 %1921
      %1923 = vrot.lane.b32.xlu0 %v1858, 56
      %v1924 = vpop.permute.xlu0 %1923
      %vm1957 = vcmask 519616
      %1958 = vst.msk [vmem:[#allocation3] sm:$0xf] %vm1957, %v1862
      %1959 = vst.msk [vmem:[#allocation3 + $0x4] sm:$0xf] %vm1957, %v1864
      %1960 = vst.msk [vmem:[#allocation3 + $0x8] sm:$0xf] %vm1957, %v1866
      %1961 = vst.msk [vmem:[#allocation3 + $0xc] sm:$0xf] %vm1957, %v1868
      %1962 = vst.msk [vmem:[#allocation3 + $0x10] sm:$0xf] %vm1957, %v1870
      %1963 = vst.msk [vmem:[#allocation3 + $0x14] sm:$0xf] %vm1957, %v1872
      %1964 = vst.msk [vmem:[#allocation3 + $0x18] sm:$0xf] %vm1957, %v1874
      %1965 = vst.msk [vmem:[#allocation3 + $0x1c] sm:$0xf] %vm1957, %v1876
      %1966 = vst.msk [vmem:[#allocation3 + $0x20] sm:$0xf] %vm1957, %v1878
      %1967 = vst.msk [vmem:[#allocation3 + $0x24] sm:$0xf] %vm1957, %v1880
      %1968 = vst.msk [vmem:[#allocation3 + $0x28] sm:$0xf] %vm1957, %v1882
      %1969 = vst.msk [vmem:[#allocation3 + $0x2c] sm:$0xf] %vm1957, %v1884
      %1970 = vst.msk [vmem:[#allocation3 + $0x30] sm:$0xf] %vm1957, %v1886
      %1971 = vst.msk [vmem:[#allocation3 + $0x34] sm:$0xf] %vm1957, %v1888
      %1972 = vst.msk [vmem:[#allocation3 + $0x38] sm:$0xf] %vm1957, %v1890
      %1973 = vst.msk [vmem:[#allocation3 + $0x3c] sm:$0xf] %vm1957, %v1892
      %1974 = vst.msk [vmem:[#allocation3 + $0x40] sm:$0xf] %vm1957, %v1894
      %1975 = vst.msk [vmem:[#allocation3 + $0x44] sm:$0xf] %vm1957, %v1896
      %1976 = vst.msk [vmem:[#allocation3 + $0x48] sm:$0xf] %vm1957, %v1898
      %1977 = vst.msk [vmem:[#allocation3 + $0x4c] sm:$0xf] %vm1957, %v1900
      %1978 = vst.msk [vmem:[#allocation3 + $0x50] sm:$0xf] %vm1957, %v1902
      %1979 = vst.msk [vmem:[#allocation3 + $0x54] sm:$0xf] %vm1957, %v1904
      %1980 = vst.msk [vmem:[#allocation3 + $0x58] sm:$0xf] %vm1957, %v1906
      %1981 = vst.msk [vmem:[#allocation3 + $0x5c] sm:$0xf] %vm1957, %v1908
      %1982 = vst.msk [vmem:[#allocation3 + $0x60] sm:$0xf] %vm1957, %v1910
      %1983 = vst.msk [vmem:[#allocation3 + $0x64] sm:$0xf] %vm1957, %v1912
      %1984 = vst.msk [vmem:[#allocation3 + $0x68] sm:$0xf] %vm1957, %v1914
      %1985 = vst.msk [vmem:[#allocation3 + $0x6c] sm:$0xf] %vm1957, %v1916
      %1986 = vst.msk [vmem:[#allocation3 + $0x70] sm:$0xf] %vm1957, %v1918
      %1987 = vst.msk [vmem:[#allocation3 + $0x74] sm:$0xf] %vm1957, %v1920
      %1988 = vst.msk [vmem:[#allocation3 + $0x78] sm:$0xf] %vm1957, %v1922
      %1989 = vst.msk [vmem:[#allocation3 + $0x7c] sm:$0xf] %vm1957, %v1924
      %v1990 = vrot.slane %v540, 2
      %v1991 = vrot.slane %v541, 2
      %v1992 = vsel %vm962, %v1990, %v1991
      %v1993 = vrot.slane %v542, 2
      %v1994 = vsel %vm962, %v1991, %v1993
      %v1997 = vpack.c.bf16 %v1992, %v1992
      %v1998 = vpack.c.bf16 %v1994, %v1994
      %2001 = vrot.lane.b32.xlu0 %v1079, 64
      %v2002 = vpop.permute.xlu0 %2001
      %2003 = vrot.lane.b32.xlu0 %v1080, 64
      %v2004 = vpop.permute.xlu0 %2003
      %2005 = vrot.lane.b32.xlu0 %v1081, 64
      %v2006 = vpop.permute.xlu0 %2005
      %2007 = vrot.lane.b32.xlu0 %v1082, 64
      %v2008 = vpop.permute.xlu0 %2007
      %2009 = vrot.lane.b32.xlu0 %v1083, 64
      %v2010 = vpop.permute.xlu0 %2009
      %2011 = vrot.lane.b32.xlu0 %v1084, 64
      %v2012 = vpop.permute.xlu0 %2011
      %2013 = vrot.lane.b32.xlu0 %v1085, 64
      %v2014 = vpop.permute.xlu0 %2013
      %2015 = vrot.lane.b32.xlu0 %v1086, 64
      %v2016 = vpop.permute.xlu0 %2015
      %2017 = vrot.lane.b32.xlu0 %v1087, 64
      %v2018 = vpop.permute.xlu0 %2017
      %2019 = vrot.lane.b32.xlu0 %v1088, 64
      %v2020 = vpop.permute.xlu0 %2019
      %2021 = vrot.lane.b32.xlu0 %v1089, 64
      %v2022 = vpop.permute.xlu0 %2021
      %2023 = vrot.lane.b32.xlu0 %v1090, 64
      %v2024 = vpop.permute.xlu0 %2023
      %2025 = vrot.lane.b32.xlu0 %v1091, 64
      %v2026 = vpop.permute.xlu0 %2025
      %2027 = vrot.lane.b32.xlu0 %v1092, 64
      %v2028 = vpop.permute.xlu0 %2027
      %2029 = vrot.lane.b32.xlu0 %v1093, 64
      %v2030 = vpop.permute.xlu0 %2029
      %2031 = vrot.lane.b32.xlu0 %v1094, 64
      %v2032 = vpop.permute.xlu0 %2031
      %2033 = vrot.lane.b32.xlu0 %v1095, 64
      %v2034 = vpop.permute.xlu0 %2033
      %2035 = vrot.lane.b32.xlu0 %v1096, 64
      %v2036 = vpop.permute.xlu0 %2035
      %2037 = vrot.lane.b32.xlu0 %v1097, 64
      %v2038 = vpop.permute.xlu0 %2037
      %2039 = vrot.lane.b32.xlu0 %v1098, 64
      %v2040 = vpop.permute.xlu0 %2039
      %2041 = vrot.lane.b32.xlu0 %v1099, 64
      %v2042 = vpop.permute.xlu0 %2041
      %2043 = vrot.lane.b32.xlu0 %v1100, 64
      %v2044 = vpop.permute.xlu0 %2043
      %2045 = vrot.lane.b32.xlu0 %v1101, 64
      %v2046 = vpop.permute.xlu0 %2045
      %2047 = vrot.lane.b32.xlu0 %v1102, 64
      %v2048 = vpop.permute.xlu0 %2047
      %2049 = vrot.lane.b32.xlu0 %v1103, 64
      %v2050 = vpop.permute.xlu0 %2049
      %2051 = vrot.lane.b32.xlu0 %v1104, 64
      %v2052 = vpop.permute.xlu0 %2051
      %2053 = vrot.lane.b32.xlu0 %v1105, 64
      %v2054 = vpop.permute.xlu0 %2053
      %2055 = vrot.lane.b32.xlu0 %v1106, 64
      %v2056 = vpop.permute.xlu0 %2055
      %2057 = vrot.lane.b32.xlu0 %v1581, 64
      %v2058 = vpop.permute.xlu0 %2057
      %2059 = vrot.lane.b32.xlu0 %v1582, 64
      %v2060 = vpop.permute.xlu0 %2059
      %2061 = vrot.lane.b32.xlu0 %v1997, 64
      %v2062 = vpop.permute.xlu0 %2061
      %2063 = vrot.lane.b32.xlu0 %v1998, 64
      %v2064 = vpop.permute.xlu0 %2063
      %vm2097 = vcmask 585216
      %2098 = vst.msk [vmem:[#allocation3] sm:$0xf] %vm2097, %v2002
      %2099 = vst.msk [vmem:[#allocation3 + $0x4] sm:$0xf] %vm2097, %v2004
      %2100 = vst.msk [vmem:[#allocation3 + $0x8] sm:$0xf] %vm2097, %v2006
      %2101 = vst.msk [vmem:[#allocation3 + $0xc] sm:$0xf] %vm2097, %v2008
      %2102 = vst.msk [vmem:[#allocation3 + $0x10] sm:$0xf] %vm2097, %v2010
      %2103 = vst.msk [vmem:[#allocation3 + $0x14] sm:$0xf] %vm2097, %v2012
      %2104 = vst.msk [vmem:[#allocation3 + $0x18] sm:$0xf] %vm2097, %v2014
      %2105 = vst.msk [vmem:[#allocation3 + $0x1c] sm:$0xf] %vm2097, %v2016
      %2106 = vst.msk [vmem:[#allocation3 + $0x20] sm:$0xf] %vm2097, %v2018
      %2107 = vst.msk [vmem:[#allocation3 + $0x24] sm:$0xf] %vm2097, %v2020
      %2108 = vst.msk [vmem:[#allocation3 + $0x28] sm:$0xf] %vm2097, %v2022
      %2109 = vst.msk [vmem:[#allocation3 + $0x2c] sm:$0xf] %vm2097, %v2024
      %2110 = vst.msk [vmem:[#allocation3 + $0x30] sm:$0xf] %vm2097, %v2026
      %2111 = vst.msk [vmem:[#allocation3 + $0x34] sm:$0xf] %vm2097, %v2028
      %2112 = vst.msk [vmem:[#allocation3 + $0x38] sm:$0xf] %vm2097, %v2030
      %2113 = vst.msk [vmem:[#allocation3 + $0x3c] sm:$0xf] %vm2097, %v2032
      %2114 = vst.msk [vmem:[#allocation3 + $0x40] sm:$0xf] %vm2097, %v2034
      %2115 = vst.msk [vmem:[#allocation3 + $0x44] sm:$0xf] %vm2097, %v2036
      %2116 = vst.msk [vmem:[#allocation3 + $0x48] sm:$0xf] %vm2097, %v2038
      %2117 = vst.msk [vmem:[#allocation3 + $0x4c] sm:$0xf] %vm2097, %v2040
      %2118 = vst.msk [vmem:[#allocation3 + $0x50] sm:$0xf] %vm2097, %v2042
      %2119 = vst.msk [vmem:[#allocation3 + $0x54] sm:$0xf] %vm2097, %v2044
      %2120 = vst.msk [vmem:[#allocation3 + $0x58] sm:$0xf] %vm2097, %v2046
      %2121 = vst.msk [vmem:[#allocation3 + $0x5c] sm:$0xf] %vm2097, %v2048
      %2122 = vst.msk [vmem:[#allocation3 + $0x60] sm:$0xf] %vm2097, %v2050
      %2123 = vst.msk [vmem:[#allocation3 + $0x64] sm:$0xf] %vm2097, %v2052
      %2124 = vst.msk [vmem:[#allocation3 + $0x68] sm:$0xf] %vm2097, %v2054
      %2125 = vst.msk [vmem:[#allocation3 + $0x6c] sm:$0xf] %vm2097, %v2056
      %2126 = vst.msk [vmem:[#allocation3 + $0x70] sm:$0xf] %vm2097, %v2058
      %2127 = vst.msk [vmem:[#allocation3 + $0x74] sm:$0xf] %vm2097, %v2060
      %2128 = vst.msk [vmem:[#allocation3 + $0x78] sm:$0xf] %vm2097, %v2062
      %2129 = vst.msk [vmem:[#allocation3 + $0x7c] sm:$0xf] %vm2097, %v2064
      %v2130 = vld [vmem:[#allocation3] sm:$0xf]
      %v2131 = vld [vmem:[#allocation3 + $0x4] sm:$0xf]
      %v2132 = vld [vmem:[#allocation3 + $0x8] sm:$0xf]
      %v2133 = vld [vmem:[#allocation3 + $0xc] sm:$0xf]
      %v2134 = vld [vmem:[#allocation3 + $0x10] sm:$0xf]
      %v2135 = vld [vmem:[#allocation3 + $0x14] sm:$0xf]
      %v2136 = vld [vmem:[#allocation3 + $0x18] sm:$0xf]
      %v2137 = vld [vmem:[#allocation3 + $0x1c] sm:$0xf]
      %v2138 = vld [vmem:[#allocation3 + $0x20] sm:$0xf]
      %v2139 = vld [vmem:[#allocation3 + $0x24] sm:$0xf]
      %v2140 = vld [vmem:[#allocation3 + $0x28] sm:$0xf]
      %v2141 = vld [vmem:[#allocation3 + $0x2c] sm:$0xf]
      %v2142 = vld [vmem:[#allocation3 + $0x30] sm:$0xf]
      %v2143 = vld [vmem:[#allocation3 + $0x34] sm:$0xf]
      %v2144 = vld [vmem:[#allocation3 + $0x38] sm:$0xf]
      %v2145 = vld [vmem:[#allocation3 + $0x3c] sm:$0xf]
      %v2146 = vld [vmem:[#allocation3 + $0x40] sm:$0xf]
      %v2147 = vld [vmem:[#allocation3 + $0x44] sm:$0xf]
      %v2148 = vld [vmem:[#allocation3 + $0x48] sm:$0xf]
      %v2149 = vld [vmem:[#allocation3 + $0x4c] sm:$0xf]
      %v2150 = vld [vmem:[#allocation3 + $0x50] sm:$0xf]
      %v2151 = vld [vmem:[#allocation3 + $0x54] sm:$0xf]
      %v2152 = vld [vmem:[#allocation3 + $0x58] sm:$0xf]
      %v2153 = vld [vmem:[#allocation3 + $0x5c] sm:$0xf]
      %v2154 = vld [vmem:[#allocation3 + $0x60] sm:$0xf]
      %v2155 = vld [vmem:[#allocation3 + $0x64] sm:$0xf]
      %v2156 = vld [vmem:[#allocation3 + $0x68] sm:$0xf]
      %v2157 = vld [vmem:[#allocation3 + $0x6c] sm:$0xf]
      %v2158 = vld [vmem:[#allocation3 + $0x70] sm:$0xf]
      %v2159 = vld [vmem:[#allocation3 + $0x74] sm:$0xf]
      %v2160 = vld [vmem:[#allocation3 + $0x78] sm:$0xf]
      %v2161 = vld [vmem:[#allocation3 + $0x7c] sm:$0xf]
      %v2162 = vld [vmem:[%s3] sm:$0xf]
      %v2163 = vld [vmem:[%s3 + $0x4] sm:$0xf]
      %v2164 = vld [vmem:[%s3 + $0x8] sm:$0xf]
      %v2165 = vld [vmem:[%s3 + $0xc] sm:$0xf]
      %v2166 = vld [vmem:[%s3 + $0x10] sm:$0xf]
      %v2167 = vld [vmem:[%s3 + $0x14] sm:$0xf]
      %v2168 = vld [vmem:[%s3 + $0x18] sm:$0xf]
      %v2169 = vld [vmem:[%s3 + $0x1c] sm:$0xf]
      %v2170 = vld [vmem:[%s3 + $0x20] sm:$0xf]
      %v2171 = vld [vmem:[%s4] sm:$0x1]
      %v2173 = vperm.slane %v2171, 0
      %v2207 = vunpack.c.l.b16 %v2130
      %v2208 = vunpack.c.l.b16 %v2131
      %v2209 = vunpack.c.l.b16 %v2132
      %v2210 = vunpack.c.l.b16 %v2133
      %v2211 = vunpack.c.l.b16 %v2134
      %v2212 = vunpack.c.l.b16 %v2135
      %v2213 = vunpack.c.l.b16 %v2136
      %v2214 = vunpack.c.l.b16 %v2137
      %v2215 = vunpack.c.l.b16 %v2138
      %v2216 = vunpack.c.l.b16 %v2139
      %v2217 = vunpack.c.l.b16 %v2140
      %v2218 = vunpack.c.l.b16 %v2141
      %v2219 = vunpack.c.l.b16 %v2142
      %v2220 = vunpack.c.l.b16 %v2143
      %v2221 = vunpack.c.l.b16 %v2144
      %v2222 = vunpack.c.l.b16 %v2145
      %v2223 = vunpack.c.l.b16 %v2146
      %v2224 = vunpack.c.l.b16 %v2147
      %v2225 = vunpack.c.l.b16 %v2148
      %v2226 = vunpack.c.l.b16 %v2149
      %v2227 = vunpack.c.l.b16 %v2150
      %v2228 = vunpack.c.l.b16 %v2151
      %v2229 = vunpack.c.l.b16 %v2152
      %v2230 = vunpack.c.l.b16 %v2153
      %v2231 = vunpack.c.l.b16 %v2154
      %v2232 = vunpack.c.l.b16 %v2155
      %v2233 = vunpack.c.l.b16 %v2156
      %v2234 = vunpack.c.l.b16 %v2157
      %v2235 = vunpack.c.l.b16 %v2158
      %v2236 = vunpack.c.l.b16 %v2159
      %v2237 = vunpack.c.l.b16 %v2160
      %v2238 = vunpack.c.l.b16 %v2161
      %v2239 = vpack.c.b16 %v2208, %v2207
      %v2240 = vpack.c.b16 %v2210, %v2209
      %v2241 = vpack.c.b16 %v2212, %v2211
      %v2242 = vpack.c.b16 %v2214, %v2213
      %v2243 = vpack.c.b16 %v2216, %v2215
      %v2244 = vpack.c.b16 %v2218, %v2217
      %v2245 = vpack.c.b16 %v2220, %v2219
      %v2246 = vpack.c.b16 %v2222, %v2221
      %v2247 = vpack.c.b16 %v2224, %v2223
      %v2248 = vpack.c.b16 %v2226, %v2225
      %v2249 = vpack.c.b16 %v2228, %v2227
      %v2250 = vpack.c.b16 %v2230, %v2229
      %v2251 = vpack.c.b16 %v2232, %v2231
      %v2252 = vpack.c.b16 %v2234, %v2233
      %v2253 = vpack.c.b16 %v2236, %v2235
      %v2254 = vpack.c.b16 %v2238, %v2237
      %v2264 = vunpack.c.l.b16 %v2162
      %v2265 = vunpack.c.l.b16 %v2163
      %v2266 = vunpack.c.l.b16 %v2164
      %v2267 = vunpack.c.l.b16 %v2165
      %v2268 = vunpack.c.l.b16 %v2166
      %v2269 = vunpack.c.l.b16 %v2167
      %v2270 = vunpack.c.l.b16 %v2168
      %v2271 = vunpack.c.l.b16 %v2169
      %v2272 = vunpack.c.l.b16 %v2170
      %v2273 = vpack.c.b16 %v2265, %v2264
      %v2274 = vpack.c.b16 %v2267, %v2266
      %v2275 = vpack.c.b16 %v2269, %v2268
      %v2276 = vpack.c.b16 %v2271, %v2270
      %v2277 = vpack.c.b16 %v2272, %v2272
      %vm2282 = vcmask 588800
      %v2284 = vsel %vm2282, %v2239, 0
      %v2287 = vsel %vm2282, %v2240, 0
      %v2290 = vsel %vm2282, %v2241, 0
      %v2293 = vsel %vm2282, %v2242, 0
      %v2296 = vsel %vm2282, %v2243, 0
      %v2299 = vsel %vm2282, %v2244, 0
      %v2302 = vsel %vm2282, %v2245, 0
      %v2305 = vsel %vm2282, %v2246, 0
      %v2308 = vsel %vm2282, %v2247, 0
      %v2311 = vsel %vm2282, %v2248, 0
      %v2314 = vsel %vm2282, %v2249, 0
      %v2317 = vsel %vm2282, %v2250, 0
      %v2320 = vsel %vm2282, %v2251, 0
      %v2323 = vsel %vm2282, %v2252, 0
      %v2326 = vsel %vm2282, %v2253, 0
      %v2329 = vsel %vm2282, %v2254, 0
      %vm2331 = vcmask 1043456
      %v2333 = vsel %vm2331, %v2277, 0
      %2335 = vmatpush.bf16.msra.mxu0 0
      %2336 = vmatpush.bf16.msra.mxu0 0
      %2337 = vmatpush.bf16.msra.mxu0 0
      %2338 = vmatpush.bf16.msra.mxu0 %v2333
      %2339 = vmatpush.bf16.msra.mxu0 %v2276
      %2340 = vmatpush.bf16.msra.mxu0 %v2275
      %2341 = vmatpush.bf16.msra.mxu0 %v2274
      %2342 = vmatpush.bf16.msra.mxu0 %v2273
      %2343 = vmatmul.bf16.gmra.mxu0 %v2284
      %v2344 = vpop.f32.mrf.mxu0
      %v2345 = vadd.f32 %v2173, %v2344
      %v2346 = vpop.f32.mrf.mxu0
      %v2347 = vadd.f32 %v2173, %v2346
      %2348 = vmatmul.bf16.gmra.mxu0 %v2287
      %v2349 = vpop.f32.mrf.mxu0
      %v2350 = vadd.f32 %v2173, %v2349
      %v2351 = vpop.f32.mrf.mxu0
      %v2352 = vadd.f32 %v2173, %v2351
      %2353 = vmatmul.bf16.gmra.mxu0 %v2290
      %v2354 = vpop.f32.mrf.mxu0
      %v2355 = vadd.f32 %v2173, %v2354
      %v2356 = vpop.f32.mrf.mxu0
      %v2357 = vadd.f32 %v2173, %v2356
      %2358 = vmatmul.bf16.gmra.mxu0 %v2293
      %v2359 = vpop.f32.mrf.mxu0
      %v2360 = vadd.f32 %v2173, %v2359
      %v2361 = vpop.f32.mrf.mxu0
      %v2362 = vadd.f32 %v2173, %v2361
      %2363 = vmatmul.bf16.gmra.mxu0 %v2296
      %v2364 = vpop.f32.mrf.mxu0
      %v2365 = vadd.f32 %v2173, %v2364
      %v2366 = vpop.f32.mrf.mxu0
      %v2367 = vadd.f32 %v2173, %v2366
      %2368 = vmatmul.bf16.gmra.mxu0 %v2299
      %v2369 = vpop.f32.mrf.mxu0
      %v2370 = vadd.f32 %v2173, %v2369
      %v2371 = vpop.f32.mrf.mxu0
      %v2372 = vadd.f32 %v2173, %v2371
      %2373 = vmatmul.bf16.gmra.mxu0 %v2302
      %v2374 = vpop.f32.mrf.mxu0
      %v2375 = vadd.f32 %v2173, %v2374
      %v2376 = vpop.f32.mrf.mxu0
      %v2377 = vadd.f32 %v2173, %v2376
      %2378 = vmatmul.bf16.gmra.mxu0 %v2305
      %v2379 = vpop.f32.mrf.mxu0
      %v2380 = vadd.f32 %v2173, %v2379
      %v2381 = vpop.f32.mrf.mxu0
      %v2382 = vadd.f32 %v2173, %v2381
      %2383 = vmatmul.bf16.gmra.mxu0 %v2308
      %v2384 = vpop.f32.mrf.mxu0
      %v2385 = vadd.f32 %v2173, %v2384
      %v2386 = vpop.f32.mrf.mxu0
      %v2387 = vadd.f32 %v2173, %v2386
      %2388 = vmatmul.bf16.gmra.mxu0 %v2311
      %v2389 = vpop.f32.mrf.mxu0
      %v2390 = vadd.f32 %v2173, %v2389
      %v2391 = vpop.f32.mrf.mxu0
      %v2392 = vadd.f32 %v2173, %v2391
      %2393 = vmatmul.bf16.gmra.mxu0 %v2314
      %v2394 = vpop.f32.mrf.mxu0
      %v2395 = vadd.f32 %v2173, %v2394
      %v2396 = vpop.f32.mrf.mxu0
      %v2397 = vadd.f32 %v2173, %v2396
      %2398 = vmatmul.bf16.gmra.mxu0 %v2317
      %v2399 = vpop.f32.mrf.mxu0
      %v2400 = vadd.f32 %v2173, %v2399
      %v2401 = vpop.f32.mrf.mxu0
      %v2402 = vadd.f32 %v2173, %v2401
      %2403 = vmatmul.bf16.gmra.mxu0 %v2320
      %v2404 = vpop.f32.mrf.mxu0
      %v2405 = vadd.f32 %v2173, %v2404
      %v2406 = vpop.f32.mrf.mxu0
      %v2407 = vadd.f32 %v2173, %v2406
      %2408 = vmatmul.bf16.gmra.mxu0 %v2323
      %v2409 = vpop.f32.mrf.mxu0
      %v2410 = vadd.f32 %v2173, %v2409
      %v2411 = vpop.f32.mrf.mxu0
      %v2412 = vadd.f32 %v2173, %v2411
      %2413 = vmatmul.bf16.gmra.mxu0 %v2326
      %v2414 = vpop.f32.mrf.mxu0
      %v2415 = vadd.f32 %v2173, %v2414
      %v2416 = vpop.f32.mrf.mxu0
      %v2417 = vadd.f32 %v2173, %v2416
      %2418 = vmatmul.bf16.gmra.mxu0 %v2329
      %v2419 = vpop.f32.mrf.mxu0
      %v2420 = vadd.f32 %v2173, %v2419
      %v2421 = vpop.f32.mrf.mxu0
      %v2422 = vadd.f32 %v2173, %v2421
      %2423 = vdwg.mxu0
      %vm2424 = vcmask 130048
      %v2425 = vsel %vm2424, %v2345, 0.0
      %v2426 = vsel %vm2424, %v2347, 0.0
      %v2427 = vadd.f32 %v2425, %v2426
      %v2428 = vsel %vm2424, %v2350, 0.0
      %v2429 = vadd.f32 %v2427, %v2428
      %v2430 = vsel %vm2424, %v2352, 0.0
      %v2431 = vadd.f32 %v2429, %v2430
      %v2432 = vsel %vm2424, %v2355, 0.0
      %v2433 = vadd.f32 %v2431, %v2432
      %v2434 = vsel %vm2424, %v2357, 0.0
      %v2435 = vadd.f32 %v2433, %v2434
      %v2436 = vsel %vm2424, %v2360, 0.0
      %v2437 = vadd.f32 %v2435, %v2436
      %v2438 = vsel %vm2424, %v2362, 0.0
      %v2439 = vadd.f32 %v2437, %v2438
      %v2440 = vsel %vm2424, %v2365, 0.0
      %v2441 = vadd.f32 %v2439, %v2440
      %v2442 = vsel %vm2424, %v2367, 0.0
      %v2443 = vadd.f32 %v2441, %v2442
      %v2444 = vsel %vm2424, %v2370, 0.0
      %v2445 = vadd.f32 %v2443, %v2444
      %v2446 = vsel %vm2424, %v2372, 0.0
      %v2447 = vadd.f32 %v2445, %v2446
      %v2448 = vsel %vm2424, %v2375, 0.0
      %v2449 = vadd.f32 %v2447, %v2448
      %v2450 = vsel %vm2424, %v2377, 0.0
      %v2451 = vadd.f32 %v2449, %v2450
      %v2452 = vsel %vm2424, %v2380, 0.0
      %v2453 = vadd.f32 %v2451, %v2452
      %v2454 = vsel %vm2424, %v2382, 0.0
      %v2455 = vadd.f32 %v2453, %v2454
      %v2456 = vsel %vm2424, %v2385, 0.0
      %v2457 = vadd.f32 %v2455, %v2456
      %v2458 = vsel %vm2424, %v2387, 0.0
      %v2459 = vadd.f32 %v2457, %v2458
      %v2460 = vsel %vm2424, %v2390, 0.0
      %v2461 = vadd.f32 %v2459, %v2460
      %v2462 = vsel %vm2424, %v2392, 0.0
      %v2463 = vadd.f32 %v2461, %v2462
      %v2464 = vsel %vm2424, %v2395, 0.0
      %v2465 = vadd.f32 %v2463, %v2464
      %v2466 = vsel %vm2424, %v2397, 0.0
      %v2467 = vadd.f32 %v2465, %v2466
      %v2468 = vsel %vm2424, %v2400, 0.0
      %v2469 = vadd.f32 %v2467, %v2468
      %v2470 = vsel %vm2424, %v2402, 0.0
      %v2471 = vadd.f32 %v2469, %v2470
      %v2472 = vsel %vm2424, %v2405, 0.0
      %v2473 = vadd.f32 %v2471, %v2472
      %v2474 = vsel %vm2424, %v2407, 0.0
      %v2475 = vadd.f32 %v2473, %v2474
      %v2476 = vsel %vm2424, %v2410, 0.0
      %v2477 = vadd.f32 %v2475, %v2476
      %v2478 = vsel %vm2424, %v2412, 0.0
      %v2479 = vadd.f32 %v2477, %v2478
      %v2480 = vsel %vm2424, %v2415, 0.0
      %v2481 = vadd.f32 %v2479, %v2480
      %v2482 = vsel %vm2424, %v2417, 0.0
      %v2483 = vadd.f32 %v2481, %v2482
      %v2484 = vsel %vm2424, %v2420, 0.0
      %v2485 = vadd.f32 %v2483, %v2484
      %v2486 = vsel %vm2424, %v2422, 0.0
      %v2487 = vadd.f32 %v2485, %v2486
      %v2488 = vrot.slane %v2487, 4
      %v2489 = vadd.f32 %v2487, %v2488
      %v2490 = vrot.slane %v2489, 2
      %v2491 = vadd.f32 %v2489, %v2490
      %v2492 = vrot.slane %v2491, 1
      %v2493 = vadd.f32 %v2491, %v2492
      %vm2494 = vcmask 122880
      %2495 = vst.msk [vmem:[%s262] sm:$0x1] %vm2494, %v2493
      %v2496 = vmul.f32 %v2345, %v2345
      %v2497 = vmul.f32 %v2347, %v2347
      %v2498 = vmul.f32 %v2350, %v2350
      %v2499 = vmul.f32 %v2352, %v2352
      %v2500 = vmul.f32 %v2355, %v2355
      %v2501 = vmul.f32 %v2357, %v2357
      %v2502 = vmul.f32 %v2360, %v2360
      %v2503 = vmul.f32 %v2362, %v2362
      %v2504 = vmul.f32 %v2365, %v2365
      %v2505 = vmul.f32 %v2367, %v2367
      %v2506 = vmul.f32 %v2370, %v2370
      %v2507 = vmul.f32 %v2372, %v2372
      %v2508 = vmul.f32 %v2375, %v2375
      %v2509 = vmul.f32 %v2377, %v2377
      %v2510 = vmul.f32 %v2380, %v2380
      %v2511 = vmul.f32 %v2382, %v2382
      %v2512 = vmul.f32 %v2385, %v2385
      %v2513 = vmul.f32 %v2387, %v2387
      %v2514 = vmul.f32 %v2390, %v2390
      %v2515 = vmul.f32 %v2392, %v2392
      %v2516 = vmul.f32 %v2395, %v2395
      %v2517 = vmul.f32 %v2397, %v2397
      %v2518 = vmul.f32 %v2400, %v2400
      %v2519 = vmul.f32 %v2402, %v2402
      %v2520 = vmul.f32 %v2405, %v2405
      %v2521 = vmul.f32 %v2407, %v2407
      %v2522 = vmul.f32 %v2410, %v2410
      %v2523 = vmul.f32 %v2412, %v2412
      %v2524 = vmul.f32 %v2415, %v2415
      %v2525 = vmul.f32 %v2417, %v2417
      %v2526 = vmul.f32 %v2420, %v2420
      %v2527 = vmul.f32 %v2422, %v2422
      %v2528 = vsel %vm2424, %v2496, 0.0
      %v2529 = vsel %vm2424, %v2497, 0.0
      %v2530 = vadd.f32 %v2528, %v2529
      %v2531 = vsel %vm2424, %v2498, 0.0
      %v2532 = vadd.f32 %v2530, %v2531
      %v2533 = vsel %vm2424, %v2499, 0.0
      %v2534 = vadd.f32 %v2532, %v2533
      %v2535 = vsel %vm2424, %v2500, 0.0
      %v2536 = vadd.f32 %v2534, %v2535
      %v2537 = vsel %vm2424, %v2501, 0.0
      %v2538 = vadd.f32 %v2536, %v2537
      %v2539 = vsel %vm2424, %v2502, 0.0
      %v2540 = vadd.f32 %v2538, %v2539
      %v2541 = vsel %vm2424, %v2503, 0.0
      %v2542 = vadd.f32 %v2540, %v2541
      %v2543 = vsel %vm2424, %v2504, 0.0
      %v2544 = vadd.f32 %v2542, %v2543
      %v2545 = vsel %vm2424, %v2505, 0.0
      %v2546 = vadd.f32 %v2544, %v2545
      %v2547 = vsel %vm2424, %v2506, 0.0
      %v2548 = vadd.f32 %v2546, %v2547
      %v2549 = vsel %vm2424, %v2507, 0.0
      %v2550 = vadd.f32 %v2548, %v2549
      %v2551 = vsel %vm2424, %v2508, 0.0
      %v2552 = vadd.f32 %v2550, %v2551
      %v2553 = vsel %vm2424, %v2509, 0.0
      %v2554 = vadd.f32 %v2552, %v2553
      %v2555 = vsel %vm2424, %v2510, 0.0
      %v2556 = vadd.f32 %v2554, %v2555
      %v2557 = vsel %vm2424, %v2511, 0.0
      %v2558 = vadd.f32 %v2556, %v2557
      %v2559 = vsel %vm2424, %v2512, 0.0
      %v2560 = vadd.f32 %v2558, %v2559
      %v2561 = vsel %vm2424, %v2513, 0.0
      %v2562 = vadd.f32 %v2560, %v2561
      %v2563 = vsel %vm2424, %v2514, 0.0
      %v2564 = vadd.f32 %v2562, %v2563
      %v2565 = vsel %vm2424, %v2515, 0.0
      %v2566 = vadd.f32 %v2564, %v2565
      %v2567 = vsel %vm2424, %v2516, 0.0
      %v2568 = vadd.f32 %v2566, %v2567
      %v2569 = vsel %vm2424, %v2517, 0.0
      %v2570 = vadd.f32 %v2568, %v2569
      %v2571 = vsel %vm2424, %v2518, 0.0
      %v2572 = vadd.f32 %v2570, %v2571
      %v2573 = vsel %vm2424, %v2519, 0.0
      %v2574 = vadd.f32 %v2572, %v2573
      %v2575 = vsel %vm2424, %v2520, 0.0
      %v2576 = vadd.f32 %v2574, %v2575
      %v2577 = vsel %vm2424, %v2521, 0.0
      %v2578 = vadd.f32 %v2576, %v2577
      %v2579 = vsel %vm2424, %v2522, 0.0
      %v2580 = vadd.f32 %v2578, %v2579
      %v2581 = vsel %vm2424, %v2523, 0.0
      %v2582 = vadd.f32 %v2580, %v2581
      %v2583 = vsel %vm2424, %v2524, 0.0
      %v2584 = vadd.f32 %v2582, %v2583
      %v2585 = vsel %vm2424, %v2525, 0.0
      %v2586 = vadd.f32 %v2584, %v2585
      %v2587 = vsel %vm2424, %v2526, 0.0
      %v2588 = vadd.f32 %v2586, %v2587
      %v2589 = vsel %vm2424, %v2527, 0.0
      %v2590 = vadd.f32 %v2588, %v2589
      %v2591 = vrot.slane %v2590, 4
      %v2592 = vadd.f32 %v2590, %v2591
      %v2593 = vrot.slane %v2592, 2
      %v2594 = vadd.f32 %v2592, %v2593
      %v2595 = vrot.slane %v2594, 1
      %v2596 = vadd.f32 %v2594, %v2595
      %2597 = vst.msk [vmem:[%s262 + $0x1] sm:$0x1] %vm2494, %v2596
      %2598 = vst.msk [vmem:[%s258] sm:$0xff] %vm2424, %v2345
      %2599 = vst.msk [vmem:[%s258 + $0x8] sm:$0xff] %vm2424, %v2347
      %2600 = vst.msk [vmem:[%s258 + $0x10] sm:$0xff] %vm2424, %v2350
      %2601 = vst.msk [vmem:[%s258 + $0x18] sm:$0xff] %vm2424, %v2352
      %2602 = vst.msk [vmem:[%s258 + $0x20] sm:$0xff] %vm2424, %v2355
      %2603 = vst.msk [vmem:[%s258 + $0x28] sm:$0xff] %vm2424, %v2357
      %2604 = vst.msk [vmem:[%s258 + $0x30] sm:$0xff] %vm2424, %v2360
      %2605 = vst.msk [vmem:[%s258 + $0x38] sm:$0xff] %vm2424, %v2362
      %2606 = vst.msk [vmem:[%s258 + $0x40] sm:$0xff] %vm2424, %v2365
      %2607 = vst.msk [vmem:[%s258 + $0x48] sm:$0xff] %vm2424, %v2367
      %2608 = vst.msk [vmem:[%s258 + $0x50] sm:$0xff] %vm2424, %v2370
      %2609 = vst.msk [vmem:[%s258 + $0x58] sm:$0xff] %vm2424, %v2372
      %2610 = vst.msk [vmem:[%s258 + $0x60] sm:$0xff] %vm2424, %v2375
      %2611 = vst.msk [vmem:[%s258 + $0x68] sm:$0xff] %vm2424, %v2377
      %2612 = vst.msk [vmem:[%s258 + $0x70] sm:$0xff] %vm2424, %v2380
      %2613 = vst.msk [vmem:[%s258 + $0x78] sm:$0xff] %vm2424, %v2382
      %2614 = vst.msk [vmem:[%s258 + $0x80] sm:$0xff] %vm2424, %v2385
      %2615 = vst.msk [vmem:[%s258 + $0x88] sm:$0xff] %vm2424, %v2387
      %2616 = vst.msk [vmem:[%s258 + $0x90] sm:$0xff] %vm2424, %v2390
      %2617 = vst.msk [vmem:[%s258 + $0x98] sm:$0xff] %vm2424, %v2392
      %2618 = vst.msk [vmem:[%s258 + $0xa0] sm:$0xff] %vm2424, %v2395
      %2619 = vst.msk [vmem:[%s258 + $0xa8] sm:$0xff] %vm2424, %v2397
      %2620 = vst.msk [vmem:[%s258 + $0xb0] sm:$0xff] %vm2424, %v2400
      %2621 = vst.msk [vmem:[%s258 + $0xb8] sm:$0xff] %vm2424, %v2402
      %2622 = vst.msk [vmem:[%s258 + $0xc0] sm:$0xff] %vm2424, %v2405
      %2623 = vst.msk [vmem:[%s258 + $0xc8] sm:$0xff] %vm2424, %v2407
      %2624 = vst.msk [vmem:[%s258 + $0xd0] sm:$0xff] %vm2424, %v2410
      %2625 = vst.msk [vmem:[%s258 + $0xd8] sm:$0xff] %vm2424, %v2412
      %2626 = vst.msk [vmem:[%s258 + $0xe0] sm:$0xff] %vm2424, %v2415
      %2627 = vst.msk [vmem:[%s258 + $0xe8] sm:$0xff] %vm2424, %v2417
      %2628 = vst.msk [vmem:[%s258 + $0xf0] sm:$0xff] %vm2424, %v2420
      %2629 = vst.msk [vmem:[%s258 + $0xf8] sm:$0xff] %vm2424, %v2422
      %p2630 = scmp.lt.s32.totalorder %s18, 1
      %s2631 = scalar_select %p2630, %s18, 1
      %s2632 = smul.addr %s2631, 32
      %s2633 = smul.addr %s2632, 8
      %s2634 = scalar_lea.vmem %s5, %s2633
      %p2635 = scmp.lt.s32.totalorder %s18, 1
      %s2636 = scalar_select %p2635, %s18, 1
      %s2637 = smul.addr %s2636, 2
      %s2638 = scalar_lea.vmem %s6, %s2637
      // Predicated region
      $region41: #{up_forward.4} parent=39 // pred_check
        %p2639 = pneg %p146
      $region42: #{up_forward.4} parent=39 // pred_check_branch
        %2641 = sbr.rel (%p2639) target = $region44
      $region43: #{up_forward.4} parent=39 // pred_region
        _
      $region44: #{up_forward.4} parent=39 // pred_fallthru
        _
      // Predicated region
      $region45: #{up_forward.4} parent=39 // pred_check
        %p2642 = pneg %p172
      $region46: #{up_forward.4} parent=39 // pred_check_branch
        %2644 = sbr.rel (%p2642) target = $region48
      $region47: #{up_forward.4} parent=39 // pred_region
        _
      $region48: #{up_forward.4} parent=39 // pred_fallthru
        _
    $region40: #{up_forward.4} parent=5 // pred_fallthru
      _
    %p2645 = scmp.le.s32.totalorder 2, %s13
    // Predicated region
    $region49: #{up_forward.4} parent=5 // pred_check
      %p2646 = pneg %p2645
    $region50: #{up_forward.4} parent=5 // pred_check_branch
      %2648 = sbr.rel (%p2646) target = $region52
    $region51: #{up_forward.4} parent=5 // pred_region
      %s2649 = ssub.s32 %s13, 2
      // Predicated region
      $region53: #{up_forward.4} parent=51 // pred_check
        %p2650 = pneg %p152
      $region54: #{up_forward.4} parent=51 // pred_check_branch
        %2652 = sbr.rel (%p2650) target = $region56
      $region55: #{up_forward.4} parent=51 // pred_region
        %p2653 = scmp.lt.s32.totalorder %s19, 1
        %s2654 = scalar_select %p2653, %s19, 1
        %s2655 = smul.addr %s2654, 32
        %s2656 = smul.addr %s2655, 8
        %s2657 = scalar_lea.vmem %s5, %s2656
      $region56: #{up_forward.4} parent=51 // pred_fallthru
        _
      // Predicated region
      $region57: #{up_forward.4} parent=51 // pred_check
        %p2658 = pneg %p178
      $region58: #{up_forward.4} parent=51 // pred_check_branch
        %2660 = sbr.rel (%p2658) target = $region60
      $region59: #{up_forward.4} parent=51 // pred_region
        %p2661 = scmp.lt.s32.totalorder %s19, 1
        %s2662 = scalar_select %p2661, %s19, 1
        %s2663 = smul.addr %s2662, 2
        %s2664 = scalar_lea.vmem %s6, %s2663
      $region60: #{up_forward.4} parent=51 // pred_fallthru
        _
    $region52: #{up_forward.4} parent=5 // pred_fallthru
      _
  $region6: #{up_forward.4} parent=0 // loop_footer
    %s17 = sadd.s32 1, %s13
  $region7: #{up_forward.4} parent=0 // loop_footer_branch
    %12 = sbr.rel target = $region3
  $region8: #{up_forward.4} parent=0 // loop_exit
    _

// kernel: up_forward.3
$region0: #{up_forward.3}
  #allocation0 [shape = 'u32[]', space=smem, size = 0x4, offset = 0x4, fixed_abs, tag = 'smem constant byte address 0x4 - core index']
  #allocation1 [shape = 'u32[72,128]{1,0:T(1,128)}', space=vmem, size = 0x9000, scoped, tag = 'internal scratch']
  #allocation2 [shape = 'f32[18,18,8]{2,1,0:T(8,128)}', space=vmem, size = 0x36000, scoped, tag = 'scratch operand']
  #allocation3 [shape = 'f32[18,18,8]{2,1,0:T(8,128)}', space=vmem, size = 0x36000, scoped, tag = 'scratch operand']
  #allocation4 [shape = 'f32[16,8,8]{2,1,0:T(8,128)}', space=vmem, size = 0x10000, scoped, tag = 'scratch operand']
  #allocation5 [shape = 'bf16[256,144]{1,0:T(8,128)(2,1)}', space=vmem, size = 0x20000, scoped, tag = 'scratch operand']
  %s0 = inlined_call_operand.vmem [shape: f32[2,16,16,8], index: 0, kind: input, shape index: {}]
  %s1 = inlined_call_operand.vmem [shape: f32[2,8,8,8], index: 1, kind: input, shape index: {}]
  %s2 = inlined_call_operand.vmem [shape: bf16[144,8], index: 2, kind: input, shape index: {}]
  %s3 = inlined_call_operand.vmem [shape: f32[1,8], index: 3, kind: input, shape index: {}]
  %s4 = inlined_call_operand.vmem [shape: f32[2,16,16,8], index: 4, kind: output, shape index: {0}]
  %s5 = inlined_call_operand.vmem [shape: f32[2,2,8], index: 5, kind: output, shape index: {1}]
  %6 = xla_tuple %s4, %s5
  %s7 = sld [smem:[#allocation0]]
  $region57: #{up_forward.3} parent=0
    _
  %s9 = ssub.s32 1, %s7
  %s10 = scalar_select 0, %s9, %s7
  loop: start=0, step=1, limit=4
  $region2: #{up_forward.3} parent=0 // loop_pre_header
    _
  $region3: #{up_forward.3} parent=0 // loop_header
    %s12 = sphi 0, %s16
    %p13 = scmp.ge.s32.totalorder %s12, 4
    %s22 = sphi 0, %s24
    %s25 = sphi 0, %s22
    %s26 = sphi 0, %s25
    %s42 = sphi 0, %s26
    %s48 = sphi 0, %s50
    %s51 = sphi 0, %s48
    %s52 = sphi 0, %s51
    %s68 = sphi 0, %s52
    %s72 = sphi 0, %s72
    %s74 = sphi 0, %s72
    %s75 = sphi 0, %s74
    %s89 = sphi 0, %s75
    %s93 = sphi 0, %s93
    %s95 = sphi 0, %s93
    %s96 = sphi 0, %s95
    %s110 = sphi 0, %s96
    %s116 = sphi 0, %s118
    %s119 = sphi 0, %s116
    %s120 = sphi 0, %s119
    %s136 = sphi 0, %s120
    %s142 = sphi 0, %s144
    %s145 = sphi 0, %s142
    %s146 = sphi 0, %s145
    %s162 = sphi 0, %s146
  $region4: #{up_forward.3} parent=0 // loop_header_branch
    %15 = sbr.rel (%p13) target = $region8
  $region5: #{up_forward.3} parent=0 // loop_body
    %s17 = ssub.s32 %s12, 1
    %s18 = ssub.s32 %s12, 2
    %s19 = sadd.s32 %s12, 1
    %s20 = ssub.s32 %s12, %s19
    %p21 = scmp.eq.s32.totalorder %s20, 0
    %s23 = sadd.s32 %s22, 1
    %s24 = scalar_select %p21, %s22, %s23
    %p27 = pneg %p21
    %p28 = scmp.eq.s32.totalorder %s12, 1
    %p29 = por %p27, %p28
    %p30 = scmp.ne.s32.totalorder %s22, %s25
    %p31 = scmp.eq.s32.totalorder %s12, 0
    %p32 = por %p30, %p31
    %p33 = scmp.ne.s32.totalorder %s22, %s25
    %p34 = scmp.eq.s32.totalorder %s17, 1
    %p35 = por %p33, %p34
    %p36 = scmp.ne.s32.totalorder %s25, %s26
    %p37 = scmp.eq.s32.totalorder %s17, 0
    %p38 = por %p36, %p37
    %p39 = scmp.ne.s32.totalorder %s25, %s26
    %p40 = scmp.eq.s32.totalorder %s18, 1
    %p41 = por %p39, %p40
    %p43 = scmp.ne.s32.totalorder %s26, %s42
    %p44 = scmp.eq.s32.totalorder %s18, 0
    %p45 = por %p43, %p44
    %s46 = ssub.s32 %s12, %s19
    %p47 = scmp.eq.s32.totalorder %s46, 0
    %s49 = sadd.s32 %s48, 1
    %s50 = scalar_select %p47, %s48, %s49
    %p53 = pneg %p47
    %p54 = scmp.eq.s32.totalorder %s12, 1
    %p55 = por %p53, %p54
    %p56 = scmp.ne.s32.totalorder %s48, %s51
    %p57 = scmp.eq.s32.totalorder %s12, 0
    %p58 = por %p56, %p57
    %p59 = scmp.ne.s32.totalorder %s48, %s51
    %p60 = scmp.eq.s32.totalorder %s17, 1
    %p61 = por %p59, %p60
    %p62 = scmp.ne.s32.totalorder %s51, %s52
    %p63 = scmp.eq.s32.totalorder %s17, 0
    %p64 = por %p62, %p63
    %p65 = scmp.ne.s32.totalorder %s51, %s52
    %p66 = scmp.eq.s32.totalorder %s18, 1
    %p67 = por %p65, %p66
    %p69 = scmp.ne.s32.totalorder %s52, %s68
    %p70 = scmp.eq.s32.totalorder %s18, 0
    %p71 = por %p69, %p70
    %s73 = sadd.s32 %s72, 1
    %p76 = scmp.eq.s32.totalorder %s12, 1
    %p77 = scmp.ne.s32.totalorder %s72, %s74
    %p78 = scmp.eq.s32.totalorder %s12, 0
    %p79 = por %p77, %p78
    %p80 = scmp.ne.s32.totalorder %s72, %s74
    %p81 = scmp.eq.s32.totalorder %s17, 1
    %p82 = por %p80, %p81
    %p83 = scmp.ne.s32.totalorder %s74, %s75
    %p84 = scmp.eq.s32.totalorder %s17, 0
    %p85 = por %p83, %p84
    %p86 = scmp.ne.s32.totalorder %s74, %s75
    %p87 = scmp.eq.s32.totalorder %s18, 1
    %p88 = por %p86, %p87
    %p90 = scmp.ne.s32.totalorder %s75, %s89
    %p91 = scmp.eq.s32.totalorder %s18, 0
    %p92 = por %p90, %p91
    %s94 = sadd.s32 %s93, 1
    %p97 = scmp.eq.s32.totalorder %s12, 1
    %p98 = scmp.ne.s32.totalorder %s93, %s95
    %p99 = scmp.eq.s32.totalorder %s12, 0
    %p100 = por %p98, %p99
    %p101 = scmp.ne.s32.totalorder %s93, %s95
    %p102 = scmp.eq.s32.totalorder %s17, 1
    %p103 = por %p101, %p102
    %p104 = scmp.ne.s32.totalorder %s95, %s96
    %p105 = scmp.eq.s32.totalorder %s17, 0
    %p106 = por %p104, %p105
    %p107 = scmp.ne.s32.totalorder %s95, %s96
    %p108 = scmp.eq.s32.totalorder %s18, 1
    %p109 = por %p107, %p108
    %p111 = scmp.ne.s32.totalorder %s96, %s110
    %p112 = scmp.eq.s32.totalorder %s18, 0
    %p113 = por %p111, %p112
    %s114 = ssub.s32 %s12, %s19
    %p115 = scmp.eq.s32.totalorder %s114, 0
    %s117 = sadd.s32 %s116, 1
    %s118 = scalar_select %p115, %s116, %s117
    %p121 = pneg %p115
    %p122 = scmp.eq.s32.totalorder %s12, 1
    %p123 = por %p121, %p122
    %p124 = scmp.ne.s32.totalorder %s116, %s119
    %p125 = scmp.eq.s32.totalorder %s12, 0
    %p126 = por %p124, %p125
    %p127 = scmp.ne.s32.totalorder %s116, %s119
    %p128 = scmp.eq.s32.totalorder %s17, 1
    %p129 = por %p127, %p128
    %p130 = scmp.ne.s32.totalorder %s119, %s120
    %p131 = scmp.eq.s32.totalorder %s17, 0
    %p132 = por %p130, %p131
    %p133 = scmp.ne.s32.totalorder %s119, %s120
    %p134 = scmp.eq.s32.totalorder %s18, 1
    %p135 = por %p133, %p134
    %p137 = scmp.ne.s32.totalorder %s120, %s136
    %p138 = scmp.eq.s32.totalorder %s18, 0
    %p139 = por %p137, %p138
    %s140 = ssub.s32 %s12, %s19
    %p141 = scmp.eq.s32.totalorder %s140, 0
    %s143 = sadd.s32 %s142, 1
    %s144 = scalar_select %p141, %s142, %s143
    %p147 = pneg %p141
    %p148 = scmp.eq.s32.totalorder %s12, 1
    %p149 = por %p147, %p148
    %p150 = scmp.ne.s32.totalorder %s142, %s145
    %p151 = scmp.eq.s32.totalorder %s12, 0
    %p152 = por %p150, %p151
    %p153 = scmp.ne.s32.totalorder %s142, %s145
    %p154 = scmp.eq.s32.totalorder %s17, 1
    %p155 = por %p153, %p154
    %p156 = scmp.ne.s32.totalorder %s145, %s146
    %p157 = scmp.eq.s32.totalorder %s17, 0
    %p158 = por %p156, %p157
    %p159 = scmp.ne.s32.totalorder %s145, %s146
    %p160 = scmp.eq.s32.totalorder %s18, 1
    %p161 = por %p159, %p160
    %p163 = scmp.ne.s32.totalorder %s146, %s162
    %p164 = scmp.eq.s32.totalorder %s18, 0
    %p165 = por %p163, %p164
    %p166 = scmp.le.s32.totalorder 1, %s12
    %p167 = scmp.lt.s32.totalorder %s12, 3
    %p168 = pnand %p166, %p167
    %p169 = pneg %p168
    // Predicated region
    $region9: #{up_forward.3} parent=5 // pred_check
      _
    $region10: #{up_forward.3} parent=5 // pred_check_branch
      %171 = sbr.rel (%p168) target = $region12
    $region11: #{up_forward.3} parent=5 // pred_region
      %s172 = ssub.s32 %s12, 1
      // Predicated region
      $region13: #{up_forward.3} parent=11 // pred_check
        %p173 = pneg %p85
      $region14: #{up_forward.3} parent=11 // pred_check_branch
        %175 = sbr.rel (%p173) target = $region16
      $region15: #{up_forward.3} parent=11 // pred_region
        _
      $region16: #{up_forward.3} parent=11 // pred_fallthru
        _
      // Predicated region
      $region17: #{up_forward.3} parent=11 // pred_check
        %p176 = pneg %p106
      $region18: #{up_forward.3} parent=11 // pred_check_branch
        %178 = sbr.rel (%p176) target = $region20
      $region19: #{up_forward.3} parent=11 // pred_region
        _
      $region20: #{up_forward.3} parent=11 // pred_fallthru
        _
    $region12: #{up_forward.3} parent=5 // pred_fallthru
      _
    %p179 = scmp.lt.s32.totalorder %s12, 2
    // Predicated region
    $region21: #{up_forward.3} parent=5 // pred_check
      %p180 = pneg %p179
    $region22: #{up_forward.3} parent=5 // pred_check_branch
      %182 = sbr.rel (%p180) target = $region24
    $region23: #{up_forward.3} parent=5 // pred_region
      // Predicated region
      $region25: #{up_forward.3} parent=23 // pred_check
        %p183 = pneg %p32
      $region26: #{up_forward.3} parent=23 // pred_check_branch
        %185 = sbr.rel (%p183) target = $region28
      $region27: #{up_forward.3} parent=23 // pred_region
        %p186 = scmp.lt.s32.totalorder %s12, 1
        %s187 = scalar_select %p186, %s12, 1
        %s188 = smul.addr %s187, 32
        %s189 = smul.addr %s188, 8
        %s190 = scalar_lea.vmem %s0, %s189
      $region28: #{up_forward.3} parent=23 // pred_fallthru
        _
      // Predicated region
      $region29: #{up_forward.3} parent=23 // pred_check
        %p191 = pneg %p58
      $region30: #{up_forward.3} parent=23 // pred_check_branch
        %193 = sbr.rel (%p191) target = $region32
      $region31: #{up_forward.3} parent=23 // pred_region
        %p194 = scmp.lt.s32.totalorder %s12, 1
        %s195 = scalar_select %p194, %s12, 1
        %s196 = smul.addr %s195, 8
        %s197 = smul.addr %s196, 8
        %s198 = scalar_lea.vmem %s1, %s197
      $region32: #{up_forward.3} parent=23 // pred_fallthru
        _
    $region24: #{up_forward.3} parent=5 // pred_fallthru
      _
    %p199 = scmp.le.s32.totalorder 1, %s12
    %p200 = scmp.lt.s32.totalorder %s12, 3
    %p201 = pnand %p199, %p200
    %p202 = pneg %p201
    // Predicated region
    $region33: #{up_forward.3} parent=5 // pred_check
      _
    $region34: #{up_forward.3} parent=5 // pred_check_branch
      %204 = sbr.rel (%p201) target = $region36
    $region35: #{up_forward.3} parent=5 // pred_region
      %s205 = ssub.s32 %s12, 1
      %p206 = scmp.lt.s32.totalorder %s17, 1
      %s207 = scalar_select %p206, %s17, 1
      %s208 = smul.addr %s207, 32
      %s209 = smul.addr %s208, 8
      %s210 = scalar_lea.vmem %s0, %s209
      %p211 = pneg %p38
      %p212 = pneg %p35
      %p213 = scmp.lt.s32.totalorder %s17, 1
      %s214 = scalar_select %p213, %s17, 1
      %s215 = smul.addr %s214, 8
      %s216 = smul.addr %s215, 8
      %s217 = scalar_lea.vmem %s1, %s216
      %p218 = pneg %p64
      %p219 = pneg %p61
      %p220 = pneg %p85
      %p221 = pneg %p82
      %p222 = pneg %p106
      %p223 = pneg %p103
      %p224 = pneg %p132
      %p225 = pneg %p129
      %p226 = scmp.lt.s32.totalorder %s17, 1
      %s227 = scalar_select %p226, %s17, 1
      %s228 = smul.addr %s227, 32
      %s229 = smul.addr %s228, 8
      %s230 = scalar_lea.vmem %s4, %s229
      %p231 = pneg %p158
      %p232 = pneg %p155
      %p233 = scmp.lt.s32.totalorder %s17, 1
      %s234 = scalar_select %p233, %s17, 1
      %s235 = smul.addr %s234, 2
      %s236 = scalar_lea.vmem %s5, %s235
      %p237 = scmp.lt.s32.totalorder %s17, 1
      %s238 = scalar_select %p237, %s17, 1
      %s239 = smul.addr %s238, 32
      %s240 = smul.addr %s239, 8
      %s241 = scalar_lea.vmem %s0, %s240
      %p242 = scmp.lt.s32.totalorder %s17, 1
      %s243 = scalar_select %p242, %s17, 1
      %s244 = smul.addr %s243, 8
      %s245 = smul.addr %s244, 8
      %s246 = scalar_lea.vmem %s1, %s245
      %p247 = scmp.lt.s32.totalorder %s17, 1
      %s248 = scalar_select %p247, %s17, 1
      %s249 = smul.addr %s248, 32
      %s250 = smul.addr %s249, 8
      %s251 = scalar_lea.vmem %s4, %s250
      %p252 = scmp.lt.s32.totalorder %s17, 1
      %s253 = scalar_select %p252, %s17, 1
      %s254 = smul.addr %s253, 2
      %s255 = scalar_lea.vmem %s5, %s254
      %v257 = vld [vmem:[%s246] sm:$0xff]
      %v258 = vld [vmem:[%s246 + $0x8] sm:$0xff]
      %v259 = vld [vmem:[%s246 + $0x10] sm:$0xff]
      %v260 = vld [vmem:[%s246 + $0x18] sm:$0xff]
      %v261 = vld [vmem:[%s246 + $0x20] sm:$0xff]
      %v262 = vld [vmem:[%s246 + $0x28] sm:$0xff]
      %v263 = vld [vmem:[%s246 + $0x30] sm:$0xff]
      %v264 = vld [vmem:[%s246 + $0x38] sm:$0xff]
      %v265 = vmul.f32 %v258, 0.0
      %v266 = vadd.f32 %v257, %v265
      %vm267 = vcmask 64512
      %268 = vst.msk [vmem:[#allocation4] sm:$0xff] %vm267, %v266
      %v269 = vmul.f32 %v257, 0.53333336
      %v270 = vmul.f32 %v258, 0.46666667
      %v271 = vadd.f32 %v269, %v270
      %s272 = scalar_lea.vmem [#allocation4], 8
      %273 = vst.msk [vmem:[%s272] sm:$0xff] %vm267, %v271
      %v274 = vmul.f32 %v257, 0.06666667
      %v275 = vmul.f32 %v258, 0.93333334
      %v276 = vadd.f32 %v274, %v275
      %s277 = scalar_lea.vmem [#allocation4], 16
      %278 = vst.msk [vmem:[%s277] sm:$0xff] %vm267, %v276
      %v279 = vmul.f32 %v258, 0.6
      %v280 = vmul.f32 %v259, 0.4
      %v281 = vadd.f32 %v279, %v280
      %s282 = scalar_lea.vmem [#allocation4], 24
      %283 = vst.msk [vmem:[%s282] sm:$0xff] %vm267, %v281
      %v284 = vmul.f32 %v258, 0.13333334
      %v285 = vmul.f32 %v259, 0.8666667
      %v286 = vadd.f32 %v284, %v285
      %s287 = scalar_lea.vmem [#allocation4], 32
      %288 = vst.msk [vmem:[%s287] sm:$0xff] %vm267, %v286
      %v289 = vmul.f32 %v259, 0.6666667
      %v290 = vmul.f32 %v260, 0.33333334
      %v291 = vadd.f32 %v289, %v290
      %s292 = scalar_lea.vmem [#allocation4], 40
      %293 = vst.msk [vmem:[%s292] sm:$0xff] %vm267, %v291
      %v294 = vmul.f32 %v259, 0.2
      %v295 = vmul.f32 %v260, 0.8
      %v296 = vadd.f32 %v294, %v295
      %s297 = scalar_lea.vmem [#allocation4], 48
      %298 = vst.msk [vmem:[%s297] sm:$0xff] %vm267, %v296
      %v299 = vmul.f32 %v260, 0.73333335
      %v300 = vmul.f32 %v261, 0.26666668
      %v301 = vadd.f32 %v299, %v300
      %s302 = scalar_lea.vmem [#allocation4], 56
      %303 = vst.msk [vmem:[%s302] sm:$0xff] %vm267, %v301
      %v304 = vmul.f32 %v260, 0.26666668
      %v305 = vmul.f32 %v261, 0.73333335
      %v306 = vadd.f32 %v304, %v305
      %s307 = scalar_lea.vmem [#allocation4], 64
      %308 = vst.msk [vmem:[%s307] sm:$0xff] %vm267, %v306
      %v309 = vmul.f32 %v261, 0.8
      %v310 = vmul.f32 %v262, 0.2
      %v311 = vadd.f32 %v309, %v310
      %s312 = scalar_lea.vmem [#allocation4], 72
      %313 = vst.msk [vmem:[%s312] sm:$0xff] %vm267, %v311
      %v314 = vmul.f32 %v261, 0.33333334
      %v315 = vmul.f32 %v262, 0.6666667
      %v316 = vadd.f32 %v314, %v315
      %s317 = scalar_lea.vmem [#allocation4], 80
      %318 = vst.msk [vmem:[%s317] sm:$0xff] %vm267, %v316
      %v319 = vmul.f32 %v262, 0.8666667
      %v320 = vmul.f32 %v263, 0.13333334
      %v321 = vadd.f32 %v319, %v320
      %s322 = scalar_lea.vmem [#allocation4], 88
      %323 = vst.msk [vmem:[%s322] sm:$0xff] %vm267, %v321
      %v324 = vmul.f32 %v262, 0.4
      %v325 = vmul.f32 %v263, 0.6
      %v326 = vadd.f32 %v324, %v325
      %s327 = scalar_lea.vmem [#allocation4], 96
      %328 = vst.msk [vmem:[%s327] sm:$0xff] %vm267, %v326
      %v329 = vmul.f32 %v263, 0.93333334
      %v330 = vmul.f32 %v264, 0.06666667
      %v331 = vadd.f32 %v329, %v330
      %s332 = scalar_lea.vmem [#allocation4], 104
      %333 = vst.msk [vmem:[%s332] sm:$0xff] %vm267, %v331
      %v334 = vmul.f32 %v263, 0.46666667
      %v335 = vmul.f32 %v264, 0.53333336
      %v336 = vadd.f32 %v334, %v335
      %s337 = scalar_lea.vmem [#allocation4], 112
      %338 = vst.msk [vmem:[%s337] sm:$0xff] %vm267, %v336
      %v339 = vmul.f32 %v263, 0.0
      %v340 = vadd.f32 %v339, %v264
      %s341 = scalar_lea.vmem [#allocation4], 120
      %342 = vst.msk [vmem:[%s341] sm:$0xff] %vm267, %v340
      %v343 = vld [vmem:[#allocation4] sm:$0xff]
      %v344 = vld [vmem:[#allocation4 + $0x8] sm:$0xff]
      %v345 = vld [vmem:[#allocation4 + $0x10] sm:$0xff]
      %v346 = vld [vmem:[#allocation4 + $0x18] sm:$0xff]
      %v347 = vld [vmem:[#allocation4 + $0x20] sm:$0xff]
      %v348 = vld [vmem:[#allocation4 + $0x28] sm:$0xff]
      %v349 = vld [vmem:[#allocation4 + $0x30] sm:$0xff]
      %v350 = vld [vmem:[#allocation4 + $0x38] sm:$0xff]
      %v351 = vld [vmem:[#allocation4 + $0x40] sm:$0xff]
      %v352 = vld [vmem:[#allocation4 + $0x48] sm:$0xff]
      %v353 = vld [vmem:[#allocation4 + $0x50] sm:$0xff]
      %v354 = vld [vmem:[#allocation4 + $0x58] sm:$0xff]
      %v355 = vld [vmem:[#allocation4 + $0x60] sm:$0xff]
      %v356 = vld [vmem:[#allocation4 + $0x68] sm:$0xff]
      %v357 = vld [vmem:[#allocation4 + $0x70] sm:$0xff]
      %v358 = vld [vmem:[#allocation4 + $0x78] sm:$0xff]
      %359 = vst.msk [vmem:[#allocation2] sm:$0xff] %vm267, 0.0
      %360 = vst.msk [vmem:[#allocation2 + $0x8] sm:$0xff] %vm267, 0.0
      %vm361 = vcmask 58368
      %362 = vst.msk [vmem:[#allocation2 + $0x10] sm:$0x3] %vm361, 0.0
      %363 = vst.msk [vmem:[#allocation2 + $0x18] sm:$0xff] %vm267, 0.0
      %364 = vst.msk [vmem:[#allocation2 + $0x20] sm:$0xff] %vm267, 0.0
      %365 = vst.msk [vmem:[#allocation2 + $0x28] sm:$0x3] %vm361, 0.0
      %366 = vst.msk [vmem:[#allocation2 + $0x30] sm:$0xff] %vm267, 0.0
      %367 = vst.msk [vmem:[#allocation2 + $0x38] sm:$0xff] %vm267, 0.0
      %368 = vst.msk [vmem:[#allocation2 + $0x40] sm:$0x3] %vm361, 0.0
      %369 = vst.msk [vmem:[#allocation2 + $0x48] sm:$0xff] %vm267, 0.0
      %370 = vst.msk [vmem:[#allocation2 + $0x50] sm:$0xff] %vm267, 0.0
      %371 = vst.msk [vmem:[#allocation2 + $0x58] sm:$0x3] %vm361, 0.0
      %372 = vst.msk [vmem:[#allocation2 + $0x60] sm:$0xff] %vm267, 0.0
      %373 = vst.msk [vmem:[#allocation2 + $0x68] sm:$0xff] %vm267, 0.0
      %374 = vst.msk [vmem:[#allocation2 + $0x70] sm:$0x3] %vm361, 0.0
      %375 = vst.msk [vmem:[#allocation2 + $0x78] sm:$0xff] %vm267, 0.0
      %376 = vst.msk [vmem:[#allocation2 + $0x80] sm:$0xff] %vm267, 0.0
      %377 = vst.msk [vmem:[#allocation2 + $0x88] sm:$0x3] %vm361, 0.0
      %378 = vst.msk [vmem:[#allocation2 + $0x90] sm:$0xff] %vm267, 0.0
      %379 = vst.msk [vmem:[#allocation2 + $0x98] sm:$0xff] %vm267, 0.0
      %380 = vst.msk [vmem:[#allocation2 + $0xa0] sm:$0x3] %vm361, 0.0
      %381 = vst.msk [vmem:[#allocation2 + $0xa8] sm:$0xff] %vm267, 0.0
      %382 = vst.msk [vmem:[#allocation2 + $0xb0] sm:$0xff] %vm267, 0.0
      %383 = vst.msk [vmem:[#allocation2 + $0xb8] sm:$0x3] %vm361, 0.0
      %384 = vst.msk [vmem:[#allocation2 + $0xc0] sm:$0xff] %vm267, 0.0
      %385 = vst.msk [vmem:[#allocation2 + $0xc8] sm:$0xff] %vm267, 0.0
      %386 = vst.msk [vmem:[#allocation2 + $0xd0] sm:$0x3] %vm361, 0.0
      %387 = vst.msk [vmem:[#allocation2 + $0xd8] sm:$0xff] %vm267, 0.0
      %388 = vst.msk [vmem:[#allocation2 + $0xe0] sm:$0xff] %vm267, 0.0
      %389 = vst.msk [vmem:[#allocation2 + $0xe8] sm:$0x3] %vm361, 0.0
      %390 = vst.msk [vmem:[#allocation2 + $0xf0] sm:$0xff] %vm267, 0.0
      %391 = vst.msk [vmem:[#allocation2 + $0xf8] sm:$0xff] %vm267, 0.0
      %392 = vst.msk [vmem:[#allocation2 + $0x100] sm:$0x3] %vm361, 0.0
      %393 = vst.msk [vmem:[#allocation2 + $0x108] sm:$0xff] %vm267, 0.0
      %394 = vst.msk [vmem:[#allocation2 + $0x110] sm:$0xff] %vm267, 0.0
      %395 = vst.msk [vmem:[#allocation2 + $0x118] sm:$0x3] %vm361, 0.0
      %396 = vst.msk [vmem:[#allocation2 + $0x120] sm:$0xff] %vm267, 0.0
      %397 = vst.msk [vmem:[#allocation2 + $0x128] sm:$0xff] %vm267, 0.0
      %398 = vst.msk [vmem:[#allocation2 + $0x130] sm:$0x3] %vm361, 0.0
      %399 = vst.msk [vmem:[#allocation2 + $0x138] sm:$0xff] %vm267, 0.0
      %400 = vst.msk [vmem:[#allocation2 + $0x140] sm:$0xff] %vm267, 0.0
      %401 = vst.msk [vmem:[#allocation2 + $0x148] sm:$0x3] %vm361, 0.0
      %402 = vst.msk [vmem:[#allocation2 + $0x150] sm:$0xff] %vm267, 0.0
      %403 = vst.msk [vmem:[#allocation2 + $0x158] sm:$0xff] %vm267, 0.0
      %404 = vst.msk [vmem:[#allocation2 + $0x160] sm:$0x3] %vm361, 0.0
      %405 = vst.msk [vmem:[#allocation2 + $0x168] sm:$0xff] %vm267, 0.0
      %406 = vst.msk [vmem:[#allocation2 + $0x170] sm:$0xff] %vm267, 0.0
      %407 = vst.msk [vmem:[#allocation2 + $0x178] sm:$0x3] %vm361, 0.0
      %408 = vst.msk [vmem:[#allocation2 + $0x180] sm:$0xff] %vm267, 0.0
      %409 = vst.msk [vmem:[#allocation2 + $0x188] sm:$0xff] %vm267, 0.0
      %410 = vst.msk [vmem:[#allocation2 + $0x190] sm:$0x3] %vm361, 0.0
      %411 = vst.msk [vmem:[#allocation2 + $0x198] sm:$0xff] %vm267, 0.0
      %412 = vst.msk [vmem:[#allocation2 + $0x1a0] sm:$0xff] %vm267, 0.0
      %413 = vst.msk [vmem:[#allocation2 + $0x1a8] sm:$0x3] %vm361, 0.0
      %414 = vst.msk [vmem:[#allocation3] sm:$0xff] %vm267, 0.0
      %415 = vst.msk [vmem:[#allocation3 + $0x8] sm:$0xff] %vm267, 0.0
      %416 = vst.msk [vmem:[#allocation3 + $0x10] sm:$0x3] %vm361, 0.0
      %417 = vst.msk [vmem:[#allocation3 + $0x18] sm:$0xff] %vm267, 0.0
      %418 = vst.msk [vmem:[#allocation3 + $0x20] sm:$0xff] %vm267, 0.0
      %419 = vst.msk [vmem:[#allocation3 + $0x28] sm:$0x3] %vm361, 0.0
      %420 = vst.msk [vmem:[#allocation3 + $0x30] sm:$0xff] %vm267, 0.0
      %421 = vst.msk [vmem:[#allocation3 + $0x38] sm:$0xff] %vm267, 0.0
      %422 = vst.msk [vmem:[#allocation3 + $0x40] sm:$0x3] %vm361, 0.0
      %423 = vst.msk [vmem:[#allocation3 + $0x48] sm:$0xff] %vm267, 0.0
      %424 = vst.msk [vmem:[#allocation3 + $0x50] sm:$0xff] %vm267, 0.0
      %425 = vst.msk [vmem:[#allocation3 + $0x58] sm:$0x3] %vm361, 0.0
      %426 = vst.msk [vmem:[#allocation3 + $0x60] sm:$0xff] %vm267, 0.0
      %427 = vst.msk [vmem:[#allocation3 + $0x68] sm:$0xff] %vm267, 0.0
      %428 = vst.msk [vmem:[#allocation3 + $0x70] sm:$0x3] %vm361, 0.0
      %429 = vst.msk [vmem:[#allocation3 + $0x78] sm:$0xff] %vm267, 0.0
      %430 = vst.msk [vmem:[#allocation3 + $0x80] sm:$0xff] %vm267, 0.0
      %431 = vst.msk [vmem:[#allocation3 + $0x88] sm:$0x3] %vm361, 0.0
      %432 = vst.msk [vmem:[#allocation3 + $0x90] sm:$0xff] %vm267, 0.0
      %433 = vst.msk [vmem:[#allocation3 + $0x98] sm:$0xff] %vm267, 0.0
      %434 = vst.msk [vmem:[#allocation3 + $0xa0] sm:$0x3] %vm361, 0.0
      %435 = vst.msk [vmem:[#allocation3 + $0xa8] sm:$0xff] %vm267, 0.0
      %436 = vst.msk [vmem:[#allocation3 + $0xb0] sm:$0xff] %vm267, 0.0
      %437 = vst.msk [vmem:[#allocation3 + $0xb8] sm:$0x3] %vm361, 0.0
      %438 = vst.msk [vmem:[#allocation3 + $0xc0] sm:$0xff] %vm267, 0.0
      %439 = vst.msk [vmem:[#allocation3 + $0xc8] sm:$0xff] %vm267, 0.0
      %440 = vst.msk [vmem:[#allocation3 + $0xd0] sm:$0x3] %vm361, 0.0
      %441 = vst.msk [vmem:[#allocation3 + $0xd8] sm:$0xff] %vm267, 0.0
      %442 = vst.msk [vmem:[#allocation3 + $0xe0] sm:$0xff] %vm267, 0.0
      %443 = vst.msk [vmem:[#allocation3 + $0xe8] sm:$0x3] %vm361, 0.0
      %444 = vst.msk [vmem:[#allocation3 + $0xf0] sm:$0xff] %vm267, 0.0
      %445 = vst.msk [vmem:[#allocation3 + $0xf8] sm:$0xff] %vm267, 0.0
      %446 = vst.msk [vmem:[#allocation3 + $0x100] sm:$0x3] %vm361, 0.0
      %447 = vst.msk [vmem:[#allocation3 + $0x108] sm:$0xff] %vm267, 0.0
      %448 = vst.msk [vmem:[#allocation3 + $0x110] sm:$0xff] %vm267, 0.0
      %449 = vst.msk [vmem:[#allocation3 + $0x118] sm:$0x3] %vm361, 0.0
      %450 = vst.msk [vmem:[#allocation3 + $0x120] sm:$0xff] %vm267, 0.0
      %451 = vst.msk [vmem:[#allocation3 + $0x128] sm:$0xff] %vm267, 0.0
      %452 = vst.msk [vmem:[#allocation3 + $0x130] sm:$0x3] %vm361, 0.0
      %453 = vst.msk [vmem:[#allocation3 + $0x138] sm:$0xff] %vm267, 0.0
      %454 = vst.msk [vmem:[#allocation3 + $0x140] sm:$0xff] %vm267, 0.0
      %455 = vst.msk [vmem:[#allocation3 + $0x148] sm:$0x3] %vm361, 0.0
      %456 = vst.msk [vmem:[#allocation3 + $0x150] sm:$0xff] %vm267, 0.0
      %457 = vst.msk [vmem:[#allocation3 + $0x158] sm:$0xff] %vm267, 0.0
      %458 = vst.msk [vmem:[#allocation3 + $0x160] sm:$0x3] %vm361, 0.0
      %459 = vst.msk [vmem:[#allocation3 + $0x168] sm:$0xff] %vm267, 0.0
      %460 = vst.msk [vmem:[#allocation3 + $0x170] sm:$0xff] %vm267, 0.0
      %461 = vst.msk [vmem:[#allocation3 + $0x178] sm:$0x3] %vm361, 0.0
      %462 = vst.msk [vmem:[#allocation3 + $0x180] sm:$0xff] %vm267, 0.0
      %463 = vst.msk [vmem:[#allocation3 + $0x188] sm:$0xff] %vm267, 0.0
      %464 = vst.msk [vmem:[#allocation3 + $0x190] sm:$0x3] %vm361, 0.0
      %465 = vst.msk [vmem:[#allocation3 + $0x198] sm:$0xff] %vm267, 0.0
      %466 = vst.msk [vmem:[#allocation3 + $0x1a0] sm:$0xff] %vm267, 0.0
      %467 = vst.msk [vmem:[#allocation3 + $0x1a8] sm:$0x3] %vm361, 0.0
      %v468 = vld [vmem:[%s241] sm:$0xff]
      %v469 = vld [vmem:[%s241 + $0x8] sm:$0xff]
      %v470 = vld [vmem:[%s241 + $0x10] sm:$0xff]
      %v471 = vld [vmem:[%s241 + $0x18] sm:$0xff]
      %v472 = vld [vmem:[%s241 + $0x20] sm:$0xff]
      %v473 = vld [vmem:[%s241 + $0x28] sm:$0xff]
      %v474 = vld [vmem:[%s241 + $0x30] sm:$0xff]
      %v475 = vld [vmem:[%s241 + $0x38] sm:$0xff]
      %v476 = vld [vmem:[%s241 + $0x40] sm:$0xff]
      %v477 = vld [vmem:[%s241 + $0x48] sm:$0xff]
      %v478 = vld [vmem:[%s241 + $0x50] sm:$0xff]
      %v479 = vld [vmem:[%s241 + $0x58] sm:$0xff]
      %v480 = vld [vmem:[%s241 + $0x60] sm:$0xff]
      %v481 = vld [vmem:[%s241 + $0x68] sm:$0xff]
      %v482 = vld [vmem:[%s241 + $0x70] sm:$0xff]
      %v483 = vld [vmem:[%s241 + $0x78] sm:$0xff]
      %v484 = vld [vmem:[%s241 + $0x80] sm:$0xff]
      %v485 = vld [vmem:[%s241 + $0x88] sm:$0xff]
      %v486 = vld [vmem:[%s241 + $0x90] sm:$0xff]
      %v487 = vld [vmem:[%s241 + $0x98] sm:$0xff]
      %v488 = vld [vmem:[%s241 + $0xa0] sm:$0xff]
      %v489 = vld [vmem:[%s241 + $0xa8] sm:$0xff]
      %v490 = vld [vmem:[%s241 + $0xb0] sm:$0xff]
      %v491 = vld [vmem:[%s241 + $0xb8] sm:$0xff]
      %v492 = vld [vmem:[%s241 + $0xc0] sm:$0xff]
      %v493 = vld [vmem:[%s241 + $0xc8] sm:$0xff]
      %v494 = vld [vmem:[%s241 + $0xd0] sm:$0xff]
      %v495 = vld [vmem:[%s241 + $0xd8] sm:$0xff]
      %v496 = vld [vmem:[%s241 + $0xe0] sm:$0xff]
      %v497 = vld [vmem:[%s241 + $0xe8] sm:$0xff]
      %v498 = vld [vmem:[%s241 + $0xf0] sm:$0xff]
      %v499 = vld [vmem:[%s241 + $0xf8] sm:$0xff]
      %s500 = scalar_lea.vmem [#allocation2], 24
      %501 = vst.msk [vmem:[%s500 + $0x1] sm:$0xff] %vm267, %v468
      %502 = vst.msk [vmem:[%s500 + $0x9] sm:$0xff] %vm267, %v469
      %503 = vst.msk [vmem:[%s500 + $0x19] sm:$0xff] %vm267, %v470
      %504 = vst.msk [vmem:[%s500 + $0x21] sm:$0xff] %vm267, %v471
      %505 = vst.msk [vmem:[%s500 + $0x31] sm:$0xff] %vm267, %v472
      %506 = vst.msk [vmem:[%s500 + $0x39] sm:$0xff] %vm267, %v473
      %507 = vst.msk [vmem:[%s500 + $0x49] sm:$0xff] %vm267, %v474
      %508 = vst.msk [vmem:[%s500 + $0x51] sm:$0xff] %vm267, %v475
      %509 = vst.msk [vmem:[%s500 + $0x61] sm:$0xff] %vm267, %v476
      %510 = vst.msk [vmem:[%s500 + $0x69] sm:$0xff] %vm267, %v477
      %511 = vst.msk [vmem:[%s500 + $0x79] sm:$0xff] %vm267, %v478
      %512 = vst.msk [vmem:[%s500 + $0x81] sm:$0xff] %vm267, %v479
      %513 = vst.msk [vmem:[%s500 + $0x91] sm:$0xff] %vm267, %v480
      %514 = vst.msk [vmem:[%s500 + $0x99] sm:$0xff] %vm267, %v481
      %515 = vst.msk [vmem:[%s500 + $0xa9] sm:$0xff] %vm267, %v482
      %516 = vst.msk [vmem:[%s500 + $0xb1] sm:$0xff] %vm267, %v483
      %517 = vst.msk [vmem:[%s500 + $0xc1] sm:$0xff] %vm267, %v484
      %518 = vst.msk [vmem:[%s500 + $0xc9] sm:$0xff] %vm267, %v485
      %519 = vst.msk [vmem:[%s500 + $0xd9] sm:$0xff] %vm267, %v486
      %520 = vst.msk [vmem:[%s500 + $0xe1] sm:$0xff] %vm267, %v487
      %521 = vst.msk [vmem:[%s500 + $0xf1] sm:$0xff] %vm267, %v488
      %522 = vst.msk [vmem:[%s500 + $0xf9] sm:$0xff] %vm267, %v489
      %523 = vst.msk [vmem:[%s500 + $0x109] sm:$0xff] %vm267, %v490
      %524 = vst.msk [vmem:[%s500 + $0x111] sm:$0xff] %vm267, %v491
      %525 = vst.msk [vmem:[%s500 + $0x121] sm:$0xff] %vm267, %v492
      %526 = vst.msk [vmem:[%s500 + $0x129] sm:$0xff] %vm267, %v493
      %527 = vst.msk [vmem:[%s500 + $0x139] sm:$0xff] %vm267, %v494
      %528 = vst.msk [vmem:[%s500 + $0x141] sm:$0xff] %vm267, %v495
      %529 = vst.msk [vmem:[%s500 + $0x151] sm:$0xff] %vm267, %v496
      %530 = vst.msk [vmem:[%s500 + $0x159] sm:$0xff] %vm267, %v497
      %531 = vst.msk [vmem:[%s500 + $0x169] sm:$0xff] %vm267, %v498
      %532 = vst.msk [vmem:[%s500 + $0x171] sm:$0xff] %vm267, %v499
      %v533 = vmul.f32 %v343, 0.0
      %v534 = vmul.f32 %v344, 0.0
      %v535 = vmul.f32 %v345, 0.0
      %v536 = vmul.f32 %v346, 0.0
      %v537 = vmul.f32 %v347, 0.0
      %v538 = vmul.f32 %v348, 0.0
      %v539 = vmul.f32 %v349, 0.0
      %v540 = vmul.f32 %v350, 0.0
      %v541 = vmul.f32 %v351, 0.0
      %v542 = vmul.f32 %v352, 0.0
      %v543 = vmul.f32 %v353, 0.0
      %v544 = vmul.f32 %v354, 0.0
      %v545 = vmul.f32 %v355, 0.0
      %v546 = vmul.f32 %v356, 0.0
      %v547 = vmul.f32 %v357, 0.0
      %v548 = vmul.f32 %v358, 0.0
      %v565 = vrot.slane %v533, 1
      %v566 = vrot.slane %v534, 1
      %v567 = vrot.slane %v535, 1
      %v568 = vrot.slane %v536, 1
      %v569 = vrot.slane %v537, 1
      %v570 = vrot.slane %v538, 1
      %v571 = vrot.slane %v539, 1
      %v572 = vrot.slane %v540, 1
      %v573 = vrot.slane %v541, 1
      %v574 = vrot.slane %v542, 1
      %v575 = vrot.slane %v543, 1
      %v576 = vrot.slane %v544, 1
      %v577 = vrot.slane %v545, 1
      %v578 = vrot.slane %v546, 1
      %v579 = vrot.slane %v547, 1
      %v580 = vrot.slane %v548, 1
      %v597 = vadd.f32 %v343, %v565
      %v598 = vadd.f32 %v344, %v566
      %v599 = vadd.f32 %v345, %v567
      %v600 = vadd.f32 %v346, %v568
      %v601 = vadd.f32 %v347, %v569
      %v602 = vadd.f32 %v348, %v570
      %v603 = vadd.f32 %v349, %v571
      %v604 = vadd.f32 %v350, %v572
      %v605 = vadd.f32 %v351, %v573
      %v606 = vadd.f32 %v352, %v574
      %v607 = vadd.f32 %v353, %v575
      %v608 = vadd.f32 %v354, %v576
      %v609 = vadd.f32 %v355, %v577
      %v610 = vadd.f32 %v356, %v578
      %v611 = vadd.f32 %v357, %v579
      %v612 = vadd.f32 %v358, %v580
      %s613 = scalar_lea.vmem [#allocation3], 24
      %vm614 = vcmask 57344
      %615 = vst.msk [vmem:[%s613 + $0x1] sm:$0x1] %vm614, %v597
      %616 = vst.msk [vmem:[%s613 + $0x19] sm:$0x1] %vm614, %v598
      %617 = vst.msk [vmem:[%s613 + $0x31] sm:$0x1] %vm614, %v599
      %618 = vst.msk [vmem:[%s613 + $0x49] sm:$0x1] %vm614, %v600
      %619 = vst.msk [vmem:[%s613 + $0x61] sm:$0x1] %vm614, %v601
      %620 = vst.msk [vmem:[%s613 + $0x79] sm:$0x1] %vm614, %v602
      %621 = vst.msk [vmem:[%s613 + $0x91] sm:$0x1] %vm614, %v603
      %622 = vst.msk [vmem:[%s613 + $0xa9] sm:$0x1] %vm614, %v604
      %623 = vst.msk [vmem:[%s613 + $0xc1] sm:$0x1] %vm614, %v605
      %624 = vst.msk [vmem:[%s613 + $0xd9] sm:$0x1] %vm614, %v606
      %625 = vst.msk [vmem:[%s613 + $0xf1] sm:$0x1] %vm614, %v607
      %626 = vst.msk [vmem:[%s613 + $0x109] sm:$0x1] %vm614, %v608
      %627 = vst.msk [vmem:[%s613 + $0x121] sm:$0x1] %vm614, %v609
      %628 = vst.msk [vmem:[%s613 + $0x139] sm:$0x1] %vm614, %v610
      %629 = vst.msk [vmem:[%s613 + $0x151] sm:$0x1] %vm614, %v611
      %630 = vst.msk [vmem:[%s613 + $0x169] sm:$0x1] %vm614, %v612
      %v631 = vmul.f32 %v343, 0.53333336
      %v632 = vmul.f32 %v344, 0.53333336
      %v633 = vmul.f32 %v345, 0.53333336
      %v634 = vmul.f32 %v346, 0.53333336
      %v635 = vmul.f32 %v347, 0.53333336
      %v636 = vmul.f32 %v348, 0.53333336
      %v637 = vmul.f32 %v349, 0.53333336
      %v638 = vmul.f32 %v350, 0.53333336
      %v639 = vmul.f32 %v351, 0.53333336
      %v640 = vmul.f32 %v352, 0.53333336
      %v641 = vmul.f32 %v353, 0.53333336
      %v642 = vmul.f32 %v354, 0.53333336
      %v643 = vmul.f32 %v355, 0.53333336
      %v644 = vmul.f32 %v356, 0.53333336
      %v645 = vmul.f32 %v357, 0.53333336
      %v646 = vmul.f32 %v358, 0.53333336
      %v647 = vmul.f32 %v343, 0.46666667
      %v648 = vmul.f32 %v344, 0.46666667
      %v649 = vmul.f32 %v345, 0.46666667
      %v650 = vmul.f32 %v346, 0.46666667
      %v651 = vmul.f32 %v347, 0.46666667
      %v652 = vmul.f32 %v348, 0.46666667
      %v653 = vmul.f32 %v349, 0.46666667
      %v654 = vmul.f32 %v350, 0.46666667
      %v655 = vmul.f32 %v351, 0.46666667
      %v656 = vmul.f32 %v352, 0.46666667
      %v657 = vmul.f32 %v353, 0.46666667
      %v658 = vmul.f32 %v354, 0.46666667
      %v659 = vmul.f32 %v355, 0.46666667
      %v660 = vmul.f32 %v356, 0.46666667
      %v661 = vmul.f32 %v357, 0.46666667
      %v662 = vmul.f32 %v358, 0.46666667
      %v679 = vrot.slane %v647, 1
      %v680 = vrot.slane %v648, 1
      %v681 = vrot.slane %v649, 1
      %v682 = vrot.slane %v650, 1
      %v683 = vrot.slane %v651, 1
      %v684 = vrot.slane %v652, 1
      %v685 = vrot.slane %v653, 1
      %v686 = vrot.slane %v654, 1
      %v687 = vrot.slane %v655, 1
      %v688 = vrot.slane %v656, 1
      %v689 = vrot.slane %v657, 1
      %v690 = vrot.slane %v658, 1
      %v691 = vrot.slane %v659, 1
      %v692 = vrot.slane %v660, 1
      %v693 = vrot.slane %v661, 1
      %v694 = vrot.slane %v662, 1
      %v711 = vadd.f32 %v631, %v679
      %v712 = vadd.f32 %v632, %v680
      %v713 = vadd.f32 %v633, %v681
      %v714 = vadd.f32 %v634, %v682
      %v715 = vadd.f32 %v635, %v683
      %v716 = vadd.f32 %v636, %v684
      %v717 = vadd.f32 %v637, %v685
      %v718 = vadd.f32 %v638, %v686
      %v719 = vadd.f32 %v639, %v687
      %v720 = vadd.f32 %v640, %v688
      %v721 = vadd.f32 %v641, %v689
      %v722 = vadd.f32 %v642, %v690
      %v723 = vadd.f32 %v643, %v691
      %v724 = vadd.f32 %v644, %v692
      %v725 = vadd.f32 %v645, %v693
      %v726 = vadd.f32 %v646, %v694
      %727 = vst.msk [vmem:[%s613 + $0x2] sm:$0x1] %vm614, %v711
      %728 = vst.msk [vmem:[%s613 + $0x1a] sm:$0x1] %vm614, %v712
      %729 = vst.msk [vmem:[%s613 + $0x32] sm:$0x1] %vm614, %v713
      %730 = vst.msk [vmem:[%s613 + $0x4a] sm:$0x1] %vm614, %v714
      %731 = vst.msk [vmem:[%s613 + $0x62] sm:$0x1] %vm614, %v715
      %732 = vst.msk [vmem:[%s613 + $0x7a] sm:$0x1] %vm614, %v716
      %733 = vst.msk [vmem:[%s613 + $0x92] sm:$0x1] %vm614, %v717
      %734 = vst.msk [vmem:[%s613 + $0xaa] sm:$0x1] %vm614, %v718
      %735 = vst.msk [vmem:[%s613 + $0xc2] sm:$0x1] %vm614, %v719
      %736 = vst.msk [vmem:[%s613 + $0xda] sm:$0x1] %vm614, %v720
      %737 = vst.msk [vmem:[%s613 + $0xf2] sm:$0x1] %vm614, %v721
      %738 = vst.msk [vmem:[%s613 + $0x10a] sm:$0x1] %vm614, %v722
      %739 = vst.msk [vmem:[%s613 + $0x122] sm:$0x1] %vm614, %v723
      %740 = vst.msk [vmem:[%s613 + $0x13a] sm:$0x1] %vm614, %v724
      %741 = vst.msk [vmem:[%s613 + $0x152] sm:$0x1] %vm614, %v725
      %742 = vst.msk [vmem:[%s613 + $0x16a] sm:$0x1] %vm614, %v726
      %v743 = vmul.f32 %v343, 0.06666667
      %v744 = vmul.f32 %v344, 0.06666667
      %v745 = vmul.f32 %v345, 0.06666667
      %v746 = vmul.f32 %v346, 0.06666667
      %v747 = vmul.f32 %v347, 0.06666667
      %v748 = vmul.f32 %v348, 0.06666667
      %v749 = vmul.f32 %v349, 0.06666667
      %v750 = vmul.f32 %v350, 0.06666667
      %v751 = vmul.f32 %v351, 0.06666667
      %v752 = vmul.f32 %v352, 0.06666667
      %v753 = vmul.f32 %v353, 0.06666667
      %v754 = vmul.f32 %v354, 0.06666667
      %v755 = vmul.f32 %v355, 0.06666667
      %v756 = vmul.f32 %v356, 0.06666667
      %v757 = vmul.f32 %v357, 0.06666667
      %v758 = vmul.f32 %v358, 0.06666667
      %v759 = vmul.f32 %v343, 0.93333334
      %v760 = vmul.f32 %v344, 0.93333334
      %v761 = vmul.f32 %v345, 0.93333334
      %v762 = vmul.f32 %v346, 0.93333334
      %v763 = vmul.f32 %v347, 0.93333334
      %v764 = vmul.f32 %v348, 0.93333334
      %v765 = vmul.f32 %v349, 0.93333334
      %v766 = vmul.f32 %v350, 0.93333334
      %v767 = vmul.f32 %v351, 0.93333334
      %v768 = vmul.f32 %v352, 0.93333334
      %v769 = vmul.f32 %v353, 0.93333334
      %v770 = vmul.f32 %v354, 0.93333334
      %v771 = vmul.f32 %v355, 0.93333334
      %v772 = vmul.f32 %v356, 0.93333334
      %v773 = vmul.f32 %v357, 0.93333334
      %v774 = vmul.f32 %v358, 0.93333334
      %v791 = vrot.slane %v759, 1
      %v792 = vrot.slane %v760, 1
      %v793 = vrot.slane %v761, 1
      %v794 = vrot.slane %v762, 1
      %v795 = vrot.slane %v763, 1
      %v796 = vrot.slane %v764, 1
      %v797 = vrot.slane %v765, 1
      %v798 = vrot.slane %v766, 1
      %v799 = vrot.slane %v767, 1
      %v800 = vrot.slane %v768, 1
      %v801 = vrot.slane %v769, 1
      %v802 = vrot.slane %v770, 1
      %v803 = vrot.slane %v771, 1
      %v804 = vrot.slane %v772, 1
      %v805 = vrot.slane %v773, 1
      %v806 = vrot.slane %v774, 1
      %v823 = vadd.f32 %v743, %v791
      %v824 = vadd.f32 %v744, %v792
      %v825 = vadd.f32 %v745, %v793
      %v826 = vadd.f32 %v746, %v794
      %v827 = vadd.f32 %v747, %v795
      %v828 = vadd.f32 %v748, %v796
      %v829 = vadd.f32 %v749, %v797
      %v830 = vadd.f32 %v750, %v798
      %v831 = vadd.f32 %v751, %v799
      %v832 = vadd.f32 %v752, %v800
      %v833 = vadd.f32 %v753, %v801
      %v834 = vadd.f32 %v754, %v802
      %v835 = vadd.f32 %v755, %v803
      %v836 = vadd.f32 %v756, %v804
      %v837 = vadd.f32 %v757, %v805
      %v838 = vadd.f32 %v758, %v806
      %839 = vst.msk [vmem:[%s613 + $0x3] sm:$0x1] %vm614, %v823
      %840 = vst.msk [vmem:[%s613 + $0x1b] sm:$0x1] %vm614, %v824
      %841 = vst.msk [vmem:[%s613 + $0x33] sm:$0x1] %vm614, %v825
      %842 = vst.msk [vmem:[%s613 + $0x4b] sm:$0x1] %vm614, %v826
      %843 = vst.msk [vmem:[%s613 + $0x63] sm:$0x1] %vm614, %v827
      %844 = vst.msk [vmem:[%s613 + $0x7b] sm:$0x1] %vm614, %v828
      %845 = vst.msk [vmem:[%s613 + $0x93] sm:$0x1] %vm614, %v829
      %846 = vst.msk [vmem:[%s613 + $0xab] sm:$0x1] %vm614, %v830
      %847 = vst.msk [vmem:[%s613 + $0xc3] sm:$0x1] %vm614, %v831
      %848 = vst.msk [vmem:[%s613 + $0xdb] sm:$0x1] %vm614, %v832
      %849 = vst.msk [vmem:[%s613 + $0xf3] sm:$0x1] %vm614, %v833
      %850 = vst.msk [vmem:[%s613 + $0x10b] sm:$0x1] %vm614, %v834
      %851 = vst.msk [vmem:[%s613 + $0x123] sm:$0x1] %vm614, %v835
      %852 = vst.msk [vmem:[%s613 + $0x13b] sm:$0x1] %vm614, %v836
      %853 = vst.msk [vmem:[%s613 + $0x153] sm:$0x1] %vm614, %v837
      %854 = vst.msk [vmem:[%s613 + $0x16b] sm:$0x1] %vm614, %v838
      %v855 = vmul.f32 %v343, 0.6
      %v856 = vmul.f32 %v344, 0.6
      %v857 = vmul.f32 %v345, 0.6
      %v858 = vmul.f32 %v346, 0.6
      %v859 = vmul.f32 %v347, 0.6
      %v860 = vmul.f32 %v348, 0.6
      %v861 = vmul.f32 %v349, 0.6
      %v862 = vmul.f32 %v350, 0.6
      %v863 = vmul.f32 %v351, 0.6
      %v864 = vmul.f32 %v352, 0.6
      %v865 = vmul.f32 %v353, 0.6
      %v866 = vmul.f32 %v354, 0.6
      %v867 = vmul.f32 %v355, 0.6
      %v868 = vmul.f32 %v356, 0.6
      %v869 = vmul.f32 %v357, 0.6
      %v870 = vmul.f32 %v358, 0.6
      %v871 = vmul.f32 %v343, 0.4
      %v872 = vmul.f32 %v344, 0.4
      %v873 = vmul.f32 %v345, 0.4
      %v874 = vmul.f32 %v346, 0.4
      %v875 = vmul.f32 %v347, 0.4
      %v876 = vmul.f32 %v348, 0.4
      %v877 = vmul.f32 %v349, 0.4
      %v878 = vmul.f32 %v350, 0.4
      %v879 = vmul.f32 %v351, 0.4
      %v880 = vmul.f32 %v352, 0.4
      %v881 = vmul.f32 %v353, 0.4
      %v882 = vmul.f32 %v354, 0.4
      %v883 = vmul.f32 %v355, 0.4
      %v884 = vmul.f32 %v356, 0.4
      %v885 = vmul.f32 %v357, 0.4
      %v886 = vmul.f32 %v358, 0.4
      %v903 = vrot.slane %v871, 1
      %v904 = vrot.slane %v872, 1
      %v905 = vrot.slane %v873, 1
      %v906 = vrot.slane %v874, 1
      %v907 = vrot.slane %v875, 1
      %v908 = vrot.slane %v876, 1
      %v909 = vrot.slane %v877, 1
      %v910 = vrot.slane %v878, 1
      %v911 = vrot.slane %v879, 1
      %v912 = vrot.slane %v880, 1
      %v913 = vrot.slane %v881, 1
      %v914 = vrot.slane %v882, 1
      %v915 = vrot.slane %v883, 1
      %v916 = vrot.slane %v884, 1
      %v917 = vrot.slane %v885, 1
      %v918 = vrot.slane %v886, 1
      %v935 = vadd.f32 %v855, %v903
      %v936 = vadd.f32 %v856, %v904
      %v937 = vadd.f32 %v857, %v905
      %v938 = vadd.f32 %v858, %v906
      %v939 = vadd.f32 %v859, %v907
      %v940 = vadd.f32 %v860, %v908
      %v941 = vadd.f32 %v861, %v909
      %v942 = vadd.f32 %v862, %v910
      %v943 = vadd.f32 %v863, %v911
      %v944 = vadd.f32 %v864, %v912
      %v945 = vadd.f32 %v865, %v913
      %v946 = vadd.f32 %v866, %v914
      %v947 = vadd.f32 %v867, %v915
      %v948 = vadd.f32 %v868, %v916
      %v949 = vadd.f32 %v869, %v917
      %v950 = vadd.f32 %v870, %v918
      %vm951 = vcmask 58369
      %952 = vst.msk [vmem:[%s613 + $0x3] sm:$0x2] %vm951, %v935
      %953 = vst.msk [vmem:[%s613 + $0x1b] sm:$0x2] %vm951, %v936
      %954 = vst.msk [vmem:[%s613 + $0x33] sm:$0x2] %vm951, %v937
      %955 = vst.msk [vmem:[%s613 + $0x4b] sm:$0x2] %vm951, %v938
      %956 = vst.msk [vmem:[%s613 + $0x63] sm:$0x2] %vm951, %v939
      %957 = vst.msk [vmem:[%s613 + $0x7b] sm:$0x2] %vm951, %v940
      %958 = vst.msk [vmem:[%s613 + $0x93] sm:$0x2] %vm951, %v941
      %959 = vst.msk [vmem:[%s613 + $0xab] sm:$0x2] %vm951, %v942
      %960 = vst.msk [vmem:[%s613 + $0xc3] sm:$0x2] %vm951, %v943
      %961 = vst.msk [vmem:[%s613 + $0xdb] sm:$0x2] %vm951, %v944
      %962 = vst.msk [vmem:[%s613 + $0xf3] sm:$0x2] %vm951, %v945
      %963 = vst.msk [vmem:[%s613 + $0x10b] sm:$0x2] %vm951, %v946
      %964 = vst.msk [vmem:[%s613 + $0x123] sm:$0x2] %vm951, %v947
      %965 = vst.msk [vmem:[%s613 + $0x13b] sm:$0x2] %vm951, %v948
      %966 = vst.msk [vmem:[%s613 + $0x153] sm:$0x2] %vm951, %v949
      %967 = vst.msk [vmem:[%s613 + $0x16b] sm:$0x2] %vm951, %v950
      %v968 = vmul.f32 %v343, 0.13333334
      %v969 = vmul.f32 %v344, 0.13333334
      %v970 = vmul.f32 %v345, 0.13333334
      %v971 = vmul.f32 %v346, 0.13333334
      %v972 = vmul.f32 %v347, 0.13333334
      %v973 = vmul.f32 %v348, 0.13333334
      %v974 = vmul.f32 %v349, 0.13333334
      %v975 = vmul.f32 %v350, 0.13333334
      %v976 = vmul.f32 %v351, 0.13333334
      %v977 = vmul.f32 %v352, 0.13333334
      %v978 = vmul.f32 %v353, 0.13333334
      %v979 = vmul.f32 %v354, 0.13333334
      %v980 = vmul.f32 %v355, 0.13333334
      %v981 = vmul.f32 %v356, 0.13333334
      %v982 = vmul.f32 %v357, 0.13333334
      %v983 = vmul.f32 %v358, 0.13333334
      %v984 = vmul.f32 %v343, 0.8666667
      %v985 = vmul.f32 %v344, 0.8666667
      %v986 = vmul.f32 %v345, 0.8666667
      %v987 = vmul.f32 %v346, 0.8666667
      %v988 = vmul.f32 %v347, 0.8666667
      %v989 = vmul.f32 %v348, 0.8666667
      %v990 = vmul.f32 %v349, 0.8666667
      %v991 = vmul.f32 %v350, 0.8666667
      %v992 = vmul.f32 %v351, 0.8666667
      %v993 = vmul.f32 %v352, 0.8666667
      %v994 = vmul.f32 %v353, 0.8666667
      %v995 = vmul.f32 %v354, 0.8666667
      %v996 = vmul.f32 %v355, 0.8666667
      %v997 = vmul.f32 %v356, 0.8666667
      %v998 = vmul.f32 %v357, 0.8666667
      %v999 = vmul.f32 %v358, 0.8666667
      %v1016 = vrot.slane %v984, 1
      %v1017 = vrot.slane %v985, 1
      %v1018 = vrot.slane %v986, 1
      %v1019 = vrot.slane %v987, 1
      %v1020 = vrot.slane %v988, 1
      %v1021 = vrot.slane %v989, 1
      %v1022 = vrot.slane %v990, 1
      %v1023 = vrot.slane %v991, 1
      %v1024 = vrot.slane %v992, 1
      %v1025 = vrot.slane %v993, 1
      %v1026 = vrot.slane %v994, 1
      %v1027 = vrot.slane %v995, 1
      %v1028 = vrot.slane %v996, 1
      %v1029 = vrot.slane %v997, 1
      %v1030 = vrot.slane %v998, 1
      %v1031 = vrot.slane %v999, 1
      %v1048 = vadd.f32 %v968, %v1016
      %v1049 = vadd.f32 %v969, %v1017
      %v1050 = vadd.f32 %v970, %v1018
      %v1051 = vadd.f32 %v971, %v1019
      %v1052 = vadd.f32 %v972, %v1020
      %v1053 = vadd.f32 %v973, %v1021
      %v1054 = vadd.f32 %v974, %v1022
      %v1055 = vadd.f32 %v975, %v1023
      %v1056 = vadd.f32 %v976, %v1024
      %v1057 = vadd.f32 %v977, %v1025
      %v1058 = vadd.f32 %v978, %v1026
      %v1059 = vadd.f32 %v979, %v1027
      %v1060 = vadd.f32 %v980, %v1028
      %v1061 = vadd.f32 %v981, %v1029
      %v1062 = vadd.f32 %v982, %v1030
      %v1063 = vadd.f32 %v983, %v1031
      %1064 = vst.msk [vmem:[%s613 + $0x4] sm:$0x2] %vm951, %v1048
      %1065 = vst.msk [vmem:[%s613 + $0x1c] sm:$0x2] %vm951, %v1049
      %1066 = vst.msk [vmem:[%s613 + $0x34] sm:$0x2] %vm951, %v1050
      %1067 = vst.msk [vmem:[%s613 + $0x4c] sm:$0x2] %vm951, %v1051
      %1068 = vst.msk [vmem:[%s613 + $0x64] sm:$0x2] %vm951, %v1052
      %1069 = vst.msk [vmem:[%s613 + $0x7c] sm:$0x2] %vm951, %v1053
      %1070 = vst.msk [vmem:[%s613 + $0x94] sm:$0x2] %vm951, %v1054
      %1071 = vst.msk [vmem:[%s613 + $0xac] sm:$0x2] %vm951, %v1055
      %1072 = vst.msk [vmem:[%s613 + $0xc4] sm:$0x2] %vm951, %v1056
      %1073 = vst.msk [vmem:[%s613 + $0xdc] sm:$0x2] %vm951, %v1057
      %1074 = vst.msk [vmem:[%s613 + $0xf4] sm:$0x2] %vm951, %v1058
      %1075 = vst.msk [vmem:[%s613 + $0x10c] sm:$0x2] %vm951, %v1059
      %1076 = vst.msk [vmem:[%s613 + $0x124] sm:$0x2] %vm951, %v1060
      %1077 = vst.msk [vmem:[%s613 + $0x13c] sm:$0x2] %vm951, %v1061
      %1078 = vst.msk [vmem:[%s613 + $0x154] sm:$0x2] %vm951, %v1062
      %1079 = vst.msk [vmem:[%s613 + $0x16c] sm:$0x2] %vm951, %v1063
      %v1080 = vmul.f32 %v343, 0.6666667
      %v1081 = vmul.f32 %v344, 0.6666667
      %v1082 = vmul.f32 %v345, 0.6666667
      %v1083 = vmul.f32 %v346, 0.6666667
      %v1084 = vmul.f32 %v347, 0.6666667
      %v1085 = vmul.f32 %v348, 0.6666667
      %v1086 = vmul.f32 %v349, 0.6666667
      %v1087 = vmul.f32 %v350, 0.6666667
      %v1088 = vmul.f32 %v351, 0.6666667
      %v1089 = vmul.f32 %v352, 0.6666667
      %v1090 = vmul.f32 %v353, 0.6666667
      %v1091 = vmul.f32 %v354, 0.6666667
      %v1092 = vmul.f32 %v355, 0.6666667
      %v1093 = vmul.f32 %v356, 0.6666667
      %v1094 = vmul.f32 %v357, 0.6666667
      %v1095 = vmul.f32 %v358, 0.6666667
      %v1096 = vmul.f32 %v343, 0.33333334
      %v1097 = vmul.f32 %v344, 0.33333334
      %v1098 = vmul.f32 %v345, 0.33333334
      %v1099 = vmul.f32 %v346, 0.33333334
      %v1100 = vmul.f32 %v347, 0.33333334
      %v1101 = vmul.f32 %v348, 0.33333334
      %v1102 = vmul.f32 %v349, 0.33333334
      %v1103 = vmul.f32 %v350, 0.33333334
      %v1104 = vmul.f32 %v351, 0.33333334
      %v1105 = vmul.f32 %v352, 0.33333334
      %v1106 = vmul.f32 %v353, 0.33333334
      %v1107 = vmul.f32 %v354, 0.33333334
      %v1108 = vmul.f32 %v355, 0.33333334
      %v1109 = vmul.f32 %v356, 0.33333334
      %v1110 = vmul.f32 %v357, 0.33333334
      %v1111 = vmul.f32 %v358, 0.33333334
      %v1128 = vrot.slane %v1096, 1
      %v1129 = vrot.slane %v1097, 1
      %v1130 = vrot.slane %v1098, 1
      %v1131 = vrot.slane %v1099, 1
      %v1132 = vrot.slane %v1100, 1
      %v1133 = vrot.slane %v1101, 1
      %v1134 = vrot.slane %v1102, 1
      %v1135 = vrot.slane %v1103, 1
      %v1136 = vrot.slane %v1104, 1
      %v1137 = vrot.slane %v1105, 1
      %v1138 = vrot.slane %v1106, 1
      %v1139 = vrot.slane %v1107, 1
      %v1140 = vrot.slane %v1108, 1
      %v1141 = vrot.slane %v1109, 1
      %v1142 = vrot.slane %v1110, 1
      %v1143 = vrot.slane %v1111, 1
      %v1160 = vadd.f32 %v1080, %v1128
      %v1161 = vadd.f32 %v1081, %v1129
      %v1162 = vadd.f32 %v1082, %v1130
      %v1163 = vadd.f32 %v1083, %v1131
      %v1164 = vadd.f32 %v1084, %v1132
      %v1165 = vadd.f32 %v1085, %v1133
      %v1166 = vadd.f32 %v1086, %v1134
      %v1167 = vadd.f32 %v1087, %v1135
      %v1168 = vadd.f32 %v1088, %v1136
      %v1169 = vadd.f32 %v1089, %v1137
      %v1170 = vadd.f32 %v1090, %v1138
      %v1171 = vadd.f32 %v1091, %v1139
      %v1172 = vadd.f32 %v1092, %v1140
      %v1173 = vadd.f32 %v1093, %v1141
      %v1174 = vadd.f32 %v1094, %v1142
      %v1175 = vadd.f32 %v1095, %v1143
      %vm1176 = vcmask 59394
      %1177 = vst.msk [vmem:[%s613 + $0x4] sm:$0x4] %vm1176, %v1160
      %1178 = vst.msk [vmem:[%s613 + $0x1c] sm:$0x4] %vm1176, %v1161
      %1179 = vst.msk [vmem:[%s613 + $0x34] sm:$0x4] %vm1176, %v1162
      %1180 = vst.msk [vmem:[%s613 + $0x4c] sm:$0x4] %vm1176, %v1163
      %1181 = vst.msk [vmem:[%s613 + $0x64] sm:$0x4] %vm1176, %v1164
      %1182 = vst.msk [vmem:[%s613 + $0x7c] sm:$0x4] %vm1176, %v1165
      %1183 = vst.msk [vmem:[%s613 + $0x94] sm:$0x4] %vm1176, %v1166
      %1184 = vst.msk [vmem:[%s613 + $0xac] sm:$0x4] %vm1176, %v1167
      %1185 = vst.msk [vmem:[%s613 + $0xc4] sm:$0x4] %vm1176, %v1168
      %1186 = vst.msk [vmem:[%s613 + $0xdc] sm:$0x4] %vm1176, %v1169
      %1187 = vst.msk [vmem:[%s613 + $0xf4] sm:$0x4] %vm1176, %v1170
      %1188 = vst.msk [vmem:[%s613 + $0x10c] sm:$0x4] %vm1176, %v1171
      %1189 = vst.msk [vmem:[%s613 + $0x124] sm:$0x4] %vm1176, %v1172
      %1190 = vst.msk [vmem:[%s613 + $0x13c] sm:$0x4] %vm1176, %v1173
      %1191 = vst.msk [vmem:[%s613 + $0x154] sm:$0x4] %vm1176, %v1174
      %1192 = vst.msk [vmem:[%s613 + $0x16c] sm:$0x4] %vm1176, %v1175
      %v1193 = vmul.f32 %v343, 0.2
      %v1194 = vmul.f32 %v344, 0.2
      %v1195 = vmul.f32 %v345, 0.2
      %v1196 = vmul.f32 %v346, 0.2
      %v1197 = vmul.f32 %v347, 0.2
      %v1198 = vmul.f32 %v348, 0.2
      %v1199 = vmul.f32 %v349, 0.2
      %v1200 = vmul.f32 %v350, 0.2
      %v1201 = vmul.f32 %v351, 0.2
      %v1202 = vmul.f32 %v352, 0.2
      %v1203 = vmul.f32 %v353, 0.2
      %v1204 = vmul.f32 %v354, 0.2
      %v1205 = vmul.f32 %v355, 0.2
      %v1206 = vmul.f32 %v356, 0.2
      %v1207 = vmul.f32 %v357, 0.2
      %v1208 = vmul.f32 %v358, 0.2
      %v1209 = vmul.f32 %v343, 0.8
      %v1210 = vmul.f32 %v344, 0.8
      %v1211 = vmul.f32 %v345, 0.8
      %v1212 = vmul.f32 %v346, 0.8
      %v1213 = vmul.f32 %v347, 0.8
      %v1214 = vmul.f32 %v348, 0.8
      %v1215 = vmul.f32 %v349, 0.8
      %v1216 = vmul.f32 %v350, 0.8
      %v1217 = vmul.f32 %v351, 0.8
      %v1218 = vmul.f32 %v352, 0.8
      %v1219 = vmul.f32 %v353, 0.8
      %v1220 = vmul.f32 %v354, 0.8
      %v1221 = vmul.f32 %v355, 0.8
      %v1222 = vmul.f32 %v356, 0.8
      %v1223 = vmul.f32 %v357, 0.8
      %v1224 = vmul.f32 %v358, 0.8
      %v1241 = vrot.slane %v1209, 1
      %v1242 = vrot.slane %v1210, 1
      %v1243 = vrot.slane %v1211, 1
      %v1244 = vrot.slane %v1212, 1
      %v1245 = vrot.slane %v1213, 1
      %v1246 = vrot.slane %v1214, 1
      %v1247 = vrot.slane %v1215, 1
      %v1248 = vrot.slane %v1216, 1
      %v1249 = vrot.slane %v1217, 1
      %v1250 = vrot.slane %v1218, 1
      %v1251 = vrot.slane %v1219, 1
      %v1252 = vrot.slane %v1220, 1
      %v1253 = vrot.slane %v1221, 1
      %v1254 = vrot.slane %v1222, 1
      %v1255 = vrot.slane %v1223, 1
      %v1256 = vrot.slane %v1224, 1
      %v1273 = vadd.f32 %v1193, %v1241
      %v1274 = vadd.f32 %v1194, %v1242
      %v1275 = vadd.f32 %v1195, %v1243
      %v1276 = vadd.f32 %v1196, %v1244
      %v1277 = vadd.f32 %v1197, %v1245
      %v1278 = vadd.f32 %v1198, %v1246
      %v1279 = vadd.f32 %v1199, %v1247
      %v1280 = vadd.f32 %v1200, %v1248
      %v1281 = vadd.f32 %v1201, %v1249
      %v1282 = vadd.f32 %v1202, %v1250
      %v1283 = vadd.f32 %v1203, %v1251
      %v1284 = vadd.f32 %v1204, %v1252
      %v1285 = vadd.f32 %v1205, %v1253
      %v1286 = vadd.f32 %v1206, %v1254
      %v1287 = vadd.f32 %v1207, %v1255
      %v1288 = vadd.f32 %v1208, %v1256
      %1289 = vst.msk [vmem:[%s613 + $0x5] sm:$0x4] %vm1176, %v1273
      %1290 = vst.msk [vmem:[%s613 + $0x1d] sm:$0x4] %vm1176, %v1274
      %1291 = vst.msk [vmem:[%s613 + $0x35] sm:$0x4] %vm1176, %v1275
      %1292 = vst.msk [vmem:[%s613 + $0x4d] sm:$0x4] %vm1176, %v1276
      %1293 = vst.msk [vmem:[%s613 + $0x65] sm:$0x4] %vm1176, %v1277
      %1294 = vst.msk [vmem:[%s613 + $0x7d] sm:$0x4] %vm1176, %v1278
      %1295 = vst.msk [vmem:[%s613 + $0x95] sm:$0x4] %vm1176, %v1279
      %1296 = vst.msk [vmem:[%s613 + $0xad] sm:$0x4] %vm1176, %v1280
      %1297 = vst.msk [vmem:[%s613 + $0xc5] sm:$0x4] %vm1176, %v1281
      %1298 = vst.msk [vmem:[%s613 + $0xdd] sm:$0x4] %vm1176, %v1282
      %1299 = vst.msk [vmem:[%s613 + $0xf5] sm:$0x4] %vm1176, %v1283
      %1300 = vst.msk [vmem:[%s613 + $0x10d] sm:$0x4] %vm1176, %v1284
      %1301 = vst.msk [vmem:[%s613 + $0x125] sm:$0x4] %vm1176, %v1285
      %1302 = vst.msk [vmem:[%s613 + $0x13d] sm:$0x4] %vm1176, %v1286
      %1303 = vst.msk [vmem:[%s613 + $0x155] sm:$0x4] %vm1176, %v1287
      %1304 = vst.msk [vmem:[%s613 + $0x16d] sm:$0x4] %vm1176, %v1288
      %v1305 = vmul.f32 %v343, 0.73333335
      %v1306 = vmul.f32 %v344, 0.73333335
      %v1307 = vmul.f32 %v345, 0.73333335
      %v1308 = vmul.f32 %v346, 0.73333335
      %v1309 = vmul.f32 %v347, 0.73333335
      %v1310 = vmul.f32 %v348, 0.73333335
      %v1311 = vmul.f32 %v349, 0.73333335
      %v1312 = vmul.f32 %v350, 0.73333335
      %v1313 = vmul.f32 %v351, 0.73333335
      %v1314 = vmul.f32 %v352, 0.73333335
      %v1315 = vmul.f32 %v353, 0.73333335
      %v1316 = vmul.f32 %v354, 0.73333335
      %v1317 = vmul.f32 %v355, 0.73333335
      %v1318 = vmul.f32 %v356, 0.73333335
      %v1319 = vmul.f32 %v357, 0.73333335
      %v1320 = vmul.f32 %v358, 0.73333335
      %v1321 = vmul.f32 %v343, 0.26666668
      %v1322 = vmul.f32 %v344, 0.26666668
      %v1323 = vmul.f32 %v345, 0.26666668
      %v1324 = vmul.f32 %v346, 0.26666668
      %v1325 = vmul.f32 %v347, 0.26666668
      %v1326 = vmul.f32 %v348, 0.26666668
      %v1327 = vmul.f32 %v349, 0.26666668
      %v1328 = vmul.f32 %v350, 0.26666668
      %v1329 = vmul.f32 %v351, 0.26666668
      %v1330 = vmul.f32 %v352, 0.26666668
      %v1331 = vmul.f32 %v353, 0.26666668
      %v1332 = vmul.f32 %v354, 0.26666668
      %v1333 = vmul.f32 %v355, 0.26666668
      %v1334 = vmul.f32 %v356, 0.26666668
      %v1335 = vmul.f32 %v357, 0.26666668
      %v1336 = vmul.f32 %v358, 0.26666668
      %v1353 = vrot.slane %v1321, 1
      %v1354 = vrot.slane %v1322, 1
      %v1355 = vrot.slane %v1323, 1
      %v1356 = vrot.slane %v1324, 1
      %v1357 = vrot.slane %v1325, 1
      %v1358 = vrot.slane %v1326, 1
      %v1359 = vrot.slane %v1327, 1
      %v1360 = vrot.slane %v1328, 1
      %v1361 = vrot.slane %v1329, 1
      %v1362 = vrot.slane %v1330, 1
      %v1363 = vrot.slane %v1331, 1
      %v1364 = vrot.slane %v1332, 1
      %v1365 = vrot.slane %v1333, 1
      %v1366 = vrot.slane %v1334, 1
      %v1367 = vrot.slane %v1335, 1
      %v1368 = vrot.slane %v1336, 1
      %v1385 = vadd.f32 %v1305, %v1353
      %v1386 = vadd.f32 %v1306, %v1354
      %v1387 = vadd.f32 %v1307, %v1355
      %v1388 = vadd.f32 %v1308, %v1356
      %v1389 = vadd.f32 %v1309, %v1357
      %v1390 = vadd.f32 %v1310, %v1358
      %v1391 = vadd.f32 %v1311, %v1359
      %v1392 = vadd.f32 %v1312, %v1360
      %v1393 = vadd.f32 %v1313, %v1361
      %v1394 = vadd.f32 %v1314, %v1362
      %v1395 = vadd.f32 %v1315, %v1363
      %v1396 = vadd.f32 %v1316, %v1364
      %v1397 = vadd.f32 %v1317, %v1365
      %v1398 = vadd.f32 %v1318, %v1366
      %v1399 = vadd.f32 %v1319, %v1367
      %v1400 = vadd.f32 %v1320, %v1368
      %vm1401 = vcmask 60419
      %1402 = vst.msk [vmem:[%s613 + $0x5] sm:$0x8] %vm1401, %v1385
      %1403 = vst.msk [vmem:[%s613 + $0x1d] sm:$0x8] %vm1401, %v1386
      %1404 = vst.msk [vmem:[%s613 + $0x35] sm:$0x8] %vm1401, %v1387
      %1405 = vst.msk [vmem:[%s613 + $0x4d] sm:$0x8] %vm1401, %v1388
      %1406 = vst.msk [vmem:[%s613 + $0x65] sm:$0x8] %vm1401, %v1389
      %1407 = vst.msk [vmem:[%s613 + $0x7d] sm:$0x8] %vm1401, %v1390
      %1408 = vst.msk [vmem:[%s613 + $0x95] sm:$0x8] %vm1401, %v1391
      %1409 = vst.msk [vmem:[%s613 + $0xad] sm:$0x8] %vm1401, %v1392
      %1410 = vst.msk [vmem:[%s613 + $0xc5] sm:$0x8] %vm1401, %v1393
      %1411 = vst.msk [vmem:[%s613 + $0xdd] sm:$0x8] %vm1401, %v1394
      %1412 = vst.msk [vmem:[%s613 + $0xf5] sm:$0x8] %vm1401, %v1395
      %1413 = vst.msk [vmem:[%s613 + $0x10d] sm:$0x8] %vm1401, %v1396
      %1414 = vst.msk [vmem:[%s613 + $0x125] sm:$0x8] %vm1401, %v1397
      %1415 = vst.msk [vmem:[%s613 + $0x13d] sm:$0x8] %vm1401, %v1398
      %1416 = vst.msk [vmem:[%s613 + $0x155] sm:$0x8] %vm1401, %v1399
      %1417 = vst.msk [vmem:[%s613 + $0x16d] sm:$0x8] %vm1401, %v1400
      %v1434 = vrot.slane %v1305, 1
      %v1435 = vrot.slane %v1306, 1
      %v1436 = vrot.slane %v1307, 1
      %v1437 = vrot.slane %v1308, 1
      %v1438 = vrot.slane %v1309, 1
      %v1439 = vrot.slane %v1310, 1
      %v1440 = vrot.slane %v1311, 1
      %v1441 = vrot.slane %v1312, 1
      %v1442 = vrot.slane %v1313, 1
      %v1443 = vrot.slane %v1314, 1
      %v1444 = vrot.slane %v1315, 1
      %v1445 = vrot.slane %v1316, 1
      %v1446 = vrot.slane %v1317, 1
      %v1447 = vrot.slane %v1318, 1
      %v1448 = vrot.slane %v1319, 1
      %v1449 = vrot.slane %v1320, 1
      %v1466 = vadd.f32 %v1321, %v1434
      %v1467 = vadd.f32 %v1322, %v1435
      %v1468 = vadd.f32 %v1323, %v1436
      %v1469 = vadd.f32 %v1324, %v1437
      %v1470 = vadd.f32 %v1325, %v1438
      %v1471 = vadd.f32 %v1326, %v1439
      %v1472 = vadd.f32 %v1327, %v1440
      %v1473 = vadd.f32 %v1328, %v1441
      %v1474 = vadd.f32 %v1329, %v1442
      %v1475 = vadd.f32 %v1330, %v1443
      %v1476 = vadd.f32 %v1331, %v1444
      %v1477 = vadd.f32 %v1332, %v1445
      %v1478 = vadd.f32 %v1333, %v1446
      %v1479 = vadd.f32 %v1334, %v1447
      %v1480 = vadd.f32 %v1335, %v1448
      %v1481 = vadd.f32 %v1336, %v1449
      %1482 = vst.msk [vmem:[%s613 + $0x6] sm:$0x8] %vm1401, %v1466
      %1483 = vst.msk [vmem:[%s613 + $0x1e] sm:$0x8] %vm1401, %v1467
      %1484 = vst.msk [vmem:[%s613 + $0x36] sm:$0x8] %vm1401, %v1468
      %1485 = vst.msk [vmem:[%s613 + $0x4e] sm:$0x8] %vm1401, %v1469
      %1486 = vst.msk [vmem:[%s613 + $0x66] sm:$0x8] %vm1401, %v1470
      %1487 = vst.msk [vmem:[%s613 + $0x7e] sm:$0x8] %vm1401, %v1471
      %1488 = vst.msk [vmem:[%s613 + $0x96] sm:$0x8] %vm1401, %v1472
      %1489 = vst.msk [vmem:[%s613 + $0xae] sm:$0x8] %vm1401, %v1473
      %1490 = vst.msk [vmem:[%s613 + $0xc6] sm:$0x8] %vm1401, %v1474
      %1491 = vst.msk [vmem:[%s613 + $0xde] sm:$0x8] %vm1401, %v1475
      %1492 = vst.msk [vmem:[%s613 + $0xf6] sm:$0x8] %vm1401, %v1476
      %1493 = vst.msk [vmem:[%s613 + $0x10e] sm:$0x8] %vm1401, %v1477
      %1494 = vst.msk [vmem:[%s613 + $0x126] sm:$0x8] %vm1401, %v1478
      %1495 = vst.msk [vmem:[%s613 + $0x13e] sm:$0x8] %vm1401, %v1479
      %1496 = vst.msk [vmem:[%s613 + $0x156] sm:$0x8] %vm1401, %v1480
      %1497 = vst.msk [vmem:[%s613 + $0x16e] sm:$0x8] %vm1401, %v1481
      %v1514 = vrot.slane %v1193, 1
      %v1515 = vrot.slane %v1194, 1
      %v1516 = vrot.slane %v1195, 1
      %v1517 = vrot.slane %v1196, 1
      %v1518 = vrot.slane %v1197, 1
      %v1519 = vrot.slane %v1198, 1
      %v1520 = vrot.slane %v1199, 1
      %v1521 = vrot.slane %v1200, 1
      %v1522 = vrot.slane %v1201, 1
      %v1523 = vrot.slane %v1202, 1
      %v1524 = vrot.slane %v1203, 1
      %v1525 = vrot.slane %v1204, 1
      %v1526 = vrot.slane %v1205, 1
      %v1527 = vrot.slane %v1206, 1
      %v1528 = vrot.slane %v1207, 1
      %v1529 = vrot.slane %v1208, 1
      %v1546 = vadd.f32 %v1209, %v1514
      %v1547 = vadd.f32 %v1210, %v1515
      %v1548 = vadd.f32 %v1211, %v1516
      %v1549 = vadd.f32 %v1212, %v1517
      %v1550 = vadd.f32 %v1213, %v1518
      %v1551 = vadd.f32 %v1214, %v1519
      %v1552 = vadd.f32 %v1215, %v1520
      %v1553 = vadd.f32 %v1216, %v1521
      %v1554 = vadd.f32 %v1217, %v1522
      %v1555 = vadd.f32 %v1218, %v1523
      %v1556 = vadd.f32 %v1219, %v1524
      %v1557 = vadd.f32 %v1220, %v1525
      %v1558 = vadd.f32 %v1221, %v1526
      %v1559 = vadd.f32 %v1222, %v1527
      %v1560 = vadd.f32 %v1223, %v1528
      %v1561 = vadd.f32 %v1224, %v1529
      %vm1562 = vcmask 61444
      %1563 = vst.msk [vmem:[%s613 + $0x6] sm:$0x10] %vm1562, %v1546
      %1564 = vst.msk [vmem:[%s613 + $0x1e] sm:$0x10] %vm1562, %v1547
      %1565 = vst.msk [vmem:[%s613 + $0x36] sm:$0x10] %vm1562, %v1548
      %1566 = vst.msk [vmem:[%s613 + $0x4e] sm:$0x10] %vm1562, %v1549
      %1567 = vst.msk [vmem:[%s613 + $0x66] sm:$0x10] %vm1562, %v1550
      %1568 = vst.msk [vmem:[%s613 + $0x7e] sm:$0x10] %vm1562, %v1551
      %1569 = vst.msk [vmem:[%s613 + $0x96] sm:$0x10] %vm1562, %v1552
      %1570 = vst.msk [vmem:[%s613 + $0xae] sm:$0x10] %vm1562, %v1553
      %1571 = vst.msk [vmem:[%s613 + $0xc6] sm:$0x10] %vm1562, %v1554
      %1572 = vst.msk [vmem:[%s613 + $0xde] sm:$0x10] %vm1562, %v1555
      %1573 = vst.msk [vmem:[%s613 + $0xf6] sm:$0x10] %vm1562, %v1556
      %1574 = vst.msk [vmem:[%s613 + $0x10e] sm:$0x10] %vm1562, %v1557
      %1575 = vst.msk [vmem:[%s613 + $0x126] sm:$0x10] %vm1562, %v1558
      %1576 = vst.msk [vmem:[%s613 + $0x13e] sm:$0x10] %vm1562, %v1559
      %1577 = vst.msk [vmem:[%s613 + $0x156] sm:$0x10] %vm1562, %v1560
      %1578 = vst.msk [vmem:[%s613 + $0x16e] sm:$0x10] %vm1562, %v1561
      %v1595 = vrot.slane %v1080, 1
      %v1596 = vrot.slane %v1081, 1
      %v1597 = vrot.slane %v1082, 1
      %v1598 = vrot.slane %v1083, 1
      %v1599 = vrot.slane %v1084, 1
      %v1600 = vrot.slane %v1085, 1
      %v1601 = vrot.slane %v1086, 1
      %v1602 = vrot.slane %v1087, 1
      %v1603 = vrot.slane %v1088, 1
      %v1604 = vrot.slane %v1089, 1
      %v1605 = vrot.slane %v1090, 1
      %v1606 = vrot.slane %v1091, 1
      %v1607 = vrot.slane %v1092, 1
      %v1608 = vrot.slane %v1093, 1
      %v1609 = vrot.slane %v1094, 1
      %v1610 = vrot.slane %v1095, 1
      %v1627 = vadd.f32 %v1096, %v1595
      %v1628 = vadd.f32 %v1097, %v1596
      %v1629 = vadd.f32 %v1098, %v1597
      %v1630 = vadd.f32 %v1099, %v1598
      %v1631 = vadd.f32 %v1100, %v1599
      %v1632 = vadd.f32 %v1101, %v1600
      %v1633 = vadd.f32 %v1102, %v1601
      %v1634 = vadd.f32 %v1103, %v1602
      %v1635 = vadd.f32 %v1104, %v1603
      %v1636 = vadd.f32 %v1105, %v1604
      %v1637 = vadd.f32 %v1106, %v1605
      %v1638 = vadd.f32 %v1107, %v1606
      %v1639 = vadd.f32 %v1108, %v1607
      %v1640 = vadd.f32 %v1109, %v1608
      %v1641 = vadd.f32 %v1110, %v1609
      %v1642 = vadd.f32 %v1111, %v1610
      %1643 = vst.msk [vmem:[%s613 + $0x7] sm:$0x10] %vm1562, %v1627
      %1644 = vst.msk [vmem:[%s613 + $0x1f] sm:$0x10] %vm1562, %v1628
      %1645 = vst.msk [vmem:[%s613 + $0x37] sm:$0x10] %vm1562, %v1629
      %1646 = vst.msk [vmem:[%s613 + $0x4f] sm:$0x10] %vm1562, %v1630
      %1647 = vst.msk [vmem:[%s613 + $0x67] sm:$0x10] %vm1562, %v1631
      %1648 = vst.msk [vmem:[%s613 + $0x7f] sm:$0x10] %vm1562, %v1632
      %1649 = vst.msk [vmem:[%s613 + $0x97] sm:$0x10] %vm1562, %v1633
      %1650 = vst.msk [vmem:[%s613 + $0xaf] sm:$0x10] %vm1562, %v1634
      %1651 = vst.msk [vmem:[%s613 + $0xc7] sm:$0x10] %vm1562, %v1635
      %1652 = vst.msk [vmem:[%s613 + $0xdf] sm:$0x10] %vm1562, %v1636
      %1653 = vst.msk [vmem:[%s613 + $0xf7] sm:$0x10] %vm1562, %v1637
      %1654 = vst.msk [vmem:[%s613 + $0x10f] sm:$0x10] %vm1562, %v1638
      %1655 = vst.msk [vmem:[%s613 + $0x127] sm:$0x10] %vm1562, %v1639
      %1656 = vst.msk [vmem:[%s613 + $0x13f] sm:$0x10] %vm1562, %v1640
      %1657 = vst.msk [vmem:[%s613 + $0x157] sm:$0x10] %vm1562, %v1641
      %1658 = vst.msk [vmem:[%s613 + $0x16f] sm:$0x10] %vm1562, %v1642
      %v1675 = vrot.slane %v968, 1
      %v1676 = vrot.slane %v969, 1
      %v1677 = vrot.slane %v970, 1
      %v1678 = vrot.slane %v971, 1
      %v1679 = vrot.slane %v972, 1
      %v1680 = vrot.slane %v973, 1
      %v1681 = vrot.slane %v974, 1
      %v1682 = vrot.slane %v975, 1
      %v1683 = vrot.slane %v976, 1
      %v1684 = vrot.slane %v977, 1
      %v1685 = vrot.slane %v978, 1
      %v1686 = vrot.slane %v979, 1
      %v1687 = vrot.slane %v980, 1
      %v1688 = vrot.slane %v981, 1
      %v1689 = vrot.slane %v982, 1
      %v1690 = vrot.slane %v983, 1
      %v1707 = vadd.f32 %v984, %v1675
      %v1708 = vadd.f32 %v985, %v1676
      %v1709 = vadd.f32 %v986, %v1677
      %v1710 = vadd.f32 %v987, %v1678
      %v1711 = vadd.f32 %v988, %v1679
      %v1712 = vadd.f32 %v989, %v1680
      %v1713 = vadd.f32 %v990, %v1681
      %v1714 = vadd.f32 %v991, %v1682
      %v1715 = vadd.f32 %v992, %v1683
      %v1716 = vadd.f32 %v993, %v1684
      %v1717 = vadd.f32 %v994, %v1685
      %v1718 = vadd.f32 %v995, %v1686
      %v1719 = vadd.f32 %v996, %v1687
      %v1720 = vadd.f32 %v997, %v1688
      %v1721 = vadd.f32 %v998, %v1689
      %v1722 = vadd.f32 %v999, %v1690
      %vm1723 = vcmask 62469
      %1724 = vst.msk [vmem:[%s613 + $0x7] sm:$0x20] %vm1723, %v1707
      %1725 = vst.msk [vmem:[%s613 + $0x1f] sm:$0x20] %vm1723, %v1708
      %1726 = vst.msk [vmem:[%s613 + $0x37] sm:$0x20] %vm1723, %v1709
      %1727 = vst.msk [vmem:[%s613 + $0x4f] sm:$0x20] %vm1723, %v1710
      %1728 = vst.msk [vmem:[%s613 + $0x67] sm:$0x20] %vm1723, %v1711
      %1729 = vst.msk [vmem:[%s613 + $0x7f] sm:$0x20] %vm1723, %v1712
      %1730 = vst.msk [vmem:[%s613 + $0x97] sm:$0x20] %vm1723, %v1713
      %1731 = vst.msk [vmem:[%s613 + $0xaf] sm:$0x20] %vm1723, %v1714
      %1732 = vst.msk [vmem:[%s613 + $0xc7] sm:$0x20] %vm1723, %v1715
      %1733 = vst.msk [vmem:[%s613 + $0xdf] sm:$0x20] %vm1723, %v1716
      %1734 = vst.msk [vmem:[%s613 + $0xf7] sm:$0x20] %vm1723, %v1717
      %1735 = vst.msk [vmem:[%s613 + $0x10f] sm:$0x20] %vm1723, %v1718
      %1736 = vst.msk [vmem:[%s613 + $0x127] sm:$0x20] %vm1723, %v1719
      %1737 = vst.msk [vmem:[%s613 + $0x13f] sm:$0x20] %vm1723, %v1720
      %1738 = vst.msk [vmem:[%s613 + $0x157] sm:$0x20] %vm1723, %v1721
      %1739 = vst.msk [vmem:[%s613 + $0x16f] sm:$0x20] %vm1723, %v1722
      %v1756 = vrot.slane %v855, 1
      %v1757 = vrot.slane %v856, 1
      %v1758 = vrot.slane %v857, 1
      %v1759 = vrot.slane %v858, 1
      %v1760 = vrot.slane %v859, 1
      %v1761 = vrot.slane %v860, 1
      %v1762 = vrot.slane %v861, 1
      %v1763 = vrot.slane %v862, 1
      %v1764 = vrot.slane %v863, 1
      %v1765 = vrot.slane %v864, 1
      %v1766 = vrot.slane %v865, 1
      %v1767 = vrot.slane %v866, 1
      %v1768 = vrot.slane %v867, 1
      %v1769 = vrot.slane %v868, 1
      %v1770 = vrot.slane %v869, 1
      %v1771 = vrot.slane %v870, 1
      %v1788 = vadd.f32 %v871, %v1756
      %v1789 = vadd.f32 %v872, %v1757
      %v1790 = vadd.f32 %v873, %v1758
      %v1791 = vadd.f32 %v874, %v1759
      %v1792 = vadd.f32 %v875, %v1760
      %v1793 = vadd.f32 %v876, %v1761
      %v1794 = vadd.f32 %v877, %v1762
      %v1795 = vadd.f32 %v878, %v1763
      %v1796 = vadd.f32 %v879, %v1764
      %v1797 = vadd.f32 %v880, %v1765
      %v1798 = vadd.f32 %v881, %v1766
      %v1799 = vadd.f32 %v882, %v1767
      %v1800 = vadd.f32 %v883, %v1768
      %v1801 = vadd.f32 %v884, %v1769
      %v1802 = vadd.f32 %v885, %v1770
      %v1803 = vadd.f32 %v886, %v1771
      %1804 = vst.msk [vmem:[%s613 + $0x8] sm:$0x20] %vm1723, %v1788
      %1805 = vst.msk [vmem:[%s613 + $0x20] sm:$0x20] %vm1723, %v1789
      %1806 = vst.msk [vmem:[%s613 + $0x38] sm:$0x20] %vm1723, %v1790
      %1807 = vst.msk [vmem:[%s613 + $0x50] sm:$0x20] %vm1723, %v1791
      %1808 = vst.msk [vmem:[%s613 + $0x68] sm:$0x20] %vm1723, %v1792
      %1809 = vst.msk [vmem:[%s613 + $0x80] sm:$0x20] %vm1723, %v1793
      %1810 = vst.msk [vmem:[%s613 + $0x98] sm:$0x20] %vm1723, %v1794
      %1811 = vst.msk [vmem:[%s613 + $0xb0] sm:$0x20] %vm1723, %v1795
      %1812 = vst.msk [vmem:[%s613 + $0xc8] sm:$0x20] %vm1723, %v1796
      %1813 = vst.msk [vmem:[%s613 + $0xe0] sm:$0x20] %vm1723, %v1797
      %1814 = vst.msk [vmem:[%s613 + $0xf8] sm:$0x20] %vm1723, %v1798
      %1815 = vst.msk [vmem:[%s613 + $0x110] sm:$0x20] %vm1723, %v1799
      %1816 = vst.msk [vmem:[%s613 + $0x128] sm:$0x20] %vm1723, %v1800
      %1817 = vst.msk [vmem:[%s613 + $0x140] sm:$0x20] %vm1723, %v1801
      %1818 = vst.msk [vmem:[%s613 + $0x158] sm:$0x20] %vm1723, %v1802
      %1819 = vst.msk [vmem:[%s613 + $0x170] sm:$0x20] %vm1723, %v1803
      %v1836 = vrot.slane %v743, 1
      %v1837 = vrot.slane %v744, 1
      %v1838 = vrot.slane %v745, 1
      %v1839 = vrot.slane %v746, 1
      %v1840 = vrot.slane %v747, 1
      %v1841 = vrot.slane %v748, 1
      %v1842 = vrot.slane %v749, 1
      %v1843 = vrot.slane %v750, 1
      %v1844 = vrot.slane %v751, 1
      %v1845 = vrot.slane %v752, 1
      %v1846 = vrot.slane %v753, 1
      %v1847 = vrot.slane %v754, 1
      %v1848 = vrot.slane %v755, 1
      %v1849 = vrot.slane %v756, 1
      %v1850 = vrot.slane %v757, 1
      %v1851 = vrot.slane %v758, 1
      %v1868 = vadd.f32 %v759, %v1836
      %v1869 = vadd.f32 %v760, %v1837
      %v1870 = vadd.f32 %v761, %v1838
      %v1871 = vadd.f32 %v762, %v1839
      %v1872 = vadd.f32 %v763, %v1840
      %v1873 = vadd.f32 %v764, %v1841
      %v1874 = vadd.f32 %v765, %v1842
      %v1875 = vadd.f32 %v766, %v1843
      %v1876 = vadd.f32 %v767, %v1844
      %v1877 = vadd.f32 %v768, %v1845
      %v1878 = vadd.f32 %v769, %v1846
      %v1879 = vadd.f32 %v770, %v1847
      %v1880 = vadd.f32 %v771, %v1848
      %v1881 = vadd.f32 %v772, %v1849
      %v1882 = vadd.f32 %v773, %v1850
      %v1883 = vadd.f32 %v774, %v1851
      %vm1884 = vcmask 63494
      %1885 = vst.msk [vmem:[%s613 + $0x8] sm:$0x40] %vm1884, %v1868
      %1886 = vst.msk [vmem:[%s613 + $0x20] sm:$0x40] %vm1884, %v1869
      %1887 = vst.msk [vmem:[%s613 + $0x38] sm:$0x40] %vm1884, %v1870
      %1888 = vst.msk [vmem:[%s613 + $0x50] sm:$0x40] %vm1884, %v1871
      %1889 = vst.msk [vmem:[%s613 + $0x68] sm:$0x40] %vm1884, %v1872
      %1890 = vst.msk [vmem:[%s613 + $0x80] sm:$0x40] %vm1884, %v1873
      %1891 = vst.msk [vmem:[%s613 + $0x98] sm:$0x40] %vm1884, %v1874
      %1892 = vst.msk [vmem:[%s613 + $0xb0] sm:$0x40] %vm1884, %v1875
      %1893 = vst.msk [vmem:[%s613 + $0xc8] sm:$0x40] %vm1884, %v1876
      %1894 = vst.msk [vmem:[%s613 + $0xe0] sm:$0x40] %vm1884, %v1877
      %1895 = vst.msk [vmem:[%s613 + $0xf8] sm:$0x40] %vm1884, %v1878
      %1896 = vst.msk [vmem:[%s613 + $0x110] sm:$0x40] %vm1884, %v1879
      %1897 = vst.msk [vmem:[%s613 + $0x128] sm:$0x40] %vm1884, %v1880
      %1898 = vst.msk [vmem:[%s613 + $0x140] sm:$0x40] %vm1884, %v1881
      %1899 = vst.msk [vmem:[%s613 + $0x158] sm:$0x40] %vm1884, %v1882
      %1900 = vst.msk [vmem:[%s613 + $0x170] sm:$0x40] %vm1884, %v1883
      %v1917 = vrot.slane %v631, 1
      %v1918 = vrot.slane %v632, 1
      %v1919 = vrot.slane %v633, 1
      %v1920 = vrot.slane %v634, 1
      %v1921 = vrot.slane %v635, 1
      %v1922 = vrot.slane %v636, 1
      %v1923 = vrot.slane %v637, 1
      %v1924 = vrot.slane %v638, 1
      %v1925 = vrot.slane %v639, 1
      %v1926 = vrot.slane %v640, 1
      %v1927 = vrot.slane %v641, 1
      %v1928 = vrot.slane %v642, 1
      %v1929 = vrot.slane %v643, 1
      %v1930 = vrot.slane %v644, 1
      %v1931 = vrot.slane %v645, 1
      %v1932 = vrot.slane %v646, 1
      %v1949 = vadd.f32 %v647, %v1917
      %v1950 = vadd.f32 %v648, %v1918
      %v1951 = vadd.f32 %v649, %v1919
      %v1952 = vadd.f32 %v650, %v1920
      %v1953 = vadd.f32 %v651, %v1921
      %v1954 = vadd.f32 %v652, %v1922
      %v1955 = vadd.f32 %v653, %v1923
      %v1956 = vadd.f32 %v654, %v1924
      %v1957 = vadd.f32 %v655, %v1925
      %v1958 = vadd.f32 %v656, %v1926
      %v1959 = vadd.f32 %v657, %v1927
      %v1960 = vadd.f32 %v658, %v1928
      %v1961 = vadd.f32 %v659, %v1929
      %v1962 = vadd.f32 %v660, %v1930
      %v1963 = vadd.f32 %v661, %v1931
      %v1964 = vadd.f32 %v662, %v1932
      %1965 = vst.msk [vmem:[%s613 + $0x9] sm:$0x40] %vm1884, %v1949
      %1966 = vst.msk [vmem:[%s613 + $0x21] sm:$0x40] %vm1884, %v1950
      %1967 = vst.msk [vmem:[%s613 + $0x39] sm:$0x40] %vm1884, %v1951
      %1968 = vst.msk [vmem:[%s613 + $0x51] sm:$0x40] %vm1884, %v1952
      %1969 = vst.msk [vmem:[%s613 + $0x69] sm:$0x40] %vm1884, %v1953
      %1970 = vst.msk [vmem:[%s613 + $0x81] sm:$0x40] %vm1884, %v1954
      %1971 = vst.msk [vmem:[%s613 + $0x99] sm:$0x40] %vm1884, %v1955
      %1972 = vst.msk [vmem:[%s613 + $0xb1] sm:$0x40] %vm1884, %v1956
      %1973 = vst.msk [vmem:[%s613 + $0xc9] sm:$0x40] %vm1884, %v1957
      %1974 = vst.msk [vmem:[%s613 + $0xe1] sm:$0x40] %vm1884, %v1958
      %1975 = vst.msk [vmem:[%s613 + $0xf9] sm:$0x40] %vm1884, %v1959
      %1976 = vst.msk [vmem:[%s613 + $0x111] sm:$0x40] %vm1884, %v1960
      %1977 = vst.msk [vmem:[%s613 + $0x129] sm:$0x40] %vm1884, %v1961
      %1978 = vst.msk [vmem:[%s613 + $0x141] sm:$0x40] %vm1884, %v1962
      %1979 = vst.msk [vmem:[%s613 + $0x159] sm:$0x40] %vm1884, %v1963
      %1980 = vst.msk [vmem:[%s613 + $0x171] sm:$0x40] %vm1884, %v1964
      %v1997 = vrot.slane %v343, 1
      %v1998 = vrot.slane %v344, 1
      %v1999 = vrot.slane %v345, 1
      %v2000 = vrot.slane %v346, 1
      %v2001 = vrot.slane %v347, 1
      %v2002 = vrot.slane %v348, 1
      %v2003 = vrot.slane %v349, 1
      %v2004 = vrot.slane %v350, 1
      %v2005 = vrot.slane %v351, 1
      %v2006 = vrot.slane %v352, 1
      %v2007 = vrot.slane %v353, 1
      %v2008 = vrot.slane %v354, 1
      %v2009 = vrot.slane %v355, 1
      %v2010 = vrot.slane %v356, 1
      %v2011 = vrot.slane %v357, 1
      %v2012 = vrot.slane %v358, 1
      %v2029 = vadd.f32 %v533, %v1997
      %v2030 = vadd.f32 %v534, %v1998
      %v2031 = vadd.f32 %v535, %v1999
      %v2032 = vadd.f32 %v536, %v2000
      %v2033 = vadd.f32 %v537, %v2001
      %v2034 = vadd.f32 %v538, %v2002
      %v2035 = vadd.f32 %v539, %v2003
      %v2036 = vadd.f32 %v540, %v2004
      %v2037 = vadd.f32 %v541, %v2005
      %v2038 = vadd.f32 %v542, %v2006
      %v2039 = vadd.f32 %v543, %v2007
      %v2040 = vadd.f32 %v544, %v2008
      %v2041 = vadd.f32 %v545, %v2009
      %v2042 = vadd.f32 %v546, %v2010
      %v2043 = vadd.f32 %v547, %v2011
      %v2044 = vadd.f32 %v548, %v2012
      %2045 = vst.msk [vmem:[%s613 + $0xa] sm:$0x40] %vm1884, %v2029
      %2046 = vst.msk [vmem:[%s613 + $0x22] sm:$0x40] %vm1884, %v2030
      %2047 = vst.msk [vmem:[%s613 + $0x3a] sm:$0x40] %vm1884, %v2031
      %2048 = vst.msk [vmem:[%s613 + $0x52] sm:$0x40] %vm1884, %v2032
      %2049 = vst.msk [vmem:[%s613 + $0x6a] sm:$0x40] %vm1884, %v2033
      %2050 = vst.msk [vmem:[%s613 + $0x82] sm:$0x40] %vm1884, %v2034
      %2051 = vst.msk [vmem:[%s613 + $0x9a] sm:$0x40] %vm1884, %v2035
      %2052 = vst.msk [vmem:[%s613 + $0xb2] sm:$0x40] %vm1884, %v2036
      %2053 = vst.msk [vmem:[%s613 + $0xca] sm:$0x40] %vm1884, %v2037
      %2054 = vst.msk [vmem:[%s613 + $0xe2] sm:$0x40] %vm1884, %v2038
      %2055 = vst.msk [vmem:[%s613 + $0xfa] sm:$0x40] %vm1884, %v2039
      %2056 = vst.msk [vmem:[%s613 + $0x112] sm:$0x40] %vm1884, %v2040
      %2057 = vst.msk [vmem:[%s613 + $0x12a] sm:$0x40] %vm1884, %v2041
      %2058 = vst.msk [vmem:[%s613 + $0x142] sm:$0x40] %vm1884, %v2042
      %2059 = vst.msk [vmem:[%s613 + $0x15a] sm:$0x40] %vm1884, %v2043
      %2060 = vst.msk [vmem:[%s613 + $0x172] sm:$0x40] %vm1884, %v2044
      %v2061 = vld [vmem:[#allocation2] sm:$0xff]
      %v2062 = vld [vmem:[#allocation2 + $0x8] sm:$0xff]
      %v2063 = vld [vmem:[#allocation2 + $0x10] sm:$0x3]
      %v2064 = vld [vmem:[#allocation2 + $0x18] sm:$0xff]
      %v2065 = vld [vmem:[#allocation2 + $0x20] sm:$0xff]
      %v2066 = vld [vmem:[#allocation2 + $0x28] sm:$0x3]
      %v2067 = vld [vmem:[#allocation2 + $0x30] sm:$0xff]
      %v2068 = vld [vmem:[#allocation2 + $0x38] sm:$0xff]
      %v2069 = vld [vmem:[#allocation2 + $0x40] sm:$0x3]
      %v2070 = vld [vmem:[#allocation2 + $0x48] sm:$0xff]
      %v2071 = vld [vmem:[#allocation2 + $0x50] sm:$0xff]
      %v2072 = vld [vmem:[#allocation2 + $0x58] sm:$0x3]
      %v2073 = vld [vmem:[#allocation2 + $0x60] sm:$0xff]
      %v2074 = vld [vmem:[#allocation2 + $0x68] sm:$0xff]
      %v2075 = vld [vmem:[#allocation2 + $0x70] sm:$0x3]
      %v2076 = vld [vmem:[#allocation2 + $0x78] sm:$0xff]
      %v2077 = vld [vmem:[#allocation2 + $0x80] sm:$0xff]
      %v2078 = vld [vmem:[#allocation2 + $0x88] sm:$0x3]
      %v2079 = vld [vmem:[#allocation2 + $0x90] sm:$0xff]
      %v2080 = vld [vmem:[#allocation2 + $0x98] sm:$0xff]
      %v2081 = vld [vmem:[#allocation2 + $0xa0] sm:$0x3]
      %v2082 = vld [vmem:[#allocation2 + $0xa8] sm:$0xff]
      %v2083 = vld [vmem:[#allocation2 + $0xb0] sm:$0xff]
      %v2084 = vld [vmem:[#allocation2 + $0xb8] sm:$0x3]
      %v2085 = vld [vmem:[#allocation2 + $0xc0] sm:$0xff]
      %v2086 = vld [vmem:[#allocation2 + $0xc8] sm:$0xff]
      %v2087 = vld [vmem:[#allocation2 + $0xd0] sm:$0x3]
      %v2088 = vld [vmem:[#allocation2 + $0xd8] sm:$0xff]
      %v2089 = vld [vmem:[#allocation2 + $0xe0] sm:$0xff]
      %v2090 = vld [vmem:[#allocation2 + $0xe8] sm:$0x3]
      %v2091 = vld [vmem:[#allocation2 + $0xf0] sm:$0xff]
      %v2092 = vld [vmem:[#allocation2 + $0xf8] sm:$0xff]
      %v2093 = vld [vmem:[#allocation2 + $0x100] sm:$0x3]
      %v2094 = vld [vmem:[#allocation2 + $0x108] sm:$0xff]
      %v2095 = vld [vmem:[#allocation2 + $0x110] sm:$0xff]
      %v2096 = vld [vmem:[#allocation2 + $0x118] sm:$0x3]
      %v2097 = vld [vmem:[#allocation2 + $0x120] sm:$0xff]
      %v2098 = vld [vmem:[#allocation2 + $0x128] sm:$0xff]
      %v2099 = vld [vmem:[#allocation2 + $0x130] sm:$0x3]
      %v2100 = vld [vmem:[#allocation2 + $0x138] sm:$0xff]
      %v2101 = vld [vmem:[#allocation2 + $0x140] sm:$0xff]
      %v2102 = vld [vmem:[#allocation2 + $0x148] sm:$0x3]
      %v2103 = vld [vmem:[#allocation2 + $0x150] sm:$0xff]
      %v2104 = vld [vmem:[#allocation2 + $0x158] sm:$0xff]
      %v2105 = vld [vmem:[#allocation2 + $0x160] sm:$0x3]
      %v2106 = vld [vmem:[#allocation2 + $0x168] sm:$0xff]
      %v2107 = vld [vmem:[#allocation2 + $0x170] sm:$0xff]
      %v2108 = vld [vmem:[#allocation2 + $0x178] sm:$0x3]
      %v2109 = vld [vmem:[#allocation2 + $0x180] sm:$0xff]
      %v2110 = vld [vmem:[#allocation2 + $0x188] sm:$0xff]
      %v2111 = vld [vmem:[#allocation2 + $0x190] sm:$0x3]
      %v2112 = vld [vmem:[#allocation2 + $0x198] sm:$0xff]
      %v2113 = vld [vmem:[#allocation2 + $0x1a0] sm:$0xff]
      %v2114 = vld [vmem:[#allocation2 + $0x1a8] sm:$0x3]
      %v2115 = vld [vmem:[#allocation3] sm:$0xff]
      %v2116 = vld [vmem:[#allocation3 + $0x8] sm:$0xff]
      %v2117 = vld [vmem:[#allocation3 + $0x10] sm:$0x3]
      %v2118 = vld [vmem:[#allocation3 + $0x18] sm:$0xff]
      %v2119 = vld [vmem:[#allocation3 + $0x20] sm:$0xff]
      %v2120 = vld [vmem:[#allocation3 + $0x28] sm:$0x3]
      %v2121 = vld [vmem:[#allocation3 + $0x30] sm:$0xff]
      %v2122 = vld [vmem:[#allocation3 + $0x38] sm:$0xff]
      %v2123 = vld [vmem:[#allocation3 + $0x40] sm:$0x3]
      %v2124 = vld [vmem:[#allocation3 + $0x48] sm:$0xff]
      %v2125 = vld [vmem:[#allocation3 + $0x50] sm:$0xff]
      %v2126 = vld [vmem:[#allocation3 + $0x58] sm:$0x3]
      %v2127 = vld [vmem:[#allocation3 + $0x60] sm:$0xff]
      %v2128 = vld [vmem:[#allocation3 + $0x68] sm:$0xff]
      %v2129 = vld [vmem:[#allocation3 + $0x70] sm:$0x3]
      %v2130 = vld [vmem:[#allocation3 + $0x78] sm:$0xff]
      %v2131 = vld [vmem:[#allocation3 + $0x80] sm:$0xff]
      %v2132 = vld [vmem:[#allocation3 + $0x88] sm:$0x3]
      %v2133 = vld [vmem:[#allocation3 + $0x90] sm:$0xff]
      %v2134 = vld [vmem:[#allocation3 + $0x98] sm:$0xff]
      %v2135 = vld [vmem:[#allocation3 + $0xa0] sm:$0x3]
      %v2136 = vld [vmem:[#allocation3 + $0xa8] sm:$0xff]
      %v2137 = vld [vmem:[#allocation3 + $0xb0] sm:$0xff]
      %v2138 = vld [vmem:[#allocation3 + $0xb8] sm:$0x3]
      %v2139 = vld [vmem:[#allocation3 + $0xc0] sm:$0xff]
      %v2140 = vld [vmem:[#allocation3 + $0xc8] sm:$0xff]
      %v2141 = vld [vmem:[#allocation3 + $0xd0] sm:$0x3]
      %v2142 = vld [vmem:[#allocation3 + $0xd8] sm:$0xff]
      %v2143 = vld [vmem:[#allocation3 + $0xe0] sm:$0xff]
      %v2144 = vld [vmem:[#allocation3 + $0xe8] sm:$0x3]
      %v2145 = vld [vmem:[#allocation3 + $0xf0] sm:$0xff]
      %v2146 = vld [vmem:[#allocation3 + $0xf8] sm:$0xff]
      %v2147 = vld [vmem:[#allocation3 + $0x100] sm:$0x3]
      %v2148 = vld [vmem:[#allocation3 + $0x108] sm:$0xff]
      %v2149 = vld [vmem:[#allocation3 + $0x110] sm:$0xff]
      %v2150 = vld [vmem:[#allocation3 + $0x118] sm:$0x3]
      %v2151 = vld [vmem:[#allocation3 + $0x120] sm:$0xff]
      %v2152 = vld [vmem:[#allocation3 + $0x128] sm:$0xff]
      %v2153 = vld [vmem:[#allocation3 + $0x130] sm:$0x3]
      %v2154 = vld [vmem:[#allocation3 + $0x138] sm:$0xff]
      %v2155 = vld [vmem:[#allocation3 + $0x140] sm:$0xff]
      %v2156 = vld [vmem:[#allocation3 + $0x148] sm:$0x3]
      %v2157 = vld [vmem:[#allocation3 + $0x150] sm:$0xff]
      %v2158 = vld [vmem:[#allocation3 + $0x158] sm:$0xff]
      %v2159 = vld [vmem:[#allocation3 + $0x160] sm:$0x3]
      %v2160 = vld [vmem:[#allocation3 + $0x168] sm:$0xff]
      %v2161 = vld [vmem:[#allocation3 + $0x170] sm:$0xff]
      %v2162 = vld [vmem:[#allocation3 + $0x178] sm:$0x3]
      %v2163 = vld [vmem:[#allocation3 + $0x180] sm:$0xff]
      %v2164 = vld [vmem:[#allocation3 + $0x188] sm:$0xff]
      %v2165 = vld [vmem:[#allocation3 + $0x190] sm:$0x3]
      %v2166 = vld [vmem:[#allocation3 + $0x198] sm:$0xff]
      %v2167 = vld [vmem:[#allocation3 + $0x1a0] sm:$0xff]
      %v2168 = vld [vmem:[#allocation3 + $0x1a8] sm:$0x3]
      %v2169 = vpack.c.bf16 %v2061, %v2061
      %v2170 = vpack.c.bf16 %v2062, %v2062
      %v2171 = vpack.c.bf16 %v2064, %v2064
      %v2172 = vpack.c.bf16 %v2065, %v2065
      %v2173 = vpack.c.bf16 %v2067, %v2067
      %v2174 = vpack.c.bf16 %v2068, %v2068
      %v2175 = vpack.c.bf16 %v2070, %v2070
      %v2176 = vpack.c.bf16 %v2071, %v2071
      %v2177 = vpack.c.bf16 %v2073, %v2073
      %v2178 = vpack.c.bf16 %v2074, %v2074
      %v2179 = vpack.c.bf16 %v2076, %v2076
      %v2180 = vpack.c.bf16 %v2077, %v2077
      %v2181 = vpack.c.bf16 %v2079, %v2079
      %v2182 = vpack.c.bf16 %v2080, %v2080
      %v2183 = vpack.c.bf16 %v2082, %v2082
      %v2184 = vpack.c.bf16 %v2083, %v2083
      %v2185 = vpack.c.bf16 %v2085, %v2085
      %v2186 = vpack.c.bf16 %v2086, %v2086
      %v2187 = vpack.c.bf16 %v2088, %v2088
      %v2188 = vpack.c.bf16 %v2089, %v2089
      %v2189 = vpack.c.bf16 %v2091, %v2091
      %v2190 = vpack.c.bf16 %v2092, %v2092
      %v2191 = vpack.c.bf16 %v2094, %v2094
      %v2192 = vpack.c.bf16 %v2095, %v2095
      %v2193 = vpack.c.bf16 %v2097, %v2097
      %v2194 = vpack.c.bf16 %v2098, %v2098
      %v2195 = vpack.c.bf16 %v2100, %v2100
      %v2196 = vpack.c.bf16 %v2101, %v2101
      %v2197 = vpack.c.bf16 %v2103, %v2103
      %v2198 = vpack.c.bf16 %v2104, %v2104
      %v2199 = vpack.c.bf16 %v2106, %v2106
      %v2200 = vpack.c.bf16 %v2107, %v2107
      %vm2201 = vcmask 60416
      %2202 = vst.msk [vmem:[#allocation5] sm:$0xf] %vm2201, %v2169
      %2203 = vst.msk [vmem:[#allocation5 + $0x8] sm:$0xf] %vm2201, %v2170
      %2204 = vst.msk [vmem:[#allocation5 + $0x10] sm:$0xf] %vm2201, %v2171
      %2205 = vst.msk [vmem:[#allocation5 + $0x18] sm:$0xf] %vm2201, %v2172
      %2206 = vst.msk [vmem:[#allocation5 + $0x20] sm:$0xf] %vm2201, %v2173
      %2207 = vst.msk [vmem:[#allocation5 + $0x28] sm:$0xf] %vm2201, %v2174
      %2208 = vst.msk [vmem:[#allocation5 + $0x30] sm:$0xf] %vm2201, %v2175
      %2209 = vst.msk [vmem:[#allocation5 + $0x38] sm:$0xf] %vm2201, %v2176
      %2210 = vst.msk [vmem:[#allocation5 + $0x40] sm:$0xf] %vm2201, %v2177
      %2211 = vst.msk [vmem:[#allocation5 + $0x48] sm:$0xf] %vm2201, %v2178
      %2212 = vst.msk [vmem:[#allocation5 + $0x50] sm:$0xf] %vm2201, %v2179
      %2213 = vst.msk [vmem:[#allocation5 + $0x58] sm:$0xf] %vm2201, %v2180
      %2214 = vst.msk [vmem:[#allocation5 + $0x60] sm:$0xf] %vm2201, %v2181
      %2215 = vst.msk [vmem:[#allocation5 + $0x68] sm:$0xf] %vm2201, %v2182
      %2216 = vst.msk [vmem:[#allocation5 + $0x70] sm:$0xf] %vm2201, %v2183
      %2217 = vst.msk [vmem:[#allocation5 + $0x78] sm:$0xf] %vm2201, %v2184
      %2218 = vst.msk [vmem:[#allocation5 + $0x80] sm:$0xf] %vm2201, %v2185
      %2219 = vst.msk [vmem:[#allocation5 + $0x88] sm:$0xf] %vm2201, %v2186
      %2220 = vst.msk [vmem:[#allocation5 + $0x90] sm:$0xf] %vm2201, %v2187
      %2221 = vst.msk [vmem:[#allocation5 + $0x98] sm:$0xf] %vm2201, %v2188
      %2222 = vst.msk [vmem:[#allocation5 + $0xa0] sm:$0xf] %vm2201, %v2189
      %2223 = vst.msk [vmem:[#allocation5 + $0xa8] sm:$0xf] %vm2201, %v2190
      %2224 = vst.msk [vmem:[#allocation5 + $0xb0] sm:$0xf] %vm2201, %v2191
      %2225 = vst.msk [vmem:[#allocation5 + $0xb8] sm:$0xf] %vm2201, %v2192
      %2226 = vst.msk [vmem:[#allocation5 + $0xc0] sm:$0xf] %vm2201, %v2193
      %2227 = vst.msk [vmem:[#allocation5 + $0xc8] sm:$0xf] %vm2201, %v2194
      %2228 = vst.msk [vmem:[#allocation5 + $0xd0] sm:$0xf] %vm2201, %v2195
      %2229 = vst.msk [vmem:[#allocation5 + $0xd8] sm:$0xf] %vm2201, %v2196
      %2230 = vst.msk [vmem:[#allocation5 + $0xe0] sm:$0xf] %vm2201, %v2197
      %2231 = vst.msk [vmem:[#allocation5 + $0xe8] sm:$0xf] %vm2201, %v2198
      %2232 = vst.msk [vmem:[#allocation5 + $0xf0] sm:$0xf] %vm2201, %v2199
      %2233 = vst.msk [vmem:[#allocation5 + $0xf8] sm:$0xf] %vm2201, %v2200
      %v2234 = vpack.c.bf16 %v2115, %v2115
      %v2235 = vpack.c.bf16 %v2116, %v2116
      %v2236 = vpack.c.bf16 %v2118, %v2118
      %v2237 = vpack.c.bf16 %v2119, %v2119
      %v2238 = vpack.c.bf16 %v2121, %v2121
      %v2239 = vpack.c.bf16 %v2122, %v2122
      %v2240 = vpack.c.bf16 %v2124, %v2124
      %v2241 = vpack.c.bf16 %v2125, %v2125
      %v2242 = vpack.c.bf16 %v2127, %v2127
      %v2243 = vpack.c.bf16 %v2128, %v2128
      %v2244 = vpack.c.bf16 %v2130, %v2130
      %v2245 = vpack.c.bf16 %v2131, %v2131
      %v2246 = vpack.c.bf16 %v2133, %v2133
      %v2247 = vpack.c.bf16 %v2134, %v2134
      %v2248 = vpack.c.bf16 %v2136, %v2136
      %v2249 = vpack.c.bf16 %v2137, %v2137
      %v2250 = vpack.c.bf16 %v2139, %v2139
      %v2251 = vpack.c.bf16 %v2140, %v2140
      %v2252 = vpack.c.bf16 %v2142, %v2142
      %v2253 = vpack.c.bf16 %v2143, %v2143
      %v2254 = vpack.c.bf16 %v2145, %v2145
      %v2255 = vpack.c.bf16 %v2146, %v2146
      %v2256 = vpack.c.bf16 %v2148, %v2148
      %v2257 = vpack.c.bf16 %v2149, %v2149
      %v2258 = vpack.c.bf16 %v2151, %v2151
      %v2259 = vpack.c.bf16 %v2152, %v2152
      %v2260 = vpack.c.bf16 %v2154, %v2154
      %v2261 = vpack.c.bf16 %v2155, %v2155
      %v2262 = vpack.c.bf16 %v2157, %v2157
      %v2263 = vpack.c.bf16 %v2158, %v2158
      %v2264 = vpack.c.bf16 %v2160, %v2160
      %v2265 = vpack.c.bf16 %v2161, %v2161
      %2298 = vrot.lane.b32.xlu0 %v2234, 8
      %v2299 = vpop.permute.xlu0 %2298
      %2300 = vrot.lane.b32.xlu0 %v2235, 8
      %v2301 = vpop.permute.xlu0 %2300
      %2302 = vrot.lane.b32.xlu0 %v2236, 8
      %v2303 = vpop.permute.xlu0 %2302
      %2304 = vrot.lane.b32.xlu0 %v2237, 8
      %v2305 = vpop.permute.xlu0 %2304
      %2306 = vrot.lane.b32.xlu0 %v2238, 8
      %v2307 = vpop.permute.xlu0 %2306
      %2308 = vrot.lane.b32.xlu0 %v2239, 8
      %v2309 = vpop.permute.xlu0 %2308
      %2310 = vrot.lane.b32.xlu0 %v2240, 8
      %v2311 = vpop.permute.xlu0 %2310
      %2312 = vrot.lane.b32.xlu0 %v2241, 8
      %v2313 = vpop.permute.xlu0 %2312
      %2314 = vrot.lane.b32.xlu0 %v2242, 8
      %v2315 = vpop.permute.xlu0 %2314
      %2316 = vrot.lane.b32.xlu0 %v2243, 8
      %v2317 = vpop.permute.xlu0 %2316
      %2318 = vrot.lane.b32.xlu0 %v2244, 8
      %v2319 = vpop.permute.xlu0 %2318
      %2320 = vrot.lane.b32.xlu0 %v2245, 8
      %v2321 = vpop.permute.xlu0 %2320
      %2322 = vrot.lane.b32.xlu0 %v2246, 8
      %v2323 = vpop.permute.xlu0 %2322
      %2324 = vrot.lane.b32.xlu0 %v2247, 8
      %v2325 = vpop.permute.xlu0 %2324
      %2326 = vrot.lane.b32.xlu0 %v2248, 8
      %v2327 = vpop.permute.xlu0 %2326
      %2328 = vrot.lane.b32.xlu0 %v2249, 8
      %v2329 = vpop.permute.xlu0 %2328
      %2330 = vrot.lane.b32.xlu0 %v2250, 8
      %v2331 = vpop.permute.xlu0 %2330
      %2332 = vrot.lane.b32.xlu0 %v2251, 8
      %v2333 = vpop.permute.xlu0 %2332
      %2334 = vrot.lane.b32.xlu0 %v2252, 8
      %v2335 = vpop.permute.xlu0 %2334
      %2336 = vrot.lane.b32.xlu0 %v2253, 8
      %v2337 = vpop.permute.xlu0 %2336
      %2338 = vrot.lane.b32.xlu0 %v2254, 8
      %v2339 = vpop.permute.xlu0 %2338
      %2340 = vrot.lane.b32.xlu0 %v2255, 8
      %v2341 = vpop.permute.xlu0 %2340
      %2342 = vrot.lane.b32.xlu0 %v2256, 8
      %v2343 = vpop.permute.xlu0 %2342
      %2344 = vrot.lane.b32.xlu0 %v2257, 8
      %v2345 = vpop.permute.xlu0 %2344
      %2346 = vrot.lane.b32.xlu0 %v2258, 8
      %v2347 = vpop.permute.xlu0 %2346
      %2348 = vrot.lane.b32.xlu0 %v2259, 8
      %v2349 = vpop.permute.xlu0 %2348
      %2350 = vrot.lane.b32.xlu0 %v2260, 8
      %v2351 = vpop.permute.xlu0 %2350
      %2352 = vrot.lane.b32.xlu0 %v2261, 8
      %v2353 = vpop.permute.xlu0 %2352
      %2354 = vrot.lane.b32.xlu0 %v2262, 8
      %v2355 = vpop.permute.xlu0 %2354
      %2356 = vrot.lane.b32.xlu0 %v2263, 8
      %v2357 = vpop.permute.xlu0 %2356
      %2358 = vrot.lane.b32.xlu0 %v2264, 8
      %v2359 = vpop.permute.xlu0 %2358
      %2360 = vrot.lane.b32.xlu0 %v2265, 8
      %v2361 = vpop.permute.xlu0 %2360
      %vm2394 = vcmask 126016
      %2395 = vst.msk [vmem:[#allocation5] sm:$0xf] %vm2394, %v2299
      %2396 = vst.msk [vmem:[#allocation5 + $0x8] sm:$0xf] %vm2394, %v2301
      %2397 = vst.msk [vmem:[#allocation5 + $0x10] sm:$0xf] %vm2394, %v2303
      %2398 = vst.msk [vmem:[#allocation5 + $0x18] sm:$0xf] %vm2394, %v2305
      %2399 = vst.msk [vmem:[#allocation5 + $0x20] sm:$0xf] %vm2394, %v2307
      %2400 = vst.msk [vmem:[#allocation5 + $0x28] sm:$0xf] %vm2394, %v2309
      %2401 = vst.msk [vmem:[#allocation5 + $0x30] sm:$0xf] %vm2394, %v2311
      %2402 = vst.msk [vmem:[#allocation5 + $0x38] sm:$0xf] %vm2394, %v2313
      %2403 = vst.msk [vmem:[#allocation5 + $0x40] sm:$0xf] %vm2394, %v2315
      %2404 = vst.msk [vmem:[#allocation5 + $0x48] sm:$0xf] %vm2394, %v2317
      %2405 = vst.msk [vmem:[#allocation5 + $0x50] sm:$0xf] %vm2394, %v2319
      %2406 = vst.msk [vmem:[#allocation5 + $0x58] sm:$0xf] %vm2394, %v2321
      %2407 = vst.msk [vmem:[#allocation5 + $0x60] sm:$0xf] %vm2394, %v2323
      %2408 = vst.msk [vmem:[#allocation5 + $0x68] sm:$0xf] %vm2394, %v2325
      %2409 = vst.msk [vmem:[#allocation5 + $0x70] sm:$0xf] %vm2394, %v2327
      %2410 = vst.msk [vmem:[#allocation5 + $0x78] sm:$0xf] %vm2394, %v2329
      %2411 = vst.msk [vmem:[#allocation5 + $0x80] sm:$0xf] %vm2394, %v2331
      %2412 = vst.msk [vmem:[#allocation5 + $0x88] sm:$0xf] %vm2394, %v2333
      %2413 = vst.msk [vmem:[#allocation5 + $0x90] sm:$0xf] %vm2394, %v2335
      %2414 = vst.msk [vmem:[#allocation5 + $0x98] sm:$0xf] %vm2394, %v2337
      %2415 = vst.msk [vmem:[#allocation5 + $0xa0] sm:$0xf] %vm2394, %v2339
      %2416 = vst.msk [vmem:[#allocation5 + $0xa8] sm:$0xf] %vm2394, %v2341
      %2417 = vst.msk [vmem:[#allocation5 + $0xb0] sm:$0xf] %vm2394, %v2343
      %2418 = vst.msk [vmem:[#allocation5 + $0xb8] sm:$0xf] %vm2394, %v2345
      %2419 = vst.msk [vmem:[#allocation5 + $0xc0] sm:$0xf] %vm2394, %v2347
      %2420 = vst.msk [vmem:[#allocation5 + $0xc8] sm:$0xf] %vm2394, %v2349
      %2421 = vst.msk [vmem:[#allocation5 + $0xd0] sm:$0xf] %vm2394, %v2351
      %2422 = vst.msk [vmem:[#allocation5 + $0xd8] sm:$0xf] %vm2394, %v2353
      %2423 = vst.msk [vmem:[#allocation5 + $0xe0] sm:$0xf] %vm2394, %v2355
      %2424 = vst.msk [vmem:[#allocation5 + $0xe8] sm:$0xf] %vm2394, %v2357
      %2425 = vst.msk [vmem:[#allocation5 + $0xf0] sm:$0xf] %vm2394, %v2359
      %2426 = vst.msk [vmem:[#allocation5 + $0xf8] sm:$0xf] %vm2394, %v2361
      %vm2475 = vcmask 1046528
      %v2476 = vrot.slane %v2061, 1
      %v2477 = vrot.slane %v2062, 1
      %v2478 = vsel %vm2475, %v2476, %v2477
      %v2479 = vrot.slane %v2063, 1
      %v2480 = vsel %vm2475, %v2477, %v2479
      %v2481 = vrot.slane %v2064, 1
      %v2482 = vrot.slane %v2065, 1
      %v2483 = vsel %vm2475, %v2481, %v2482
      %v2484 = vrot.slane %v2066, 1
      %v2485 = vsel %vm2475, %v2482, %v2484
      %v2486 = vrot.slane %v2067, 1
      %v2487 = vrot.slane %v2068, 1
      %v2488 = vsel %vm2475, %v2486, %v2487
      %v2489 = vrot.slane %v2069, 1
      %v2490 = vsel %vm2475, %v2487, %v2489
      %v2491 = vrot.slane %v2070, 1
      %v2492 = vrot.slane %v2071, 1
      %v2493 = vsel %vm2475, %v2491, %v2492
      %v2494 = vrot.slane %v2072, 1
      %v2495 = vsel %vm2475, %v2492, %v2494
      %v2496 = vrot.slane %v2073, 1
      %v2497 = vrot.slane %v2074, 1
      %v2498 = vsel %vm2475, %v2496, %v2497
      %v2499 = vrot.slane %v2075, 1
      %v2500 = vsel %vm2475, %v2497, %v2499
      %v2501 = vrot.slane %v2076, 1
      %v2502 = vrot.slane %v2077, 1
      %v2503 = vsel %vm2475, %v2501, %v2502
      %v2504 = vrot.slane %v2078, 1
      %v2505 = vsel %vm2475, %v2502, %v2504
      %v2506 = vrot.slane %v2079, 1
      %v2507 = vrot.slane %v2080, 1
      %v2508 = vsel %vm2475, %v2506, %v2507
      %v2509 = vrot.slane %v2081, 1
      %v2510 = vsel %vm2475, %v2507, %v2509
      %v2511 = vrot.slane %v2082, 1
      %v2512 = vrot.slane %v2083, 1
      %v2513 = vsel %vm2475, %v2511, %v2512
      %v2514 = vrot.slane %v2084, 1
      %v2515 = vsel %vm2475, %v2512, %v2514
      %v2516 = vrot.slane %v2085, 1
      %v2517 = vrot.slane %v2086, 1
      %v2518 = vsel %vm2475, %v2516, %v2517
      %v2519 = vrot.slane %v2087, 1
      %v2520 = vsel %vm2475, %v2517, %v2519
      %v2521 = vrot.slane %v2088, 1
      %v2522 = vrot.slane %v2089, 1
      %v2523 = vsel %vm2475, %v2521, %v2522
      %v2524 = vrot.slane %v2090, 1
      %v2525 = vsel %vm2475, %v2522, %v2524
      %v2526 = vrot.slane %v2091, 1
      %v2527 = vrot.slane %v2092, 1
      %v2528 = vsel %vm2475, %v2526, %v2527
      %v2529 = vrot.slane %v2093, 1
      %v2530 = vsel %vm2475, %v2527, %v2529
      %v2531 = vrot.slane %v2094, 1
      %v2532 = vrot.slane %v2095, 1
      %v2533 = vsel %vm2475, %v2531, %v2532
      %v2534 = vrot.slane %v2096, 1
      %v2535 = vsel %vm2475, %v2532, %v2534
      %v2536 = vrot.slane %v2097, 1
      %v2537 = vrot.slane %v2098, 1
      %v2538 = vsel %vm2475, %v2536, %v2537
      %v2539 = vrot.slane %v2099, 1
      %v2540 = vsel %vm2475, %v2537, %v2539
      %v2541 = vrot.slane %v2100, 1
      %v2542 = vrot.slane %v2101, 1
      %v2543 = vsel %vm2475, %v2541, %v2542
      %v2544 = vrot.slane %v2102, 1
      %v2545 = vsel %vm2475, %v2542, %v2544
      %v2546 = vrot.slane %v2103, 1
      %v2547 = vrot.slane %v2104, 1
      %v2548 = vsel %vm2475, %v2546, %v2547
      %v2549 = vrot.slane %v2105, 1
      %v2550 = vsel %vm2475, %v2547, %v2549
      %v2551 = vrot.slane %v2106, 1
      %v2552 = vrot.slane %v2107, 1
      %v2553 = vsel %vm2475, %v2551, %v2552
      %v2554 = vrot.slane %v2108, 1
      %v2555 = vsel %vm2475, %v2552, %v2554
      %v2588 = vpack.c.bf16 %v2478, %v2478
      %v2589 = vpack.c.bf16 %v2480, %v2480
      %v2590 = vpack.c.bf16 %v2483, %v2483
      %v2591 = vpack.c.bf16 %v2485, %v2485
      %v2592 = vpack.c.bf16 %v2488, %v2488
      %v2593 = vpack.c.bf16 %v2490, %v2490
      %v2594 = vpack.c.bf16 %v2493, %v2493
      %v2595 = vpack.c.bf16 %v2495, %v2495
      %v2596 = vpack.c.bf16 %v2498, %v2498
      %v2597 = vpack.c.bf16 %v2500, %v2500
      %v2598 = vpack.c.bf16 %v2503, %v2503
      %v2599 = vpack.c.bf16 %v2505, %v2505
      %v2600 = vpack.c.bf16 %v2508, %v2508
      %v2601 = vpack.c.bf16 %v2510, %v2510
      %v2602 = vpack.c.bf16 %v2513, %v2513
      %v2603 = vpack.c.bf16 %v2515, %v2515
      %v2604 = vpack.c.bf16 %v2518, %v2518
      %v2605 = vpack.c.bf16 %v2520, %v2520
      %v2606 = vpack.c.bf16 %v2523, %v2523
      %v2607 = vpack.c.bf16 %v2525, %v2525
      %v2608 = vpack.c.bf16 %v2528, %v2528
      %v2609 = vpack.c.bf16 %v2530, %v2530
      %v2610 = vpack.c.bf16 %v2533, %v2533
      %v2611 = vpack.c.bf16 %v2535, %v2535
      %v2612 = vpack.c.bf16 %v2538, %v2538
      %v2613 = vpack.c.bf16 %v2540, %v2540
      %v2614 = vpack.c.bf16 %v2543, %v2543
      %v2615 = vpack.c.bf16 %v2545, %v2545
      %v2616 = vpack.c.bf16 %v2548, %v2548
      %v2617 = vpack.c.bf16 %v2550, %v2550
      %v2618 = vpack.c.bf16 %v2553, %v2553
      %v2619 = vpack.c.bf16 %v2555, %v2555
      %2652 = vrot.lane.b32.xlu0 %v2588, 16
      %v2653 = vpop.permute.xlu0 %2652
      %2654 = vrot.lane.b32.xlu0 %v2589, 16
      %v2655 = vpop.permute.xlu0 %2654
      %2656 = vrot.lane.b32.xlu0 %v2590, 16
      %v2657 = vpop.permute.xlu0 %2656
      %2658 = vrot.lane.b32.xlu0 %v2591, 16
      %v2659 = vpop.permute.xlu0 %2658
      %2660 = vrot.lane.b32.xlu0 %v2592, 16
      %v2661 = vpop.permute.xlu0 %2660
      %2662 = vrot.lane.b32.xlu0 %v2593, 16
      %v2663 = vpop.permute.xlu0 %2662
      %2664 = vrot.lane.b32.xlu0 %v2594, 16
      %v2665 = vpop.permute.xlu0 %2664
      %2666 = vrot.lane.b32.xlu0 %v2595, 16
      %v2667 = vpop.permute.xlu0 %2666
      %2668 = vrot.lane.b32.xlu0 %v2596, 16
      %v2669 = vpop.permute.xlu0 %2668
      %2670 = vrot.lane.b32.xlu0 %v2597, 16
      %v2671 = vpop.permute.xlu0 %2670
      %2672 = vrot.lane.b32.xlu0 %v2598, 16
      %v2673 = vpop.permute.xlu0 %2672
      %2674 = vrot.lane.b32.xlu0 %v2599, 16
      %v2675 = vpop.permute.xlu0 %2674
      %2676 = vrot.lane.b32.xlu0 %v2600, 16
      %v2677 = vpop.permute.xlu0 %2676
      %2678 = vrot.lane.b32.xlu0 %v2601, 16
      %v2679 = vpop.permute.xlu0 %2678
      %2680 = vrot.lane.b32.xlu0 %v2602, 16
      %v2681 = vpop.permute.xlu0 %2680
      %2682 = vrot.lane.b32.xlu0 %v2603, 16
      %v2683 = vpop.permute.xlu0 %2682
      %2684 = vrot.lane.b32.xlu0 %v2604, 16
      %v2685 = vpop.permute.xlu0 %2684
      %2686 = vrot.lane.b32.xlu0 %v2605, 16
      %v2687 = vpop.permute.xlu0 %2686
      %2688 = vrot.lane.b32.xlu0 %v2606, 16
      %v2689 = vpop.permute.xlu0 %2688
      %2690 = vrot.lane.b32.xlu0 %v2607, 16
      %v2691 = vpop.permute.xlu0 %2690
      %2692 = vrot.lane.b32.xlu0 %v2608, 16
      %v2693 = vpop.permute.xlu0 %2692
      %2694 = vrot.lane.b32.xlu0 %v2609, 16
      %v2695 = vpop.permute.xlu0 %2694
      %2696 = vrot.lane.b32.xlu0 %v2610, 16
      %v2697 = vpop.permute.xlu0 %2696
      %2698 = vrot.lane.b32.xlu0 %v2611, 16
      %v2699 = vpop.permute.xlu0 %2698
      %2700 = vrot.lane.b32.xlu0 %v2612, 16
      %v2701 = vpop.permute.xlu0 %2700
      %2702 = vrot.lane.b32.xlu0 %v2613, 16
      %v2703 = vpop.permute.xlu0 %2702
      %2704 = vrot.lane.b32.xlu0 %v2614, 16
      %v2705 = vpop.permute.xlu0 %2704
      %2706 = vrot.lane.b32.xlu0 %v2615, 16
      %v2707 = vpop.permute.xlu0 %2706
      %2708 = vrot.lane.b32.xlu0 %v2616, 16
      %v2709 = vpop.permute.xlu0 %2708
      %2710 = vrot.lane.b32.xlu0 %v2617, 16
      %v2711 = vpop.permute.xlu0 %2710
      %2712 = vrot.lane.b32.xlu0 %v2618, 16
      %v2713 = vpop.permute.xlu0 %2712
      %2714 = vrot.lane.b32.xlu0 %v2619, 16
      %v2715 = vpop.permute.xlu0 %2714
      %vm2748 = vcmask 191616
      %2749 = vst.msk [vmem:[#allocation5] sm:$0xf] %vm2748, %v2653
      %2750 = vst.msk [vmem:[#allocation5 + $0x8] sm:$0xf] %vm2748, %v2655
      %2751 = vst.msk [vmem:[#allocation5 + $0x10] sm:$0xf] %vm2748, %v2657
      %2752 = vst.msk [vmem:[#allocation5 + $0x18] sm:$0xf] %vm2748, %v2659
      %2753 = vst.msk [vmem:[#allocation5 + $0x20] sm:$0xf] %vm2748, %v2661
      %2754 = vst.msk [vmem:[#allocation5 + $0x28] sm:$0xf] %vm2748, %v2663
      %2755 = vst.msk [vmem:[#allocation5 + $0x30] sm:$0xf] %vm2748, %v2665
      %2756 = vst.msk [vmem:[#allocation5 + $0x38] sm:$0xf] %vm2748, %v2667
      %2757 = vst.msk [vmem:[#allocation5 + $0x40] sm:$0xf] %vm2748, %v2669
      %2758 = vst.msk [vmem:[#allocation5 + $0x48] sm:$0xf] %vm2748, %v2671
      %2759 = vst.msk [vmem:[#allocation5 + $0x50] sm:$0xf] %vm2748, %v2673
      %2760 = vst.msk [vmem:[#allocation5 + $0x58] sm:$0xf] %vm2748, %v2675
      %2761 = vst.msk [vmem:[#allocation5 + $0x60] sm:$0xf] %vm2748, %v2677
      %2762 = vst.msk [vmem:[#allocation5 + $0x68] sm:$0xf] %vm2748, %v2679
      %2763 = vst.msk [vmem:[#allocation5 + $0x70] sm:$0xf] %vm2748, %v2681
      %2764 = vst.msk [vmem:[#allocation5 + $0x78] sm:$0xf] %vm2748, %v2683
      %2765 = vst.msk [vmem:[#allocation5 + $0x80] sm:$0xf] %vm2748, %v2685
      %2766 = vst.msk [vmem:[#allocation5 + $0x88] sm:$0xf] %vm2748, %v2687
      %2767 = vst.msk [vmem:[#allocation5 + $0x90] sm:$0xf] %vm2748, %v2689
      %2768 = vst.msk [vmem:[#allocation5 + $0x98] sm:$0xf] %vm2748, %v2691
      %2769 = vst.msk [vmem:[#allocation5 + $0xa0] sm:$0xf] %vm2748, %v2693
      %2770 = vst.msk [vmem:[#allocation5 + $0xa8] sm:$0xf] %vm2748, %v2695
      %2771 = vst.msk [vmem:[#allocation5 + $0xb0] sm:$0xf] %vm2748, %v2697
      %2772 = vst.msk [vmem:[#allocation5 + $0xb8] sm:$0xf] %vm2748, %v2699
      %2773 = vst.msk [vmem:[#allocation5 + $0xc0] sm:$0xf] %vm2748, %v2701
      %2774 = vst.msk [vmem:[#allocation5 + $0xc8] sm:$0xf] %vm2748, %v2703
      %2775 = vst.msk [vmem:[#allocation5 + $0xd0] sm:$0xf] %vm2748, %v2705
      %2776 = vst.msk [vmem:[#allocation5 + $0xd8] sm:$0xf] %vm2748, %v2707
      %2777 = vst.msk [vmem:[#allocation5 + $0xe0] sm:$0xf] %vm2748, %v2709
      %2778 = vst.msk [vmem:[#allocation5 + $0xe8] sm:$0xf] %vm2748, %v2711
      %2779 = vst.msk [vmem:[#allocation5 + $0xf0] sm:$0xf] %vm2748, %v2713
      %2780 = vst.msk [vmem:[#allocation5 + $0xf8] sm:$0xf] %vm2748, %v2715
      %v2829 = vrot.slane %v2115, 1
      %v2830 = vrot.slane %v2116, 1
      %v2831 = vsel %vm2475, %v2829, %v2830
      %v2832 = vrot.slane %v2117, 1
      %v2833 = vsel %vm2475, %v2830, %v2832
      %v2834 = vrot.slane %v2118, 1
      %v2835 = vrot.slane %v2119, 1
      %v2836 = vsel %vm2475, %v2834, %v2835
      %v2837 = vrot.slane %v2120, 1
      %v2838 = vsel %vm2475, %v2835, %v2837
      %v2839 = vrot.slane %v2121, 1
      %v2840 = vrot.slane %v2122, 1
      %v2841 = vsel %vm2475, %v2839, %v2840
      %v2842 = vrot.slane %v2123, 1
      %v2843 = vsel %vm2475, %v2840, %v2842
      %v2844 = vrot.slane %v2124, 1
      %v2845 = vrot.slane %v2125, 1
      %v2846 = vsel %vm2475, %v2844, %v2845
      %v2847 = vrot.slane %v2126, 1
      %v2848 = vsel %vm2475, %v2845, %v2847
      %v2849 = vrot.slane %v2127, 1
      %v2850 = vrot.slane %v2128, 1
      %v2851 = vsel %vm2475, %v2849, %v2850
      %v2852 = vrot.slane %v2129, 1
      %v2853 = vsel %vm2475, %v2850, %v2852
      %v2854 = vrot.slane %v2130, 1
      %v2855 = vrot.slane %v2131, 1
      %v2856 = vsel %vm2475, %v2854, %v2855
      %v2857 = vrot.slane %v2132, 1
      %v2858 = vsel %vm2475, %v2855, %v2857
      %v2859 = vrot.slane %v2133, 1
      %v2860 = vrot.slane %v2134, 1
      %v2861 = vsel %vm2475, %v2859, %v2860
      %v2862 = vrot.slane %v2135, 1
      %v2863 = vsel %vm2475, %v2860, %v2862
      %v2864 = vrot.slane %v2136, 1
      %v2865 = vrot.slane %v2137, 1
      %v2866 = vsel %vm2475, %v2864, %v2865
      %v2867 = vrot.slane %v2138, 1
      %v2868 = vsel %vm2475, %v2865, %v2867
      %v2869 = vrot.slane %v2139, 1
      %v2870 = vrot.slane %v2140, 1
      %v2871 = vsel %vm2475, %v2869, %v2870
      %v2872 = vrot.slane %v2141, 1
      %v2873 = vsel %vm2475, %v2870, %v2872
      %v2874 = vrot.slane %v2142, 1
      %v2875 = vrot.slane %v2143, 1
      %v2876 = vsel %vm2475, %v2874, %v2875
      %v2877 = vrot.slane %v2144, 1
      %v2878 = vsel %vm2475, %v2875, %v2877
      %v2879 = vrot.slane %v2145, 1
      %v2880 = vrot.slane %v2146, 1
      %v2881 = vsel %vm2475, %v2879, %v2880
      %v2882 = vrot.slane %v2147, 1
      %v2883 = vsel %vm2475, %v2880, %v2882
      %v2884 = vrot.slane %v2148, 1
      %v2885 = vrot.slane %v2149, 1
      %v2886 = vsel %vm2475, %v2884, %v2885
      %v2887 = vrot.slane %v2150, 1
      %v2888 = vsel %vm2475, %v2885, %v2887
      %v2889 = vrot.slane %v2151, 1
      %v2890 = vrot.slane %v2152, 1
      %v2891 = vsel %vm2475, %v2889, %v2890
      %v2892 = vrot.slane %v2153, 1
      %v2893 = vsel %vm2475, %v2890, %v2892
      %v2894 = vrot.slane %v2154, 1
      %v2895 = vrot.slane %v2155, 1
      %v2896 = vsel %vm2475, %v2894, %v2895
      %v2897 = vrot.slane %v2156, 1
      %v2898 = vsel %vm2475, %v2895, %v2897
      %v2899 = vrot.slane %v2157, 1
      %v2900 = vrot.slane %v2158, 1
      %v2901 = vsel %vm2475, %v2899, %v2900
      %v2902 = vrot.slane %v2159, 1
      %v2903 = vsel %vm2475, %v2900, %v2902
      %v2904 = vrot.slane %v2160, 1
      %v2905 = vrot.slane %v2161, 1
      %v2906 = vsel %vm2475, %v2904, %v2905
      %v2907 = vrot.slane %v2162, 1
      %v2908 = vsel %vm2475, %v2905, %v2907
      %v2941 = vpack.c.bf16 %v2831, %v2831
      %v2942 = vpack.c.bf16 %v2833, %v2833
      %v2943 = vpack.c.bf16 %v2836, %v2836
      %v2944 = vpack.c.bf16 %v2838, %v2838
      %v2945 = vpack.c.bf16 %v2841, %v2841
      %v2946 = vpack.c.bf16 %v2843, %v2843
      %v2947 = vpack.c.bf16 %v2846, %v2846
      %v2948 = vpack.c.bf16 %v2848, %v2848
      %v2949 = vpack.c.bf16 %v2851, %v2851
      %v2950 = vpack.c.bf16 %v2853, %v2853
      %v2951 = vpack.c.bf16 %v2856, %v2856
      %v2952 = vpack.c.bf16 %v2858, %v2858
      %v2953 = vpack.c.bf16 %v2861, %v2861
      %v2954 = vpack.c.bf16 %v2863, %v2863
      %v2955 = vpack.c.bf16 %v2866, %v2866
      %v2956 = vpack.c.bf16 %v2868, %v2868
      %v2957 = vpack.c.bf16 %v2871, %v2871
      %v2958 = vpack.c.bf16 %v2873, %v2873
      %v2959 = vpack.c.bf16 %v2876, %v2876
      %v2960 = vpack.c.bf16 %v2878, %v2878
      %v2961 = vpack.c.bf16 %v2881, %v2881
      %v2962 = vpack.c.bf16 %v2883, %v2883
      %v2963 = vpack.c.bf16 %v2886, %v2886
      %v2964 = vpack.c.bf16 %v2888, %v2888
      %v2965 = vpack.c.bf16 %v2891, %v2891
      %v2966 = vpack.c.bf16 %v2893, %v2893
      %v2967 = vpack.c.bf16 %v2896, %v2896
      %v2968 = vpack.c.bf16 %v2898, %v2898
      %v2969 = vpack.c.bf16 %v2901, %v2901
      %v2970 = vpack.c.bf16 %v2903, %v2903
      %v2971 = vpack.c.bf16 %v2906, %v2906
      %v2972 = vpack.c.bf16 %v2908, %v2908
      %3005 = vrot.lane.b32.xlu0 %v2941, 24
      %v3006 = vpop.permute.xlu0 %3005
      %3007 = vrot.lane.b32.xlu0 %v2942, 24
      %v3008 = vpop.permute.xlu0 %3007
      %3009 = vrot.lane.b32.xlu0 %v2943, 24
      %v3010 = vpop.permute.xlu0 %3009
      %3011 = vrot.lane.b32.xlu0 %v2944, 24
      %v3012 = vpop.permute.xlu0 %3011
      %3013 = vrot.lane.b32.xlu0 %v2945, 24
      %v3014 = vpop.permute.xlu0 %3013
      %3015 = vrot.lane.b32.xlu0 %v2946, 24
      %v3016 = vpop.permute.xlu0 %3015
      %3017 = vrot.lane.b32.xlu0 %v2947, 24
      %v3018 = vpop.permute.xlu0 %3017
      %3019 = vrot.lane.b32.xlu0 %v2948, 24
      %v3020 = vpop.permute.xlu0 %3019
      %3021 = vrot.lane.b32.xlu0 %v2949, 24
      %v3022 = vpop.permute.xlu0 %3021
      %3023 = vrot.lane.b32.xlu0 %v2950, 24
      %v3024 = vpop.permute.xlu0 %3023
      %3025 = vrot.lane.b32.xlu0 %v2951, 24
      %v3026 = vpop.permute.xlu0 %3025
      %3027 = vrot.lane.b32.xlu0 %v2952, 24
      %v3028 = vpop.permute.xlu0 %3027
      %3029 = vrot.lane.b32.xlu0 %v2953, 24
      %v3030 = vpop.permute.xlu0 %3029
      %3031 = vrot.lane.b32.xlu0 %v2954, 24
      %v3032 = vpop.permute.xlu0 %3031
      %3033 = vrot.lane.b32.xlu0 %v2955, 24
      %v3034 = vpop.permute.xlu0 %3033
      %3035 = vrot.lane.b32.xlu0 %v2956, 24
      %v3036 = vpop.permute.xlu0 %3035
      %3037 = vrot.lane.b32.xlu0 %v2957, 24
      %v3038 = vpop.permute.xlu0 %3037
      %3039 = vrot.lane.b32.xlu0 %v2958, 24
      %v3040 = vpop.permute.xlu0 %3039
      %3041 = vrot.lane.b32.xlu0 %v2959, 24
      %v3042 = vpop.permute.xlu0 %3041
      %3043 = vrot.lane.b32.xlu0 %v2960, 24
      %v3044 = vpop.permute.xlu0 %3043
      %3045 = vrot.lane.b32.xlu0 %v2961, 24
      %v3046 = vpop.permute.xlu0 %3045
      %3047 = vrot.lane.b32.xlu0 %v2962, 24
      %v3048 = vpop.permute.xlu0 %3047
      %3049 = vrot.lane.b32.xlu0 %v2963, 24
      %v3050 = vpop.permute.xlu0 %3049
      %3051 = vrot.lane.b32.xlu0 %v2964, 24
      %v3052 = vpop.permute.xlu0 %3051
      %3053 = vrot.lane.b32.xlu0 %v2965, 24
      %v3054 = vpop.permute.xlu0 %3053
      %3055 = vrot.lane.b32.xlu0 %v2966, 24
      %v3056 = vpop.permute.xlu0 %3055
      %3057 = vrot.lane.b32.xlu0 %v2967, 24
      %v3058 = vpop.permute.xlu0 %3057
      %3059 = vrot.lane.b32.xlu0 %v2968, 24
      %v3060 = vpop.permute.xlu0 %3059
      %3061 = vrot.lane.b32.xlu0 %v2969, 24
      %v3062 = vpop.permute.xlu0 %3061
      %3063 = vrot.lane.b32.xlu0 %v2970, 24
      %v3064 = vpop.permute.xlu0 %3063
      %3065 = vrot.lane.b32.xlu0 %v2971, 24
      %v3066 = vpop.permute.xlu0 %3065
      %3067 = vrot.lane.b32.xlu0 %v2972, 24
      %v3068 = vpop.permute.xlu0 %3067
      %vm3101 = vcmask 257216
      %3102 = vst.msk [vmem:[#allocation5] sm:$0xf] %vm3101, %v3006
      %3103 = vst.msk [vmem:[#allocation5 + $0x8] sm:$0xf] %vm3101, %v3008
      %3104 = vst.msk [vmem:[#allocation5 + $0x10] sm:$0xf] %vm3101, %v3010
      %3105 = vst.msk [vmem:[#allocation5 + $0x18] sm:$0xf] %vm3101, %v3012
      %3106 = vst.msk [vmem:[#allocation5 + $0x20] sm:$0xf] %vm3101, %v3014
      %3107 = vst.msk [vmem:[#allocation5 + $0x28] sm:$0xf] %vm3101, %v3016
      %3108 = vst.msk [vmem:[#allocation5 + $0x30] sm:$0xf] %vm3101, %v3018
      %3109 = vst.msk [vmem:[#allocation5 + $0x38] sm:$0xf] %vm3101, %v3020
      %3110 = vst.msk [vmem:[#allocation5 + $0x40] sm:$0xf] %vm3101, %v3022
      %3111 = vst.msk [vmem:[#allocation5 + $0x48] sm:$0xf] %vm3101, %v3024
      %3112 = vst.msk [vmem:[#allocation5 + $0x50] sm:$0xf] %vm3101, %v3026
      %3113 = vst.msk [vmem:[#allocation5 + $0x58] sm:$0xf] %vm3101, %v3028
      %3114 = vst.msk [vmem:[#allocation5 + $0x60] sm:$0xf] %vm3101, %v3030
      %3115 = vst.msk [vmem:[#allocation5 + $0x68] sm:$0xf] %vm3101, %v3032
      %3116 = vst.msk [vmem:[#allocation5 + $0x70] sm:$0xf] %vm3101, %v3034
      %3117 = vst.msk [vmem:[#allocation5 + $0x78] sm:$0xf] %vm3101, %v3036
      %3118 = vst.msk [vmem:[#allocation5 + $0x80] sm:$0xf] %vm3101, %v3038
      %3119 = vst.msk [vmem:[#allocation5 + $0x88] sm:$0xf] %vm3101, %v3040
      %3120 = vst.msk [vmem:[#allocation5 + $0x90] sm:$0xf] %vm3101, %v3042
      %3121 = vst.msk [vmem:[#allocation5 + $0x98] sm:$0xf] %vm3101, %v3044
      %3122 = vst.msk [vmem:[#allocation5 + $0xa0] sm:$0xf] %vm3101, %v3046
      %3123 = vst.msk [vmem:[#allocation5 + $0xa8] sm:$0xf] %vm3101, %v3048
      %3124 = vst.msk [vmem:[#allocation5 + $0xb0] sm:$0xf] %vm3101, %v3050
      %3125 = vst.msk [vmem:[#allocation5 + $0xb8] sm:$0xf] %vm3101, %v3052
      %3126 = vst.msk [vmem:[#allocation5 + $0xc0] sm:$0xf] %vm3101, %v3054
      %3127 = vst.msk [vmem:[#allocation5 + $0xc8] sm:$0xf] %vm3101, %v3056
      %3128 = vst.msk [vmem:[#allocation5 + $0xd0] sm:$0xf] %vm3101, %v3058
      %3129 = vst.msk [vmem:[#allocation5 + $0xd8] sm:$0xf] %vm3101, %v3060
      %3130 = vst.msk [vmem:[#allocation5 + $0xe0] sm:$0xf] %vm3101, %v3062
      %3131 = vst.msk [vmem:[#allocation5 + $0xe8] sm:$0xf] %vm3101, %v3064
      %3132 = vst.msk [vmem:[#allocation5 + $0xf0] sm:$0xf] %vm3101, %v3066
      %3133 = vst.msk [vmem:[#allocation5 + $0xf8] sm:$0xf] %vm3101, %v3068
      %vm3134 = vcmask 1045504
      %v3135 = vrot.slane %v2061, 2
      %v3136 = vrot.slane %v2062, 2
      %v3137 = vsel %vm3134, %v3135, %v3136
      %v3138 = vrot.slane %v2063, 2
      %v3139 = vsel %vm3134, %v3136, %v3138
      %v3140 = vrot.slane %v2064, 2
      %v3141 = vrot.slane %v2065, 2
      %v3142 = vsel %vm3134, %v3140, %v3141
      %v3143 = vrot.slane %v2066, 2
      %v3144 = vsel %vm3134, %v3141, %v3143
      %v3145 = vrot.slane %v2067, 2
      %v3146 = vrot.slane %v2068, 2
      %v3147 = vsel %vm3134, %v3145, %v3146
      %v3148 = vrot.slane %v2069, 2
      %v3149 = vsel %vm3134, %v3146, %v3148
      %v3150 = vrot.slane %v2070, 2
      %v3151 = vrot.slane %v2071, 2
      %v3152 = vsel %vm3134, %v3150, %v3151
      %v3153 = vrot.slane %v2072, 2
      %v3154 = vsel %vm3134, %v3151, %v3153
      %v3155 = vrot.slane %v2073, 2
      %v3156 = vrot.slane %v2074, 2
      %v3157 = vsel %vm3134, %v3155, %v3156
      %v3158 = vrot.slane %v2075, 2
      %v3159 = vsel %vm3134, %v3156, %v3158
      %v3160 = vrot.slane %v2076, 2
      %v3161 = vrot.slane %v2077, 2
      %v3162 = vsel %vm3134, %v3160, %v3161
      %v3163 = vrot.slane %v2078, 2
      %v3164 = vsel %vm3134, %v3161, %v3163
      %v3165 = vrot.slane %v2079, 2
      %v3166 = vrot.slane %v2080, 2
      %v3167 = vsel %vm3134, %v3165, %v3166
      %v3168 = vrot.slane %v2081, 2
      %v3169 = vsel %vm3134, %v3166, %v3168
      %v3170 = vrot.slane %v2082, 2
      %v3171 = vrot.slane %v2083, 2
      %v3172 = vsel %vm3134, %v3170, %v3171
      %v3173 = vrot.slane %v2084, 2
      %v3174 = vsel %vm3134, %v3171, %v3173
      %v3175 = vrot.slane %v2085, 2
      %v3176 = vrot.slane %v2086, 2
      %v3177 = vsel %vm3134, %v3175, %v3176
      %v3178 = vrot.slane %v2087, 2
      %v3179 = vsel %vm3134, %v3176, %v3178
      %v3180 = vrot.slane %v2088, 2
      %v3181 = vrot.slane %v2089, 2
      %v3182 = vsel %vm3134, %v3180, %v3181
      %v3183 = vrot.slane %v2090, 2
      %v3184 = vsel %vm3134, %v3181, %v3183
      %v3185 = vrot.slane %v2091, 2
      %v3186 = vrot.slane %v2092, 2
      %v3187 = vsel %vm3134, %v3185, %v3186
      %v3188 = vrot.slane %v2093, 2
      %v3189 = vsel %vm3134, %v3186, %v3188
      %v3190 = vrot.slane %v2094, 2
      %v3191 = vrot.slane %v2095, 2
      %v3192 = vsel %vm3134, %v3190, %v3191
      %v3193 = vrot.slane %v2096, 2
      %v3194 = vsel %vm3134, %v3191, %v3193
      %v3195 = vrot.slane %v2097, 2
      %v3196 = vrot.slane %v2098, 2
      %v3197 = vsel %vm3134, %v3195, %v3196
      %v3198 = vrot.slane %v2099, 2
      %v3199 = vsel %vm3134, %v3196, %v3198
      %v3200 = vrot.slane %v2100, 2
      %v3201 = vrot.slane %v2101, 2
      %v3202 = vsel %vm3134, %v3200, %v3201
      %v3203 = vrot.slane %v2102, 2
      %v3204 = vsel %vm3134, %v3201, %v3203
      %v3205 = vrot.slane %v2103, 2
      %v3206 = vrot.slane %v2104, 2
      %v3207 = vsel %vm3134, %v3205, %v3206
      %v3208 = vrot.slane %v2105, 2
      %v3209 = vsel %vm3134, %v3206, %v3208
      %v3210 = vrot.slane %v2106, 2
      %v3211 = vrot.slane %v2107, 2
      %v3212 = vsel %vm3134, %v3210, %v3211
      %v3213 = vrot.slane %v2108, 2
      %v3214 = vsel %vm3134, %v3211, %v3213
      %v3247 = vpack.c.bf16 %v3137, %v3137
      %v3248 = vpack.c.bf16 %v3139, %v3139
      %v3249 = vpack.c.bf16 %v3142, %v3142
      %v3250 = vpack.c.bf16 %v3144, %v3144
      %v3251 = vpack.c.bf16 %v3147, %v3147
      %v3252 = vpack.c.bf16 %v3149, %v3149
      %v3253 = vpack.c.bf16 %v3152, %v3152
      %v3254 = vpack.c.bf16 %v3154, %v3154
      %v3255 = vpack.c.bf16 %v3157, %v3157
      %v3256 = vpack.c.bf16 %v3159, %v3159
      %v3257 = vpack.c.bf16 %v3162, %v3162
      %v3258 = vpack.c.bf16 %v3164, %v3164
      %v3259 = vpack.c.bf16 %v3167, %v3167
      %v3260 = vpack.c.bf16 %v3169, %v3169
      %v3261 = vpack.c.bf16 %v3172, %v3172
      %v3262 = vpack.c.bf16 %v3174, %v3174
      %v3263 = vpack.c.bf16 %v3177, %v3177
      %v3264 = vpack.c.bf16 %v3179, %v3179
      %v3265 = vpack.c.bf16 %v3182, %v3182
      %v3266 = vpack.c.bf16 %v3184, %v3184
      %v3267 = vpack.c.bf16 %v3187, %v3187
      %v3268 = vpack.c.bf16 %v3189, %v3189
      %v3269 = vpack.c.bf16 %v3192, %v3192
      %v3270 = vpack.c.bf16 %v3194, %v3194
      %v3271 = vpack.c.bf16 %v3197, %v3197
      %v3272 = vpack.c.bf16 %v3199, %v3199
      %v3273 = vpack.c.bf16 %v3202, %v3202
      %v3274 = vpack.c.bf16 %v3204, %v3204
      %v3275 = vpack.c.bf16 %v3207, %v3207
      %v3276 = vpack.c.bf16 %v3209, %v3209
      %v3277 = vpack.c.bf16 %v3212, %v3212
      %v3278 = vpack.c.bf16 %v3214, %v3214
      %3311 = vrot.lane.b32.xlu0 %v3247, 32
      %v3312 = vpop.permute.xlu0 %3311
      %3313 = vrot.lane.b32.xlu0 %v3248, 32
      %v3314 = vpop.permute.xlu0 %3313
      %3315 = vrot.lane.b32.xlu0 %v3249, 32
      %v3316 = vpop.permute.xlu0 %3315
      %3317 = vrot.lane.b32.xlu0 %v3250, 32
      %v3318 = vpop.permute.xlu0 %3317
      %3319 = vrot.lane.b32.xlu0 %v3251, 32
      %v3320 = vpop.permute.xlu0 %3319
      %3321 = vrot.lane.b32.xlu0 %v3252, 32
      %v3322 = vpop.permute.xlu0 %3321
      %3323 = vrot.lane.b32.xlu0 %v3253, 32
      %v3324 = vpop.permute.xlu0 %3323
      %3325 = vrot.lane.b32.xlu0 %v3254, 32
      %v3326 = vpop.permute.xlu0 %3325
      %3327 = vrot.lane.b32.xlu0 %v3255, 32
      %v3328 = vpop.permute.xlu0 %3327
      %3329 = vrot.lane.b32.xlu0 %v3256, 32
      %v3330 = vpop.permute.xlu0 %3329
      %3331 = vrot.lane.b32.xlu0 %v3257, 32
      %v3332 = vpop.permute.xlu0 %3331
      %3333 = vrot.lane.b32.xlu0 %v3258, 32
      %v3334 = vpop.permute.xlu0 %3333
      %3335 = vrot.lane.b32.xlu0 %v3259, 32
      %v3336 = vpop.permute.xlu0 %3335
      %3337 = vrot.lane.b32.xlu0 %v3260, 32
      %v3338 = vpop.permute.xlu0 %3337
      %3339 = vrot.lane.b32.xlu0 %v3261, 32
      %v3340 = vpop.permute.xlu0 %3339
      %3341 = vrot.lane.b32.xlu0 %v3262, 32
      %v3342 = vpop.permute.xlu0 %3341
      %3343 = vrot.lane.b32.xlu0 %v3263, 32
      %v3344 = vpop.permute.xlu0 %3343
      %3345 = vrot.lane.b32.xlu0 %v3264, 32
      %v3346 = vpop.permute.xlu0 %3345
      %3347 = vrot.lane.b32.xlu0 %v3265, 32
      %v3348 = vpop.permute.xlu0 %3347
      %3349 = vrot.lane.b32.xlu0 %v3266, 32
      %v3350 = vpop.permute.xlu0 %3349
      %3351 = vrot.lane.b32.xlu0 %v3267, 32
      %v3352 = vpop.permute.xlu0 %3351
      %3353 = vrot.lane.b32.xlu0 %v3268, 32
      %v3354 = vpop.permute.xlu0 %3353
      %3355 = vrot.lane.b32.xlu0 %v3269, 32
      %v3356 = vpop.permute.xlu0 %3355
      %3357 = vrot.lane.b32.xlu0 %v3270, 32
      %v3358 = vpop.permute.xlu0 %3357
      %3359 = vrot.lane.b32.xlu0 %v3271, 32
      %v3360 = vpop.permute.xlu0 %3359
      %3361 = vrot.lane.b32.xlu0 %v3272, 32
      %v3362 = vpop.permute.xlu0 %3361
      %3363 = vrot.lane.b32.xlu0 %v3273, 32
      %v3364 = vpop.permute.xlu0 %3363
      %3365 = vrot.lane.b32.xlu0 %v3274, 32
      %v3366 = vpop.permute.xlu0 %3365
      %3367 = vrot.lane.b32.xlu0 %v3275, 32
      %v3368 = vpop.permute.xlu0 %3367
      %3369 = vrot.lane.b32.xlu0 %v3276, 32
      %v3370 = vpop.permute.xlu0 %3369
      %3371 = vrot.lane.b32.xlu0 %v3277, 32
      %v3372 = vpop.permute.xlu0 %3371
      %3373 = vrot.lane.b32.xlu0 %v3278, 32
      %v3374 = vpop.permute.xlu0 %3373
      %vm3407 = vcmask 322816
      %3408 = vst.msk [vmem:[#allocation5] sm:$0xf] %vm3407, %v3312
      %3409 = vst.msk [vmem:[#allocation5 + $0x8] sm:$0xf] %vm3407, %v3314
      %3410 = vst.msk [vmem:[#allocation5 + $0x10] sm:$0xf] %vm3407, %v3316
      %3411 = vst.msk [vmem:[#allocation5 + $0x18] sm:$0xf] %vm3407, %v3318
      %3412 = vst.msk [vmem:[#allocation5 + $0x20] sm:$0xf] %vm3407, %v3320
      %3413 = vst.msk [vmem:[#allocation5 + $0x28] sm:$0xf] %vm3407, %v3322
      %3414 = vst.msk [vmem:[#allocation5 + $0x30] sm:$0xf] %vm3407, %v3324
      %3415 = vst.msk [vmem:[#allocation5 + $0x38] sm:$0xf] %vm3407, %v3326
      %3416 = vst.msk [vmem:[#allocation5 + $0x40] sm:$0xf] %vm3407, %v3328
      %3417 = vst.msk [vmem:[#allocation5 + $0x48] sm:$0xf] %vm3407, %v3330
      %3418 = vst.msk [vmem:[#allocation5 + $0x50] sm:$0xf] %vm3407, %v3332
      %3419 = vst.msk [vmem:[#allocation5 + $0x58] sm:$0xf] %vm3407, %v3334
      %3420 = vst.msk [vmem:[#allocation5 + $0x60] sm:$0xf] %vm3407, %v3336
      %3421 = vst.msk [vmem:[#allocation5 + $0x68] sm:$0xf] %vm3407, %v3338
      %3422 = vst.msk [vmem:[#allocation5 + $0x70] sm:$0xf] %vm3407, %v3340
      %3423 = vst.msk [vmem:[#allocation5 + $0x78] sm:$0xf] %vm3407, %v3342
      %3424 = vst.msk [vmem:[#allocation5 + $0x80] sm:$0xf] %vm3407, %v3344
      %3425 = vst.msk [vmem:[#allocation5 + $0x88] sm:$0xf] %vm3407, %v3346
      %3426 = vst.msk [vmem:[#allocation5 + $0x90] sm:$0xf] %vm3407, %v3348
      %3427 = vst.msk [vmem:[#allocation5 + $0x98] sm:$0xf] %vm3407, %v3350
      %3428 = vst.msk [vmem:[#allocation5 + $0xa0] sm:$0xf] %vm3407, %v3352
      %3429 = vst.msk [vmem:[#allocation5 + $0xa8] sm:$0xf] %vm3407, %v3354
      %3430 = vst.msk [vmem:[#allocation5 + $0xb0] sm:$0xf] %vm3407, %v3356
      %3431 = vst.msk [vmem:[#allocation5 + $0xb8] sm:$0xf] %vm3407, %v3358
      %3432 = vst.msk [vmem:[#allocation5 + $0xc0] sm:$0xf] %vm3407, %v3360
      %3433 = vst.msk [vmem:[#allocation5 + $0xc8] sm:$0xf] %vm3407, %v3362
      %3434 = vst.msk [vmem:[#allocation5 + $0xd0] sm:$0xf] %vm3407, %v3364
      %3435 = vst.msk [vmem:[#allocation5 + $0xd8] sm:$0xf] %vm3407, %v3366
      %3436 = vst.msk [vmem:[#allocation5 + $0xe0] sm:$0xf] %vm3407, %v3368
      %3437 = vst.msk [vmem:[#allocation5 + $0xe8] sm:$0xf] %vm3407, %v3370
      %3438 = vst.msk [vmem:[#allocation5 + $0xf0] sm:$0xf] %vm3407, %v3372
      %3439 = vst.msk [vmem:[#allocation5 + $0xf8] sm:$0xf] %vm3407, %v3374
      %v3440 = vrot.slane %v2115, 2
      %v3441 = vrot.slane %v2116, 2
      %v3442 = vsel %vm3134, %v3440, %v3441
      %v3443 = vrot.slane %v2117, 2
      %v3444 = vsel %vm3134, %v3441, %v3443
      %v3445 = vrot.slane %v2118, 2
      %v3446 = vrot.slane %v2119, 2
      %v3447 = vsel %vm3134, %v3445, %v3446
      %v3448 = vrot.slane %v2120, 2
      %v3449 = vsel %vm3134, %v3446, %v3448
      %v3450 = vrot.slane %v2121, 2
      %v3451 = vrot.slane %v2122, 2
      %v3452 = vsel %vm3134, %v3450, %v3451
      %v3453 = vrot.slane %v2123, 2
      %v3454 = vsel %vm3134, %v3451, %v3453
      %v3455 = vrot.slane %v2124, 2
      %v3456 = vrot.slane %v2125, 2
      %v3457 = vsel %vm3134, %v3455, %v3456
      %v3458 = vrot.slane %v2126, 2
      %v3459 = vsel %vm3134, %v3456, %v3458
      %v3460 = vrot.slane %v2127, 2
      %v3461 = vrot.slane %v2128, 2
      %v3462 = vsel %vm3134, %v3460, %v3461
      %v3463 = vrot.slane %v2129, 2
      %v3464 = vsel %vm3134, %v3461, %v3463
      %v3465 = vrot.slane %v2130, 2
      %v3466 = vrot.slane %v2131, 2
      %v3467 = vsel %vm3134, %v3465, %v3466
      %v3468 = vrot.slane %v2132, 2
      %v3469 = vsel %vm3134, %v3466, %v3468
      %v3470 = vrot.slane %v2133, 2
      %v3471 = vrot.slane %v2134, 2
      %v3472 = vsel %vm3134, %v3470, %v3471
      %v3473 = vrot.slane %v2135, 2
      %v3474 = vsel %vm3134, %v3471, %v3473
      %v3475 = vrot.slane %v2136, 2
      %v3476 = vrot.slane %v2137, 2
      %v3477 = vsel %vm3134, %v3475, %v3476
      %v3478 = vrot.slane %v2138, 2
      %v3479 = vsel %vm3134, %v3476, %v3478
      %v3480 = vrot.slane %v2139, 2
      %v3481 = vrot.slane %v2140, 2
      %v3482 = vsel %vm3134, %v3480, %v3481
      %v3483 = vrot.slane %v2141, 2
      %v3484 = vsel %vm3134, %v3481, %v3483
      %v3485 = vrot.slane %v2142, 2
      %v3486 = vrot.slane %v2143, 2
      %v3487 = vsel %vm3134, %v3485, %v3486
      %v3488 = vrot.slane %v2144, 2
      %v3489 = vsel %vm3134, %v3486, %v3488
      %v3490 = vrot.slane %v2145, 2
      %v3491 = vrot.slane %v2146, 2
      %v3492 = vsel %vm3134, %v3490, %v3491
      %v3493 = vrot.slane %v2147, 2
      %v3494 = vsel %vm3134, %v3491, %v3493
      %v3495 = vrot.slane %v2148, 2
      %v3496 = vrot.slane %v2149, 2
      %v3497 = vsel %vm3134, %v3495, %v3496
      %v3498 = vrot.slane %v2150, 2
      %v3499 = vsel %vm3134, %v3496, %v3498
      %v3500 = vrot.slane %v2151, 2
      %v3501 = vrot.slane %v2152, 2
      %v3502 = vsel %vm3134, %v3500, %v3501
      %v3503 = vrot.slane %v2153, 2
      %v3504 = vsel %vm3134, %v3501, %v3503
      %v3505 = vrot.slane %v2154, 2
      %v3506 = vrot.slane %v2155, 2
      %v3507 = vsel %vm3134, %v3505, %v3506
      %v3508 = vrot.slane %v2156, 2
      %v3509 = vsel %vm3134, %v3506, %v3508
      %v3510 = vrot.slane %v2157, 2
      %v3511 = vrot.slane %v2158, 2
      %v3512 = vsel %vm3134, %v3510, %v3511
      %v3513 = vrot.slane %v2159, 2
      %v3514 = vsel %vm3134, %v3511, %v3513
      %v3515 = vrot.slane %v2160, 2
      %v3516 = vrot.slane %v2161, 2
      %v3517 = vsel %vm3134, %v3515, %v3516
      %v3518 = vrot.slane %v2162, 2
      %v3519 = vsel %vm3134, %v3516, %v3518
      %v3552 = vpack.c.bf16 %v3442, %v3442
      %v3553 = vpack.c.bf16 %v3444, %v3444
      %v3554 = vpack.c.bf16 %v3447, %v3447
      %v3555 = vpack.c.bf16 %v3449, %v3449
      %v3556 = vpack.c.bf16 %v3452, %v3452
      %v3557 = vpack.c.bf16 %v3454, %v3454
      %v3558 = vpack.c.bf16 %v3457, %v3457
      %v3559 = vpack.c.bf16 %v3459, %v3459
      %v3560 = vpack.c.bf16 %v3462, %v3462
      %v3561 = vpack.c.bf16 %v3464, %v3464
      %v3562 = vpack.c.bf16 %v3467, %v3467
      %v3563 = vpack.c.bf16 %v3469, %v3469
      %v3564 = vpack.c.bf16 %v3472, %v3472
      %v3565 = vpack.c.bf16 %v3474, %v3474
      %v3566 = vpack.c.bf16 %v3477, %v3477
      %v3567 = vpack.c.bf16 %v3479, %v3479
      %v3568 = vpack.c.bf16 %v3482, %v3482
      %v3569 = vpack.c.bf16 %v3484, %v3484
      %v3570 = vpack.c.bf16 %v3487, %v3487
      %v3571 = vpack.c.bf16 %v3489, %v3489
      %v3572 = vpack.c.bf16 %v3492, %v3492
      %v3573 = vpack.c.bf16 %v3494, %v3494
      %v3574 = vpack.c.bf16 %v3497, %v3497
      %v3575 = vpack.c.bf16 %v3499, %v3499
      %v3576 = vpack.c.bf16 %v3502, %v3502
      %v3577 = vpack.c.bf16 %v3504, %v3504
      %v3578 = vpack.c.bf16 %v3507, %v3507
      %v3579 = vpack.c.bf16 %v3509, %v3509
      %v3580 = vpack.c.bf16 %v3512, %v3512
      %v3581 = vpack.c.bf16 %v3514, %v3514
      %v3582 = vpack.c.bf16 %v3517, %v3517
      %v3583 = vpack.c.bf16 %v3519, %v3519
      %3616 = vrot.lane.b32.xlu0 %v3552, 40
      %v3617 = vpop.permute.xlu0 %3616
      %3618 = vrot.lane.b32.xlu0 %v3553, 40
      %v3619 = vpop.permute.xlu0 %3618
      %3620 = vrot.lane.b32.xlu0 %v3554, 40
      %v3621 = vpop.permute.xlu0 %3620
      %3622 = vrot.lane.b32.xlu0 %v3555, 40
      %v3623 = vpop.permute.xlu0 %3622
      %3624 = vrot.lane.b32.xlu0 %v3556, 40
      %v3625 = vpop.permute.xlu0 %3624
      %3626 = vrot.lane.b32.xlu0 %v3557, 40
      %v3627 = vpop.permute.xlu0 %3626
      %3628 = vrot.lane.b32.xlu0 %v3558, 40
      %v3629 = vpop.permute.xlu0 %3628
      %3630 = vrot.lane.b32.xlu0 %v3559, 40
      %v3631 = vpop.permute.xlu0 %3630
      %3632 = vrot.lane.b32.xlu0 %v3560, 40
      %v3633 = vpop.permute.xlu0 %3632
      %3634 = vrot.lane.b32.xlu0 %v3561, 40
      %v3635 = vpop.permute.xlu0 %3634
      %3636 = vrot.lane.b32.xlu0 %v3562, 40
      %v3637 = vpop.permute.xlu0 %3636
      %3638 = vrot.lane.b32.xlu0 %v3563, 40
      %v3639 = vpop.permute.xlu0 %3638
      %3640 = vrot.lane.b32.xlu0 %v3564, 40
      %v3641 = vpop.permute.xlu0 %3640
      %3642 = vrot.lane.b32.xlu0 %v3565, 40
      %v3643 = vpop.permute.xlu0 %3642
      %3644 = vrot.lane.b32.xlu0 %v3566, 40
      %v3645 = vpop.permute.xlu0 %3644
      %3646 = vrot.lane.b32.xlu0 %v3567, 40
      %v3647 = vpop.permute.xlu0 %3646
      %3648 = vrot.lane.b32.xlu0 %v3568, 40
      %v3649 = vpop.permute.xlu0 %3648
      %3650 = vrot.lane.b32.xlu0 %v3569, 40
      %v3651 = vpop.permute.xlu0 %3650
      %3652 = vrot.lane.b32.xlu0 %v3570, 40
      %v3653 = vpop.permute.xlu0 %3652
      %3654 = vrot.lane.b32.xlu0 %v3571, 40
      %v3655 = vpop.permute.xlu0 %3654
      %3656 = vrot.lane.b32.xlu0 %v3572, 40
      %v3657 = vpop.permute.xlu0 %3656
      %3658 = vrot.lane.b32.xlu0 %v3573, 40
      %v3659 = vpop.permute.xlu0 %3658
      %3660 = vrot.lane.b32.xlu0 %v3574, 40
      %v3661 = vpop.permute.xlu0 %3660
      %3662 = vrot.lane.b32.xlu0 %v3575, 40
      %v3663 = vpop.permute.xlu0 %3662
      %3664 = vrot.lane.b32.xlu0 %v3576, 40
      %v3665 = vpop.permute.xlu0 %3664
      %3666 = vrot.lane.b32.xlu0 %v3577, 40
      %v3667 = vpop.permute.xlu0 %3666
      %3668 = vrot.lane.b32.xlu0 %v3578, 40
      %v3669 = vpop.permute.xlu0 %3668
      %3670 = vrot.lane.b32.xlu0 %v3579, 40
      %v3671 = vpop.permute.xlu0 %3670
      %3672 = vrot.lane.b32.xlu0 %v3580, 40
      %v3673 = vpop.permute.xlu0 %3672
      %3674 = vrot.lane.b32.xlu0 %v3581, 40
      %v3675 = vpop.permute.xlu0 %3674
      %3676 = vrot.lane.b32.xlu0 %v3582, 40
      %v3677 = vpop.permute.xlu0 %3676
      %3678 = vrot.lane.b32.xlu0 %v3583, 40
      %v3679 = vpop.permute.xlu0 %3678
      %vm3712 = vcmask 388416
      %3713 = vst.msk [vmem:[#allocation5] sm:$0xf] %vm3712, %v3617
      %3714 = vst.msk [vmem:[#allocation5 + $0x8] sm:$0xf] %vm3712, %v3619
      %3715 = vst.msk [vmem:[#allocation5 + $0x10] sm:$0xf] %vm3712, %v3621
      %3716 = vst.msk [vmem:[#allocation5 + $0x18] sm:$0xf] %vm3712, %v3623
      %3717 = vst.msk [vmem:[#allocation5 + $0x20] sm:$0xf] %vm3712, %v3625
      %3718 = vst.msk [vmem:[#allocation5 + $0x28] sm:$0xf] %vm3712, %v3627
      %3719 = vst.msk [vmem:[#allocation5 + $0x30] sm:$0xf] %vm3712, %v3629
      %3720 = vst.msk [vmem:[#allocation5 + $0x38] sm:$0xf] %vm3712, %v3631
      %3721 = vst.msk [vmem:[#allocation5 + $0x40] sm:$0xf] %vm3712, %v3633
      %3722 = vst.msk [vmem:[#allocation5 + $0x48] sm:$0xf] %vm3712, %v3635
      %3723 = vst.msk [vmem:[#allocation5 + $0x50] sm:$0xf] %vm3712, %v3637
      %3724 = vst.msk [vmem:[#allocation5 + $0x58] sm:$0xf] %vm3712, %v3639
      %3725 = vst.msk [vmem:[#allocation5 + $0x60] sm:$0xf] %vm3712, %v3641
      %3726 = vst.msk [vmem:[#allocation5 + $0x68] sm:$0xf] %vm3712, %v3643
      %3727 = vst.msk [vmem:[#allocation5 + $0x70] sm:$0xf] %vm3712, %v3645
      %3728 = vst.msk [vmem:[#allocation5 + $0x78] sm:$0xf] %vm3712, %v3647
      %3729 = vst.msk [vmem:[#allocation5 + $0x80] sm:$0xf] %vm3712, %v3649
      %3730 = vst.msk [vmem:[#allocation5 + $0x88] sm:$0xf] %vm3712, %v3651
      %3731 = vst.msk [vmem:[#allocation5 + $0x90] sm:$0xf] %vm3712, %v3653
      %3732 = vst.msk [vmem:[#allocation5 + $0x98] sm:$0xf] %vm3712, %v3655
      %3733 = vst.msk [vmem:[#allocation5 + $0xa0] sm:$0xf] %vm3712, %v3657
      %3734 = vst.msk [vmem:[#allocation5 + $0xa8] sm:$0xf] %vm3712, %v3659
      %3735 = vst.msk [vmem:[#allocation5 + $0xb0] sm:$0xf] %vm3712, %v3661
      %3736 = vst.msk [vmem:[#allocation5 + $0xb8] sm:$0xf] %vm3712, %v3663
      %3737 = vst.msk [vmem:[#allocation5 + $0xc0] sm:$0xf] %vm3712, %v3665
      %3738 = vst.msk [vmem:[#allocation5 + $0xc8] sm:$0xf] %vm3712, %v3667
      %3739 = vst.msk [vmem:[#allocation5 + $0xd0] sm:$0xf] %vm3712, %v3669
      %3740 = vst.msk [vmem:[#allocation5 + $0xd8] sm:$0xf] %vm3712, %v3671
      %3741 = vst.msk [vmem:[#allocation5 + $0xe0] sm:$0xf] %vm3712, %v3673
      %3742 = vst.msk [vmem:[#allocation5 + $0xe8] sm:$0xf] %vm3712, %v3675
      %3743 = vst.msk [vmem:[#allocation5 + $0xf0] sm:$0xf] %vm3712, %v3677
      %3744 = vst.msk [vmem:[#allocation5 + $0xf8] sm:$0xf] %vm3712, %v3679
      %v3745 = vpack.c.bf16 %v2109, %v2109
      %v3746 = vpack.c.bf16 %v2110, %v2110
      %3779 = vrot.lane.b32.xlu0 %v2171, 48
      %v3780 = vpop.permute.xlu0 %3779
      %3781 = vrot.lane.b32.xlu0 %v2172, 48
      %v3782 = vpop.permute.xlu0 %3781
      %3783 = vrot.lane.b32.xlu0 %v2173, 48
      %v3784 = vpop.permute.xlu0 %3783
      %3785 = vrot.lane.b32.xlu0 %v2174, 48
      %v3786 = vpop.permute.xlu0 %3785
      %3787 = vrot.lane.b32.xlu0 %v2175, 48
      %v3788 = vpop.permute.xlu0 %3787
      %3789 = vrot.lane.b32.xlu0 %v2176, 48
      %v3790 = vpop.permute.xlu0 %3789
      %3791 = vrot.lane.b32.xlu0 %v2177, 48
      %v3792 = vpop.permute.xlu0 %3791
      %3793 = vrot.lane.b32.xlu0 %v2178, 48
      %v3794 = vpop.permute.xlu0 %3793
      %3795 = vrot.lane.b32.xlu0 %v2179, 48
      %v3796 = vpop.permute.xlu0 %3795
      %3797 = vrot.lane.b32.xlu0 %v2180, 48
      %v3798 = vpop.permute.xlu0 %3797
      %3799 = vrot.lane.b32.xlu0 %v2181, 48
      %v3800 = vpop.permute.xlu0 %3799
      %3801 = vrot.lane.b32.xlu0 %v2182, 48
      %v3802 = vpop.permute.xlu0 %3801
      %3803 = vrot.lane.b32.xlu0 %v2183, 48
      %v3804 = vpop.permute.xlu0 %3803
      %3805 = vrot.lane.b32.xlu0 %v2184, 48
      %v3806 = vpop.permute.xlu0 %3805
      %3807 = vrot.lane.b32.xlu0 %v2185, 48
      %v3808 = vpop.permute.xlu0 %3807
      %3809 = vrot.lane.b32.xlu0 %v2186, 48
      %v3810 = vpop.permute.xlu0 %3809
      %3811 = vrot.lane.b32.xlu0 %v2187, 48
      %v3812 = vpop.permute.xlu0 %3811
      %3813 = vrot.lane.b32.xlu0 %v2188, 48
      %v3814 = vpop.permute.xlu0 %3813
      %3815 = vrot.lane.b32.xlu0 %v2189, 48
      %v3816 = vpop.permute.xlu0 %3815
      %3817 = vrot.lane.b32.xlu0 %v2190, 48
      %v3818 = vpop.permute.xlu0 %3817
      %3819 = vrot.lane.b32.xlu0 %v2191, 48
      %v3820 = vpop.permute.xlu0 %3819
      %3821 = vrot.lane.b32.xlu0 %v2192, 48
      %v3822 = vpop.permute.xlu0 %3821
      %3823 = vrot.lane.b32.xlu0 %v2193, 48
      %v3824 = vpop.permute.xlu0 %3823
      %3825 = vrot.lane.b32.xlu0 %v2194, 48
      %v3826 = vpop.permute.xlu0 %3825
      %3827 = vrot.lane.b32.xlu0 %v2195, 48
      %v3828 = vpop.permute.xlu0 %3827
      %3829 = vrot.lane.b32.xlu0 %v2196, 48
      %v3830 = vpop.permute.xlu0 %3829
      %3831 = vrot.lane.b32.xlu0 %v2197, 48
      %v3832 = vpop.permute.xlu0 %3831
      %3833 = vrot.lane.b32.xlu0 %v2198, 48
      %v3834 = vpop.permute.xlu0 %3833
      %3835 = vrot.lane.b32.xlu0 %v2199, 48
      %v3836 = vpop.permute.xlu0 %3835
      %3837 = vrot.lane.b32.xlu0 %v2200, 48
      %v3838 = vpop.permute.xlu0 %3837
      %3839 = vrot.lane.b32.xlu0 %v3745, 48
      %v3840 = vpop.permute.xlu0 %3839
      %3841 = vrot.lane.b32.xlu0 %v3746, 48
      %v3842 = vpop.permute.xlu0 %3841
      %vm3875 = vcmask 454016
      %3876 = vst.msk [vmem:[#allocation5] sm:$0xf] %vm3875, %v3780
      %3877 = vst.msk [vmem:[#allocation5 + $0x8] sm:$0xf] %vm3875, %v3782
      %3878 = vst.msk [vmem:[#allocation5 + $0x10] sm:$0xf] %vm3875, %v3784
      %3879 = vst.msk [vmem:[#allocation5 + $0x18] sm:$0xf] %vm3875, %v3786
      %3880 = vst.msk [vmem:[#allocation5 + $0x20] sm:$0xf] %vm3875, %v3788
      %3881 = vst.msk [vmem:[#allocation5 + $0x28] sm:$0xf] %vm3875, %v3790
      %3882 = vst.msk [vmem:[#allocation5 + $0x30] sm:$0xf] %vm3875, %v3792
      %3883 = vst.msk [vmem:[#allocation5 + $0x38] sm:$0xf] %vm3875, %v3794
      %3884 = vst.msk [vmem:[#allocation5 + $0x40] sm:$0xf] %vm3875, %v3796
      %3885 = vst.msk [vmem:[#allocation5 + $0x48] sm:$0xf] %vm3875, %v3798
      %3886 = vst.msk [vmem:[#allocation5 + $0x50] sm:$0xf] %vm3875, %v3800
      %3887 = vst.msk [vmem:[#allocation5 + $0x58] sm:$0xf] %vm3875, %v3802
      %3888 = vst.msk [vmem:[#allocation5 + $0x60] sm:$0xf] %vm3875, %v3804
      %3889 = vst.msk [vmem:[#allocation5 + $0x68] sm:$0xf] %vm3875, %v3806
      %3890 = vst.msk [vmem:[#allocation5 + $0x70] sm:$0xf] %vm3875, %v3808
      %3891 = vst.msk [vmem:[#allocation5 + $0x78] sm:$0xf] %vm3875, %v3810
      %3892 = vst.msk [vmem:[#allocation5 + $0x80] sm:$0xf] %vm3875, %v3812
      %3893 = vst.msk [vmem:[#allocation5 + $0x88] sm:$0xf] %vm3875, %v3814
      %3894 = vst.msk [vmem:[#allocation5 + $0x90] sm:$0xf] %vm3875, %v3816
      %3895 = vst.msk [vmem:[#allocation5 + $0x98] sm:$0xf] %vm3875, %v3818
      %3896 = vst.msk [vmem:[#allocation5 + $0xa0] sm:$0xf] %vm3875, %v3820
      %3897 = vst.msk [vmem:[#allocation5 + $0xa8] sm:$0xf] %vm3875, %v3822
      %3898 = vst.msk [vmem:[#allocation5 + $0xb0] sm:$0xf] %vm3875, %v3824
      %3899 = vst.msk [vmem:[#allocation5 + $0xb8] sm:$0xf] %vm3875, %v3826
      %3900 = vst.msk [vmem:[#allocation5 + $0xc0] sm:$0xf] %vm3875, %v3828
      %3901 = vst.msk [vmem:[#allocation5 + $0xc8] sm:$0xf] %vm3875, %v3830
      %3902 = vst.msk [vmem:[#allocation5 + $0xd0] sm:$0xf] %vm3875, %v3832
      %3903 = vst.msk [vmem:[#allocation5 + $0xd8] sm:$0xf] %vm3875, %v3834
      %3904 = vst.msk [vmem:[#allocation5 + $0xe0] sm:$0xf] %vm3875, %v3836
      %3905 = vst.msk [vmem:[#allocation5 + $0xe8] sm:$0xf] %vm3875, %v3838
      %3906 = vst.msk [vmem:[#allocation5 + $0xf0] sm:$0xf] %vm3875, %v3840
      %3907 = vst.msk [vmem:[#allocation5 + $0xf8] sm:$0xf] %vm3875, %v3842
      %v3908 = vpack.c.bf16 %v2163, %v2163
      %v3909 = vpack.c.bf16 %v2164, %v2164
      %3912 = vrot.lane.b32.xlu0 %v2236, 56
      %v3913 = vpop.permute.xlu0 %3912
      %3914 = vrot.lane.b32.xlu0 %v2237, 56
      %v3915 = vpop.permute.xlu0 %3914
      %3916 = vrot.lane.b32.xlu0 %v2238, 56
      %v3917 = vpop.permute.xlu0 %3916
      %3918 = vrot.lane.b32.xlu0 %v2239, 56
      %v3919 = vpop.permute.xlu0 %3918
      %3920 = vrot.lane.b32.xlu0 %v2240, 56
      %v3921 = vpop.permute.xlu0 %3920
      %3922 = vrot.lane.b32.xlu0 %v2241, 56
      %v3923 = vpop.permute.xlu0 %3922
      %3924 = vrot.lane.b32.xlu0 %v2242, 56
      %v3925 = vpop.permute.xlu0 %3924
      %3926 = vrot.lane.b32.xlu0 %v2243, 56
      %v3927 = vpop.permute.xlu0 %3926
      %3928 = vrot.lane.b32.xlu0 %v2244, 56
      %v3929 = vpop.permute.xlu0 %3928
      %3930 = vrot.lane.b32.xlu0 %v2245, 56
      %v3931 = vpop.permute.xlu0 %3930
      %3932 = vrot.lane.b32.xlu0 %v2246, 56
      %v3933 = vpop.permute.xlu0 %3932
      %3934 = vrot.lane.b32.xlu0 %v2247, 56
      %v3935 = vpop.permute.xlu0 %3934
      %3936 = vrot.lane.b32.xlu0 %v2248, 56
      %v3937 = vpop.permute.xlu0 %3936
      %3938 = vrot.lane.b32.xlu0 %v2249, 56
      %v3939 = vpop.permute.xlu0 %3938
      %3940 = vrot.lane.b32.xlu0 %v2250, 56
      %v3941 = vpop.permute.xlu0 %3940
      %3942 = vrot.lane.b32.xlu0 %v2251, 56
      %v3943 = vpop.permute.xlu0 %3942
      %3944 = vrot.lane.b32.xlu0 %v2252, 56
      %v3945 = vpop.permute.xlu0 %3944
      %3946 = vrot.lane.b32.xlu0 %v2253, 56
      %v3947 = vpop.permute.xlu0 %3946
      %3948 = vrot.lane.b32.xlu0 %v2254, 56
      %v3949 = vpop.permute.xlu0 %3948
      %3950 = vrot.lane.b32.xlu0 %v2255, 56
      %v3951 = vpop.permute.xlu0 %3950
      %3952 = vrot.lane.b32.xlu0 %v2256, 56
      %v3953 = vpop.permute.xlu0 %3952
      %3954 = vrot.lane.b32.xlu0 %v2257, 56
      %v3955 = vpop.permute.xlu0 %3954
      %3956 = vrot.lane.b32.xlu0 %v2258, 56
      %v3957 = vpop.permute.xlu0 %3956
      %3958 = vrot.lane.b32.xlu0 %v2259, 56
      %v3959 = vpop.permute.xlu0 %3958
      %3960 = vrot.lane.b32.xlu0 %v2260, 56
      %v3961 = vpop.permute.xlu0 %3960
      %3962 = vrot.lane.b32.xlu0 %v2261, 56
      %v3963 = vpop.permute.xlu0 %3962
      %3964 = vrot.lane.b32.xlu0 %v2262, 56
      %v3965 = vpop.permute.xlu0 %3964
      %3966 = vrot.lane.b32.xlu0 %v2263, 56
      %v3967 = vpop.permute.xlu0 %3966
      %3968 = vrot.lane.b32.xlu0 %v2264, 56
      %v3969 = vpop.permute.xlu0 %3968
      %3970 = vrot.lane.b32.xlu0 %v2265, 56
      %v3971 = vpop.permute.xlu0 %3970
      %3972 = vrot.lane.b32.xlu0 %v3908, 56
      %v3973 = vpop.permute.xlu0 %3972
      %3974 = vrot.lane.b32.xlu0 %v3909, 56
      %v3975 = vpop.permute.xlu0 %3974
      %vm4008 = vcmask 519616
      %4009 = vst.msk [vmem:[#allocation5] sm:$0xf] %vm4008, %v3913
      %4010 = vst.msk [vmem:[#allocation5 + $0x8] sm:$0xf] %vm4008, %v3915
      %4011 = vst.msk [vmem:[#allocation5 + $0x10] sm:$0xf] %vm4008, %v3917
      %4012 = vst.msk [vmem:[#allocation5 + $0x18] sm:$0xf] %vm4008, %v3919
      %4013 = vst.msk [vmem:[#allocation5 + $0x20] sm:$0xf] %vm4008, %v3921
      %4014 = vst.msk [vmem:[#allocation5 + $0x28] sm:$0xf] %vm4008, %v3923
      %4015 = vst.msk [vmem:[#allocation5 + $0x30] sm:$0xf] %vm4008, %v3925
      %4016 = vst.msk [vmem:[#allocation5 + $0x38] sm:$0xf] %vm4008, %v3927
      %4017 = vst.msk [vmem:[#allocation5 + $0x40] sm:$0xf] %vm4008, %v3929
      %4018 = vst.msk [vmem:[#allocation5 + $0x48] sm:$0xf] %vm4008, %v3931
      %4019 = vst.msk [vmem:[#allocation5 + $0x50] sm:$0xf] %vm4008, %v3933
      %4020 = vst.msk [vmem:[#allocation5 + $0x58] sm:$0xf] %vm4008, %v3935
      %4021 = vst.msk [vmem:[#allocation5 + $0x60] sm:$0xf] %vm4008, %v3937
      %4022 = vst.msk [vmem:[#allocation5 + $0x68] sm:$0xf] %vm4008, %v3939
      %4023 = vst.msk [vmem:[#allocation5 + $0x70] sm:$0xf] %vm4008, %v3941
      %4024 = vst.msk [vmem:[#allocation5 + $0x78] sm:$0xf] %vm4008, %v3943
      %4025 = vst.msk [vmem:[#allocation5 + $0x80] sm:$0xf] %vm4008, %v3945
      %4026 = vst.msk [vmem:[#allocation5 + $0x88] sm:$0xf] %vm4008, %v3947
      %4027 = vst.msk [vmem:[#allocation5 + $0x90] sm:$0xf] %vm4008, %v3949
      %4028 = vst.msk [vmem:[#allocation5 + $0x98] sm:$0xf] %vm4008, %v3951
      %4029 = vst.msk [vmem:[#allocation5 + $0xa0] sm:$0xf] %vm4008, %v3953
      %4030 = vst.msk [vmem:[#allocation5 + $0xa8] sm:$0xf] %vm4008, %v3955
      %4031 = vst.msk [vmem:[#allocation5 + $0xb0] sm:$0xf] %vm4008, %v3957
      %4032 = vst.msk [vmem:[#allocation5 + $0xb8] sm:$0xf] %vm4008, %v3959
      %4033 = vst.msk [vmem:[#allocation5 + $0xc0] sm:$0xf] %vm4008, %v3961
      %4034 = vst.msk [vmem:[#allocation5 + $0xc8] sm:$0xf] %vm4008, %v3963
      %4035 = vst.msk [vmem:[#allocation5 + $0xd0] sm:$0xf] %vm4008, %v3965
      %4036 = vst.msk [vmem:[#allocation5 + $0xd8] sm:$0xf] %vm4008, %v3967
      %4037 = vst.msk [vmem:[#allocation5 + $0xe0] sm:$0xf] %vm4008, %v3969
      %4038 = vst.msk [vmem:[#allocation5 + $0xe8] sm:$0xf] %vm4008, %v3971
      %4039 = vst.msk [vmem:[#allocation5 + $0xf0] sm:$0xf] %vm4008, %v3973
      %4040 = vst.msk [vmem:[#allocation5 + $0xf8] sm:$0xf] %vm4008, %v3975
      %v4044 = vrot.slane %v2109, 1
      %v4045 = vrot.slane %v2110, 1
      %v4046 = vsel %vm2475, %v4044, %v4045
      %v4047 = vrot.slane %v2111, 1
      %v4048 = vsel %vm2475, %v4045, %v4047
      %v4051 = vpack.c.bf16 %v4046, %v4046
      %v4052 = vpack.c.bf16 %v4048, %v4048
      %4055 = vrot.lane.b32.xlu0 %v2590, 64
      %v4056 = vpop.permute.xlu0 %4055
      %4057 = vrot.lane.b32.xlu0 %v2591, 64
      %v4058 = vpop.permute.xlu0 %4057
      %4059 = vrot.lane.b32.xlu0 %v2592, 64
      %v4060 = vpop.permute.xlu0 %4059
      %4061 = vrot.lane.b32.xlu0 %v2593, 64
      %v4062 = vpop.permute.xlu0 %4061
      %4063 = vrot.lane.b32.xlu0 %v2594, 64
      %v4064 = vpop.permute.xlu0 %4063
      %4065 = vrot.lane.b32.xlu0 %v2595, 64
      %v4066 = vpop.permute.xlu0 %4065
      %4067 = vrot.lane.b32.xlu0 %v2596, 64
      %v4068 = vpop.permute.xlu0 %4067
      %4069 = vrot.lane.b32.xlu0 %v2597, 64
      %v4070 = vpop.permute.xlu0 %4069
      %4071 = vrot.lane.b32.xlu0 %v2598, 64
      %v4072 = vpop.permute.xlu0 %4071
      %4073 = vrot.lane.b32.xlu0 %v2599, 64
      %v4074 = vpop.permute.xlu0 %4073
      %4075 = vrot.lane.b32.xlu0 %v2600, 64
      %v4076 = vpop.permute.xlu0 %4075
      %4077 = vrot.lane.b32.xlu0 %v2601, 64
      %v4078 = vpop.permute.xlu0 %4077
      %4079 = vrot.lane.b32.xlu0 %v2602, 64
      %v4080 = vpop.permute.xlu0 %4079
      %4081 = vrot.lane.b32.xlu0 %v2603, 64
      %v4082 = vpop.permute.xlu0 %4081
      %4083 = vrot.lane.b32.xlu0 %v2604, 64
      %v4084 = vpop.permute.xlu0 %4083
      %4085 = vrot.lane.b32.xlu0 %v2605, 64
      %v4086 = vpop.permute.xlu0 %4085
      %4087 = vrot.lane.b32.xlu0 %v2606, 64
      %v4088 = vpop.permute.xlu0 %4087
      %4089 = vrot.lane.b32.xlu0 %v2607, 64
      %v4090 = vpop.permute.xlu0 %4089
      %4091 = vrot.lane.b32.xlu0 %v2608, 64
      %v4092 = vpop.permute.xlu0 %4091
      %4093 = vrot.lane.b32.xlu0 %v2609, 64
      %v4094 = vpop.permute.xlu0 %4093
      %4095 = vrot.lane.b32.xlu0 %v2610, 64
      %v4096 = vpop.permute.xlu0 %4095
      %4097 = vrot.lane.b32.xlu0 %v2611, 64
      %v4098 = vpop.permute.xlu0 %4097
      %4099 = vrot.lane.b32.xlu0 %v2612, 64
      %v4100 = vpop.permute.xlu0 %4099
      %4101 = vrot.lane.b32.xlu0 %v2613, 64
      %v4102 = vpop.permute.xlu0 %4101
      %4103 = vrot.lane.b32.xlu0 %v2614, 64
      %v4104 = vpop.permute.xlu0 %4103
      %4105 = vrot.lane.b32.xlu0 %v2615, 64
      %v4106 = vpop.permute.xlu0 %4105
      %4107 = vrot.lane.b32.xlu0 %v2616, 64
      %v4108 = vpop.permute.xlu0 %4107
      %4109 = vrot.lane.b32.xlu0 %v2617, 64
      %v4110 = vpop.permute.xlu0 %4109
      %4111 = vrot.lane.b32.xlu0 %v2618, 64
      %v4112 = vpop.permute.xlu0 %4111
      %4113 = vrot.lane.b32.xlu0 %v2619, 64
      %v4114 = vpop.permute.xlu0 %4113
      %4115 = vrot.lane.b32.xlu0 %v4051, 64
      %v4116 = vpop.permute.xlu0 %4115
      %4117 = vrot.lane.b32.xlu0 %v4052, 64
      %v4118 = vpop.permute.xlu0 %4117
      %vm4151 = vcmask 585216
      %4152 = vst.msk [vmem:[#allocation5] sm:$0xf] %vm4151, %v4056
      %4153 = vst.msk [vmem:[#allocation5 + $0x8] sm:$0xf] %vm4151, %v4058
      %4154 = vst.msk [vmem:[#allocation5 + $0x10] sm:$0xf] %vm4151, %v4060
      %4155 = vst.msk [vmem:[#allocation5 + $0x18] sm:$0xf] %vm4151, %v4062
      %4156 = vst.msk [vmem:[#allocation5 + $0x20] sm:$0xf] %vm4151, %v4064
      %4157 = vst.msk [vmem:[#allocation5 + $0x28] sm:$0xf] %vm4151, %v4066
      %4158 = vst.msk [vmem:[#allocation5 + $0x30] sm:$0xf] %vm4151, %v4068
      %4159 = vst.msk [vmem:[#allocation5 + $0x38] sm:$0xf] %vm4151, %v4070
      %4160 = vst.msk [vmem:[#allocation5 + $0x40] sm:$0xf] %vm4151, %v4072
      %4161 = vst.msk [vmem:[#allocation5 + $0x48] sm:$0xf] %vm4151, %v4074
      %4162 = vst.msk [vmem:[#allocation5 + $0x50] sm:$0xf] %vm4151, %v4076
      %4163 = vst.msk [vmem:[#allocation5 + $0x58] sm:$0xf] %vm4151, %v4078
      %4164 = vst.msk [vmem:[#allocation5 + $0x60] sm:$0xf] %vm4151, %v4080
      %4165 = vst.msk [vmem:[#allocation5 + $0x68] sm:$0xf] %vm4151, %v4082
      %4166 = vst.msk [vmem:[#allocation5 + $0x70] sm:$0xf] %vm4151, %v4084
      %4167 = vst.msk [vmem:[#allocation5 + $0x78] sm:$0xf] %vm4151, %v4086
      %4168 = vst.msk [vmem:[#allocation5 + $0x80] sm:$0xf] %vm4151, %v4088
      %4169 = vst.msk [vmem:[#allocation5 + $0x88] sm:$0xf] %vm4151, %v4090
      %4170 = vst.msk [vmem:[#allocation5 + $0x90] sm:$0xf] %vm4151, %v4092
      %4171 = vst.msk [vmem:[#allocation5 + $0x98] sm:$0xf] %vm4151, %v4094
      %4172 = vst.msk [vmem:[#allocation5 + $0xa0] sm:$0xf] %vm4151, %v4096
      %4173 = vst.msk [vmem:[#allocation5 + $0xa8] sm:$0xf] %vm4151, %v4098
      %4174 = vst.msk [vmem:[#allocation5 + $0xb0] sm:$0xf] %vm4151, %v4100
      %4175 = vst.msk [vmem:[#allocation5 + $0xb8] sm:$0xf] %vm4151, %v4102
      %4176 = vst.msk [vmem:[#allocation5 + $0xc0] sm:$0xf] %vm4151, %v4104
      %4177 = vst.msk [vmem:[#allocation5 + $0xc8] sm:$0xf] %vm4151, %v4106
      %4178 = vst.msk [vmem:[#allocation5 + $0xd0] sm:$0xf] %vm4151, %v4108
      %4179 = vst.msk [vmem:[#allocation5 + $0xd8] sm:$0xf] %vm4151, %v4110
      %4180 = vst.msk [vmem:[#allocation5 + $0xe0] sm:$0xf] %vm4151, %v4112
      %4181 = vst.msk [vmem:[#allocation5 + $0xe8] sm:$0xf] %vm4151, %v4114
      %4182 = vst.msk [vmem:[#allocation5 + $0xf0] sm:$0xf] %vm4151, %v4116
      %4183 = vst.msk [vmem:[#allocation5 + $0xf8] sm:$0xf] %vm4151, %v4118
      %v4187 = vrot.slane %v2163, 1
      %v4188 = vrot.slane %v2164, 1
      %v4189 = vsel %vm2475, %v4187, %v4188
      %v4190 = vrot.slane %v2165, 1
      %v4191 = vsel %vm2475, %v4188, %v4190
      %v4194 = vpack.c.bf16 %v4189, %v4189
      %v4195 = vpack.c.bf16 %v4191, %v4191
      %4198 = vrot.lane.b32.xlu0 %v2943, 72
      %v4199 = vpop.permute.xlu0 %4198
      %4200 = vrot.lane.b32.xlu0 %v2944, 72
      %v4201 = vpop.permute.xlu0 %4200
      %4202 = vrot.lane.b32.xlu0 %v2945, 72
      %v4203 = vpop.permute.xlu0 %4202
      %4204 = vrot.lane.b32.xlu0 %v2946, 72
      %v4205 = vpop.permute.xlu0 %4204
      %4206 = vrot.lane.b32.xlu0 %v2947, 72
      %v4207 = vpop.permute.xlu0 %4206
      %4208 = vrot.lane.b32.xlu0 %v2948, 72
      %v4209 = vpop.permute.xlu0 %4208
      %4210 = vrot.lane.b32.xlu0 %v2949, 72
      %v4211 = vpop.permute.xlu0 %4210
      %4212 = vrot.lane.b32.xlu0 %v2950, 72
      %v4213 = vpop.permute.xlu0 %4212
      %4214 = vrot.lane.b32.xlu0 %v2951, 72
      %v4215 = vpop.permute.xlu0 %4214
      %4216 = vrot.lane.b32.xlu0 %v2952, 72
      %v4217 = vpop.permute.xlu0 %4216
      %4218 = vrot.lane.b32.xlu0 %v2953, 72
      %v4219 = vpop.permute.xlu0 %4218
      %4220 = vrot.lane.b32.xlu0 %v2954, 72
      %v4221 = vpop.permute.xlu0 %4220
      %4222 = vrot.lane.b32.xlu0 %v2955, 72
      %v4223 = vpop.permute.xlu0 %4222
      %4224 = vrot.lane.b32.xlu0 %v2956, 72
      %v4225 = vpop.permute.xlu0 %4224
      %4226 = vrot.lane.b32.xlu0 %v2957, 72
      %v4227 = vpop.permute.xlu0 %4226
      %4228 = vrot.lane.b32.xlu0 %v2958, 72
      %v4229 = vpop.permute.xlu0 %4228
      %4230 = vrot.lane.b32.xlu0 %v2959, 72
      %v4231 = vpop.permute.xlu0 %4230
      %4232 = vrot.lane.b32.xlu0 %v2960, 72
      %v4233 = vpop.permute.xlu0 %4232
      %4234 = vrot.lane.b32.xlu0 %v2961, 72
      %v4235 = vpop.permute.xlu0 %4234
      %4236 = vrot.lane.b32.xlu0 %v2962, 72
      %v4237 = vpop.permute.xlu0 %4236
      %4238 = vrot.lane.b32.xlu0 %v2963, 72
      %v4239 = vpop.permute.xlu0 %4238
      %4240 = vrot.lane.b32.xlu0 %v2964, 72
      %v4241 = vpop.permute.xlu0 %4240
      %4242 = vrot.lane.b32.xlu0 %v2965, 72
      %v4243 = vpop.permute.xlu0 %4242
      %4244 = vrot.lane.b32.xlu0 %v2966, 72
      %v4245 = vpop.permute.xlu0 %4244
      %4246 = vrot.lane.b32.xlu0 %v2967, 72
      %v4247 = vpop.permute.xlu0 %4246
      %4248 = vrot.lane.b32.xlu0 %v2968, 72
      %v4249 = vpop.permute.xlu0 %4248
      %4250 = vrot.lane.b32.xlu0 %v2969, 72
      %v4251 = vpop.permute.xlu0 %4250
      %4252 = vrot.lane.b32.xlu0 %v2970, 72
      %v4253 = vpop.permute.xlu0 %4252
      %4254 = vrot.lane.b32.xlu0 %v2971, 72
      %v4255 = vpop.permute.xlu0 %4254
      %4256 = vrot.lane.b32.xlu0 %v2972, 72
      %v4257 = vpop.permute.xlu0 %4256
      %4258 = vrot.lane.b32.xlu0 %v4194, 72
      %v4259 = vpop.permute.xlu0 %4258
      %4260 = vrot.lane.b32.xlu0 %v4195, 72
      %v4261 = vpop.permute.xlu0 %4260
      %vm4294 = vcmask 650816
      %4295 = vst.msk [vmem:[#allocation5] sm:$0xf] %vm4294, %v4199
      %4296 = vst.msk [vmem:[#allocation5 + $0x8] sm:$0xf] %vm4294, %v4201
      %4297 = vst.msk [vmem:[#allocation5 + $0x10] sm:$0xf] %vm4294, %v4203
      %4298 = vst.msk [vmem:[#allocation5 + $0x18] sm:$0xf] %vm4294, %v4205
      %4299 = vst.msk [vmem:[#allocation5 + $0x20] sm:$0xf] %vm4294, %v4207
      %4300 = vst.msk [vmem:[#allocation5 + $0x28] sm:$0xf] %vm4294, %v4209
      %4301 = vst.msk [vmem:[#allocation5 + $0x30] sm:$0xf] %vm4294, %v4211
      %4302 = vst.msk [vmem:[#allocation5 + $0x38] sm:$0xf] %vm4294, %v4213
      %4303 = vst.msk [vmem:[#allocation5 + $0x40] sm:$0xf] %vm4294, %v4215
      %4304 = vst.msk [vmem:[#allocation5 + $0x48] sm:$0xf] %vm4294, %v4217
      %4305 = vst.msk [vmem:[#allocation5 + $0x50] sm:$0xf] %vm4294, %v4219
      %4306 = vst.msk [vmem:[#allocation5 + $0x58] sm:$0xf] %vm4294, %v4221
      %4307 = vst.msk [vmem:[#allocation5 + $0x60] sm:$0xf] %vm4294, %v4223
      %4308 = vst.msk [vmem:[#allocation5 + $0x68] sm:$0xf] %vm4294, %v4225
      %4309 = vst.msk [vmem:[#allocation5 + $0x70] sm:$0xf] %vm4294, %v4227
      %4310 = vst.msk [vmem:[#allocation5 + $0x78] sm:$0xf] %vm4294, %v4229
      %4311 = vst.msk [vmem:[#allocation5 + $0x80] sm:$0xf] %vm4294, %v4231
      %4312 = vst.msk [vmem:[#allocation5 + $0x88] sm:$0xf] %vm4294, %v4233
      %4313 = vst.msk [vmem:[#allocation5 + $0x90] sm:$0xf] %vm4294, %v4235
      %4314 = vst.msk [vmem:[#allocation5 + $0x98] sm:$0xf] %vm4294, %v4237
      %4315 = vst.msk [vmem:[#allocation5 + $0xa0] sm:$0xf] %vm4294, %v4239
      %4316 = vst.msk [vmem:[#allocation5 + $0xa8] sm:$0xf] %vm4294, %v4241
      %4317 = vst.msk [vmem:[#allocation5 + $0xb0] sm:$0xf] %vm4294, %v4243
      %4318 = vst.msk [vmem:[#allocation5 + $0xb8] sm:$0xf] %vm4294, %v4245
      %4319 = vst.msk [vmem:[#allocation5 + $0xc0] sm:$0xf] %vm4294, %v4247
      %4320 = vst.msk [vmem:[#allocation5 + $0xc8] sm:$0xf] %vm4294, %v4249
      %4321 = vst.msk [vmem:[#allocation5 + $0xd0] sm:$0xf] %vm4294, %v4251
      %4322 = vst.msk [vmem:[#allocation5 + $0xd8] sm:$0xf] %vm4294, %v4253
      %4323 = vst.msk [vmem:[#allocation5 + $0xe0] sm:$0xf] %vm4294, %v4255
      %4324 = vst.msk [vmem:[#allocation5 + $0xe8] sm:$0xf] %vm4294, %v4257
      %4325 = vst.msk [vmem:[#allocation5 + $0xf0] sm:$0xf] %vm4294, %v4259
      %4326 = vst.msk [vmem:[#allocation5 + $0xf8] sm:$0xf] %vm4294, %v4261
      %v4327 = vrot.slane %v2109, 2
      %v4328 = vrot.slane %v2110, 2
      %v4329 = vsel %vm3134, %v4327, %v4328
      %v4330 = vrot.slane %v2111, 2
      %v4331 = vsel %vm3134, %v4328, %v4330
      %v4334 = vpack.c.bf16 %v4329, %v4329
      %v4335 = vpack.c.bf16 %v4331, %v4331
      %4338 = vrot.lane.b32.xlu0 %v3249, 80
      %v4339 = vpop.permute.xlu0 %4338
      %4340 = vrot.lane.b32.xlu0 %v3250, 80
      %v4341 = vpop.permute.xlu0 %4340
      %4342 = vrot.lane.b32.xlu0 %v3251, 80
      %v4343 = vpop.permute.xlu0 %4342
      %4344 = vrot.lane.b32.xlu0 %v3252, 80
      %v4345 = vpop.permute.xlu0 %4344
      %4346 = vrot.lane.b32.xlu0 %v3253, 80
      %v4347 = vpop.permute.xlu0 %4346
      %4348 = vrot.lane.b32.xlu0 %v3254, 80
      %v4349 = vpop.permute.xlu0 %4348
      %4350 = vrot.lane.b32.xlu0 %v3255, 80
      %v4351 = vpop.permute.xlu0 %4350
      %4352 = vrot.lane.b32.xlu0 %v3256, 80
      %v4353 = vpop.permute.xlu0 %4352
      %4354 = vrot.lane.b32.xlu0 %v3257, 80
      %v4355 = vpop.permute.xlu0 %4354
      %4356 = vrot.lane.b32.xlu0 %v3258, 80
      %v4357 = vpop.permute.xlu0 %4356
      %4358 = vrot.lane.b32.xlu0 %v3259, 80
      %v4359 = vpop.permute.xlu0 %4358
      %4360 = vrot.lane.b32.xlu0 %v3260, 80
      %v4361 = vpop.permute.xlu0 %4360
      %4362 = vrot.lane.b32.xlu0 %v3261, 80
      %v4363 = vpop.permute.xlu0 %4362
      %4364 = vrot.lane.b32.xlu0 %v3262, 80
      %v4365 = vpop.permute.xlu0 %4364
      %4366 = vrot.lane.b32.xlu0 %v3263, 80
      %v4367 = vpop.permute.xlu0 %4366
      %4368 = vrot.lane.b32.xlu0 %v3264, 80
      %v4369 = vpop.permute.xlu0 %4368
      %4370 = vrot.lane.b32.xlu0 %v3265, 80
      %v4371 = vpop.permute.xlu0 %4370
      %4372 = vrot.lane.b32.xlu0 %v3266, 80
      %v4373 = vpop.permute.xlu0 %4372
      %4374 = vrot.lane.b32.xlu0 %v3267, 80
      %v4375 = vpop.permute.xlu0 %4374
      %4376 = vrot.lane.b32.xlu0 %v3268, 80
      %v4377 = vpop.permute.xlu0 %4376
      %4378 = vrot.lane.b32.xlu0 %v3269, 80
      %v4379 = vpop.permute.xlu0 %4378
      %4380 = vrot.lane.b32.xlu0 %v3270, 80
      %v4381 = vpop.permute.xlu0 %4380
      %4382 = vrot.lane.b32.xlu0 %v3271, 80
      %v4383 = vpop.permute.xlu0 %4382
      %4384 = vrot.lane.b32.xlu0 %v3272, 80
      %v4385 = vpop.permute.xlu0 %4384
      %4386 = vrot.lane.b32.xlu0 %v3273, 80
      %v4387 = vpop.permute.xlu0 %4386
      %4388 = vrot.lane.b32.xlu0 %v3274, 80
      %v4389 = vpop.permute.xlu0 %4388
      %4390 = vrot.lane.b32.xlu0 %v3275, 80
      %v4391 = vpop.permute.xlu0 %4390
      %4392 = vrot.lane.b32.xlu0 %v3276, 80
      %v4393 = vpop.permute.xlu0 %4392
      %4394 = vrot.lane.b32.xlu0 %v3277, 80
      %v4395 = vpop.permute.xlu0 %4394
      %4396 = vrot.lane.b32.xlu0 %v3278, 80
      %v4397 = vpop.permute.xlu0 %4396
      %4398 = vrot.lane.b32.xlu0 %v4334, 80
      %v4399 = vpop.permute.xlu0 %4398
      %4400 = vrot.lane.b32.xlu0 %v4335, 80
      %v4401 = vpop.permute.xlu0 %4400
      %vm4434 = vcmask 716416
      %4435 = vst.msk [vmem:[#allocation5] sm:$0xf] %vm4434, %v4339
      %4436 = vst.msk [vmem:[#allocation5 + $0x8] sm:$0xf] %vm4434, %v4341
      %4437 = vst.msk [vmem:[#allocation5 + $0x10] sm:$0xf] %vm4434, %v4343
      %4438 = vst.msk [vmem:[#allocation5 + $0x18] sm:$0xf] %vm4434, %v4345
      %4439 = vst.msk [vmem:[#allocation5 + $0x20] sm:$0xf] %vm4434, %v4347
      %4440 = vst.msk [vmem:[#allocation5 + $0x28] sm:$0xf] %vm4434, %v4349
      %4441 = vst.msk [vmem:[#allocation5 + $0x30] sm:$0xf] %vm4434, %v4351
      %4442 = vst.msk [vmem:[#allocation5 + $0x38] sm:$0xf] %vm4434, %v4353
      %4443 = vst.msk [vmem:[#allocation5 + $0x40] sm:$0xf] %vm4434, %v4355
      %4444 = vst.msk [vmem:[#allocation5 + $0x48] sm:$0xf] %vm4434, %v4357
      %4445 = vst.msk [vmem:[#allocation5 + $0x50] sm:$0xf] %vm4434, %v4359
      %4446 = vst.msk [vmem:[#allocation5 + $0x58] sm:$0xf] %vm4434, %v4361
      %4447 = vst.msk [vmem:[#allocation5 + $0x60] sm:$0xf] %vm4434, %v4363
      %4448 = vst.msk [vmem:[#allocation5 + $0x68] sm:$0xf] %vm4434, %v4365
      %4449 = vst.msk [vmem:[#allocation5 + $0x70] sm:$0xf] %vm4434, %v4367
      %4450 = vst.msk [vmem:[#allocation5 + $0x78] sm:$0xf] %vm4434, %v4369
      %4451 = vst.msk [vmem:[#allocation5 + $0x80] sm:$0xf] %vm4434, %v4371
      %4452 = vst.msk [vmem:[#allocation5 + $0x88] sm:$0xf] %vm4434, %v4373
      %4453 = vst.msk [vmem:[#allocation5 + $0x90] sm:$0xf] %vm4434, %v4375
      %4454 = vst.msk [vmem:[#allocation5 + $0x98] sm:$0xf] %vm4434, %v4377
      %4455 = vst.msk [vmem:[#allocation5 + $0xa0] sm:$0xf] %vm4434, %v4379
      %4456 = vst.msk [vmem:[#allocation5 + $0xa8] sm:$0xf] %vm4434, %v4381
      %4457 = vst.msk [vmem:[#allocation5 + $0xb0] sm:$0xf] %vm4434, %v4383
      %4458 = vst.msk [vmem:[#allocation5 + $0xb8] sm:$0xf] %vm4434, %v4385
      %4459 = vst.msk [vmem:[#allocation5 + $0xc0] sm:$0xf] %vm4434, %v4387
      %4460 = vst.msk [vmem:[#allocation5 + $0xc8] sm:$0xf] %vm4434, %v4389
      %4461 = vst.msk [vmem:[#allocation5 + $0xd0] sm:$0xf] %vm4434, %v4391
      %4462 = vst.msk [vmem:[#allocation5 + $0xd8] sm:$0xf] %vm4434, %v4393
      %4463 = vst.msk [vmem:[#allocation5 + $0xe0] sm:$0xf] %vm4434, %v4395
      %4464 = vst.msk [vmem:[#allocation5 + $0xe8] sm:$0xf] %vm4434, %v4397
      %4465 = vst.msk [vmem:[#allocation5 + $0xf0] sm:$0xf] %vm4434, %v4399
      %4466 = vst.msk [vmem:[#allocation5 + $0xf8] sm:$0xf] %vm4434, %v4401
      %v4467 = vrot.slane %v2163, 2
      %v4468 = vrot.slane %v2164, 2
      %v4469 = vsel %vm3134, %v4467, %v4468
      %v4470 = vrot.slane %v2165, 2
      %v4471 = vsel %vm3134, %v4468, %v4470
      %v4474 = vpack.c.bf16 %v4469, %v4469
      %v4475 = vpack.c.bf16 %v4471, %v4471
      %4478 = vrot.lane.b32.xlu0 %v3554, 88
      %v4479 = vpop.permute.xlu0 %4478
      %4480 = vrot.lane.b32.xlu0 %v3555, 88
      %v4481 = vpop.permute.xlu0 %4480
      %4482 = vrot.lane.b32.xlu0 %v3556, 88
      %v4483 = vpop.permute.xlu0 %4482
      %4484 = vrot.lane.b32.xlu0 %v3557, 88
      %v4485 = vpop.permute.xlu0 %4484
      %4486 = vrot.lane.b32.xlu0 %v3558, 88
      %v4487 = vpop.permute.xlu0 %4486
      %4488 = vrot.lane.b32.xlu0 %v3559, 88
      %v4489 = vpop.permute.xlu0 %4488
      %4490 = vrot.lane.b32.xlu0 %v3560, 88
      %v4491 = vpop.permute.xlu0 %4490
      %4492 = vrot.lane.b32.xlu0 %v3561, 88
      %v4493 = vpop.permute.xlu0 %4492
      %4494 = vrot.lane.b32.xlu0 %v3562, 88
      %v4495 = vpop.permute.xlu0 %4494
      %4496 = vrot.lane.b32.xlu0 %v3563, 88
      %v4497 = vpop.permute.xlu0 %4496
      %4498 = vrot.lane.b32.xlu0 %v3564, 88
      %v4499 = vpop.permute.xlu0 %4498
      %4500 = vrot.lane.b32.xlu0 %v3565, 88
      %v4501 = vpop.permute.xlu0 %4500
      %4502 = vrot.lane.b32.xlu0 %v3566, 88
      %v4503 = vpop.permute.xlu0 %4502
      %4504 = vrot.lane.b32.xlu0 %v3567, 88
      %v4505 = vpop.permute.xlu0 %4504
      %4506 = vrot.lane.b32.xlu0 %v3568, 88
      %v4507 = vpop.permute.xlu0 %4506
      %4508 = vrot.lane.b32.xlu0 %v3569, 88
      %v4509 = vpop.permute.xlu0 %4508
      %4510 = vrot.lane.b32.xlu0 %v3570, 88
      %v4511 = vpop.permute.xlu0 %4510
      %4512 = vrot.lane.b32.xlu0 %v3571, 88
      %v4513 = vpop.permute.xlu0 %4512
      %4514 = vrot.lane.b32.xlu0 %v3572, 88
      %v4515 = vpop.permute.xlu0 %4514
      %4516 = vrot.lane.b32.xlu0 %v3573, 88
      %v4517 = vpop.permute.xlu0 %4516
      %4518 = vrot.lane.b32.xlu0 %v3574, 88
      %v4519 = vpop.permute.xlu0 %4518
      %4520 = vrot.lane.b32.xlu0 %v3575, 88
      %v4521 = vpop.permute.xlu0 %4520
      %4522 = vrot.lane.b32.xlu0 %v3576, 88
      %v4523 = vpop.permute.xlu0 %4522
      %4524 = vrot.lane.b32.xlu0 %v3577, 88
      %v4525 = vpop.permute.xlu0 %4524
      %4526 = vrot.lane.b32.xlu0 %v3578, 88
      %v4527 = vpop.permute.xlu0 %4526
      %4528 = vrot.lane.b32.xlu0 %v3579, 88
      %v4529 = vpop.permute.xlu0 %4528
      %4530 = vrot.lane.b32.xlu0 %v3580, 88
      %v4531 = vpop.permute.xlu0 %4530
      %4532 = vrot.lane.b32.xlu0 %v3581, 88
      %v4533 = vpop.permute.xlu0 %4532
      %4534 = vrot.lane.b32.xlu0 %v3582, 88
      %v4535 = vpop.permute.xlu0 %4534
      %4536 = vrot.lane.b32.xlu0 %v3583, 88
      %v4537 = vpop.permute.xlu0 %4536
      %4538 = vrot.lane.b32.xlu0 %v4474, 88
      %v4539 = vpop.permute.xlu0 %4538
      %4540 = vrot.lane.b32.xlu0 %v4475, 88
      %v4541 = vpop.permute.xlu0 %4540
      %vm4574 = vcmask 782016
      %4575 = vst.msk [vmem:[#allocation5] sm:$0xf] %vm4574, %v4479
      %4576 = vst.msk [vmem:[#allocation5 + $0x8] sm:$0xf] %vm4574, %v4481
      %4577 = vst.msk [vmem:[#allocation5 + $0x10] sm:$0xf] %vm4574, %v4483
      %4578 = vst.msk [vmem:[#allocation5 + $0x18] sm:$0xf] %vm4574, %v4485
      %4579 = vst.msk [vmem:[#allocation5 + $0x20] sm:$0xf] %vm4574, %v4487
      %4580 = vst.msk [vmem:[#allocation5 + $0x28] sm:$0xf] %vm4574, %v4489
      %4581 = vst.msk [vmem:[#allocation5 + $0x30] sm:$0xf] %vm4574, %v4491
      %4582 = vst.msk [vmem:[#allocation5 + $0x38] sm:$0xf] %vm4574, %v4493
      %4583 = vst.msk [vmem:[#allocation5 + $0x40] sm:$0xf] %vm4574, %v4495
      %4584 = vst.msk [vmem:[#allocation5 + $0x48] sm:$0xf] %vm4574, %v4497
      %4585 = vst.msk [vmem:[#allocation5 + $0x50] sm:$0xf] %vm4574, %v4499
      %4586 = vst.msk [vmem:[#allocation5 + $0x58] sm:$0xf] %vm4574, %v4501
      %4587 = vst.msk [vmem:[#allocation5 + $0x60] sm:$0xf] %vm4574, %v4503
      %4588 = vst.msk [vmem:[#allocation5 + $0x68] sm:$0xf] %vm4574, %v4505
      %4589 = vst.msk [vmem:[#allocation5 + $0x70] sm:$0xf] %vm4574, %v4507
      %4590 = vst.msk [vmem:[#allocation5 + $0x78] sm:$0xf] %vm4574, %v4509
      %4591 = vst.msk [vmem:[#allocation5 + $0x80] sm:$0xf] %vm4574, %v4511
      %4592 = vst.msk [vmem:[#allocation5 + $0x88] sm:$0xf] %vm4574, %v4513
      %4593 = vst.msk [vmem:[#allocation5 + $0x90] sm:$0xf] %vm4574, %v4515
      %4594 = vst.msk [vmem:[#allocation5 + $0x98] sm:$0xf] %vm4574, %v4517
      %4595 = vst.msk [vmem:[#allocation5 + $0xa0] sm:$0xf] %vm4574, %v4519
      %4596 = vst.msk [vmem:[#allocation5 + $0xa8] sm:$0xf] %vm4574, %v4521
      %4597 = vst.msk [vmem:[#allocation5 + $0xb0] sm:$0xf] %vm4574, %v4523
      %4598 = vst.msk [vmem:[#allocation5 + $0xb8] sm:$0xf] %vm4574, %v4525
      %4599 = vst.msk [vmem:[#allocation5 + $0xc0] sm:$0xf] %vm4574, %v4527
      %4600 = vst.msk [vmem:[#allocation5 + $0xc8] sm:$0xf] %vm4574, %v4529
      %4601 = vst.msk [vmem:[#allocation5 + $0xd0] sm:$0xf] %vm4574, %v4531
      %4602 = vst.msk [vmem:[#allocation5 + $0xd8] sm:$0xf] %vm4574, %v4533
      %4603 = vst.msk [vmem:[#allocation5 + $0xe0] sm:$0xf] %vm4574, %v4535
      %4604 = vst.msk [vmem:[#allocation5 + $0xe8] sm:$0xf] %vm4574, %v4537
      %4605 = vst.msk [vmem:[#allocation5 + $0xf0] sm:$0xf] %vm4574, %v4539
      %4606 = vst.msk [vmem:[#allocation5 + $0xf8] sm:$0xf] %vm4574, %v4541
      %v4607 = vpack.c.bf16 %v2112, %v2112
      %v4608 = vpack.c.bf16 %v2113, %v2113
      %4611 = vrot.lane.b32.xlu0 %v2173, 96
      %v4612 = vpop.permute.xlu0 %4611
      %4613 = vrot.lane.b32.xlu0 %v2174, 96
      %v4614 = vpop.permute.xlu0 %4613
      %4615 = vrot.lane.b32.xlu0 %v2175, 96
      %v4616 = vpop.permute.xlu0 %4615
      %4617 = vrot.lane.b32.xlu0 %v2176, 96
      %v4618 = vpop.permute.xlu0 %4617
      %4619 = vrot.lane.b32.xlu0 %v2177, 96
      %v4620 = vpop.permute.xlu0 %4619
      %4621 = vrot.lane.b32.xlu0 %v2178, 96
      %v4622 = vpop.permute.xlu0 %4621
      %4623 = vrot.lane.b32.xlu0 %v2179, 96
      %v4624 = vpop.permute.xlu0 %4623
      %4625 = vrot.lane.b32.xlu0 %v2180, 96
      %v4626 = vpop.permute.xlu0 %4625
      %4627 = vrot.lane.b32.xlu0 %v2181, 96
      %v4628 = vpop.permute.xlu0 %4627
      %4629 = vrot.lane.b32.xlu0 %v2182, 96
      %v4630 = vpop.permute.xlu0 %4629
      %4631 = vrot.lane.b32.xlu0 %v2183, 96
      %v4632 = vpop.permute.xlu0 %4631
      %4633 = vrot.lane.b32.xlu0 %v2184, 96
      %v4634 = vpop.permute.xlu0 %4633
      %4635 = vrot.lane.b32.xlu0 %v2185, 96
      %v4636 = vpop.permute.xlu0 %4635
      %4637 = vrot.lane.b32.xlu0 %v2186, 96
      %v4638 = vpop.permute.xlu0 %4637
      %4639 = vrot.lane.b32.xlu0 %v2187, 96
      %v4640 = vpop.permute.xlu0 %4639
      %4641 = vrot.lane.b32.xlu0 %v2188, 96
      %v4642 = vpop.permute.xlu0 %4641
      %4643 = vrot.lane.b32.xlu0 %v2189, 96
      %v4644 = vpop.permute.xlu0 %4643
      %4645 = vrot.lane.b32.xlu0 %v2190, 96
      %v4646 = vpop.permute.xlu0 %4645
      %4647 = vrot.lane.b32.xlu0 %v2191, 96
      %v4648 = vpop.permute.xlu0 %4647
      %4649 = vrot.lane.b32.xlu0 %v2192, 96
      %v4650 = vpop.permute.xlu0 %4649
      %4651 = vrot.lane.b32.xlu0 %v2193, 96
      %v4652 = vpop.permute.xlu0 %4651
      %4653 = vrot.lane.b32.xlu0 %v2194, 96
      %v4654 = vpop.permute.xlu0 %4653
      %4655 = vrot.lane.b32.xlu0 %v2195, 96
      %v4656 = vpop.permute.xlu0 %4655
      %4657 = vrot.lane.b32.xlu0 %v2196, 96
      %v4658 = vpop.permute.xlu0 %4657
      %4659 = vrot.lane.b32.xlu0 %v2197, 96
      %v4660 = vpop.permute.xlu0 %4659
      %4661 = vrot.lane.b32.xlu0 %v2198, 96
      %v4662 = vpop.permute.xlu0 %4661
      %4663 = vrot.lane.b32.xlu0 %v2199, 96
      %v4664 = vpop.permute.xlu0 %4663
      %4665 = vrot.lane.b32.xlu0 %v2200, 96
      %v4666 = vpop.permute.xlu0 %4665
      %4667 = vrot.lane.b32.xlu0 %v3745, 96
      %v4668 = vpop.permute.xlu0 %4667
      %4669 = vrot.lane.b32.xlu0 %v3746, 96
      %v4670 = vpop.permute.xlu0 %4669
      %4671 = vrot.lane.b32.xlu0 %v4607, 96
      %v4672 = vpop.permute.xlu0 %4671
      %4673 = vrot.lane.b32.xlu0 %v4608, 96
      %v4674 = vpop.permute.xlu0 %4673
      %vm4707 = vcmask 847616
      %4708 = vst.msk [vmem:[#allocation5] sm:$0xf] %vm4707, %v4612
      %4709 = vst.msk [vmem:[#allocation5 + $0x8] sm:$0xf] %vm4707, %v4614
      %4710 = vst.msk [vmem:[#allocation5 + $0x10] sm:$0xf] %vm4707, %v4616
      %4711 = vst.msk [vmem:[#allocation5 + $0x18] sm:$0xf] %vm4707, %v4618
      %4712 = vst.msk [vmem:[#allocation5 + $0x20] sm:$0xf] %vm4707, %v4620
      %4713 = vst.msk [vmem:[#allocation5 + $0x28] sm:$0xf] %vm4707, %v4622
      %4714 = vst.msk [vmem:[#allocation5 + $0x30] sm:$0xf] %vm4707, %v4624
      %4715 = vst.msk [vmem:[#allocation5 + $0x38] sm:$0xf] %vm4707, %v4626
      %4716 = vst.msk [vmem:[#allocation5 + $0x40] sm:$0xf] %vm4707, %v4628
      %4717 = vst.msk [vmem:[#allocation5 + $0x48] sm:$0xf] %vm4707, %v4630
      %4718 = vst.msk [vmem:[#allocation5 + $0x50] sm:$0xf] %vm4707, %v4632
      %4719 = vst.msk [vmem:[#allocation5 + $0x58] sm:$0xf] %vm4707, %v4634
      %4720 = vst.msk [vmem:[#allocation5 + $0x60] sm:$0xf] %vm4707, %v4636
      %4721 = vst.msk [vmem:[#allocation5 + $0x68] sm:$0xf] %vm4707, %v4638
      %4722 = vst.msk [vmem:[#allocation5 + $0x70] sm:$0xf] %vm4707, %v4640
      %4723 = vst.msk [vmem:[#allocation5 + $0x78] sm:$0xf] %vm4707, %v4642
      %4724 = vst.msk [vmem:[#allocation5 + $0x80] sm:$0xf] %vm4707, %v4644
      %4725 = vst.msk [vmem:[#allocation5 + $0x88] sm:$0xf] %vm4707, %v4646
      %4726 = vst.msk [vmem:[#allocation5 + $0x90] sm:$0xf] %vm4707, %v4648
      %4727 = vst.msk [vmem:[#allocation5 + $0x98] sm:$0xf] %vm4707, %v4650
      %4728 = vst.msk [vmem:[#allocation5 + $0xa0] sm:$0xf] %vm4707, %v4652
      %4729 = vst.msk [vmem:[#allocation5 + $0xa8] sm:$0xf] %vm4707, %v4654
      %4730 = vst.msk [vmem:[#allocation5 + $0xb0] sm:$0xf] %vm4707, %v4656
      %4731 = vst.msk [vmem:[#allocation5 + $0xb8] sm:$0xf] %vm4707, %v4658
      %4732 = vst.msk [vmem:[#allocation5 + $0xc0] sm:$0xf] %vm4707, %v4660
      %4733 = vst.msk [vmem:[#allocation5 + $0xc8] sm:$0xf] %vm4707, %v4662
      %4734 = vst.msk [vmem:[#allocation5 + $0xd0] sm:$0xf] %vm4707, %v4664
      %4735 = vst.msk [vmem:[#allocation5 + $0xd8] sm:$0xf] %vm4707, %v4666
      %4736 = vst.msk [vmem:[#allocation5 + $0xe0] sm:$0xf] %vm4707, %v4668
      %4737 = vst.msk [vmem:[#allocation5 + $0xe8] sm:$0xf] %vm4707, %v4670
      %4738 = vst.msk [vmem:[#allocation5 + $0xf0] sm:$0xf] %vm4707, %v4672
      %4739 = vst.msk [vmem:[#allocation5 + $0xf8] sm:$0xf] %vm4707, %v4674
      %v4740 = vpack.c.bf16 %v2166, %v2166
      %v4741 = vpack.c.bf16 %v2167, %v2167
      %4744 = vrot.lane.b32.xlu0 %v2238, 104
      %v4745 = vpop.permute.xlu0 %4744
      %4746 = vrot.lane.b32.xlu0 %v2239, 104
      %v4747 = vpop.permute.xlu0 %4746
      %4748 = vrot.lane.b32.xlu0 %v2240, 104
      %v4749 = vpop.permute.xlu0 %4748
      %4750 = vrot.lane.b32.xlu0 %v2241, 104
      %v4751 = vpop.permute.xlu0 %4750
      %4752 = vrot.lane.b32.xlu0 %v2242, 104
      %v4753 = vpop.permute.xlu0 %4752
      %4754 = vrot.lane.b32.xlu0 %v2243, 104
      %v4755 = vpop.permute.xlu0 %4754
      %4756 = vrot.lane.b32.xlu0 %v2244, 104
      %v4757 = vpop.permute.xlu0 %4756
      %4758 = vrot.lane.b32.xlu0 %v2245, 104
      %v4759 = vpop.permute.xlu0 %4758
      %4760 = vrot.lane.b32.xlu0 %v2246, 104
      %v4761 = vpop.permute.xlu0 %4760
      %4762 = vrot.lane.b32.xlu0 %v2247, 104
      %v4763 = vpop.permute.xlu0 %4762
      %4764 = vrot.lane.b32.xlu0 %v2248, 104
      %v4765 = vpop.permute.xlu0 %4764
      %4766 = vrot.lane.b32.xlu0 %v2249, 104
      %v4767 = vpop.permute.xlu0 %4766
      %4768 = vrot.lane.b32.xlu0 %v2250, 104
      %v4769 = vpop.permute.xlu0 %4768
      %4770 = vrot.lane.b32.xlu0 %v2251, 104
      %v4771 = vpop.permute.xlu0 %4770
      %4772 = vrot.lane.b32.xlu0 %v2252, 104
      %v4773 = vpop.permute.xlu0 %4772
      %4774 = vrot.lane.b32.xlu0 %v2253, 104
      %v4775 = vpop.permute.xlu0 %4774
      %4776 = vrot.lane.b32.xlu0 %v2254, 104
      %v4777 = vpop.permute.xlu0 %4776
      %4778 = vrot.lane.b32.xlu0 %v2255, 104
      %v4779 = vpop.permute.xlu0 %4778
      %4780 = vrot.lane.b32.xlu0 %v2256, 104
      %v4781 = vpop.permute.xlu0 %4780
      %4782 = vrot.lane.b32.xlu0 %v2257, 104
      %v4783 = vpop.permute.xlu0 %4782
      %4784 = vrot.lane.b32.xlu0 %v2258, 104
      %v4785 = vpop.permute.xlu0 %4784
      %4786 = vrot.lane.b32.xlu0 %v2259, 104
      %v4787 = vpop.permute.xlu0 %4786
      %4788 = vrot.lane.b32.xlu0 %v2260, 104
      %v4789 = vpop.permute.xlu0 %4788
      %4790 = vrot.lane.b32.xlu0 %v2261, 104
      %v4791 = vpop.permute.xlu0 %4790
      %4792 = vrot.lane.b32.xlu0 %v2262, 104
      %v4793 = vpop.permute.xlu0 %4792
      %4794 = vrot.lane.b32.xlu0 %v2263, 104
      %v4795 = vpop.permute.xlu0 %4794
      %4796 = vrot.lane.b32.xlu0 %v2264, 104
      %v4797 = vpop.permute.xlu0 %4796
      %4798 = vrot.lane.b32.xlu0 %v2265, 104
      %v4799 = vpop.permute.xlu0 %4798
      %4800 = vrot.lane.b32.xlu0 %v3908, 104
      %v4801 = vpop.permute.xlu0 %4800
      %4802 = vrot.lane.b32.xlu0 %v3909, 104
      %v4803 = vpop.permute.xlu0 %4802
      %4804 = vrot.lane.b32.xlu0 %v4740, 104
      %v4805 = vpop.permute.xlu0 %4804
      %4806 = vrot.lane.b32.xlu0 %v4741, 104
      %v4807 = vpop.permute.xlu0 %4806
      %vm4840 = vcmask 913216
      %4841 = vst.msk [vmem:[#allocation5] sm:$0xf] %vm4840, %v4745
      %4842 = vst.msk [vmem:[#allocation5 + $0x8] sm:$0xf] %vm4840, %v4747
      %4843 = vst.msk [vmem:[#allocation5 + $0x10] sm:$0xf] %vm4840, %v4749
      %4844 = vst.msk [vmem:[#allocation5 + $0x18] sm:$0xf] %vm4840, %v4751
      %4845 = vst.msk [vmem:[#allocation5 + $0x20] sm:$0xf] %vm4840, %v4753
      %4846 = vst.msk [vmem:[#allocation5 + $0x28] sm:$0xf] %vm4840, %v4755
      %4847 = vst.msk [vmem:[#allocation5 + $0x30] sm:$0xf] %vm4840, %v4757
      %4848 = vst.msk [vmem:[#allocation5 + $0x38] sm:$0xf] %vm4840, %v4759
      %4849 = vst.msk [vmem:[#allocation5 + $0x40] sm:$0xf] %vm4840, %v4761
      %4850 = vst.msk [vmem:[#allocation5 + $0x48] sm:$0xf] %vm4840, %v4763
      %4851 = vst.msk [vmem:[#allocation5 + $0x50] sm:$0xf] %vm4840, %v4765
      %4852 = vst.msk [vmem:[#allocation5 + $0x58] sm:$0xf] %vm4840, %v4767
      %4853 = vst.msk [vmem:[#allocation5 + $0x60] sm:$0xf] %vm4840, %v4769
      %4854 = vst.msk [vmem:[#allocation5 + $0x68] sm:$0xf] %vm4840, %v4771
      %4855 = vst.msk [vmem:[#allocation5 + $0x70] sm:$0xf] %vm4840, %v4773
      %4856 = vst.msk [vmem:[#allocation5 + $0x78] sm:$0xf] %vm4840, %v4775
      %4857 = vst.msk [vmem:[#allocation5 + $0x80] sm:$0xf] %vm4840, %v4777
      %4858 = vst.msk [vmem:[#allocation5 + $0x88] sm:$0xf] %vm4840, %v4779
      %4859 = vst.msk [vmem:[#allocation5 + $0x90] sm:$0xf] %vm4840, %v4781
      %4860 = vst.msk [vmem:[#allocation5 + $0x98] sm:$0xf] %vm4840, %v4783
      %4861 = vst.msk [vmem:[#allocation5 + $0xa0] sm:$0xf] %vm4840, %v4785
      %4862 = vst.msk [vmem:[#allocation5 + $0xa8] sm:$0xf] %vm4840, %v4787
      %4863 = vst.msk [vmem:[#allocation5 + $0xb0] sm:$0xf] %vm4840, %v4789
      %4864 = vst.msk [vmem:[#allocation5 + $0xb8] sm:$0xf] %vm4840, %v4791
      %4865 = vst.msk [vmem:[#allocation5 + $0xc0] sm:$0xf] %vm4840, %v4793
      %4866 = vst.msk [vmem:[#allocation5 + $0xc8] sm:$0xf] %vm4840, %v4795
      %4867 = vst.msk [vmem:[#allocation5 + $0xd0] sm:$0xf] %vm4840, %v4797
      %4868 = vst.msk [vmem:[#allocation5 + $0xd8] sm:$0xf] %vm4840, %v4799
      %4869 = vst.msk [vmem:[#allocation5 + $0xe0] sm:$0xf] %vm4840, %v4801
      %4870 = vst.msk [vmem:[#allocation5 + $0xe8] sm:$0xf] %vm4840, %v4803
      %4871 = vst.msk [vmem:[#allocation5 + $0xf0] sm:$0xf] %vm4840, %v4805
      %4872 = vst.msk [vmem:[#allocation5 + $0xf8] sm:$0xf] %vm4840, %v4807
      %v4876 = vrot.slane %v2112, 1
      %v4877 = vrot.slane %v2113, 1
      %v4878 = vsel %vm2475, %v4876, %v4877
      %v4879 = vrot.slane %v2114, 1
      %v4880 = vsel %vm2475, %v4877, %v4879
      %v4883 = vpack.c.bf16 %v4878, %v4878
      %v4884 = vpack.c.bf16 %v4880, %v4880
      %4887 = vrot.lane.b32.xlu0 %v2592, 112
      %v4888 = vpop.permute.xlu0 %4887
      %4889 = vrot.lane.b32.xlu0 %v2593, 112
      %v4890 = vpop.permute.xlu0 %4889
      %4891 = vrot.lane.b32.xlu0 %v2594, 112
      %v4892 = vpop.permute.xlu0 %4891
      %4893 = vrot.lane.b32.xlu0 %v2595, 112
      %v4894 = vpop.permute.xlu0 %4893
      %4895 = vrot.lane.b32.xlu0 %v2596, 112
      %v4896 = vpop.permute.xlu0 %4895
      %4897 = vrot.lane.b32.xlu0 %v2597, 112
      %v4898 = vpop.permute.xlu0 %4897
      %4899 = vrot.lane.b32.xlu0 %v2598, 112
      %v4900 = vpop.permute.xlu0 %4899
      %4901 = vrot.lane.b32.xlu0 %v2599, 112
      %v4902 = vpop.permute.xlu0 %4901
      %4903 = vrot.lane.b32.xlu0 %v2600, 112
      %v4904 = vpop.permute.xlu0 %4903
      %4905 = vrot.lane.b32.xlu0 %v2601, 112
      %v4906 = vpop.permute.xlu0 %4905
      %4907 = vrot.lane.b32.xlu0 %v2602, 112
      %v4908 = vpop.permute.xlu0 %4907
      %4909 = vrot.lane.b32.xlu0 %v2603, 112
      %v4910 = vpop.permute.xlu0 %4909
      %4911 = vrot.lane.b32.xlu0 %v2604, 112
      %v4912 = vpop.permute.xlu0 %4911
      %4913 = vrot.lane.b32.xlu0 %v2605, 112
      %v4914 = vpop.permute.xlu0 %4913
      %4915 = vrot.lane.b32.xlu0 %v2606, 112
      %v4916 = vpop.permute.xlu0 %4915
      %4917 = vrot.lane.b32.xlu0 %v2607, 112
      %v4918 = vpop.permute.xlu0 %4917
      %4919 = vrot.lane.b32.xlu0 %v2608, 112
      %v4920 = vpop.permute.xlu0 %4919
      %4921 = vrot.lane.b32.xlu0 %v2609, 112
      %v4922 = vpop.permute.xlu0 %4921
      %4923 = vrot.lane.b32.xlu0 %v2610, 112
      %v4924 = vpop.permute.xlu0 %4923
      %4925 = vrot.lane.b32.xlu0 %v2611, 112
      %v4926 = vpop.permute.xlu0 %4925
      %4927 = vrot.lane.b32.xlu0 %v2612, 112
      %v4928 = vpop.permute.xlu0 %4927
      %4929 = vrot.lane.b32.xlu0 %v2613, 112
      %v4930 = vpop.permute.xlu0 %4929
      %4931 = vrot.lane.b32.xlu0 %v2614, 112
      %v4932 = vpop.permute.xlu0 %4931
      %4933 = vrot.lane.b32.xlu0 %v2615, 112
      %v4934 = vpop.permute.xlu0 %4933
      %4935 = vrot.lane.b32.xlu0 %v2616, 112
      %v4936 = vpop.permute.xlu0 %4935
      %4937 = vrot.lane.b32.xlu0 %v2617, 112
      %v4938 = vpop.permute.xlu0 %4937
      %4939 = vrot.lane.b32.xlu0 %v2618, 112
      %v4940 = vpop.permute.xlu0 %4939
      %4941 = vrot.lane.b32.xlu0 %v2619, 112
      %v4942 = vpop.permute.xlu0 %4941
      %4943 = vrot.lane.b32.xlu0 %v4051, 112
      %v4944 = vpop.permute.xlu0 %4943
      %4945 = vrot.lane.b32.xlu0 %v4052, 112
      %v4946 = vpop.permute.xlu0 %4945
      %4947 = vrot.lane.b32.xlu0 %v4883, 112
      %v4948 = vpop.permute.xlu0 %4947
      %4949 = vrot.lane.b32.xlu0 %v4884, 112
      %v4950 = vpop.permute.xlu0 %4949
      %vm4983 = vcmask 978816
      %4984 = vst.msk [vmem:[#allocation5] sm:$0xf] %vm4983, %v4888
      %4985 = vst.msk [vmem:[#allocation5 + $0x8] sm:$0xf] %vm4983, %v4890
      %4986 = vst.msk [vmem:[#allocation5 + $0x10] sm:$0xf] %vm4983, %v4892
      %4987 = vst.msk [vmem:[#allocation5 + $0x18] sm:$0xf] %vm4983, %v4894
      %4988 = vst.msk [vmem:[#allocation5 + $0x20] sm:$0xf] %vm4983, %v4896
      %4989 = vst.msk [vmem:[#allocation5 + $0x28] sm:$0xf] %vm4983, %v4898
      %4990 = vst.msk [vmem:[#allocation5 + $0x30] sm:$0xf] %vm4983, %v4900
      %4991 = vst.msk [vmem:[#allocation5 + $0x38] sm:$0xf] %vm4983, %v4902
      %4992 = vst.msk [vmem:[#allocation5 + $0x40] sm:$0xf] %vm4983, %v4904
      %4993 = vst.msk [vmem:[#allocation5 + $0x48] sm:$0xf] %vm4983, %v4906
      %4994 = vst.msk [vmem:[#allocation5 + $0x50] sm:$0xf] %vm4983, %v4908
      %4995 = vst.msk [vmem:[#allocation5 + $0x58] sm:$0xf] %vm4983, %v4910
      %4996 = vst.msk [vmem:[#allocation5 + $0x60] sm:$0xf] %vm4983, %v4912
      %4997 = vst.msk [vmem:[#allocation5 + $0x68] sm:$0xf] %vm4983, %v4914
      %4998 = vst.msk [vmem:[#allocation5 + $0x70] sm:$0xf] %vm4983, %v4916
      %4999 = vst.msk [vmem:[#allocation5 + $0x78] sm:$0xf] %vm4983, %v4918
      %5000 = vst.msk [vmem:[#allocation5 + $0x80] sm:$0xf] %vm4983, %v4920
      %5001 = vst.msk [vmem:[#allocation5 + $0x88] sm:$0xf] %vm4983, %v4922
      %5002 = vst.msk [vmem:[#allocation5 + $0x90] sm:$0xf] %vm4983, %v4924
      %5003 = vst.msk [vmem:[#allocation5 + $0x98] sm:$0xf] %vm4983, %v4926
      %5004 = vst.msk [vmem:[#allocation5 + $0xa0] sm:$0xf] %vm4983, %v4928
      %5005 = vst.msk [vmem:[#allocation5 + $0xa8] sm:$0xf] %vm4983, %v4930
      %5006 = vst.msk [vmem:[#allocation5 + $0xb0] sm:$0xf] %vm4983, %v4932
      %5007 = vst.msk [vmem:[#allocation5 + $0xb8] sm:$0xf] %vm4983, %v4934
      %5008 = vst.msk [vmem:[#allocation5 + $0xc0] sm:$0xf] %vm4983, %v4936
      %5009 = vst.msk [vmem:[#allocation5 + $0xc8] sm:$0xf] %vm4983, %v4938
      %5010 = vst.msk [vmem:[#allocation5 + $0xd0] sm:$0xf] %vm4983, %v4940
      %5011 = vst.msk [vmem:[#allocation5 + $0xd8] sm:$0xf] %vm4983, %v4942
      %5012 = vst.msk [vmem:[#allocation5 + $0xe0] sm:$0xf] %vm4983, %v4944
      %5013 = vst.msk [vmem:[#allocation5 + $0xe8] sm:$0xf] %vm4983, %v4946
      %5014 = vst.msk [vmem:[#allocation5 + $0xf0] sm:$0xf] %vm4983, %v4948
      %5015 = vst.msk [vmem:[#allocation5 + $0xf8] sm:$0xf] %vm4983, %v4950
      %v5019 = vrot.slane %v2166, 1
      %v5020 = vrot.slane %v2167, 1
      %v5021 = vsel %vm2475, %v5019, %v5020
      %v5022 = vrot.slane %v2168, 1
      %v5023 = vsel %vm2475, %v5020, %v5022
      %v5026 = vpack.c.bf16 %v5021, %v5021
      %v5027 = vpack.c.bf16 %v5023, %v5023
      %5030 = vrot.lane.b32.xlu0 %v2945, 120
      %v5031 = vpop.permute.xlu0 %5030
      %5032 = vrot.lane.b32.xlu0 %v2946, 120
      %v5033 = vpop.permute.xlu0 %5032
      %5034 = vrot.lane.b32.xlu0 %v2947, 120
      %v5035 = vpop.permute.xlu0 %5034
      %5036 = vrot.lane.b32.xlu0 %v2948, 120
      %v5037 = vpop.permute.xlu0 %5036
      %5038 = vrot.lane.b32.xlu0 %v2949, 120
      %v5039 = vpop.permute.xlu0 %5038
      %5040 = vrot.lane.b32.xlu0 %v2950, 120
      %v5041 = vpop.permute.xlu0 %5040
      %5042 = vrot.lane.b32.xlu0 %v2951, 120
      %v5043 = vpop.permute.xlu0 %5042
      %5044 = vrot.lane.b32.xlu0 %v2952, 120
      %v5045 = vpop.permute.xlu0 %5044
      %5046 = vrot.lane.b32.xlu0 %v2953, 120
      %v5047 = vpop.permute.xlu0 %5046
      %5048 = vrot.lane.b32.xlu0 %v2954, 120
      %v5049 = vpop.permute.xlu0 %5048
      %5050 = vrot.lane.b32.xlu0 %v2955, 120
      %v5051 = vpop.permute.xlu0 %5050
      %5052 = vrot.lane.b32.xlu0 %v2956, 120
      %v5053 = vpop.permute.xlu0 %5052
      %5054 = vrot.lane.b32.xlu0 %v2957, 120
      %v5055 = vpop.permute.xlu0 %5054
      %5056 = vrot.lane.b32.xlu0 %v2958, 120
      %v5057 = vpop.permute.xlu0 %5056
      %5058 = vrot.lane.b32.xlu0 %v2959, 120
      %v5059 = vpop.permute.xlu0 %5058
      %5060 = vrot.lane.b32.xlu0 %v2960, 120
      %v5061 = vpop.permute.xlu0 %5060
      %5062 = vrot.lane.b32.xlu0 %v2961, 120
      %v5063 = vpop.permute.xlu0 %5062
      %5064 = vrot.lane.b32.xlu0 %v2962, 120
      %v5065 = vpop.permute.xlu0 %5064
      %5066 = vrot.lane.b32.xlu0 %v2963, 120
      %v5067 = vpop.permute.xlu0 %5066
      %5068 = vrot.lane.b32.xlu0 %v2964, 120
      %v5069 = vpop.permute.xlu0 %5068
      %5070 = vrot.lane.b32.xlu0 %v2965, 120
      %v5071 = vpop.permute.xlu0 %5070
      %5072 = vrot.lane.b32.xlu0 %v2966, 120
      %v5073 = vpop.permute.xlu0 %5072
      %5074 = vrot.lane.b32.xlu0 %v2967, 120
      %v5075 = vpop.permute.xlu0 %5074
      %5076 = vrot.lane.b32.xlu0 %v2968, 120
      %v5077 = vpop.permute.xlu0 %5076
      %5078 = vrot.lane.b32.xlu0 %v2969, 120
      %v5079 = vpop.permute.xlu0 %5078
      %5080 = vrot.lane.b32.xlu0 %v2970, 120
      %v5081 = vpop.permute.xlu0 %5080
      %5082 = vrot.lane.b32.xlu0 %v2971, 120
      %v5083 = vpop.permute.xlu0 %5082
      %5084 = vrot.lane.b32.xlu0 %v2972, 120
      %v5085 = vpop.permute.xlu0 %5084
      %5086 = vrot.lane.b32.xlu0 %v4194, 120
      %v5087 = vpop.permute.xlu0 %5086
      %5088 = vrot.lane.b32.xlu0 %v4195, 120
      %v5089 = vpop.permute.xlu0 %5088
      %5090 = vrot.lane.b32.xlu0 %v5026, 120
      %v5091 = vpop.permute.xlu0 %5090
      %5092 = vrot.lane.b32.xlu0 %v5027, 120
      %v5093 = vpop.permute.xlu0 %5092
      %vm5126 = vcmask 1044416
      %5127 = vst.msk [vmem:[#allocation5] sm:$0xf] %vm5126, %v5031
      %5128 = vst.msk [vmem:[#allocation5 + $0x8] sm:$0xf] %vm5126, %v5033
      %5129 = vst.msk [vmem:[#allocation5 + $0x10] sm:$0xf] %vm5126, %v5035
      %5130 = vst.msk [vmem:[#allocation5 + $0x18] sm:$0xf] %vm5126, %v5037
      %5131 = vst.msk [vmem:[#allocation5 + $0x20] sm:$0xf] %vm5126, %v5039
      %5132 = vst.msk [vmem:[#allocation5 + $0x28] sm:$0xf] %vm5126, %v5041
      %5133 = vst.msk [vmem:[#allocation5 + $0x30] sm:$0xf] %vm5126, %v5043
      %5134 = vst.msk [vmem:[#allocation5 + $0x38] sm:$0xf] %vm5126, %v5045
      %5135 = vst.msk [vmem:[#allocation5 + $0x40] sm:$0xf] %vm5126, %v5047
      %5136 = vst.msk [vmem:[#allocation5 + $0x48] sm:$0xf] %vm5126, %v5049
      %5137 = vst.msk [vmem:[#allocation5 + $0x50] sm:$0xf] %vm5126, %v5051
      %5138 = vst.msk [vmem:[#allocation5 + $0x58] sm:$0xf] %vm5126, %v5053
      %5139 = vst.msk [vmem:[#allocation5 + $0x60] sm:$0xf] %vm5126, %v5055
      %5140 = vst.msk [vmem:[#allocation5 + $0x68] sm:$0xf] %vm5126, %v5057
      %5141 = vst.msk [vmem:[#allocation5 + $0x70] sm:$0xf] %vm5126, %v5059
      %5142 = vst.msk [vmem:[#allocation5 + $0x78] sm:$0xf] %vm5126, %v5061
      %5143 = vst.msk [vmem:[#allocation5 + $0x80] sm:$0xf] %vm5126, %v5063
      %5144 = vst.msk [vmem:[#allocation5 + $0x88] sm:$0xf] %vm5126, %v5065
      %5145 = vst.msk [vmem:[#allocation5 + $0x90] sm:$0xf] %vm5126, %v5067
      %5146 = vst.msk [vmem:[#allocation5 + $0x98] sm:$0xf] %vm5126, %v5069
      %5147 = vst.msk [vmem:[#allocation5 + $0xa0] sm:$0xf] %vm5126, %v5071
      %5148 = vst.msk [vmem:[#allocation5 + $0xa8] sm:$0xf] %vm5126, %v5073
      %5149 = vst.msk [vmem:[#allocation5 + $0xb0] sm:$0xf] %vm5126, %v5075
      %5150 = vst.msk [vmem:[#allocation5 + $0xb8] sm:$0xf] %vm5126, %v5077
      %5151 = vst.msk [vmem:[#allocation5 + $0xc0] sm:$0xf] %vm5126, %v5079
      %5152 = vst.msk [vmem:[#allocation5 + $0xc8] sm:$0xf] %vm5126, %v5081
      %5153 = vst.msk [vmem:[#allocation5 + $0xd0] sm:$0xf] %vm5126, %v5083
      %5154 = vst.msk [vmem:[#allocation5 + $0xd8] sm:$0xf] %vm5126, %v5085
      %5155 = vst.msk [vmem:[#allocation5 + $0xe0] sm:$0xf] %vm5126, %v5087
      %5156 = vst.msk [vmem:[#allocation5 + $0xe8] sm:$0xf] %vm5126, %v5089
      %5157 = vst.msk [vmem:[#allocation5 + $0xf0] sm:$0xf] %vm5126, %v5091
      %5158 = vst.msk [vmem:[#allocation5 + $0xf8] sm:$0xf] %vm5126, %v5093
      %v5159 = vrot.slane %v2112, 2
      %v5160 = vrot.slane %v2113, 2
      %v5161 = vsel %vm3134, %v5159, %v5160
      %v5162 = vrot.slane %v2114, 2
      %v5163 = vsel %vm3134, %v5160, %v5162
      %v5166 = vpack.c.bf16 %v5161, %v5161
      %v5167 = vpack.c.bf16 %v5163, %v5163
      %5168 = vst.msk [vmem:[#allocation5 + $0x4] sm:$0xf] %vm2201, %v3251
      %5169 = vst.msk [vmem:[#allocation5 + $0xc] sm:$0xf] %vm2201, %v3252
      %5170 = vst.msk [vmem:[#allocation5 + $0x14] sm:$0xf] %vm2201, %v3253
      %5171 = vst.msk [vmem:[#allocation5 + $0x1c] sm:$0xf] %vm2201, %v3254
      %5172 = vst.msk [vmem:[#allocation5 + $0x24] sm:$0xf] %vm2201, %v3255
      %5173 = vst.msk [vmem:[#allocation5 + $0x2c] sm:$0xf] %vm2201, %v3256
      %5174 = vst.msk [vmem:[#allocation5 + $0x34] sm:$0xf] %vm2201, %v3257
      %5175 = vst.msk [vmem:[#allocation5 + $0x3c] sm:$0xf] %vm2201, %v3258
      %5176 = vst.msk [vmem:[#allocation5 + $0x44] sm:$0xf] %vm2201, %v3259
      %5177 = vst.msk [vmem:[#allocation5 + $0x4c] sm:$0xf] %vm2201, %v3260
      %5178 = vst.msk [vmem:[#allocation5 + $0x54] sm:$0xf] %vm2201, %v3261
      %5179 = vst.msk [vmem:[#allocation5 + $0x5c] sm:$0xf] %vm2201, %v3262
      %5180 = vst.msk [vmem:[#allocation5 + $0x64] sm:$0xf] %vm2201, %v3263
      %5181 = vst.msk [vmem:[#allocation5 + $0x6c] sm:$0xf] %vm2201, %v3264
      %5182 = vst.msk [vmem:[#allocation5 + $0x74] sm:$0xf] %vm2201, %v3265
      %5183 = vst.msk [vmem:[#allocation5 + $0x7c] sm:$0xf] %vm2201, %v3266
      %5184 = vst.msk [vmem:[#allocation5 + $0x84] sm:$0xf] %vm2201, %v3267
      %5185 = vst.msk [vmem:[#allocation5 + $0x8c] sm:$0xf] %vm2201, %v3268
      %5186 = vst.msk [vmem:[#allocation5 + $0x94] sm:$0xf] %vm2201, %v3269
      %5187 = vst.msk [vmem:[#allocation5 + $0x9c] sm:$0xf] %vm2201, %v3270
      %5188 = vst.msk [vmem:[#allocation5 + $0xa4] sm:$0xf] %vm2201, %v3271
      %5189 = vst.msk [vmem:[#allocation5 + $0xac] sm:$0xf] %vm2201, %v3272
      %5190 = vst.msk [vmem:[#allocation5 + $0xb4] sm:$0xf] %vm2201, %v3273
      %5191 = vst.msk [vmem:[#allocation5 + $0xbc] sm:$0xf] %vm2201, %v3274
      %5192 = vst.msk [vmem:[#allocation5 + $0xc4] sm:$0xf] %vm2201, %v3275
      %5193 = vst.msk [vmem:[#allocation5 + $0xcc] sm:$0xf] %vm2201, %v3276
      %5194 = vst.msk [vmem:[#allocation5 + $0xd4] sm:$0xf] %vm2201, %v3277
      %5195 = vst.msk [vmem:[#allocation5 + $0xdc] sm:$0xf] %vm2201, %v3278
      %5196 = vst.msk [vmem:[#allocation5 + $0xe4] sm:$0xf] %vm2201, %v4334
      %5197 = vst.msk [vmem:[#allocation5 + $0xec] sm:$0xf] %vm2201, %v4335
      %5198 = vst.msk [vmem:[#allocation5 + $0xf4] sm:$0xf] %vm2201, %v5166
      %5199 = vst.msk [vmem:[#allocation5 + $0xfc] sm:$0xf] %vm2201, %v5167
      %v5200 = vrot.slane %v2166, 2
      %v5201 = vrot.slane %v2167, 2
      %v5202 = vsel %vm3134, %v5200, %v5201
      %v5203 = vrot.slane %v2168, 2
      %v5204 = vsel %vm3134, %v5201, %v5203
      %v5207 = vpack.c.bf16 %v5202, %v5202
      %v5208 = vpack.c.bf16 %v5204, %v5204
      %5211 = vrot.lane.b32.xlu0 %v3556, 8
      %v5212 = vpop.permute.xlu0 %5211
      %5213 = vrot.lane.b32.xlu0 %v3557, 8
      %v5214 = vpop.permute.xlu0 %5213
      %5215 = vrot.lane.b32.xlu0 %v3558, 8
      %v5216 = vpop.permute.xlu0 %5215
      %5217 = vrot.lane.b32.xlu0 %v3559, 8
      %v5218 = vpop.permute.xlu0 %5217
      %5219 = vrot.lane.b32.xlu0 %v3560, 8
      %v5220 = vpop.permute.xlu0 %5219
      %5221 = vrot.lane.b32.xlu0 %v3561, 8
      %v5222 = vpop.permute.xlu0 %5221
      %5223 = vrot.lane.b32.xlu0 %v3562, 8
      %v5224 = vpop.permute.xlu0 %5223
      %5225 = vrot.lane.b32.xlu0 %v3563, 8
      %v5226 = vpop.permute.xlu0 %5225
      %5227 = vrot.lane.b32.xlu0 %v3564, 8
      %v5228 = vpop.permute.xlu0 %5227
      %5229 = vrot.lane.b32.xlu0 %v3565, 8
      %v5230 = vpop.permute.xlu0 %5229
      %5231 = vrot.lane.b32.xlu0 %v3566, 8
      %v5232 = vpop.permute.xlu0 %5231
      %5233 = vrot.lane.b32.xlu0 %v3567, 8
      %v5234 = vpop.permute.xlu0 %5233
      %5235 = vrot.lane.b32.xlu0 %v3568, 8
      %v5236 = vpop.permute.xlu0 %5235
      %5237 = vrot.lane.b32.xlu0 %v3569, 8
      %v5238 = vpop.permute.xlu0 %5237
      %5239 = vrot.lane.b32.xlu0 %v3570, 8
      %v5240 = vpop.permute.xlu0 %5239
      %5241 = vrot.lane.b32.xlu0 %v3571, 8
      %v5242 = vpop.permute.xlu0 %5241
      %5243 = vrot.lane.b32.xlu0 %v3572, 8
      %v5244 = vpop.permute.xlu0 %5243
      %5245 = vrot.lane.b32.xlu0 %v3573, 8
      %v5246 = vpop.permute.xlu0 %5245
      %5247 = vrot.lane.b32.xlu0 %v3574, 8
      %v5248 = vpop.permute.xlu0 %5247
      %5249 = vrot.lane.b32.xlu0 %v3575, 8
      %v5250 = vpop.permute.xlu0 %5249
      %5251 = vrot.lane.b32.xlu0 %v3576, 8
      %v5252 = vpop.permute.xlu0 %5251
      %5253 = vrot.lane.b32.xlu0 %v3577, 8
      %v5254 = vpop.permute.xlu0 %5253
      %5255 = vrot.lane.b32.xlu0 %v3578, 8
      %v5256 = vpop.permute.xlu0 %5255
      %5257 = vrot.lane.b32.xlu0 %v3579, 8
      %v5258 = vpop.permute.xlu0 %5257
      %5259 = vrot.lane.b32.xlu0 %v3580, 8
      %v5260 = vpop.permute.xlu0 %5259
      %5261 = vrot.lane.b32.xlu0 %v3581, 8
      %v5262 = vpop.permute.xlu0 %5261
      %5263 = vrot.lane.b32.xlu0 %v3582, 8
      %v5264 = vpop.permute.xlu0 %5263
      %5265 = vrot.lane.b32.xlu0 %v3583, 8
      %v5266 = vpop.permute.xlu0 %5265
      %5267 = vrot.lane.b32.xlu0 %v4474, 8
      %v5268 = vpop.permute.xlu0 %5267
      %5269 = vrot.lane.b32.xlu0 %v4475, 8
      %v5270 = vpop.permute.xlu0 %5269
      %5271 = vrot.lane.b32.xlu0 %v5207, 8
      %v5272 = vpop.permute.xlu0 %5271
      %5273 = vrot.lane.b32.xlu0 %v5208, 8
      %v5274 = vpop.permute.xlu0 %5273
      %5307 = vst.msk [vmem:[#allocation5 + $0x4] sm:$0xf] %vm2394, %v5212
      %5308 = vst.msk [vmem:[#allocation5 + $0xc] sm:$0xf] %vm2394, %v5214
      %5309 = vst.msk [vmem:[#allocation5 + $0x14] sm:$0xf] %vm2394, %v5216
      %5310 = vst.msk [vmem:[#allocation5 + $0x1c] sm:$0xf] %vm2394, %v5218
      %5311 = vst.msk [vmem:[#allocation5 + $0x24] sm:$0xf] %vm2394, %v5220
      %5312 = vst.msk [vmem:[#allocation5 + $0x2c] sm:$0xf] %vm2394, %v5222
      %5313 = vst.msk [vmem:[#allocation5 + $0x34] sm:$0xf] %vm2394, %v5224
      %5314 = vst.msk [vmem:[#allocation5 + $0x3c] sm:$0xf] %vm2394, %v5226
      %5315 = vst.msk [vmem:[#allocation5 + $0x44] sm:$0xf] %vm2394, %v5228
      %5316 = vst.msk [vmem:[#allocation5 + $0x4c] sm:$0xf] %vm2394, %v5230
      %5317 = vst.msk [vmem:[#allocation5 + $0x54] sm:$0xf] %vm2394, %v5232
      %5318 = vst.msk [vmem:[#allocation5 + $0x5c] sm:$0xf] %vm2394, %v5234
      %5319 = vst.msk [vmem:[#allocation5 + $0x64] sm:$0xf] %vm2394, %v5236
      %5320 = vst.msk [vmem:[#allocation5 + $0x6c] sm:$0xf] %vm2394, %v5238
      %5321 = vst.msk [vmem:[#allocation5 + $0x74] sm:$0xf] %vm2394, %v5240
      %5322 = vst.msk [vmem:[#allocation5 + $0x7c] sm:$0xf] %vm2394, %v5242
      %5323 = vst.msk [vmem:[#allocation5 + $0x84] sm:$0xf] %vm2394, %v5244
      %5324 = vst.msk [vmem:[#allocation5 + $0x8c] sm:$0xf] %vm2394, %v5246
      %5325 = vst.msk [vmem:[#allocation5 + $0x94] sm:$0xf] %vm2394, %v5248
      %5326 = vst.msk [vmem:[#allocation5 + $0x9c] sm:$0xf] %vm2394, %v5250
      %5327 = vst.msk [vmem:[#allocation5 + $0xa4] sm:$0xf] %vm2394, %v5252
      %5328 = vst.msk [vmem:[#allocation5 + $0xac] sm:$0xf] %vm2394, %v5254
      %5329 = vst.msk [vmem:[#allocation5 + $0xb4] sm:$0xf] %vm2394, %v5256
      %5330 = vst.msk [vmem:[#allocation5 + $0xbc] sm:$0xf] %vm2394, %v5258
      %5331 = vst.msk [vmem:[#allocation5 + $0xc4] sm:$0xf] %vm2394, %v5260
      %5332 = vst.msk [vmem:[#allocation5 + $0xcc] sm:$0xf] %vm2394, %v5262
      %5333 = vst.msk [vmem:[#allocation5 + $0xd4] sm:$0xf] %vm2394, %v5264
      %5334 = vst.msk [vmem:[#allocation5 + $0xdc] sm:$0xf] %vm2394, %v5266
      %5335 = vst.msk [vmem:[#allocation5 + $0xe4] sm:$0xf] %vm2394, %v5268
      %5336 = vst.msk [vmem:[#allocation5 + $0xec] sm:$0xf] %vm2394, %v5270
      %5337 = vst.msk [vmem:[#allocation5 + $0xf4] sm:$0xf] %vm2394, %v5272
      %5338 = vst.msk [vmem:[#allocation5 + $0xfc] sm:$0xf] %vm2394, %v5274
      %v5339 = vld [vmem:[#allocation5] sm:$0xff]
      %v5340 = vld [vmem:[#allocation5 + $0x8] sm:$0xff]
      %v5341 = vld [vmem:[#allocation5 + $0x10] sm:$0xff]
      %v5342 = vld [vmem:[#allocation5 + $0x18] sm:$0xff]
      %v5343 = vld [vmem:[#allocation5 + $0x20] sm:$0xff]
      %v5344 = vld [vmem:[#allocation5 + $0x28] sm:$0xff]
      %v5345 = vld [vmem:[#allocation5 + $0x30] sm:$0xff]
      %v5346 = vld [vmem:[#allocation5 + $0x38] sm:$0xff]
      %v5347 = vld [vmem:[#allocation5 + $0x40] sm:$0xff]
      %v5348 = vld [vmem:[#allocation5 + $0x48] sm:$0xff]
      %v5349 = vld [vmem:[#allocation5 + $0x50] sm:$0xff]
      %v5350 = vld [vmem:[#allocation5 + $0x58] sm:$0xff]
      %v5351 = vld [vmem:[#allocation5 + $0x60] sm:$0xff]
      %v5352 = vld [vmem:[#allocation5 + $0x68] sm:$0xff]
      %v5353 = vld [vmem:[#allocation5 + $0x70] sm:$0xff]
      %v5354 = vld [vmem:[#allocation5 + $0x78] sm:$0xff]
      %v5355 = vld [vmem:[#allocation5 + $0x80] sm:$0xff]
      %v5356 = vld [vmem:[#allocation5 + $0x88] sm:$0xff]
      %v5357 = vld [vmem:[#allocation5 + $0x90] sm:$0xff]
      %v5358 = vld [vmem:[#allocation5 + $0x98] sm:$0xff]
      %v5359 = vld [vmem:[#allocation5 + $0xa0] sm:$0xff]
      %v5360 = vld [vmem:[#allocation5 + $0xa8] sm:$0xff]
      %v5361 = vld [vmem:[#allocation5 + $0xb0] sm:$0xff]
      %v5362 = vld [vmem:[#allocation5 + $0xb8] sm:$0xff]
      %v5363 = vld [vmem:[#allocation5 + $0xc0] sm:$0xff]
      %v5364 = vld [vmem:[#allocation5 + $0xc8] sm:$0xff]
      %v5365 = vld [vmem:[#allocation5 + $0xd0] sm:$0xff]
      %v5366 = vld [vmem:[#allocation5 + $0xd8] sm:$0xff]
      %v5367 = vld [vmem:[#allocation5 + $0xe0] sm:$0xff]
      %v5368 = vld [vmem:[#allocation5 + $0xe8] sm:$0xff]
      %v5369 = vld [vmem:[#allocation5 + $0xf0] sm:$0xff]
      %v5370 = vld [vmem:[#allocation5 + $0xf8] sm:$0xff]
      %v5371 = vld [vmem:[%s2] sm:$0xf]
      %v5372 = vld [vmem:[%s2 + $0x4] sm:$0xf]
      %v5373 = vld [vmem:[%s2 + $0x8] sm:$0xf]
      %v5374 = vld [vmem:[%s2 + $0xc] sm:$0xf]
      %v5375 = vld [vmem:[%s2 + $0x10] sm:$0xf]
      %v5376 = vld [vmem:[%s2 + $0x14] sm:$0xf]
      %v5377 = vld [vmem:[%s2 + $0x18] sm:$0xf]
      %v5378 = vld [vmem:[%s2 + $0x1c] sm:$0xf]
      %v5379 = vld [vmem:[%s2 + $0x20] sm:$0xf]
      %v5380 = vld [vmem:[%s2 + $0x24] sm:$0xf]
      %v5381 = vld [vmem:[%s2 + $0x28] sm:$0xf]
      %v5382 = vld [vmem:[%s2 + $0x2c] sm:$0xf]
      %v5383 = vld [vmem:[%s2 + $0x30] sm:$0xf]
      %v5384 = vld [vmem:[%s2 + $0x34] sm:$0xf]
      %v5385 = vld [vmem:[%s2 + $0x38] sm:$0xf]
      %v5386 = vld [vmem:[%s2 + $0x3c] sm:$0xf]
      %v5387 = vld [vmem:[%s2 + $0x40] sm:$0xf]
      %v5388 = vld [vmem:[%s2 + $0x44] sm:$0xf]
      %v5389 = vld [vmem:[%s3] sm:$0x1]
      %v5391 = vperm.slane %v5389, 0
      %v5425 = vunpack.c.l.b16 %v5339
      %v5426 = vunpack.c.h.b16 %v5339
      %v5427 = vunpack.c.l.b16 %v5340
      %v5428 = vunpack.c.h.b16 %v5340
      %v5429 = vunpack.c.l.b16 %v5341
      %v5430 = vunpack.c.h.b16 %v5341
      %v5431 = vunpack.c.l.b16 %v5342
      %v5432 = vunpack.c.h.b16 %v5342
      %v5433 = vunpack.c.l.b16 %v5343
      %v5434 = vunpack.c.h.b16 %v5343
      %v5435 = vunpack.c.l.b16 %v5344
      %v5436 = vunpack.c.h.b16 %v5344
      %v5437 = vunpack.c.l.b16 %v5345
      %v5438 = vunpack.c.h.b16 %v5345
      %v5439 = vunpack.c.l.b16 %v5346
      %v5440 = vunpack.c.h.b16 %v5346
      %v5441 = vunpack.c.l.b16 %v5347
      %v5442 = vunpack.c.h.b16 %v5347
      %v5443 = vunpack.c.l.b16 %v5348
      %v5444 = vunpack.c.h.b16 %v5348
      %v5445 = vunpack.c.l.b16 %v5349
      %v5446 = vunpack.c.h.b16 %v5349
      %v5447 = vunpack.c.l.b16 %v5350
      %v5448 = vunpack.c.h.b16 %v5350
      %v5449 = vunpack.c.l.b16 %v5351
      %v5450 = vunpack.c.h.b16 %v5351
      %v5451 = vunpack.c.l.b16 %v5352
      %v5452 = vunpack.c.h.b16 %v5352
      %v5453 = vunpack.c.l.b16 %v5353
      %v5454 = vunpack.c.h.b16 %v5353
      %v5455 = vunpack.c.l.b16 %v5354
      %v5456 = vunpack.c.h.b16 %v5354
      %v5457 = vunpack.c.l.b16 %v5355
      %v5458 = vunpack.c.h.b16 %v5355
      %v5459 = vunpack.c.l.b16 %v5356
      %v5460 = vunpack.c.h.b16 %v5356
      %v5461 = vunpack.c.l.b16 %v5357
      %v5462 = vunpack.c.h.b16 %v5357
      %v5463 = vunpack.c.l.b16 %v5358
      %v5464 = vunpack.c.h.b16 %v5358
      %v5465 = vunpack.c.l.b16 %v5359
      %v5466 = vunpack.c.h.b16 %v5359
      %v5467 = vunpack.c.l.b16 %v5360
      %v5468 = vunpack.c.h.b16 %v5360
      %v5469 = vunpack.c.l.b16 %v5361
      %v5470 = vunpack.c.h.b16 %v5361
      %v5471 = vunpack.c.l.b16 %v5362
      %v5472 = vunpack.c.h.b16 %v5362
      %v5473 = vunpack.c.l.b16 %v5363
      %v5474 = vunpack.c.h.b16 %v5363
      %v5475 = vunpack.c.l.b16 %v5364
      %v5476 = vunpack.c.h.b16 %v5364
      %v5477 = vunpack.c.l.b16 %v5365
      %v5478 = vunpack.c.h.b16 %v5365
      %v5479 = vunpack.c.l.b16 %v5366
      %v5480 = vunpack.c.h.b16 %v5366
      %v5481 = vunpack.c.l.b16 %v5367
      %v5482 = vunpack.c.h.b16 %v5367
      %v5483 = vunpack.c.l.b16 %v5368
      %v5484 = vunpack.c.h.b16 %v5368
      %v5485 = vunpack.c.l.b16 %v5369
      %v5486 = vunpack.c.h.b16 %v5369
      %v5487 = vunpack.c.l.b16 %v5370
      %v5488 = vunpack.c.h.b16 %v5370
      %v5489 = vpack.c.b16 %v5427, %v5425
      %v5490 = vpack.c.b16 %v5428, %v5426
      %v5491 = vpack.c.b16 %v5431, %v5429
      %v5492 = vpack.c.b16 %v5432, %v5430
      %v5493 = vpack.c.b16 %v5435, %v5433
      %v5494 = vpack.c.b16 %v5436, %v5434
      %v5495 = vpack.c.b16 %v5439, %v5437
      %v5496 = vpack.c.b16 %v5440, %v5438
      %v5497 = vpack.c.b16 %v5443, %v5441
      %v5498 = vpack.c.b16 %v5444, %v5442
      %v5499 = vpack.c.b16 %v5447, %v5445
      %v5500 = vpack.c.b16 %v5448, %v5446
      %v5501 = vpack.c.b16 %v5451, %v5449
      %v5502 = vpack.c.b16 %v5452, %v5450
      %v5503 = vpack.c.b16 %v5455, %v5453
      %v5504 = vpack.c.b16 %v5456, %v5454
      %v5505 = vpack.c.b16 %v5459, %v5457
      %v5506 = vpack.c.b16 %v5460, %v5458
      %v5507 = vpack.c.b16 %v5463, %v5461
      %v5508 = vpack.c.b16 %v5464, %v5462
      %v5509 = vpack.c.b16 %v5467, %v5465
      %v5510 = vpack.c.b16 %v5468, %v5466
      %v5511 = vpack.c.b16 %v5471, %v5469
      %v5512 = vpack.c.b16 %v5472, %v5470
      %v5513 = vpack.c.b16 %v5475, %v5473
      %v5514 = vpack.c.b16 %v5476, %v5474
      %v5515 = vpack.c.b16 %v5479, %v5477
      %v5516 = vpack.c.b16 %v5480, %v5478
      %v5517 = vpack.c.b16 %v5483, %v5481
      %v5518 = vpack.c.b16 %v5484, %v5482
      %v5519 = vpack.c.b16 %v5487, %v5485
      %v5520 = vpack.c.b16 %v5488, %v5486
      %v5555 = vunpack.c.l.b16 %v5371
      %v5556 = vunpack.c.l.b16 %v5372
      %v5557 = vunpack.c.l.b16 %v5373
      %v5558 = vunpack.c.l.b16 %v5374
      %v5559 = vunpack.c.l.b16 %v5375
      %v5560 = vunpack.c.l.b16 %v5376
      %v5561 = vunpack.c.l.b16 %v5377
      %v5562 = vunpack.c.l.b16 %v5378
      %v5563 = vunpack.c.l.b16 %v5379
      %v5564 = vunpack.c.l.b16 %v5380
      %v5565 = vunpack.c.l.b16 %v5381
      %v5566 = vunpack.c.l.b16 %v5382
      %v5567 = vunpack.c.l.b16 %v5383
      %v5568 = vunpack.c.l.b16 %v5384
      %v5569 = vunpack.c.l.b16 %v5385
      %v5570 = vunpack.c.l.b16 %v5386
      %v5571 = vunpack.c.l.b16 %v5387
      %v5572 = vunpack.c.l.b16 %v5388
      %v5573 = vpack.c.b16 %v5556, %v5555
      %v5574 = vpack.c.b16 %v5558, %v5557
      %v5575 = vpack.c.b16 %v5560, %v5559
      %v5576 = vpack.c.b16 %v5562, %v5561
      %v5577 = vpack.c.b16 %v5564, %v5563
      %v5578 = vpack.c.b16 %v5566, %v5565
      %v5579 = vpack.c.b16 %v5568, %v5567
      %v5580 = vpack.c.b16 %v5570, %v5569
      %v5581 = vpack.c.b16 %v5572, %v5571
      %vm5591 = vcmask 130048
      %v5593 = vsel %vm5591, %v5490, 0
      %v5596 = vsel %vm5591, %v5492, 0
      %v5599 = vsel %vm5591, %v5494, 0
      %v5602 = vsel %vm5591, %v5496, 0
      %v5605 = vsel %vm5591, %v5498, 0
      %v5608 = vsel %vm5591, %v5500, 0
      %v5611 = vsel %vm5591, %v5502, 0
      %v5614 = vsel %vm5591, %v5504, 0
      %v5617 = vsel %vm5591, %v5506, 0
      %v5620 = vsel %vm5591, %v5508, 0
      %v5623 = vsel %vm5591, %v5510, 0
      %v5626 = vsel %vm5591, %v5512, 0
      %v5629 = vsel %vm5591, %v5514, 0
      %v5632 = vsel %vm5591, %v5516, 0
      %v5635 = vsel %vm5591, %v5518, 0
      %v5638 = vsel %vm5591, %v5520, 0
      %5640 = vmatpush.bf16.msra.mxu0 %v5580
      %5641 = vmatpush.bf16.msra.mxu0 %v5579
      %5642 = vmatpush.bf16.msra.mxu0 %v5578
      %5643 = vmatpush.bf16.msra.mxu0 %v5577
      %5644 = vmatpush.bf16.msra.mxu0 %v5576
      %5645 = vmatpush.bf16.msra.mxu0 %v5575
      %5646 = vmatpush.bf16.msra.mxu0 %v5574
      %5647 = vmatpush.bf16.msra.mxu0 %v5573
      %5648 = vmatmul.bf16.gmra.mxu0 %v5489
      %v5649 = vpop.f32.mrf.mxu0
      %v5650 = vadd.f32 %v5391, %v5649
      %v5651 = vpop.f32.mrf.mxu0
      %v5652 = vadd.f32 %v5391, %v5651
      %5653 = vmatmul.bf16.gmra.mxu0 %v5491
      %v5654 = vpop.f32.mrf.mxu0
      %v5655 = vadd.f32 %v5391, %v5654
      %v5656 = vpop.f32.mrf.mxu0
      %v5657 = vadd.f32 %v5391, %v5656
      %5658 = vmatmul.bf16.gmra.mxu0 %v5493
      %v5659 = vpop.f32.mrf.mxu0
      %v5660 = vadd.f32 %v5391, %v5659
      %v5661 = vpop.f32.mrf.mxu0
      %v5662 = vadd.f32 %v5391, %v5661
      %5663 = vmatmul.bf16.gmra.mxu0 %v5495
      %v5664 = vpop.f32.mrf.mxu0
      %v5665 = vadd.f32 %v5391, %v5664
      %v5666 = vpop.f32.mrf.mxu0
      %v5667 = vadd.f32 %v5391, %v5666
      %5668 = vmatmul.bf16.gmra.mxu0 %v5497
      %v5669 = vpop.f32.mrf.mxu0
      %v5670 = vadd.f32 %v5391, %v5669
      %v5671 = vpop.f32.mrf.mxu0
      %v5672 = vadd.f32 %v5391, %v5671
      %5673 = vmatmul.bf16.gmra.mxu0 %v5499
      %v5674 = vpop.f32.mrf.mxu0
      %v5675 = vadd.f32 %v5391, %v5674
      %v5676 = vpop.f32.mrf.mxu0
      %v5677 = vadd.f32 %v5391, %v5676
      %5678 = vmatmul.bf16.gmra.mxu0 %v5501
      %v5679 = vpop.f32.mrf.mxu0
      %v5680 = vadd.f32 %v5391, %v5679
      %v5681 = vpop.f32.mrf.mxu0
      %v5682 = vadd.f32 %v5391, %v5681
      %5683 = vmatmul.bf16.gmra.mxu0 %v5503
      %v5684 = vpop.f32.mrf.mxu0
      %v5685 = vadd.f32 %v5391, %v5684
      %v5686 = vpop.f32.mrf.mxu0
      %v5687 = vadd.f32 %v5391, %v5686
      %5688 = vmatmul.bf16.gmra.mxu0 %v5505
      %v5689 = vpop.f32.mrf.mxu0
      %v5690 = vadd.f32 %v5391, %v5689
      %v5691 = vpop.f32.mrf.mxu0
      %v5692 = vadd.f32 %v5391, %v5691
      %5693 = vmatmul.bf16.gmra.mxu0 %v5507
      %v5694 = vpop.f32.mrf.mxu0
      %v5695 = vadd.f32 %v5391, %v5694
      %v5696 = vpop.f32.mrf.mxu0
      %v5697 = vadd.f32 %v5391, %v5696
      %5698 = vmatmul.bf16.gmra.mxu0 %v5509
      %v5699 = vpop.f32.mrf.mxu0
      %v5700 = vadd.f32 %v5391, %v5699
      %v5701 = vpop.f32.mrf.mxu0
      %v5702 = vadd.f32 %v5391, %v5701
      %5703 = vmatmul.bf16.gmra.mxu0 %v5511
      %v5704 = vpop.f32.mrf.mxu0
      %v5705 = vadd.f32 %v5391, %v5704
      %v5706 = vpop.f32.mrf.mxu0
      %v5707 = vadd.f32 %v5391, %v5706
      %5708 = vmatmul.bf16.gmra.mxu0 %v5513
      %v5709 = vpop.f32.mrf.mxu0
      %v5710 = vadd.f32 %v5391, %v5709
      %v5711 = vpop.f32.mrf.mxu0
      %v5712 = vadd.f32 %v5391, %v5711
      %5713 = vmatmul.bf16.gmra.mxu0 %v5515
      %v5714 = vpop.f32.mrf.mxu0
      %v5715 = vadd.f32 %v5391, %v5714
      %v5716 = vpop.f32.mrf.mxu0
      %v5717 = vadd.f32 %v5391, %v5716
      %5718 = vmatmul.bf16.gmra.mxu0 %v5517
      %v5719 = vpop.f32.mrf.mxu0
      %v5720 = vadd.f32 %v5391, %v5719
      %v5721 = vpop.f32.mrf.mxu0
      %v5722 = vadd.f32 %v5391, %v5721
      %5723 = vmatmul.bf16.gmra.mxu0 %v5519
      %v5724 = vpop.f32.mrf.mxu0
      %v5725 = vadd.f32 %v5391, %v5724
      %v5726 = vpop.f32.mrf.mxu0
      %v5727 = vadd.f32 %v5391, %v5726
      %5728 = vdwg.mxu0
      %5729 = vmatpush.bf16.msra.mxu0 0
      %5730 = vmatpush.bf16.msra.mxu0 0
      %5731 = vmatpush.bf16.msra.mxu0 0
      %5732 = vmatpush.bf16.msra.mxu0 0
      %5733 = vmatpush.bf16.msra.mxu0 0
      %5734 = vmatpush.bf16.msra.mxu0 0
      %5735 = vmatpush.bf16.msra.mxu0 0
      %5736 = vmatpush.bf16.msra.mxu0 %v5581
      %5737 = vmatmul.bf16.gmra.mxu0 %v5593
      %v5738 = vpop.f32.mrf.mxu0
      %v5739 = vadd.f32 %v5650, %v5738
      %v5740 = vpop.f32.mrf.mxu0
      %v5741 = vadd.f32 %v5652, %v5740
      %5742 = vmatmul.bf16.gmra.mxu0 %v5596
      %v5743 = vpop.f32.mrf.mxu0
      %v5744 = vadd.f32 %v5655, %v5743
      %v5745 = vpop.f32.mrf.mxu0
      %v5746 = vadd.f32 %v5657, %v5745
      %5747 = vmatmul.bf16.gmra.mxu0 %v5599
      %v5748 = vpop.f32.mrf.mxu0
      %v5749 = vadd.f32 %v5660, %v5748
      %v5750 = vpop.f32.mrf.mxu0
      %v5751 = vadd.f32 %v5662, %v5750
      %5752 = vmatmul.bf16.gmra.mxu0 %v5602
      %v5753 = vpop.f32.mrf.mxu0
      %v5754 = vadd.f32 %v5665, %v5753
      %v5755 = vpop.f32.mrf.mxu0
      %v5756 = vadd.f32 %v5667, %v5755
      %5757 = vmatmul.bf16.gmra.mxu0 %v5605
      %v5758 = vpop.f32.mrf.mxu0
      %v5759 = vadd.f32 %v5670, %v5758
      %v5760 = vpop.f32.mrf.mxu0
      %v5761 = vadd.f32 %v5672, %v5760
      %5762 = vmatmul.bf16.gmra.mxu0 %v5608
      %v5763 = vpop.f32.mrf.mxu0
      %v5764 = vadd.f32 %v5675, %v5763
      %v5765 = vpop.f32.mrf.mxu0
      %v5766 = vadd.f32 %v5677, %v5765
      %5767 = vmatmul.bf16.gmra.mxu0 %v5611
      %v5768 = vpop.f32.mrf.mxu0
      %v5769 = vadd.f32 %v5680, %v5768
      %v5770 = vpop.f32.mrf.mxu0
      %v5771 = vadd.f32 %v5682, %v5770
      %5772 = vmatmul.bf16.gmra.mxu0 %v5614
      %v5773 = vpop.f32.mrf.mxu0
      %v5774 = vadd.f32 %v5685, %v5773
      %v5775 = vpop.f32.mrf.mxu0
      %v5776 = vadd.f32 %v5687, %v5775
      %5777 = vmatmul.bf16.gmra.mxu0 %v5617
      %v5778 = vpop.f32.mrf.mxu0
      %v5779 = vadd.f32 %v5690, %v5778
      %v5780 = vpop.f32.mrf.mxu0
      %v5781 = vadd.f32 %v5692, %v5780
      %5782 = vmatmul.bf16.gmra.mxu0 %v5620
      %v5783 = vpop.f32.mrf.mxu0
      %v5784 = vadd.f32 %v5695, %v5783
      %v5785 = vpop.f32.mrf.mxu0
      %v5786 = vadd.f32 %v5697, %v5785
      %5787 = vmatmul.bf16.gmra.mxu0 %v5623
      %v5788 = vpop.f32.mrf.mxu0
      %v5789 = vadd.f32 %v5700, %v5788
      %v5790 = vpop.f32.mrf.mxu0
      %v5791 = vadd.f32 %v5702, %v5790
      %5792 = vmatmul.bf16.gmra.mxu0 %v5626
      %v5793 = vpop.f32.mrf.mxu0
      %v5794 = vadd.f32 %v5705, %v5793
      %v5795 = vpop.f32.mrf.mxu0
      %v5796 = vadd.f32 %v5707, %v5795
      %5797 = vmatmul.bf16.gmra.mxu0 %v5629
      %v5798 = vpop.f32.mrf.mxu0
      %v5799 = vadd.f32 %v5710, %v5798
      %v5800 = vpop.f32.mrf.mxu0
      %v5801 = vadd.f32 %v5712, %v5800
      %5802 = vmatmul.bf16.gmra.mxu0 %v5632
      %v5803 = vpop.f32.mrf.mxu0
      %v5804 = vadd.f32 %v5715, %v5803
      %v5805 = vpop.f32.mrf.mxu0
      %v5806 = vadd.f32 %v5717, %v5805
      %5807 = vmatmul.bf16.gmra.mxu0 %v5635
      %v5808 = vpop.f32.mrf.mxu0
      %v5809 = vadd.f32 %v5720, %v5808
      %v5810 = vpop.f32.mrf.mxu0
      %v5811 = vadd.f32 %v5722, %v5810
      %5812 = vmatmul.bf16.gmra.mxu0 %v5638
      %v5813 = vpop.f32.mrf.mxu0
      %v5814 = vadd.f32 %v5725, %v5813
      %v5815 = vpop.f32.mrf.mxu0
      %v5816 = vadd.f32 %v5727, %v5815
      %5817 = vdwg.mxu0
      %v5818 = vsel %vm267, %v5739, 0.0
      %v5819 = vsel %vm267, %v5741, 0.0
      %v5820 = vadd.f32 %v5818, %v5819
      %v5821 = vsel %vm267, %v5744, 0.0
      %v5822 = vadd.f32 %v5820, %v5821
      %v5823 = vsel %vm267, %v5746, 0.0
      %v5824 = vadd.f32 %v5822, %v5823
      %v5825 = vsel %vm267, %v5749, 0.0
      %v5826 = vadd.f32 %v5824, %v5825
      %v5827 = vsel %vm267, %v5751, 0.0
      %v5828 = vadd.f32 %v5826, %v5827
      %v5829 = vsel %vm267, %v5754, 0.0
      %v5830 = vadd.f32 %v5828, %v5829
      %v5831 = vsel %vm267, %v5756, 0.0
      %v5832 = vadd.f32 %v5830, %v5831
      %v5833 = vsel %vm267, %v5759, 0.0
      %v5834 = vadd.f32 %v5832, %v5833
      %v5835 = vsel %vm267, %v5761, 0.0
      %v5836 = vadd.f32 %v5834, %v5835
      %v5837 = vsel %vm267, %v5764, 0.0
      %v5838 = vadd.f32 %v5836, %v5837
      %v5839 = vsel %vm267, %v5766, 0.0
      %v5840 = vadd.f32 %v5838, %v5839
      %v5841 = vsel %vm267, %v5769, 0.0
      %v5842 = vadd.f32 %v5840, %v5841
      %v5843 = vsel %vm267, %v5771, 0.0
      %v5844 = vadd.f32 %v5842, %v5843
      %v5845 = vsel %vm267, %v5774, 0.0
      %v5846 = vadd.f32 %v5844, %v5845
      %v5847 = vsel %vm267, %v5776, 0.0
      %v5848 = vadd.f32 %v5846, %v5847
      %v5849 = vsel %vm267, %v5779, 0.0
      %v5850 = vadd.f32 %v5848, %v5849
      %v5851 = vsel %vm267, %v5781, 0.0
      %v5852 = vadd.f32 %v5850, %v5851
      %v5853 = vsel %vm267, %v5784, 0.0
      %v5854 = vadd.f32 %v5852, %v5853
      %v5855 = vsel %vm267, %v5786, 0.0
      %v5856 = vadd.f32 %v5854, %v5855
      %v5857 = vsel %vm267, %v5789, 0.0
      %v5858 = vadd.f32 %v5856, %v5857
      %v5859 = vsel %vm267, %v5791, 0.0
      %v5860 = vadd.f32 %v5858, %v5859
      %v5861 = vsel %vm267, %v5794, 0.0
      %v5862 = vadd.f32 %v5860, %v5861
      %v5863 = vsel %vm267, %v5796, 0.0
      %v5864 = vadd.f32 %v5862, %v5863
      %v5865 = vsel %vm267, %v5799, 0.0
      %v5866 = vadd.f32 %v5864, %v5865
      %v5867 = vsel %vm267, %v5801, 0.0
      %v5868 = vadd.f32 %v5866, %v5867
      %v5869 = vsel %vm267, %v5804, 0.0
      %v5870 = vadd.f32 %v5868, %v5869
      %v5871 = vsel %vm267, %v5806, 0.0
      %v5872 = vadd.f32 %v5870, %v5871
      %v5873 = vsel %vm267, %v5809, 0.0
      %v5874 = vadd.f32 %v5872, %v5873
      %v5875 = vsel %vm267, %v5811, 0.0
      %v5876 = vadd.f32 %v5874, %v5875
      %v5877 = vsel %vm267, %v5814, 0.0
      %v5878 = vadd.f32 %v5876, %v5877
      %v5879 = vsel %vm267, %v5816, 0.0
      %v5880 = vadd.f32 %v5878, %v5879
      %v5881 = vrot.slane %v5880, 4
      %v5882 = vadd.f32 %v5880, %v5881
      %v5883 = vrot.slane %v5882, 2
      %v5884 = vadd.f32 %v5882, %v5883
      %v5885 = vrot.slane %v5884, 1
      %v5886 = vadd.f32 %v5884, %v5885
      %5887 = vst.msk [vmem:[%s255] sm:$0x1] %vm614, %v5886
      %v5888 = vmul.f32 %v5739, %v5739
      %v5889 = vmul.f32 %v5741, %v5741
      %v5890 = vmul.f32 %v5744, %v5744
      %v5891 = vmul.f32 %v5746, %v5746
      %v5892 = vmul.f32 %v5749, %v5749
      %v5893 = vmul.f32 %v5751, %v5751
      %v5894 = vmul.f32 %v5754, %v5754
      %v5895 = vmul.f32 %v5756, %v5756
      %v5896 = vmul.f32 %v5759, %v5759
      %v5897 = vmul.f32 %v5761, %v5761
      %v5898 = vmul.f32 %v5764, %v5764
      %v5899 = vmul.f32 %v5766, %v5766
      %v5900 = vmul.f32 %v5769, %v5769
      %v5901 = vmul.f32 %v5771, %v5771
      %v5902 = vmul.f32 %v5774, %v5774
      %v5903 = vmul.f32 %v5776, %v5776
      %v5904 = vmul.f32 %v5779, %v5779
      %v5905 = vmul.f32 %v5781, %v5781
      %v5906 = vmul.f32 %v5784, %v5784
      %v5907 = vmul.f32 %v5786, %v5786
      %v5908 = vmul.f32 %v5789, %v5789
      %v5909 = vmul.f32 %v5791, %v5791
      %v5910 = vmul.f32 %v5794, %v5794
      %v5911 = vmul.f32 %v5796, %v5796
      %v5912 = vmul.f32 %v5799, %v5799
      %v5913 = vmul.f32 %v5801, %v5801
      %v5914 = vmul.f32 %v5804, %v5804
      %v5915 = vmul.f32 %v5806, %v5806
      %v5916 = vmul.f32 %v5809, %v5809
      %v5917 = vmul.f32 %v5811, %v5811
      %v5918 = vmul.f32 %v5814, %v5814
      %v5919 = vmul.f32 %v5816, %v5816
      %v5920 = vsel %vm267, %v5888, 0.0
      %v5921 = vsel %vm267, %v5889, 0.0
      %v5922 = vadd.f32 %v5920, %v5921
      %v5923 = vsel %vm267, %v5890, 0.0
      %v5924 = vadd.f32 %v5922, %v5923
      %v5925 = vsel %vm267, %v5891, 0.0
      %v5926 = vadd.f32 %v5924, %v5925
      %v5927 = vsel %vm267, %v5892, 0.0
      %v5928 = vadd.f32 %v5926, %v5927
      %v5929 = vsel %vm267, %v5893, 0.0
      %v5930 = vadd.f32 %v5928, %v5929
      %v5931 = vsel %vm267, %v5894, 0.0
      %v5932 = vadd.f32 %v5930, %v5931
      %v5933 = vsel %vm267, %v5895, 0.0
      %v5934 = vadd.f32 %v5932, %v5933
      %v5935 = vsel %vm267, %v5896, 0.0
      %v5936 = vadd.f32 %v5934, %v5935
      %v5937 = vsel %vm267, %v5897, 0.0
      %v5938 = vadd.f32 %v5936, %v5937
      %v5939 = vsel %vm267, %v5898, 0.0
      %v5940 = vadd.f32 %v5938, %v5939
      %v5941 = vsel %vm267, %v5899, 0.0
      %v5942 = vadd.f32 %v5940, %v5941
      %v5943 = vsel %vm267, %v5900, 0.0
      %v5944 = vadd.f32 %v5942, %v5943
      %v5945 = vsel %vm267, %v5901, 0.0
      %v5946 = vadd.f32 %v5944, %v5945
      %v5947 = vsel %vm267, %v5902, 0.0
      %v5948 = vadd.f32 %v5946, %v5947
      %v5949 = vsel %vm267, %v5903, 0.0
      %v5950 = vadd.f32 %v5948, %v5949
      %v5951 = vsel %vm267, %v5904, 0.0
      %v5952 = vadd.f32 %v5950, %v5951
      %v5953 = vsel %vm267, %v5905, 0.0
      %v5954 = vadd.f32 %v5952, %v5953
      %v5955 = vsel %vm267, %v5906, 0.0
      %v5956 = vadd.f32 %v5954, %v5955
      %v5957 = vsel %vm267, %v5907, 0.0
      %v5958 = vadd.f32 %v5956, %v5957
      %v5959 = vsel %vm267, %v5908, 0.0
      %v5960 = vadd.f32 %v5958, %v5959
      %v5961 = vsel %vm267, %v5909, 0.0
      %v5962 = vadd.f32 %v5960, %v5961
      %v5963 = vsel %vm267, %v5910, 0.0
      %v5964 = vadd.f32 %v5962, %v5963
      %v5965 = vsel %vm267, %v5911, 0.0
      %v5966 = vadd.f32 %v5964, %v5965
      %v5967 = vsel %vm267, %v5912, 0.0
      %v5968 = vadd.f32 %v5966, %v5967
      %v5969 = vsel %vm267, %v5913, 0.0
      %v5970 = vadd.f32 %v5968, %v5969
      %v5971 = vsel %vm267, %v5914, 0.0
      %v5972 = vadd.f32 %v5970, %v5971
      %v5973 = vsel %vm267, %v5915, 0.0
      %v5974 = vadd.f32 %v5972, %v5973
      %v5975 = vsel %vm267, %v5916, 0.0
      %v5976 = vadd.f32 %v5974, %v5975
      %v5977 = vsel %vm267, %v5917, 0.0
      %v5978 = vadd.f32 %v5976, %v5977
      %v5979 = vsel %vm267, %v5918, 0.0
      %v5980 = vadd.f32 %v5978, %v5979
      %v5981 = vsel %vm267, %v5919, 0.0
      %v5982 = vadd.f32 %v5980, %v5981
      %v5983 = vrot.slane %v5982, 4
      %v5984 = vadd.f32 %v5982, %v5983
      %v5985 = vrot.slane %v5984, 2
      %v5986 = vadd.f32 %v5984, %v5985
      %v5987 = vrot.slane %v5986, 1
      %v5988 = vadd.f32 %v5986, %v5987
      %5989 = vst.msk [vmem:[%s255 + $0x1] sm:$0x1] %vm614, %v5988
      %5990 = vst.msk [vmem:[%s251] sm:$0xff] %vm267, %v5739
      %5991 = vst.msk [vmem:[%s251 + $0x8] sm:$0xff] %vm267, %v5741
      %5992 = vst.msk [vmem:[%s251 + $0x10] sm:$0xff] %vm267, %v5744
      %5993 = vst.msk [vmem:[%s251 + $0x18] sm:$0xff] %vm267, %v5746
      %5994 = vst.msk [vmem:[%s251 + $0x20] sm:$0xff] %vm267, %v5749
      %5995 = vst.msk [vmem:[%s251 + $0x28] sm:$0xff] %vm267, %v5751
      %5996 = vst.msk [vmem:[%s251 + $0x30] sm:$0xff] %vm267, %v5754
      %5997 = vst.msk [vmem:[%s251 + $0x38] sm:$0xff] %vm267, %v5756
      %5998 = vst.msk [vmem:[%s251 + $0x40] sm:$0xff] %vm267, %v5759
      %5999 = vst.msk [vmem:[%s251 + $0x48] sm:$0xff] %vm267, %v5761
      %6000 = vst.msk [vmem:[%s251 + $0x50] sm:$0xff] %vm267, %v5764
      %6001 = vst.msk [vmem:[%s251 + $0x58] sm:$0xff] %vm267, %v5766
      %6002 = vst.msk [vmem:[%s251 + $0x60] sm:$0xff] %vm267, %v5769
      %6003 = vst.msk [vmem:[%s251 + $0x68] sm:$0xff] %vm267, %v5771
      %6004 = vst.msk [vmem:[%s251 + $0x70] sm:$0xff] %vm267, %v5774
      %6005 = vst.msk [vmem:[%s251 + $0x78] sm:$0xff] %vm267, %v5776
      %6006 = vst.msk [vmem:[%s251 + $0x80] sm:$0xff] %vm267, %v5779
      %6007 = vst.msk [vmem:[%s251 + $0x88] sm:$0xff] %vm267, %v5781
      %6008 = vst.msk [vmem:[%s251 + $0x90] sm:$0xff] %vm267, %v5784
      %6009 = vst.msk [vmem:[%s251 + $0x98] sm:$0xff] %vm267, %v5786
      %6010 = vst.msk [vmem:[%s251 + $0xa0] sm:$0xff] %vm267, %v5789
      %6011 = vst.msk [vmem:[%s251 + $0xa8] sm:$0xff] %vm267, %v5791
      %6012 = vst.msk [vmem:[%s251 + $0xb0] sm:$0xff] %vm267, %v5794
      %6013 = vst.msk [vmem:[%s251 + $0xb8] sm:$0xff] %vm267, %v5796
      %6014 = vst.msk [vmem:[%s251 + $0xc0] sm:$0xff] %vm267, %v5799
      %6015 = vst.msk [vmem:[%s251 + $0xc8] sm:$0xff] %vm267, %v5801
      %6016 = vst.msk [vmem:[%s251 + $0xd0] sm:$0xff] %vm267, %v5804
      %6017 = vst.msk [vmem:[%s251 + $0xd8] sm:$0xff] %vm267, %v5806
      %6018 = vst.msk [vmem:[%s251 + $0xe0] sm:$0xff] %vm267, %v5809
      %6019 = vst.msk [vmem:[%s251 + $0xe8] sm:$0xff] %vm267, %v5811
      %6020 = vst.msk [vmem:[%s251 + $0xf0] sm:$0xff] %vm267, %v5814
      %6021 = vst.msk [vmem:[%s251 + $0xf8] sm:$0xff] %vm267, %v5816
      %p6022 = scmp.lt.s32.totalorder %s17, 1
      %s6023 = scalar_select %p6022, %s17, 1
      %s6024 = smul.addr %s6023, 32
      %s6025 = smul.addr %s6024, 8
      %s6026 = scalar_lea.vmem %s4, %s6025
      %p6027 = scmp.lt.s32.totalorder %s17, 1
      %s6028 = scalar_select %p6027, %s17, 1
      %s6029 = smul.addr %s6028, 2
      %s6030 = scalar_lea.vmem %s5, %s6029
      // Predicated region
      $region37: #{up_forward.3} parent=35 // pred_check
        %p6031 = pneg %p129
      $region38: #{up_forward.3} parent=35 // pred_check_branch
        %6033 = sbr.rel (%p6031) target = $region40
      $region39: #{up_forward.3} parent=35 // pred_region
        _
      $region40: #{up_forward.3} parent=35 // pred_fallthru
        _
      // Predicated region
      $region41: #{up_forward.3} parent=35 // pred_check
        %p6034 = pneg %p155
      $region42: #{up_forward.3} parent=35 // pred_check_branch
        %6036 = sbr.rel (%p6034) target = $region44
      $region43: #{up_forward.3} parent=35 // pred_region
        _
      $region44: #{up_forward.3} parent=35 // pred_fallthru
        _
    $region36: #{up_forward.3} parent=5 // pred_fallthru
      _
    %p6037 = scmp.le.s32.totalorder 2, %s12
    // Predicated region
    $region45: #{up_forward.3} parent=5 // pred_check
      %p6038 = pneg %p6037
    $region46: #{up_forward.3} parent=5 // pred_check_branch
      %6040 = sbr.rel (%p6038) target = $region48
    $region47: #{up_forward.3} parent=5 // pred_region
      %s6041 = ssub.s32 %s12, 2
      // Predicated region
      $region49: #{up_forward.3} parent=47 // pred_check
        %p6042 = pneg %p135
      $region50: #{up_forward.3} parent=47 // pred_check_branch
        %6044 = sbr.rel (%p6042) target = $region52
      $region51: #{up_forward.3} parent=47 // pred_region
        %p6045 = scmp.lt.s32.totalorder %s18, 1
        %s6046 = scalar_select %p6045, %s18, 1
        %s6047 = smul.addr %s6046, 32
        %s6048 = smul.addr %s6047, 8
        %s6049 = scalar_lea.vmem %s4, %s6048
      $region52: #{up_forward.3} parent=47 // pred_fallthru
        _
      // Predicated region
      $region53: #{up_forward.3} parent=47 // pred_check
        %p6050 = pneg %p161
      $region54: #{up_forward.3} parent=47 // pred_check_branch
        %6052 = sbr.rel (%p6050) target = $region56
      $region55: #{up_forward.3} parent=47 // pred_region
        %p6053 = scmp.lt.s32.totalorder %s18, 1
        %s6054 = scalar_select %p6053, %s18, 1
        %s6055 = smul.addr %s6054, 2
        %s6056 = scalar_lea.vmem %s5, %s6055
      $region56: #{up_forward.3} parent=47 // pred_fallthru
        _
    $region48: #{up_forward.3} parent=5 // pred_fallthru
      _
  $region6: #{up_forward.3} parent=0 // loop_footer
    %s16 = sadd.s32 1, %s12
  $region7: #{up_forward.3} parent=0 // loop_footer_branch
    %11 = sbr.rel target = $region3
  $region8: #{up_forward.3} parent=0 // loop_exit
    _

</llo_original>
